<compile_context>
chip_gen: v5e
topology: v5e:2x2
jax: 0.10.0
libtpu: 0.0.40
codegen_flags: <defaults>
</compile_context>

<pallas_src>
import functools

import jax
import jax.numpy as jnp
from jax import lax
from jax.experimental import pallas as pl
from jax.experimental.pallas import tpu as pltpu


# ----------------------------------------------------------------------------
# Fused kernel: conv1 -> ReLU -> pool -> conv2 -> ReLU -> pool -> fc1 -> ReLU -> fc2
# ----------------------------------------------------------------------------
def _fused_cnn_kernel(x_ref, w1_ref, b1_ref, w2_ref, b2_ref,
                      wf1_ref, bf1_ref, wf2_ref, bf2_ref,
                      o_ref,
                      xp1_ref, p1_ref, xp2_ref, p2_ref, flat_ref,
                      *, N, H, W, Cin, C1, C2):
    H1, W1 = H // 2, W // 2        # spatial size after pool1
    H2, W2 = H1 // 2, W1 // 2      # spatial size after pool2

    # ---- SAME (3x3, pad=1) padding done in VMEM scratch ----------------------
    xp1_ref[...] = jnp.zeros(xp1_ref.shape, jnp.float32)
    xp2_ref[...] = jnp.zeros(xp2_ref.shape, jnp.float32)
    for n in range(N):
        xp1_ref[n, 1:H + 1, 1:W + 1, :] = x_ref[n]

    # ---- conv1 as one im2col matmul over the whole batch ---------------------
    # p1: (N*H*W, 9*Cin); w1 was pre-flattened in the wrapper to (9*Cin, C1).
    for n in range(N):
        xp = xp1_ref[n]                                    # (H+2, W+2, Cin)
        for kh in range(3):
            for kw in range(3):
                tap = xp[kh:kh + H, kw:kw + W, :]          # static slice
                col = (kh * 3 + kw) * Cin
                p1_ref[n * H * W:(n + 1) * H * W, col:col + Cin] = (
                    tap.reshape(H * W, Cin))
    y = jnp.dot(p1_ref[...], w1_ref[...], preferred_element_type=jnp.float32)
    y = jnp.maximum(y + b1_ref[...], 0.0)                  # (N*H*W, C1)

    # ---- 2x2 max-pool, stride 2 (pool W then H; rows are n-major so with even
    #      H/W the pairwise grouping never crosses an image boundary) ----------
    def pool2x2(z, n, h, w, c):
        z = z.reshape(n * h, w // 2, 2, c).max(axis=2)         # (n*h, w/2, c)
        z = z.reshape(n * h // 2, 2, w // 2, c).max(axis=1)    # (n*h/2, w/2, c)
        return z

    y = pool2x2(y, N, H, W, C1)                            # (N*H1, W1, C1)

    # ---- conv2: pad pooled activations in VMEM, one im2col matmul ------------
    for n in range(N):
        xp2_ref[n, 1:H1 + 1, 1:W1 + 1, :] = y[n * H1:(n + 1) * H1]
    for n in range(N):
        xp = xp2_ref[n]                                    # (H1+2, W1+2, C1)
        for kh in range(3):
            for kw in range(3):
                tap = xp[kh:kh + H1, kw:kw + W1, :]
                col = (kh * 3 + kw) * C1
                p2_ref[n * H1 * W1:(n + 1) * H1 * W1, col:col + C1] = (
                    tap.reshape(H1 * W1, C1))
    y = jnp.dot(p2_ref[...], w2_ref[...], preferred_element_type=jnp.float32)
    y = jnp.maximum(y + b2_ref[...], 0.0)                  # (N*H1*W1, C2)
    y = pool2x2(y, N, H1, W1, C2)                          # (N*H2, W2, C2)

    # ---- flatten in NHWC order (fc1 weight rows were pre-permuted to match) --
    for n in range(N):
        for h in range(H2):
            for w in range(W2):
                col = (h * W2 + w) * C2
                flat_ref[n:n + 1, col:col + C2] = (
                    y[n * H2 + h:n * H2 + h + 1, w, :])

    # ---- MLP head: fc1 + ReLU + fc2 ------------------------------------------
    hdn = jnp.dot(flat_ref[...], wf1_ref[...], preferred_element_type=jnp.float32)
    hdn = jnp.maximum(hdn + bf1_ref[...], 0.0)             # (N, 128)
    out = jnp.dot(hdn, wf2_ref[...], preferred_element_type=jnp.float32)
    o_ref[...] = out + bf2_ref[...]                        # (N, num_classes)


def fused_forward(params, x_nhwc):
    N, H, W, Cin = x_nhwc.shape
    C1 = params["w1"].shape[-1]
    C2 = params["w2"].shape[-1]
    H1, W1 = H // 2, W // 2
    H2, W2 = H1 // 2, W1 // 2
    flat = H2 * W2 * C2
    hidden = params["wf1"].shape[-1]
    num_classes = params["wf2"].shape[-1]
    assert H % 4 == 0 and W % 4 == 0, "two 2x2 max-pools need H, W divisible by 4"

    # One-time (tiny) weight layout transforms:
    #   * 3x3 conv weights flattened to im2col form (9*Cin, Cout)
    #   * fc1 rows permuted from PyTorch's NCHW-flatten order to NHWC order so
    #     the kernel can flatten the conv output directly (no transpose pass).
    w1f = params["w1"].reshape(9 * Cin, C1)
    w2f = params["w2"].reshape(9 * C1, C2)
    wf1p = params["wf1"].reshape(C2, H2, W2, hidden).transpose(1, 2, 0, 3)
    wf1p = wf1p.reshape(flat, hidden)

    kernel = functools.partial(_fused_cnn_kernel,
                               N=N, H=H, W=W, Cin=Cin, C1=C1, C2=C2)
    vmem = lambda: pl.BlockSpec(memory_space=pltpu.MemorySpace.VMEM)

    # TODO(synk): on v7x (2 TensorCores) a size-2 "parallel" batch grid would
    # use the second core; kept grid-free here since v5e/v6e have one core and
    # the whole working set is a few hundred KB.
    return pl.pallas_call(
        kernel,
        out_shape=jax.ShapeDtypeStruct((N, num_classes), jnp.float32),
        in_specs=[vmem() for _ in range(9)],
        out_specs=vmem(),
        scratch_shapes=[
            pltpu.VMEM((N, H + 2, W + 2, Cin), jnp.float32),    # padded input
            pltpu.VMEM((N * H * W, 9 * Cin), jnp.float32),      # im2col conv1
            pltpu.VMEM((N, H1 + 2, W1 + 2, C1), jnp.float32),   # padded pool1
            pltpu.VMEM((N * H1 * W1, 9 * C1), jnp.float32),     # im2col conv2
            pltpu.VMEM((N, flat), jnp.float32),                 # flattened feats
        ],
    )(x_nhwc, w1f, params["b1"].reshape(1, C1),
      w2f, params["b2"].reshape(1, C2),
      wf1p, params["bf1"].reshape(1, hidden),
      params["wf2"], params["bf2"].reshape(1, num_classes))


# ----------------------------------------------------------------------------
# Model: parameters + forward
# ----------------------------------------------------------------------------
def init_params(key, input_channels, H, W, num_classes):
    ks = jax.random.split(key, 8)
    flat = (H // 4) * (W // 4) * 32          # == flattened_size in the PyTorch module
    return {
        "w1": jax.random.normal(ks[0], (3, 3, input_channels, 16), jnp.float32) * 0.1,
        "b1": jax.random.normal(ks[1], (16,), jnp.float32) * 0.1,
        "w2": jax.random.normal(ks[2], (3, 3, 16, 32), jnp.float32) * 0.1,
        "b2": jax.random.normal(ks[3], (32,), jnp.float32) * 0.1,
        "wf1": jax.random.normal(ks[4], (flat, 128), jnp.float32) * 0.05,
        "bf1": jax.random.normal(ks[5], (128,), jnp.float32) * 0.05,
        "wf2": jax.random.normal(ks[6], (128, num_classes), jnp.float32) * 0.05,
        "bf2": jax.random.normal(ks[7], (num_classes,), jnp.float32) * 0.05,
    }


@jax.jit
def forward(params, x_nchw):
    # NCHW -> NHWC once at the boundary (channels live on the 128-lane axis).
    x = jnp.transpose(x_nchw, (0, 2, 3, 1))
    return fused_forward(params, x)


# Pure-JAX reference (for a correctness sanity check).
def ref_forward(params, x_nchw):
    x = jnp.transpose(x_nchw, (0, 2, 3, 1))

    def block(x, w, b):
        y = lax.conv_general_dilated(
            x, w, window_strides=(1, 1), padding="SAME",
            dimension_numbers=("NHWC", "HWIO", "NHWC")) + b
        y = jnp.maximum(y, 0.0)
        return lax.reduce_window(y, -jnp.inf, lax.max,
                                 (1, 2, 2, 1), (1, 2, 2, 1), "VALID")

    y = block(x, params["w1"], params["b1"])
    y = block(y, params["w2"], params["b2"])
    y = jnp.transpose(y, (0, 3, 1, 2)).reshape(y.shape[0], -1)   # NCHW flatten
    h = jnp.maximum(y @ params["wf1"] + params["bf1"], 0.0)
    return h @ params["wf2"] + params["bf2"]


if __name__ == "__main__":
    # Small shapes consistent with the module's implied globals.
    batch, input_channels, resize_x, resize_y, num_classes = 2, 4, 16, 16, 10

    key = jax.random.PRNGKey(0)
    k_param, k_input = jax.random.split(key)
    params = init_params(k_param, input_channels, resize_x, resize_y, num_classes)
    x = jax.random.normal(k_input, (batch, input_channels, resize_x, resize_y),
                          jnp.float32)

    out = forward(params, x)
    out = jax.block_until_ready(out)
    assert out.shape == (batch, num_classes), out.shape

    ref = ref_forward(params, x)
    assert jnp.allclose(out, ref, atol=1e-2, rtol=1e-2), (
        float(jnp.max(jnp.abs(out - ref))))

    print("KERNEL_OK")
</pallas_src>

<mosaic_0001>
module attributes {stable_mosaic.version = 11 : i64} {
  func.func @_fused_cnn_kernel(%arg0: memref<2x16x16x4xf32, #tpu.memory_space<vmem>>, %arg1: memref<36x16xf32, #tpu.memory_space<vmem>>, %arg2: memref<1x16xf32, #tpu.memory_space<vmem>>, %arg3: memref<144x32xf32, #tpu.memory_space<vmem>>, %arg4: memref<1x32xf32, #tpu.memory_space<vmem>>, %arg5: memref<512x128xf32, #tpu.memory_space<vmem>>, %arg6: memref<1x128xf32, #tpu.memory_space<vmem>>, %arg7: memref<128x10xf32, #tpu.memory_space<vmem>>, %arg8: memref<1x10xf32, #tpu.memory_space<vmem>>, %arg9: memref<2x10xf32, #tpu.memory_space<vmem>>, %arg10: memref<2x18x18x4xf32, #tpu.memory_space<vmem>>, %arg11: memref<512x36xf32, #tpu.memory_space<vmem>>, %arg12: memref<2x10x10x16xf32, #tpu.memory_space<vmem>>, %arg13: memref<128x144xf32, #tpu.memory_space<vmem>>, %arg14: memref<2x512xf32, #tpu.memory_space<vmem>>) attributes {dimension_semantics = [], scalar_prefetch = 0 : i64, scratch_operands = 5 : i64, tpu.core_type = #tpu.core_type<tc>} {
    %cst = arith.constant 0.000000e+00 : f32
    %0 = vector.broadcast %cst : f32 to vector<2x18x18x4xf32>
    %c0 = arith.constant 0 : index
    %c0_0 = arith.constant 0 : index
    %c0_1 = arith.constant 0 : index
    %c0_2 = arith.constant 0 : index
    %1 = vector.load %arg10[%c0, %c0_0, %c0_1, %c0_2] : memref<2x18x18x4xf32, #tpu.memory_space<vmem>>, vector<2x18x18x4xf32>
    tpu.vector_store %arg10[%c0, %c0_0, %c0_1, %c0_2], %0 {strides = array<i32>} : memref<2x18x18x4xf32, #tpu.memory_space<vmem>>, vector<2x18x18x4xf32>,
    %cst_3 = arith.constant 0.000000e+00 : f32
    %2 = vector.broadcast %cst_3 : f32 to vector<2x10x10x16xf32>
    %c0_4 = arith.constant 0 : index
    %c0_5 = arith.constant 0 : index
    %c0_6 = arith.constant 0 : index
    %c0_7 = arith.constant 0 : index
    %3 = vector.load %arg12[%c0_4, %c0_5, %c0_6, %c0_7] : memref<2x10x10x16xf32, #tpu.memory_space<vmem>>, vector<2x10x10x16xf32>
    tpu.vector_store %arg12[%c0_4, %c0_5, %c0_6, %c0_7], %2 {strides = array<i32>} : memref<2x10x10x16xf32, #tpu.memory_space<vmem>>, vector<2x10x10x16xf32>,
    %c0_8 = arith.constant 0 : index
    %c0_9 = arith.constant 0 : index
    %c0_10 = arith.constant 0 : index
    %c0_11 = arith.constant 0 : index
    %4 = vector.load %arg0[%c0_8, %c0_9, %c0_10, %c0_11] : memref<2x16x16x4xf32, #tpu.memory_space<vmem>>, vector<1x16x16x4xf32>
    %5 = vector.shape_cast %4 : vector<1x16x16x4xf32> to vector<16x16x4xf32>
    %c0_12 = arith.constant 0 : index
    %c1 = arith.constant 1 : index
    %c1_13 = arith.constant 1 : index
    %c0_14 = arith.constant 0 : index
    %6 = vector.load %arg10[%c0_12, %c1, %c1_13, %c0_14] : memref<2x18x18x4xf32, #tpu.memory_space<vmem>>, vector<1x16x16x4xf32>
    %7 = vector.shape_cast %6 : vector<1x16x16x4xf32> to vector<16x16x4xf32>
    %8 = vector.shape_cast %5 : vector<16x16x4xf32> to vector<1x16x16x4xf32>
    tpu.vector_store %arg10[%c0_12, %c1, %c1_13, %c0_14], %8 {strides = array<i32>} : memref<2x18x18x4xf32, #tpu.memory_space<vmem>>, vector<1x16x16x4xf32>,
    %c1_15 = arith.constant 1 : index
    %c0_16 = arith.constant 0 : index
    %c0_17 = arith.constant 0 : index
    %c0_18 = arith.constant 0 : index
    %9 = vector.load %arg0[%c1_15, %c0_16, %c0_17, %c0_18] : memref<2x16x16x4xf32, #tpu.memory_space<vmem>>, vector<1x16x16x4xf32>
    %10 = vector.shape_cast %9 : vector<1x16x16x4xf32> to vector<16x16x4xf32>
    %c1_19 = arith.constant 1 : index
    %c1_20 = arith.constant 1 : index
    %c1_21 = arith.constant 1 : index
    %c0_22 = arith.constant 0 : index
    %11 = vector.load %arg10[%c1_19, %c1_20, %c1_21, %c0_22] : memref<2x18x18x4xf32, #tpu.memory_space<vmem>>, vector<1x16x16x4xf32>
    %12 = vector.shape_cast %11 : vector<1x16x16x4xf32> to vector<16x16x4xf32>
    %13 = vector.shape_cast %10 : vector<16x16x4xf32> to vector<1x16x16x4xf32>
    tpu.vector_store %arg10[%c1_19, %c1_20, %c1_21, %c0_22], %13 {strides = array<i32>} : memref<2x18x18x4xf32, #tpu.memory_space<vmem>>, vector<1x16x16x4xf32>,
    %c0_23 = arith.constant 0 : index
    %c0_24 = arith.constant 0 : index
    %c0_25 = arith.constant 0 : index
    %c0_26 = arith.constant 0 : index
    %14 = vector.load %arg10[%c0_23, %c0_24, %c0_25, %c0_26] : memref<2x18x18x4xf32, #tpu.memory_space<vmem>>, vector<1x18x18x4xf32>
    %15 = vector.shape_cast %14 : vector<1x18x18x4xf32> to vector<18x18x4xf32>
    %16 = vector.extract_strided_slice %15 {offsets = [0, 0, 0], sizes = [16, 16, 4], strides = [1, 1, 1]} : vector<18x18x4xf32> to vector<16x16x4xf32>
    %17 = vector.shape_cast %16 : vector<16x16x4xf32> to vector<256x4xf32>
    %c0_27 = arith.constant 0 : index
    %c0_28 = arith.constant 0 : index
    %18 = vector.load %arg11[%c0_27, %c0_28] : memref<512x36xf32, #tpu.memory_space<vmem>>, vector<256x4xf32>
    tpu.vector_store %arg11[%c0_27, %c0_28], %17 {strides = array<i32>} : memref<512x36xf32, #tpu.memory_space<vmem>>, vector<256x4xf32>,
    %19 = vector.extract_strided_slice %15 {offsets = [0, 1, 0], sizes = [16, 16, 4], strides = [1, 1, 1]} : vector<18x18x4xf32> to vector<16x16x4xf32>
    %20 = vector.shape_cast %19 : vector<16x16x4xf32> to vector<256x4xf32>
    %c0_29 = arith.constant 0 : index
    %c4 = arith.constant 4 : index
    %21 = vector.load %arg11[%c0_29, %c4] : memref<512x36xf32, #tpu.memory_space<vmem>>, vector<256x4xf32>
    tpu.vector_store %arg11[%c0_29, %c4], %20 {strides = array<i32>} : memref<512x36xf32, #tpu.memory_space<vmem>>, vector<256x4xf32>,
    %22 = vector.extract_strided_slice %15 {offsets = [0, 2, 0], sizes = [16, 16, 4], strides = [1, 1, 1]} : vector<18x18x4xf32> to vector<16x16x4xf32>
    %23 = vector.shape_cast %22 : vector<16x16x4xf32> to vector<256x4xf32>
    %c0_30 = arith.constant 0 : index
    %c8 = arith.constant 8 : index
    %24 = vector.load %arg11[%c0_30, %c8] : memref<512x36xf32, #tpu.memory_space<vmem>>, vector<256x4xf32>
    tpu.vector_store %arg11[%c0_30, %c8], %23 {strides = array<i32>} : memref<512x36xf32, #tpu.memory_space<vmem>>, vector<256x4xf32>,
    %25 = vector.extract_strided_slice %15 {offsets = [1, 0, 0], sizes = [16, 16, 4], strides = [1, 1, 1]} : vector<18x18x4xf32> to vector<16x16x4xf32>
    %26 = vector.shape_cast %25 : vector<16x16x4xf32> to vector<256x4xf32>
    %c0_31 = arith.constant 0 : index
    %c12 = arith.constant 12 : index
    %27 = vector.load %arg11[%c0_31, %c12] : memref<512x36xf32, #tpu.memory_space<vmem>>, vector<256x4xf32>
    tpu.vector_store %arg11[%c0_31, %c12], %26 {strides = array<i32>} : memref<512x36xf32, #tpu.memory_space<vmem>>, vector<256x4xf32>,
    %28 = vector.extract_strided_slice %15 {offsets = [1, 1, 0], sizes = [16, 16, 4], strides = [1, 1, 1]} : vector<18x18x4xf32> to vector<16x16x4xf32>
    %29 = vector.shape_cast %28 : vector<16x16x4xf32> to vector<256x4xf32>
    %c0_32 = arith.constant 0 : index
    %c16 = arith.constant 16 : index
    %30 = vector.load %arg11[%c0_32, %c16] : memref<512x36xf32, #tpu.memory_space<vmem>>, vector<256x4xf32>
    tpu.vector_store %arg11[%c0_32, %c16], %29 {strides = array<i32>} : memref<512x36xf32, #tpu.memory_space<vmem>>, vector<256x4xf32>,
    %31 = vector.extract_strided_slice %15 {offsets = [1, 2, 0], sizes = [16, 16, 4], strides = [1, 1, 1]} : vector<18x18x4xf32> to vector<16x16x4xf32>
    %32 = vector.shape_cast %31 : vector<16x16x4xf32> to vector<256x4xf32>
    %c0_33 = arith.constant 0 : index
    %c20 = arith.constant 20 : index
    %33 = vector.load %arg11[%c0_33, %c20] : memref<512x36xf32, #tpu.memory_space<vmem>>, vector<256x4xf32>
    tpu.vector_store %arg11[%c0_33, %c20], %32 {strides = array<i32>} : memref<512x36xf32, #tpu.memory_space<vmem>>, vector<256x4xf32>,
    %34 = vector.extract_strided_slice %15 {offsets = [2, 0, 0], sizes = [16, 16, 4], strides = [1, 1, 1]} : vector<18x18x4xf32> to vector<16x16x4xf32>
    %35 = vector.shape_cast %34 : vector<16x16x4xf32> to vector<256x4xf32>
    %c0_34 = arith.constant 0 : index
    %c24 = arith.constant 24 : index
    %36 = vector.load %arg11[%c0_34, %c24] : memref<512x36xf32, #tpu.memory_space<vmem>>, vector<256x4xf32>
    tpu.vector_store %arg11[%c0_34, %c24], %35 {strides = array<i32>} : memref<512x36xf32, #tpu.memory_space<vmem>>, vector<256x4xf32>,
    %37 = vector.extract_strided_slice %15 {offsets = [2, 1, 0], sizes = [16, 16, 4], strides = [1, 1, 1]} : vector<18x18x4xf32> to vector<16x16x4xf32>
    %38 = vector.shape_cast %37 : vector<16x16x4xf32> to vector<256x4xf32>
    %c0_35 = arith.constant 0 : index
    %c28 = arith.constant 28 : index
    %39 = vector.load %arg11[%c0_35, %c28] : memref<512x36xf32, #tpu.memory_space<vmem>>, vector<256x4xf32>
    tpu.vector_store %arg11[%c0_35, %c28], %38 {strides = array<i32>} : memref<512x36xf32, #tpu.memory_space<vmem>>, vector<256x4xf32>,
    %40 = vector.extract_strided_slice %15 {offsets = [2, 2, 0], sizes = [16, 16, 4], strides = [1, 1, 1]} : vector<18x18x4xf32> to vector<16x16x4xf32>
    %41 = vector.shape_cast %40 : vector<16x16x4xf32> to vector<256x4xf32>
    %c0_36 = arith.constant 0 : index
    %c32 = arith.constant 32 : index
    %42 = vector.load %arg11[%c0_36, %c32] : memref<512x36xf32, #tpu.memory_space<vmem>>, vector<256x4xf32>
    tpu.vector_store %arg11[%c0_36, %c32], %41 {strides = array<i32>} : memref<512x36xf32, #tpu.memory_space<vmem>>, vector<256x4xf32>,
    %c1_37 = arith.constant 1 : index
    %c0_38 = arith.constant 0 : index
    %c0_39 = arith.constant 0 : index
    %c0_40 = arith.constant 0 : index
    %43 = vector.load %arg10[%c1_37, %c0_38, %c0_39, %c0_40] : memref<2x18x18x4xf32, #tpu.memory_space<vmem>>, vector<1x18x18x4xf32>
    %44 = vector.shape_cast %43 : vector<1x18x18x4xf32> to vector<18x18x4xf32>
    %45 = vector.extract_strided_slice %44 {offsets = [0, 0, 0], sizes = [16, 16, 4], strides = [1, 1, 1]} : vector<18x18x4xf32> to vector<16x16x4xf32>
    %46 = vector.shape_cast %45 : vector<16x16x4xf32> to vector<256x4xf32>
    %c256 = arith.constant 256 : index
    %c0_41 = arith.constant 0 : index
    %47 = vector.load %arg11[%c256, %c0_41] : memref<512x36xf32, #tpu.memory_space<vmem>>, vector<256x4xf32>
    tpu.vector_store %arg11[%c256, %c0_41], %46 {strides = array<i32>} : memref<512x36xf32, #tpu.memory_space<vmem>>, vector<256x4xf32>,
    %48 = vector.extract_strided_slice %44 {offsets = [0, 1, 0], sizes = [16, 16, 4], strides = [1, 1, 1]} : vector<18x18x4xf32> to vector<16x16x4xf32>
    %49 = vector.shape_cast %48 : vector<16x16x4xf32> to vector<256x4xf32>
    %c256_42 = arith.constant 256 : index
    %c4_43 = arith.constant 4 : index
    %50 = vector.load %arg11[%c256_42, %c4_43] : memref<512x36xf32, #tpu.memory_space<vmem>>, vector<256x4xf32>
    tpu.vector_store %arg11[%c256_42, %c4_43], %49 {strides = array<i32>} : memref<512x36xf32, #tpu.memory_space<vmem>>, vector<256x4xf32>,
    %51 = vector.extract_strided_slice %44 {offsets = [0, 2, 0], sizes = [16, 16, 4], strides = [1, 1, 1]} : vector<18x18x4xf32> to vector<16x16x4xf32>
    %52 = vector.shape_cast %51 : vector<16x16x4xf32> to vector<256x4xf32>
    %c256_44 = arith.constant 256 : index
    %c8_45 = arith.constant 8 : index
    %53 = vector.load %arg11[%c256_44, %c8_45] : memref<512x36xf32, #tpu.memory_space<vmem>>, vector<256x4xf32>
    tpu.vector_store %arg11[%c256_44, %c8_45], %52 {strides = array<i32>} : memref<512x36xf32, #tpu.memory_space<vmem>>, vector<256x4xf32>,
    %54 = vector.extract_strided_slice %44 {offsets = [1, 0, 0], sizes = [16, 16, 4], strides = [1, 1, 1]} : vector<18x18x4xf32> to vector<16x16x4xf32>
    %55 = vector.shape_cast %54 : vector<16x16x4xf32> to vector<256x4xf32>
    %c256_46 = arith.constant 256 : index
    %c12_47 = arith.constant 12 : index
    %56 = vector.load %arg11[%c256_46, %c12_47] : memref<512x36xf32, #tpu.memory_space<vmem>>, vector<256x4xf32>
    tpu.vector_store %arg11[%c256_46, %c12_47], %55 {strides = array<i32>} : memref<512x36xf32, #tpu.memory_space<vmem>>, vector<256x4xf32>,
    %57 = vector.extract_strided_slice %44 {offsets = [1, 1, 0], sizes = [16, 16, 4], strides = [1, 1, 1]} : vector<18x18x4xf32> to vector<16x16x4xf32>
    %58 = vector.shape_cast %57 : vector<16x16x4xf32> to vector<256x4xf32>
    %c256_48 = arith.constant 256 : index
    %c16_49 = arith.constant 16 : index
    %59 = vector.load %arg11[%c256_48, %c16_49] : memref<512x36xf32, #tpu.memory_space<vmem>>, vector<256x4xf32>
    tpu.vector_store %arg11[%c256_48, %c16_49], %58 {strides = array<i32>} : memref<512x36xf32, #tpu.memory_space<vmem>>, vector<256x4xf32>,
    %60 = vector.extract_strided_slice %44 {offsets = [1, 2, 0], sizes = [16, 16, 4], strides = [1, 1, 1]} : vector<18x18x4xf32> to vector<16x16x4xf32>
    %61 = vector.shape_cast %60 : vector<16x16x4xf32> to vector<256x4xf32>
    %c256_50 = arith.constant 256 : index
    %c20_51 = arith.constant 20 : index
    %62 = vector.load %arg11[%c256_50, %c20_51] : memref<512x36xf32, #tpu.memory_space<vmem>>, vector<256x4xf32>
    tpu.vector_store %arg11[%c256_50, %c20_51], %61 {strides = array<i32>} : memref<512x36xf32, #tpu.memory_space<vmem>>, vector<256x4xf32>,
    %63 = vector.extract_strided_slice %44 {offsets = [2, 0, 0], sizes = [16, 16, 4], strides = [1, 1, 1]} : vector<18x18x4xf32> to vector<16x16x4xf32>
    %64 = vector.shape_cast %63 : vector<16x16x4xf32> to vector<256x4xf32>
    %c256_52 = arith.constant 256 : index
    %c24_53 = arith.constant 24 : index
    %65 = vector.load %arg11[%c256_52, %c24_53] : memref<512x36xf32, #tpu.memory_space<vmem>>, vector<256x4xf32>
    tpu.vector_store %arg11[%c256_52, %c24_53], %64 {strides = array<i32>} : memref<512x36xf32, #tpu.memory_space<vmem>>, vector<256x4xf32>,
    %66 = vector.extract_strided_slice %44 {offsets = [2, 1, 0], sizes = [16, 16, 4], strides = [1, 1, 1]} : vector<18x18x4xf32> to vector<16x16x4xf32>
    %67 = vector.shape_cast %66 : vector<16x16x4xf32> to vector<256x4xf32>
    %c256_54 = arith.constant 256 : index
    %c28_55 = arith.constant 28 : index
    %68 = vector.load %arg11[%c256_54, %c28_55] : memref<512x36xf32, #tpu.memory_space<vmem>>, vector<256x4xf32>
    tpu.vector_store %arg11[%c256_54, %c28_55], %67 {strides = array<i32>} : memref<512x36xf32, #tpu.memory_space<vmem>>, vector<256x4xf32>,
    %69 = vector.extract_strided_slice %44 {offsets = [2, 2, 0], sizes = [16, 16, 4], strides = [1, 1, 1]} : vector<18x18x4xf32> to vector<16x16x4xf32>
    %70 = vector.shape_cast %69 : vector<16x16x4xf32> to vector<256x4xf32>
    %c256_56 = arith.constant 256 : index
    %c32_57 = arith.constant 32 : index
    %71 = vector.load %arg11[%c256_56, %c32_57] : memref<512x36xf32, #tpu.memory_space<vmem>>, vector<256x4xf32>
    tpu.vector_store %arg11[%c256_56, %c32_57], %70 {strides = array<i32>} : memref<512x36xf32, #tpu.memory_space<vmem>>, vector<256x4xf32>,
    %c0_58 = arith.constant 0 : index
    %c0_59 = arith.constant 0 : index
    %72 = vector.load %arg11[%c0_58, %c0_59] : memref<512x36xf32, #tpu.memory_space<vmem>>, vector<512x36xf32>
    %c0_60 = arith.constant 0 : index
    %c0_61 = arith.constant 0 : index
    %73 = vector.load %arg1[%c0_60, %c0_61] : memref<36x16xf32, #tpu.memory_space<vmem>>, vector<36x16xf32>
    %cst_62 = arith.constant dense<0.000000e+00> : vector<512x16xf32>
    %74 = tpu.matmul %72, %73, %cst_62 {dimension_numbers = #tpu.dot_dimension_numbers<[1], [0], [0], [1], [0, 0, 1, 1], [], []>} : vector<512x36xf32>, vector<36x16xf32>, vector<512x16xf32> -> vector<512x16xf32>
    %c0_63 = arith.constant 0 : index
    %c0_64 = arith.constant 0 : index
    %75 = vector.load %arg2[%c0_63, %c0_64] : memref<1x16xf32, #tpu.memory_space<vmem>>, vector<1x16xf32>
    %76 = vector.broadcast %75 : vector<1x16xf32> to vector<512x16xf32>
    %77 = arith.addf %74, %76 : vector<512x16xf32>
    %cst_65 = arith.constant 0.000000e+00 : f32
    %78 = vector.broadcast %cst_65 : f32 to vector<512x16xf32>
    %79 = arith.maximumf %77, %78 : vector<512x16xf32>
    %80 = vector.shape_cast %79 : vector<512x16xf32> to vector<32x8x2x16xf32>
    %cst_66 = arith.constant dense<0xFF800000> : vector<32x8x16xf32>
    %81 = vector.multi_reduction <maximumf>, %80, %cst_66 [2] : vector<32x8x2x16xf32> to vector<32x8x16xf32>
    %82 = vector.shape_cast %81 : vector<32x8x16xf32> to vector<16x2x8x16xf32>
    %cst_67 = arith.constant dense<0xFF800000> : vector<16x8x16xf32>
    %83 = vector.multi_reduction <maximumf>, %82, %cst_67 [1] : vector<16x2x8x16xf32> to vector<16x8x16xf32>
    %84 = vector.extract_strided_slice %83 {offsets = [0, 0, 0], sizes = [8, 8, 16], strides = [1, 1, 1]} : vector<16x8x16xf32> to vector<8x8x16xf32>
    %c0_68 = arith.constant 0 : index
    %c1_69 = arith.constant 1 : index
    %c1_70 = arith.constant 1 : index
    %c0_71 = arith.constant 0 : index
    %85 = vector.load %arg12[%c0_68, %c1_69, %c1_70, %c0_71] : memref<2x10x10x16xf32, #tpu.memory_space<vmem>>, vector<1x8x8x16xf32>
    %86 = vector.shape_cast %85 : vector<1x8x8x16xf32> to vector<8x8x16xf32>
    %87 = vector.shape_cast %84 : vector<8x8x16xf32> to vector<1x8x8x16xf32>
    tpu.vector_store %arg12[%c0_68, %c1_69, %c1_70, %c0_71], %87 {strides = array<i32>} : memref<2x10x10x16xf32, #tpu.memory_space<vmem>>, vector<1x8x8x16xf32>,
    %88 = vector.extract_strided_slice %83 {offsets = [8, 0, 0], sizes = [8, 8, 16], strides = [1, 1, 1]} : vector<16x8x16xf32> to vector<8x8x16xf32>
    %c1_72 = arith.constant 1 : index
    %c1_73 = arith.constant 1 : index
    %c1_74 = arith.constant 1 : index
    %c0_75 = arith.constant 0 : index
    %89 = vector.load %arg12[%c1_72, %c1_73, %c1_74, %c0_75] : memref<2x10x10x16xf32, #tpu.memory_space<vmem>>, vector<1x8x8x16xf32>
    %90 = vector.shape_cast %89 : vector<1x8x8x16xf32> to vector<8x8x16xf32>
    %91 = vector.shape_cast %88 : vector<8x8x16xf32> to vector<1x8x8x16xf32>
    tpu.vector_store %arg12[%c1_72, %c1_73, %c1_74, %c0_75], %91 {strides = array<i32>} : memref<2x10x10x16xf32, #tpu.memory_space<vmem>>, vector<1x8x8x16xf32>,
    %c0_76 = arith.constant 0 : index
    %c0_77 = arith.constant 0 : index
    %c0_78 = arith.constant 0 : index
    %c0_79 = arith.constant 0 : index
    %92 = vector.load %arg12[%c0_76, %c0_77, %c0_78, %c0_79] : memref<2x10x10x16xf32, #tpu.memory_space<vmem>>, vector<1x10x10x16xf32>
    %93 = vector.shape_cast %92 : vector<1x10x10x16xf32> to vector<10x10x16xf32>
    %94 = vector.extract_strided_slice %93 {offsets = [0, 0, 0], sizes = [8, 8, 16], strides = [1, 1, 1]} : vector<10x10x16xf32> to vector<8x8x16xf32>
    %95 = vector.shape_cast %94 : vector<8x8x16xf32> to vector<64x16xf32>
    %c0_80 = arith.constant 0 : index
    %c0_81 = arith.constant 0 : index
    %96 = vector.load %arg13[%c0_80, %c0_81] : memref<128x144xf32, #tpu.memory_space<vmem>>, vector<64x16xf32>
    tpu.vector_store %arg13[%c0_80, %c0_81], %95 {strides = array<i32>} : memref<128x144xf32, #tpu.memory_space<vmem>>, vector<64x16xf32>,
    %97 = vector.extract_strided_slice %93 {offsets = [0, 1, 0], sizes = [8, 8, 16], strides = [1, 1, 1]} : vector<10x10x16xf32> to vector<8x8x16xf32>
    %98 = vector.shape_cast %97 : vector<8x8x16xf32> to vector<64x16xf32>
    %c0_82 = arith.constant 0 : index
    %c16_83 = arith.constant 16 : index
    %99 = vector.load %arg13[%c0_82, %c16_83] : memref<128x144xf32, #tpu.memory_space<vmem>>, vector<64x16xf32>
    tpu.vector_store %arg13[%c0_82, %c16_83], %98 {strides = array<i32>} : memref<128x144xf32, #tpu.memory_space<vmem>>, vector<64x16xf32>,
    %100 = vector.extract_strided_slice %93 {offsets = [0, 2, 0], sizes = [8, 8, 16], strides = [1, 1, 1]} : vector<10x10x16xf32> to vector<8x8x16xf32>
    %101 = vector.shape_cast %100 : vector<8x8x16xf32> to vector<64x16xf32>
    %c0_84 = arith.constant 0 : index
    %c32_85 = arith.constant 32 : index
    %102 = vector.load %arg13[%c0_84, %c32_85] : memref<128x144xf32, #tpu.memory_space<vmem>>, vector<64x16xf32>
    tpu.vector_store %arg13[%c0_84, %c32_85], %101 {strides = array<i32>} : memref<128x144xf32, #tpu.memory_space<vmem>>, vector<64x16xf32>,
    %103 = vector.extract_strided_slice %93 {offsets = [1, 0, 0], sizes = [8, 8, 16], strides = [1, 1, 1]} : vector<10x10x16xf32> to vector<8x8x16xf32>
    %104 = vector.shape_cast %103 : vector<8x8x16xf32> to vector<64x16xf32>
    %c0_86 = arith.constant 0 : index
    %c48 = arith.constant 48 : index
    %105 = vector.load %arg13[%c0_86, %c48] : memref<128x144xf32, #tpu.memory_space<vmem>>, vector<64x16xf32>
    tpu.vector_store %arg13[%c0_86, %c48], %104 {strides = array<i32>} : memref<128x144xf32, #tpu.memory_space<vmem>>, vector<64x16xf32>,
    %106 = vector.extract_strided_slice %93 {offsets = [1, 1, 0], sizes = [8, 8, 16], strides = [1, 1, 1]} : vector<10x10x16xf32> to vector<8x8x16xf32>
    %107 = vector.shape_cast %106 : vector<8x8x16xf32> to vector<64x16xf32>
    %c0_87 = arith.constant 0 : index
    %c64 = arith.constant 64 : index
    %108 = vector.load %arg13[%c0_87, %c64] : memref<128x144xf32, #tpu.memory_space<vmem>>, vector<64x16xf32>
    tpu.vector_store %arg13[%c0_87, %c64], %107 {strides = array<i32>} : memref<128x144xf32, #tpu.memory_space<vmem>>, vector<64x16xf32>,
    %109 = vector.extract_strided_slice %93 {offsets = [1, 2, 0], sizes = [8, 8, 16], strides = [1, 1, 1]} : vector<10x10x16xf32> to vector<8x8x16xf32>
    %110 = vector.shape_cast %109 : vector<8x8x16xf32> to vector<64x16xf32>
    %c0_88 = arith.constant 0 : index
    %c80 = arith.constant 80 : index
    %111 = vector.load %arg13[%c0_88, %c80] : memref<128x144xf32, #tpu.memory_space<vmem>>, vector<64x16xf32>
    tpu.vector_store %arg13[%c0_88, %c80], %110 {strides = array<i32>} : memref<128x144xf32, #tpu.memory_space<vmem>>, vector<64x16xf32>,
    %112 = vector.extract_strided_slice %93 {offsets = [2, 0, 0], sizes = [8, 8, 16], strides = [1, 1, 1]} : vector<10x10x16xf32> to vector<8x8x16xf32>
    %113 = vector.shape_cast %112 : vector<8x8x16xf32> to vector<64x16xf32>
    %c0_89 = arith.constant 0 : index
    %c96 = arith.constant 96 : index
    %114 = vector.load %arg13[%c0_89, %c96] : memref<128x144xf32, #tpu.memory_space<vmem>>, vector<64x16xf32>
    tpu.vector_store %arg13[%c0_89, %c96], %113 {strides = array<i32>} : memref<128x144xf32, #tpu.memory_space<vmem>>, vector<64x16xf32>,
    %115 = vector.extract_strided_slice %93 {offsets = [2, 1, 0], sizes = [8, 8, 16], strides = [1, 1, 1]} : vector<10x10x16xf32> to vector<8x8x16xf32>
    %116 = vector.shape_cast %115 : vector<8x8x16xf32> to vector<64x16xf32>
    %c0_90 = arith.constant 0 : index
    %c112 = arith.constant 112 : index
    %117 = vector.load %arg13[%c0_90, %c112] : memref<128x144xf32, #tpu.memory_space<vmem>>, vector<64x16xf32>
    tpu.vector_store %arg13[%c0_90, %c112], %116 {strides = array<i32>} : memref<128x144xf32, #tpu.memory_space<vmem>>, vector<64x16xf32>,
    %118 = vector.extract_strided_slice %93 {offsets = [2, 2, 0], sizes = [8, 8, 16], strides = [1, 1, 1]} : vector<10x10x16xf32> to vector<8x8x16xf32>
    %119 = vector.shape_cast %118 : vector<8x8x16xf32> to vector<64x16xf32>
    %c0_91 = arith.constant 0 : index
    %c128 = arith.constant 128 : index
    %120 = vector.load %arg13[%c0_91, %c128] : memref<128x144xf32, #tpu.memory_space<vmem>>, vector<64x16xf32>
    tpu.vector_store %arg13[%c0_91, %c128], %119 {strides = array<i32>} : memref<128x144xf32, #tpu.memory_space<vmem>>, vector<64x16xf32>,
    %c1_92 = arith.constant 1 : index
    %c0_93 = arith.constant 0 : index
    %c0_94 = arith.constant 0 : index
    %c0_95 = arith.constant 0 : index
    %121 = vector.load %arg12[%c1_92, %c0_93, %c0_94, %c0_95] : memref<2x10x10x16xf32, #tpu.memory_space<vmem>>, vector<1x10x10x16xf32>
    %122 = vector.shape_cast %121 : vector<1x10x10x16xf32> to vector<10x10x16xf32>
    %123 = vector.extract_strided_slice %122 {offsets = [0, 0, 0], sizes = [8, 8, 16], strides = [1, 1, 1]} : vector<10x10x16xf32> to vector<8x8x16xf32>
    %124 = vector.shape_cast %123 : vector<8x8x16xf32> to vector<64x16xf32>
    %c64_96 = arith.constant 64 : index
    %c0_97 = arith.constant 0 : index
    %125 = vector.load %arg13[%c64_96, %c0_97] : memref<128x144xf32, #tpu.memory_space<vmem>>, vector<64x16xf32>
    tpu.vector_store %arg13[%c64_96, %c0_97], %124 {strides = array<i32>} : memref<128x144xf32, #tpu.memory_space<vmem>>, vector<64x16xf32>,
    %126 = vector.extract_strided_slice %122 {offsets = [0, 1, 0], sizes = [8, 8, 16], strides = [1, 1, 1]} : vector<10x10x16xf32> to vector<8x8x16xf32>
    %127 = vector.shape_cast %126 : vector<8x8x16xf32> to vector<64x16xf32>
    %c64_98 = arith.constant 64 : index
    %c16_99 = arith.constant 16 : index
    %128 = vector.load %arg13[%c64_98, %c16_99] : memref<128x144xf32, #tpu.memory_space<vmem>>, vector<64x16xf32>
    tpu.vector_store %arg13[%c64_98, %c16_99], %127 {strides = array<i32>} : memref<128x144xf32, #tpu.memory_space<vmem>>, vector<64x16xf32>,
    %129 = vector.extract_strided_slice %122 {offsets = [0, 2, 0], sizes = [8, 8, 16], strides = [1, 1, 1]} : vector<10x10x16xf32> to vector<8x8x16xf32>
    %130 = vector.shape_cast %129 : vector<8x8x16xf32> to vector<64x16xf32>
    %c64_100 = arith.constant 64 : index
    %c32_101 = arith.constant 32 : index
    %131 = vector.load %arg13[%c64_100, %c32_101] : memref<128x144xf32, #tpu.memory_space<vmem>>, vector<64x16xf32>
    tpu.vector_store %arg13[%c64_100, %c32_101], %130 {strides = array<i32>} : memref<128x144xf32, #tpu.memory_space<vmem>>, vector<64x16xf32>,
    %132 = vector.extract_strided_slice %122 {offsets = [1, 0, 0], sizes = [8, 8, 16], strides = [1, 1, 1]} : vector<10x10x16xf32> to vector<8x8x16xf32>
    %133 = vector.shape_cast %132 : vector<8x8x16xf32> to vector<64x16xf32>
    %c64_102 = arith.constant 64 : index
    %c48_103 = arith.constant 48 : index
    %134 = vector.load %arg13[%c64_102, %c48_103] : memref<128x144xf32, #tpu.memory_space<vmem>>, vector<64x16xf32>
    tpu.vector_store %arg13[%c64_102, %c48_103], %133 {strides = array<i32>} : memref<128x144xf32, #tpu.memory_space<vmem>>, vector<64x16xf32>,
    %135 = vector.extract_strided_slice %122 {offsets = [1, 1, 0], sizes = [8, 8, 16], strides = [1, 1, 1]} : vector<10x10x16xf32> to vector<8x8x16xf32>
    %136 = vector.shape_cast %135 : vector<8x8x16xf32> to vector<64x16xf32>
    %c64_104 = arith.constant 64 : index
    %c64_105 = arith.constant 64 : index
    %137 = vector.load %arg13[%c64_104, %c64_105] : memref<128x144xf32, #tpu.memory_space<vmem>>, vector<64x16xf32>
    tpu.vector_store %arg13[%c64_104, %c64_105], %136 {strides = array<i32>} : memref<128x144xf32, #tpu.memory_space<vmem>>, vector<64x16xf32>,
    %138 = vector.extract_strided_slice %122 {offsets = [1, 2, 0], sizes = [8, 8, 16], strides = [1, 1, 1]} : vector<10x10x16xf32> to vector<8x8x16xf32>
    %139 = vector.shape_cast %138 : vector<8x8x16xf32> to vector<64x16xf32>
    %c64_106 = arith.constant 64 : index
    %c80_107 = arith.constant 80 : index
    %140 = vector.load %arg13[%c64_106, %c80_107] : memref<128x144xf32, #tpu.memory_space<vmem>>, vector<64x16xf32>
    tpu.vector_store %arg13[%c64_106, %c80_107], %139 {strides = array<i32>} : memref<128x144xf32, #tpu.memory_space<vmem>>, vector<64x16xf32>,
    %141 = vector.extract_strided_slice %122 {offsets = [2, 0, 0], sizes = [8, 8, 16], strides = [1, 1, 1]} : vector<10x10x16xf32> to vector<8x8x16xf32>
    %142 = vector.shape_cast %141 : vector<8x8x16xf32> to vector<64x16xf32>
    %c64_108 = arith.constant 64 : index
    %c96_109 = arith.constant 96 : index
    %143 = vector.load %arg13[%c64_108, %c96_109] : memref<128x144xf32, #tpu.memory_space<vmem>>, vector<64x16xf32>
    tpu.vector_store %arg13[%c64_108, %c96_109], %142 {strides = array<i32>} : memref<128x144xf32, #tpu.memory_space<vmem>>, vector<64x16xf32>,
    %144 = vector.extract_strided_slice %122 {offsets = [2, 1, 0], sizes = [8, 8, 16], strides = [1, 1, 1]} : vector<10x10x16xf32> to vector<8x8x16xf32>
    %145 = vector.shape_cast %144 : vector<8x8x16xf32> to vector<64x16xf32>
    %c64_110 = arith.constant 64 : index
    %c112_111 = arith.constant 112 : index
    %146 = vector.load %arg13[%c64_110, %c112_111] : memref<128x144xf32, #tpu.memory_space<vmem>>, vector<64x16xf32>
    tpu.vector_store %arg13[%c64_110, %c112_111], %145 {strides = array<i32>} : memref<128x144xf32, #tpu.memory_space<vmem>>, vector<64x16xf32>,
    %147 = vector.extract_strided_slice %122 {offsets = [2, 2, 0], sizes = [8, 8, 16], strides = [1, 1, 1]} : vector<10x10x16xf32> to vector<8x8x16xf32>
    %148 = vector.shape_cast %147 : vector<8x8x16xf32> to vector<64x16xf32>
    %c64_112 = arith.constant 64 : index
    %c128_113 = arith.constant 128 : index
    %149 = vector.load %arg13[%c64_112, %c128_113] : memref<128x144xf32, #tpu.memory_space<vmem>>, vector<64x16xf32>
    tpu.vector_store %arg13[%c64_112, %c128_113], %148 {strides = array<i32>} : memref<128x144xf32, #tpu.memory_space<vmem>>, vector<64x16xf32>,
    %c0_114 = arith.constant 0 : index
    %c0_115 = arith.constant 0 : index
    %150 = vector.load %arg13[%c0_114, %c0_115] : memref<128x144xf32, #tpu.memory_space<vmem>>, vector<128x144xf32>
    %c0_116 = arith.constant 0 : index
    %c0_117 = arith.constant 0 : index
    %151 = vector.load %arg3[%c0_116, %c0_117] : memref<144x32xf32, #tpu.memory_space<vmem>>, vector<144x32xf32>
    %cst_118 = arith.constant dense<0.000000e+00> : vector<128x32xf32>
    %152 = tpu.matmul %150, %151, %cst_118 {dimension_numbers = #tpu.dot_dimension_numbers<[1], [0], [0], [1], [0, 0, 1, 1], [], []>} : vector<128x144xf32>, vector<144x32xf32>, vector<128x32xf32> -> vector<128x32xf32>
    %c0_119 = arith.constant 0 : index
    %c0_120 = arith.constant 0 : index
    %153 = vector.load %arg4[%c0_119, %c0_120] : memref<1x32xf32, #tpu.memory_space<vmem>>, vector<1x32xf32>
    %154 = vector.broadcast %153 : vector<1x32xf32> to vector<128x32xf32>
    %155 = arith.addf %152, %154 : vector<128x32xf32>
    %cst_121 = arith.constant 0.000000e+00 : f32
    %156 = vector.broadcast %cst_121 : f32 to vector<128x32xf32>
    %157 = arith.maximumf %155, %156 : vector<128x32xf32>
    %158 = vector.shape_cast %157 : vector<128x32xf32> to vector<16x4x2x32xf32>
    %cst_122 = arith.constant dense<0xFF800000> : vector<16x4x32xf32>
    %159 = vector.multi_reduction <maximumf>, %158, %cst_122 [2] : vector<16x4x2x32xf32> to vector<16x4x32xf32>
    %160 = vector.shape_cast %159 : vector<16x4x32xf32> to vector<8x2x4x32xf32>
    %cst_123 = arith.constant dense<0xFF800000> : vector<8x4x32xf32>
    %161 = vector.multi_reduction <maximumf>, %160, %cst_123 [1] : vector<8x2x4x32xf32> to vector<8x4x32xf32>
    %162 = vector.extract_strided_slice %161 {offsets = [0, 0, 0], sizes = [1, 1, 32], strides = [1, 1, 1]} : vector<8x4x32xf32> to vector<1x1x32xf32>
    %163 = vector.shape_cast %162 : vector<1x1x32xf32> to vector<1x32xf32>
    %c0_124 = arith.constant 0 : index
    %c0_125 = arith.constant 0 : index
    %164 = vector.load %arg14[%c0_124, %c0_125] : memref<2x512xf32, #tpu.memory_space<vmem>>, vector<1x32xf32>
    tpu.vector_store %arg14[%c0_124, %c0_125], %163 {strides = array<i32>} : memref<2x512xf32, #tpu.memory_space<vmem>>, vector<1x32xf32>,
    %165 = vector.extract_strided_slice %161 {offsets = [0, 1, 0], sizes = [1, 1, 32], strides = [1, 1, 1]} : vector<8x4x32xf32> to vector<1x1x32xf32>
    %166 = vector.shape_cast %165 : vector<1x1x32xf32> to vector<1x32xf32>
    %c0_126 = arith.constant 0 : index
    %c32_127 = arith.constant 32 : index
    %167 = vector.load %arg14[%c0_126, %c32_127] : memref<2x512xf32, #tpu.memory_space<vmem>>, vector<1x32xf32>
    tpu.vector_store %arg14[%c0_126, %c32_127], %166 {strides = array<i32>} : memref<2x512xf32, #tpu.memory_space<vmem>>, vector<1x32xf32>,
    %168 = vector.extract_strided_slice %161 {offsets = [0, 2, 0], sizes = [1, 1, 32], strides = [1, 1, 1]} : vector<8x4x32xf32> to vector<1x1x32xf32>
    %169 = vector.shape_cast %168 : vector<1x1x32xf32> to vector<1x32xf32>
    %c0_128 = arith.constant 0 : index
    %c64_129 = arith.constant 64 : index
    %170 = vector.load %arg14[%c0_128, %c64_129] : memref<2x512xf32, #tpu.memory_space<vmem>>, vector<1x32xf32>
    tpu.vector_store %arg14[%c0_128, %c64_129], %169 {strides = array<i32>} : memref<2x512xf32, #tpu.memory_space<vmem>>, vector<1x32xf32>,
    %171 = vector.extract_strided_slice %161 {offsets = [0, 3, 0], sizes = [1, 1, 32], strides = [1, 1, 1]} : vector<8x4x32xf32> to vector<1x1x32xf32>
    %172 = vector.shape_cast %171 : vector<1x1x32xf32> to vector<1x32xf32>
    %c0_130 = arith.constant 0 : index
    %c96_131 = arith.constant 96 : index
    %173 = vector.load %arg14[%c0_130, %c96_131] : memref<2x512xf32, #tpu.memory_space<vmem>>, vector<1x32xf32>
    tpu.vector_store %arg14[%c0_130, %c96_131], %172 {strides = array<i32>} : memref<2x512xf32, #tpu.memory_space<vmem>>, vector<1x32xf32>,
    %174 = vector.extract_strided_slice %161 {offsets = [1, 0, 0], sizes = [1, 1, 32], strides = [1, 1, 1]} : vector<8x4x32xf32> to vector<1x1x32xf32>
    %175 = vector.shape_cast %174 : vector<1x1x32xf32> to vector<1x32xf32>
    %c0_132 = arith.constant 0 : index
    %c128_133 = arith.constant 128 : index
    %176 = vector.load %arg14[%c0_132, %c128_133] : memref<2x512xf32, #tpu.memory_space<vmem>>, vector<1x32xf32>
    tpu.vector_store %arg14[%c0_132, %c128_133], %175 {strides = array<i32>} : memref<2x512xf32, #tpu.memory_space<vmem>>, vector<1x32xf32>,
    %177 = vector.extract_strided_slice %161 {offsets = [1, 1, 0], sizes = [1, 1, 32], strides = [1, 1, 1]} : vector<8x4x32xf32> to vector<1x1x32xf32>
    %178 = vector.shape_cast %177 : vector<1x1x32xf32> to vector<1x32xf32>
    %c0_134 = arith.constant 0 : index
    %c160 = arith.constant 160 : index
    %179 = vector.load %arg14[%c0_134, %c160] : memref<2x512xf32, #tpu.memory_space<vmem>>, vector<1x32xf32>
    tpu.vector_store %arg14[%c0_134, %c160], %178 {strides = array<i32>} : memref<2x512xf32, #tpu.memory_space<vmem>>, vector<1x32xf32>,
    %180 = vector.extract_strided_slice %161 {offsets = [1, 2, 0], sizes = [1, 1, 32], strides = [1, 1, 1]} : vector<8x4x32xf32> to vector<1x1x32xf32>
    %181 = vector.shape_cast %180 : vector<1x1x32xf32> to vector<1x32xf32>
    %c0_135 = arith.constant 0 : index
    %c192 = arith.constant 192 : index
    %182 = vector.load %arg14[%c0_135, %c192] : memref<2x512xf32, #tpu.memory_space<vmem>>, vector<1x32xf32>
    tpu.vector_store %arg14[%c0_135, %c192], %181 {strides = array<i32>} : memref<2x512xf32, #tpu.memory_space<vmem>>, vector<1x32xf32>,
    %183 = vector.extract_strided_slice %161 {offsets = [1, 3, 0], sizes = [1, 1, 32], strides = [1, 1, 1]} : vector<8x4x32xf32> to vector<1x1x32xf32>
    %184 = vector.shape_cast %183 : vector<1x1x32xf32> to vector<1x32xf32>
    %c0_136 = arith.constant 0 : index
    %c224 = arith.constant 224 : index
    %185 = vector.load %arg14[%c0_136, %c224] : memref<2x512xf32, #tpu.memory_space<vmem>>, vector<1x32xf32>
    tpu.vector_store %arg14[%c0_136, %c224], %184 {strides = array<i32>} : memref<2x512xf32, #tpu.memory_space<vmem>>, vector<1x32xf32>,
    %186 = vector.extract_strided_slice %161 {offsets = [2, 0, 0], sizes = [1, 1, 32], strides = [1, 1, 1]} : vector<8x4x32xf32> to vector<1x1x32xf32>
    %187 = vector.shape_cast %186 : vector<1x1x32xf32> to vector<1x32xf32>
    %c0_137 = arith.constant 0 : index
    %c256_138 = arith.constant 256 : index
    %188 = vector.load %arg14[%c0_137, %c256_138] : memref<2x512xf32, #tpu.memory_space<vmem>>, vector<1x32xf32>
    tpu.vector_store %arg14[%c0_137, %c256_138], %187 {strides = array<i32>} : memref<2x512xf32, #tpu.memory_space<vmem>>, vector<1x32xf32>,
    %189 = vector.extract_strided_slice %161 {offsets = [2, 1, 0], sizes = [1, 1, 32], strides = [1, 1, 1]} : vector<8x4x32xf32> to vector<1x1x32xf32>
    %190 = vector.shape_cast %189 : vector<1x1x32xf32> to vector<1x32xf32>
    %c0_139 = arith.constant 0 : index
    %c288 = arith.constant 288 : index
    %191 = vector.load %arg14[%c0_139, %c288] : memref<2x512xf32, #tpu.memory_space<vmem>>, vector<1x32xf32>
    tpu.vector_store %arg14[%c0_139, %c288], %190 {strides = array<i32>} : memref<2x512xf32, #tpu.memory_space<vmem>>, vector<1x32xf32>,
    %192 = vector.extract_strided_slice %161 {offsets = [2, 2, 0], sizes = [1, 1, 32], strides = [1, 1, 1]} : vector<8x4x32xf32> to vector<1x1x32xf32>
    %193 = vector.shape_cast %192 : vector<1x1x32xf32> to vector<1x32xf32>
    %c0_140 = arith.constant 0 : index
    %c320 = arith.constant 320 : index
    %194 = vector.load %arg14[%c0_140, %c320] : memref<2x512xf32, #tpu.memory_space<vmem>>, vector<1x32xf32>
    tpu.vector_store %arg14[%c0_140, %c320], %193 {strides = array<i32>} : memref<2x512xf32, #tpu.memory_space<vmem>>, vector<1x32xf32>,
    %195 = vector.extract_strided_slice %161 {offsets = [2, 3, 0], sizes = [1, 1, 32], strides = [1, 1, 1]} : vector<8x4x32xf32> to vector<1x1x32xf32>
    %196 = vector.shape_cast %195 : vector<1x1x32xf32> to vector<1x32xf32>
    %c0_141 = arith.constant 0 : index
    %c352 = arith.constant 352 : index
    %197 = vector.load %arg14[%c0_141, %c352] : memref<2x512xf32, #tpu.memory_space<vmem>>, vector<1x32xf32>
    tpu.vector_store %arg14[%c0_141, %c352], %196 {strides = array<i32>} : memref<2x512xf32, #tpu.memory_space<vmem>>, vector<1x32xf32>,
    %198 = vector.extract_strided_slice %161 {offsets = [3, 0, 0], sizes = [1, 1, 32], strides = [1, 1, 1]} : vector<8x4x32xf32> to vector<1x1x32xf32>
    %199 = vector.shape_cast %198 : vector<1x1x32xf32> to vector<1x32xf32>
    %c0_142 = arith.constant 0 : index
    %c384 = arith.constant 384 : index
    %200 = vector.load %arg14[%c0_142, %c384] : memref<2x512xf32, #tpu.memory_space<vmem>>, vector<1x32xf32>
    tpu.vector_store %arg14[%c0_142, %c384], %199 {strides = array<i32>} : memref<2x512xf32, #tpu.memory_space<vmem>>, vector<1x32xf32>,
    %201 = vector.extract_strided_slice %161 {offsets = [3, 1, 0], sizes = [1, 1, 32], strides = [1, 1, 1]} : vector<8x4x32xf32> to vector<1x1x32xf32>
    %202 = vector.shape_cast %201 : vector<1x1x32xf32> to vector<1x32xf32>
    %c0_143 = arith.constant 0 : index
    %c416 = arith.constant 416 : index
    %203 = vector.load %arg14[%c0_143, %c416] : memref<2x512xf32, #tpu.memory_space<vmem>>, vector<1x32xf32>
    tpu.vector_store %arg14[%c0_143, %c416], %202 {strides = array<i32>} : memref<2x512xf32, #tpu.memory_space<vmem>>, vector<1x32xf32>,
    %204 = vector.extract_strided_slice %161 {offsets = [3, 2, 0], sizes = [1, 1, 32], strides = [1, 1, 1]} : vector<8x4x32xf32> to vector<1x1x32xf32>
    %205 = vector.shape_cast %204 : vector<1x1x32xf32> to vector<1x32xf32>
    %c0_144 = arith.constant 0 : index
    %c448 = arith.constant 448 : index
    %206 = vector.load %arg14[%c0_144, %c448] : memref<2x512xf32, #tpu.memory_space<vmem>>, vector<1x32xf32>
    tpu.vector_store %arg14[%c0_144, %c448], %205 {strides = array<i32>} : memref<2x512xf32, #tpu.memory_space<vmem>>, vector<1x32xf32>,
    %207 = vector.extract_strided_slice %161 {offsets = [3, 3, 0], sizes = [1, 1, 32], strides = [1, 1, 1]} : vector<8x4x32xf32> to vector<1x1x32xf32>
    %208 = vector.shape_cast %207 : vector<1x1x32xf32> to vector<1x32xf32>
    %c0_145 = arith.constant 0 : index
    %c480 = arith.constant 480 : index
    %209 = vector.load %arg14[%c0_145, %c480] : memref<2x512xf32, #tpu.memory_space<vmem>>, vector<1x32xf32>
    tpu.vector_store %arg14[%c0_145, %c480], %208 {strides = array<i32>} : memref<2x512xf32, #tpu.memory_space<vmem>>, vector<1x32xf32>,
    %210 = vector.extract_strided_slice %161 {offsets = [4, 0, 0], sizes = [1, 1, 32], strides = [1, 1, 1]} : vector<8x4x32xf32> to vector<1x1x32xf32>
    %211 = vector.shape_cast %210 : vector<1x1x32xf32> to vector<1x32xf32>
    %c1_146 = arith.constant 1 : index
    %c0_147 = arith.constant 0 : index
    %212 = vector.load %arg14[%c1_146, %c0_147] : memref<2x512xf32, #tpu.memory_space<vmem>>, vector<1x32xf32>
    tpu.vector_store %arg14[%c1_146, %c0_147], %211 {strides = array<i32>} : memref<2x512xf32, #tpu.memory_space<vmem>>, vector<1x32xf32>,
    %213 = vector.extract_strided_slice %161 {offsets = [4, 1, 0], sizes = [1, 1, 32], strides = [1, 1, 1]} : vector<8x4x32xf32> to vector<1x1x32xf32>
    %214 = vector.shape_cast %213 : vector<1x1x32xf32> to vector<1x32xf32>
    %c1_148 = arith.constant 1 : index
    %c32_149 = arith.constant 32 : index
    %215 = vector.load %arg14[%c1_148, %c32_149] : memref<2x512xf32, #tpu.memory_space<vmem>>, vector<1x32xf32>
    tpu.vector_store %arg14[%c1_148, %c32_149], %214 {strides = array<i32>} : memref<2x512xf32, #tpu.memory_space<vmem>>, vector<1x32xf32>,
    %216 = vector.extract_strided_slice %161 {offsets = [4, 2, 0], sizes = [1, 1, 32], strides = [1, 1, 1]} : vector<8x4x32xf32> to vector<1x1x32xf32>
    %217 = vector.shape_cast %216 : vector<1x1x32xf32> to vector<1x32xf32>
    %c1_150 = arith.constant 1 : index
    %c64_151 = arith.constant 64 : index
    %218 = vector.load %arg14[%c1_150, %c64_151] : memref<2x512xf32, #tpu.memory_space<vmem>>, vector<1x32xf32>
    tpu.vector_store %arg14[%c1_150, %c64_151], %217 {strides = array<i32>} : memref<2x512xf32, #tpu.memory_space<vmem>>, vector<1x32xf32>,
    %219 = vector.extract_strided_slice %161 {offsets = [4, 3, 0], sizes = [1, 1, 32], strides = [1, 1, 1]} : vector<8x4x32xf32> to vector<1x1x32xf32>
    %220 = vector.shape_cast %219 : vector<1x1x32xf32> to vector<1x32xf32>
    %c1_152 = arith.constant 1 : index
    %c96_153 = arith.constant 96 : index
    %221 = vector.load %arg14[%c1_152, %c96_153] : memref<2x512xf32, #tpu.memory_space<vmem>>, vector<1x32xf32>
    tpu.vector_store %arg14[%c1_152, %c96_153], %220 {strides = array<i32>} : memref<2x512xf32, #tpu.memory_space<vmem>>, vector<1x32xf32>,
    %222 = vector.extract_strided_slice %161 {offsets = [5, 0, 0], sizes = [1, 1, 32], strides = [1, 1, 1]} : vector<8x4x32xf32> to vector<1x1x32xf32>
    %223 = vector.shape_cast %222 : vector<1x1x32xf32> to vector<1x32xf32>
    %c1_154 = arith.constant 1 : index
    %c128_155 = arith.constant 128 : index
    %224 = vector.load %arg14[%c1_154, %c128_155] : memref<2x512xf32, #tpu.memory_space<vmem>>, vector<1x32xf32>
    tpu.vector_store %arg14[%c1_154, %c128_155], %223 {strides = array<i32>} : memref<2x512xf32, #tpu.memory_space<vmem>>, vector<1x32xf32>,
    %225 = vector.extract_strided_slice %161 {offsets = [5, 1, 0], sizes = [1, 1, 32], strides = [1, 1, 1]} : vector<8x4x32xf32> to vector<1x1x32xf32>
    %226 = vector.shape_cast %225 : vector<1x1x32xf32> to vector<1x32xf32>
    %c1_156 = arith.constant 1 : index
    %c160_157 = arith.constant 160 : index
    %227 = vector.load %arg14[%c1_156, %c160_157] : memref<2x512xf32, #tpu.memory_space<vmem>>, vector<1x32xf32>
    tpu.vector_store %arg14[%c1_156, %c160_157], %226 {strides = array<i32>} : memref<2x512xf32, #tpu.memory_space<vmem>>, vector<1x32xf32>,
    %228 = vector.extract_strided_slice %161 {offsets = [5, 2, 0], sizes = [1, 1, 32], strides = [1, 1, 1]} : vector<8x4x32xf32> to vector<1x1x32xf32>
    %229 = vector.shape_cast %228 : vector<1x1x32xf32> to vector<1x32xf32>
    %c1_158 = arith.constant 1 : index
    %c192_159 = arith.constant 192 : index
    %230 = vector.load %arg14[%c1_158, %c192_159] : memref<2x512xf32, #tpu.memory_space<vmem>>, vector<1x32xf32>
    tpu.vector_store %arg14[%c1_158, %c192_159], %229 {strides = array<i32>} : memref<2x512xf32, #tpu.memory_space<vmem>>, vector<1x32xf32>,
    %231 = vector.extract_strided_slice %161 {offsets = [5, 3, 0], sizes = [1, 1, 32], strides = [1, 1, 1]} : vector<8x4x32xf32> to vector<1x1x32xf32>
    %232 = vector.shape_cast %231 : vector<1x1x32xf32> to vector<1x32xf32>
    %c1_160 = arith.constant 1 : index
    %c224_161 = arith.constant 224 : index
    %233 = vector.load %arg14[%c1_160, %c224_161] : memref<2x512xf32, #tpu.memory_space<vmem>>, vector<1x32xf32>
    tpu.vector_store %arg14[%c1_160, %c224_161], %232 {strides = array<i32>} : memref<2x512xf32, #tpu.memory_space<vmem>>, vector<1x32xf32>,
    %234 = vector.extract_strided_slice %161 {offsets = [6, 0, 0], sizes = [1, 1, 32], strides = [1, 1, 1]} : vector<8x4x32xf32> to vector<1x1x32xf32>
    %235 = vector.shape_cast %234 : vector<1x1x32xf32> to vector<1x32xf32>
    %c1_162 = arith.constant 1 : index
    %c256_163 = arith.constant 256 : index
    %236 = vector.load %arg14[%c1_162, %c256_163] : memref<2x512xf32, #tpu.memory_space<vmem>>, vector<1x32xf32>
    tpu.vector_store %arg14[%c1_162, %c256_163], %235 {strides = array<i32>} : memref<2x512xf32, #tpu.memory_space<vmem>>, vector<1x32xf32>,
    %237 = vector.extract_strided_slice %161 {offsets = [6, 1, 0], sizes = [1, 1, 32], strides = [1, 1, 1]} : vector<8x4x32xf32> to vector<1x1x32xf32>
    %238 = vector.shape_cast %237 : vector<1x1x32xf32> to vector<1x32xf32>
    %c1_164 = arith.constant 1 : index
    %c288_165 = arith.constant 288 : index
    %239 = vector.load %arg14[%c1_164, %c288_165] : memref<2x512xf32, #tpu.memory_space<vmem>>, vector<1x32xf32>
    tpu.vector_store %arg14[%c1_164, %c288_165], %238 {strides = array<i32>} : memref<2x512xf32, #tpu.memory_space<vmem>>, vector<1x32xf32>,
    %240 = vector.extract_strided_slice %161 {offsets = [6, 2, 0], sizes = [1, 1, 32], strides = [1, 1, 1]} : vector<8x4x32xf32> to vector<1x1x32xf32>
    %241 = vector.shape_cast %240 : vector<1x1x32xf32> to vector<1x32xf32>
    %c1_166 = arith.constant 1 : index
    %c320_167 = arith.constant 320 : index
    %242 = vector.load %arg14[%c1_166, %c320_167] : memref<2x512xf32, #tpu.memory_space<vmem>>, vector<1x32xf32>
    tpu.vector_store %arg14[%c1_166, %c320_167], %241 {strides = array<i32>} : memref<2x512xf32, #tpu.memory_space<vmem>>, vector<1x32xf32>,
    %243 = vector.extract_strided_slice %161 {offsets = [6, 3, 0], sizes = [1, 1, 32], strides = [1, 1, 1]} : vector<8x4x32xf32> to vector<1x1x32xf32>
    %244 = vector.shape_cast %243 : vector<1x1x32xf32> to vector<1x32xf32>
    %c1_168 = arith.constant 1 : index
    %c352_169 = arith.constant 352 : index
    %245 = vector.load %arg14[%c1_168, %c352_169] : memref<2x512xf32, #tpu.memory_space<vmem>>, vector<1x32xf32>
    tpu.vector_store %arg14[%c1_168, %c352_169], %244 {strides = array<i32>} : memref<2x512xf32, #tpu.memory_space<vmem>>, vector<1x32xf32>,
    %246 = vector.extract_strided_slice %161 {offsets = [7, 0, 0], sizes = [1, 1, 32], strides = [1, 1, 1]} : vector<8x4x32xf32> to vector<1x1x32xf32>
    %247 = vector.shape_cast %246 : vector<1x1x32xf32> to vector<1x32xf32>
    %c1_170 = arith.constant 1 : index
    %c384_171 = arith.constant 384 : index
    %248 = vector.load %arg14[%c1_170, %c384_171] : memref<2x512xf32, #tpu.memory_space<vmem>>, vector<1x32xf32>
    tpu.vector_store %arg14[%c1_170, %c384_171], %247 {strides = array<i32>} : memref<2x512xf32, #tpu.memory_space<vmem>>, vector<1x32xf32>,
    %249 = vector.extract_strided_slice %161 {offsets = [7, 1, 0], sizes = [1, 1, 32], strides = [1, 1, 1]} : vector<8x4x32xf32> to vector<1x1x32xf32>
    %250 = vector.shape_cast %249 : vector<1x1x32xf32> to vector<1x32xf32>
    %c1_172 = arith.constant 1 : index
    %c416_173 = arith.constant 416 : index
    %251 = vector.load %arg14[%c1_172, %c416_173] : memref<2x512xf32, #tpu.memory_space<vmem>>, vector<1x32xf32>
    tpu.vector_store %arg14[%c1_172, %c416_173], %250 {strides = array<i32>} : memref<2x512xf32, #tpu.memory_space<vmem>>, vector<1x32xf32>,
    %252 = vector.extract_strided_slice %161 {offsets = [7, 2, 0], sizes = [1, 1, 32], strides = [1, 1, 1]} : vector<8x4x32xf32> to vector<1x1x32xf32>
    %253 = vector.shape_cast %252 : vector<1x1x32xf32> to vector<1x32xf32>
    %c1_174 = arith.constant 1 : index
    %c448_175 = arith.constant 448 : index
    %254 = vector.load %arg14[%c1_174, %c448_175] : memref<2x512xf32, #tpu.memory_space<vmem>>, vector<1x32xf32>
    tpu.vector_store %arg14[%c1_174, %c448_175], %253 {strides = array<i32>} : memref<2x512xf32, #tpu.memory_space<vmem>>, vector<1x32xf32>,
    %255 = vector.extract_strided_slice %161 {offsets = [7, 3, 0], sizes = [1, 1, 32], strides = [1, 1, 1]} : vector<8x4x32xf32> to vector<1x1x32xf32>
    %256 = vector.shape_cast %255 : vector<1x1x32xf32> to vector<1x32xf32>
    %c1_176 = arith.constant 1 : index
    %c480_177 = arith.constant 480 : index
    %257 = vector.load %arg14[%c1_176, %c480_177] : memref<2x512xf32, #tpu.memory_space<vmem>>, vector<1x32xf32>
    tpu.vector_store %arg14[%c1_176, %c480_177], %256 {strides = array<i32>} : memref<2x512xf32, #tpu.memory_space<vmem>>, vector<1x32xf32>,
    %c0_178 = arith.constant 0 : index
    %c0_179 = arith.constant 0 : index
    %258 = vector.load %arg14[%c0_178, %c0_179] : memref<2x512xf32, #tpu.memory_space<vmem>>, vector<2x512xf32>
    %c0_180 = arith.constant 0 : index
    %c0_181 = arith.constant 0 : index
    %259 = vector.load %arg5[%c0_180, %c0_181] : memref<512x128xf32, #tpu.memory_space<vmem>>, vector<512x128xf32>
    %cst_182 = arith.constant dense<0.000000e+00> : vector<2x128xf32>
    %260 = tpu.matmul %258, %259, %cst_182 {dimension_numbers = #tpu.dot_dimension_numbers<[1], [0], [0], [1], [0, 0, 1, 1], [], []>} : vector<2x512xf32>, vector<512x128xf32>, vector<2x128xf32> -> vector<2x128xf32>
    %c0_183 = arith.constant 0 : index
    %c0_184 = arith.constant 0 : index
    %261 = vector.load %arg6[%c0_183, %c0_184] : memref<1x128xf32, #tpu.memory_space<vmem>>, vector<1x128xf32>
    %262 = vector.broadcast %261 : vector<1x128xf32> to vector<2x128xf32>
    %263 = arith.addf %260, %262 : vector<2x128xf32>
    %cst_185 = arith.constant 0.000000e+00 : f32
    %264 = vector.broadcast %cst_185 : f32 to vector<2x128xf32>
    %265 = arith.maximumf %263, %264 : vector<2x128xf32>
    %c0_186 = arith.constant 0 : index
    %c0_187 = arith.constant 0 : index
    %266 = vector.load %arg7[%c0_186, %c0_187] : memref<128x10xf32, #tpu.memory_space<vmem>>, vector<128x10xf32>
    %cst_188 = arith.constant dense<0.000000e+00> : vector<2x10xf32>
    %267 = tpu.matmul %265, %266, %cst_188 {dimension_numbers = #tpu.dot_dimension_numbers<[1], [0], [0], [1], [0, 0, 1, 1], [], []>} : vector<2x128xf32>, vector<128x10xf32>, vector<2x10xf32> -> vector<2x10xf32>
    %c0_189 = arith.constant 0 : index
    %c0_190 = arith.constant 0 : index
    %268 = vector.load %arg8[%c0_189, %c0_190] : memref<1x10xf32, #tpu.memory_space<vmem>>, vector<1x10xf32>
    %269 = vector.broadcast %268 : vector<1x10xf32> to vector<2x10xf32>
    %270 = arith.addf %267, %269 : vector<2x10xf32>
    %c0_191 = arith.constant 0 : index
    %c0_192 = arith.constant 0 : index
    %271 = vector.load %arg9[%c0_191, %c0_192] : memref<2x10xf32, #tpu.memory_space<vmem>>, vector<2x10xf32>
    tpu.vector_store %arg9[%c0_191, %c0_192], %270 {strides = array<i32>} : memref<2x10xf32, #tpu.memory_space<vmem>>, vector<2x10xf32>,
    return
  }
}

</mosaic_0001>

<llo_original>
// kernel: forward.1
$region0: #{forward.1}
  #allocation0 [shape = 'u32[]', space=smem, size = 0x4, offset = 0x4, fixed_abs, tag = 'smem constant byte address 0x4 - core index']
  #allocation1 [shape = 'u32[72,128]{1,0:T(1,128)}', space=vmem, size = 0x9000, scoped, tag = 'internal scratch']
  #allocation2 [shape = 'f32[2,18,18,4]{3,2,1,0:T(8,128)}', space=vmem, size = 0x6c000, scoped, tag = 'scratch operand']
  #allocation3 [shape = 'f32[512,36]{1,0:T(8,128)}', space=vmem, size = 0x40000, scoped, tag = 'scratch operand']
  #allocation4 [shape = 'f32[2,10,10,16]{3,2,1,0:T(8,128)}', space=vmem, size = 0x28000, scoped, tag = 'scratch operand']
  #allocation5 [shape = 'f32[128,144]{1,0:T(8,128)}', space=vmem, size = 0x20000, scoped, tag = 'scratch operand']
  #allocation6 [shape = 'f32[2,512]{1,0:T(2,128)}', space=vmem, size = 0x1000, scoped, tag = 'scratch operand']
  %s0 = inlined_call_operand.vmem [shape: f32[2,16,16,4], index: 0, kind: input, shape index: {}]
  %s1 = inlined_call_operand.vmem [shape: f32[36,16], index: 1, kind: input, shape index: {}]
  %s2 = inlined_call_operand.vmem [shape: f32[1,16], index: 2, kind: input, shape index: {}]
  %s3 = inlined_call_operand.vmem [shape: f32[144,32], index: 3, kind: input, shape index: {}]
  %s4 = inlined_call_operand.vmem [shape: f32[1,32], index: 4, kind: input, shape index: {}]
  %s5 = inlined_call_operand.vmem [shape: f32[512,128], index: 5, kind: input, shape index: {}]
  %s6 = inlined_call_operand.vmem [shape: f32[1,128], index: 6, kind: input, shape index: {}]
  %s7 = inlined_call_operand.vmem [shape: f32[128,10], index: 7, kind: input, shape index: {}]
  %s8 = inlined_call_operand.vmem [shape: f32[1,10], index: 8, kind: input, shape index: {}]
  %s9 = inlined_call_operand.hbm [shape: f32[2,10], index: 9, kind: output, shape index: {}]
  %s10 = sld [smem:[#allocation0]]
  $region46: #{forward.1} parent=0
    _
  %s12 = ssub.s32 1, %s10
  %s13 = scalar_select 0, %s12, %s10
  $region1: #{forward.1} parent=0
    #allocation7 [shape = 'u8[1024]{0}', space=vmem, size = 0x400, scoped, tag = 'output window, operand 0, single buffered']
    #allocation8 [shape = 's32[1]{0}', space=sflag, size = 0x4, scoped, tag = 'scoped memory for forward.1']
    %14 = vsyncpa [#allocation8], 0
    // Predicated region
    $region2: #{forward.1} parent=1 // pred_check
      _
    $region3: #{forward.1} parent=1 // pred_check_branch
      %16 = sbr.rel (0) target = $region5
    $region4: #{forward.1} parent=1 // pred_region
      _
    $region5: #{forward.1} parent=1 // pred_fallthru
      _
    // Predicated region
    $region6: #{forward.1} parent=1 // pred_check
      _
    $region7: #{forward.1} parent=1 // pred_check_branch
      %18 = sbr.rel (0) target = $region9
    $region8: #{forward.1} parent=1 // pred_region
      _
    $region9: #{forward.1} parent=1 // pred_fallthru
      _
    // Predicated region
    $region10: #{forward.1} parent=1 // pred_check
      _
    $region11: #{forward.1} parent=1 // pred_check_branch
      %20 = sbr.rel (0) target = $region13
    $region12: #{forward.1} parent=1 // pred_region
      _
    $region13: #{forward.1} parent=1 // pred_fallthru
      _
    // Predicated region
    $region14: #{forward.1} parent=1 // pred_check
      _
    $region15: #{forward.1} parent=1 // pred_check_branch
      %22 = sbr.rel (0) target = $region17
    $region16: #{forward.1} parent=1 // pred_region
      _
    $region17: #{forward.1} parent=1 // pred_fallthru
      _
    // Predicated region
    $region18: #{forward.1} parent=1 // pred_check
      _
    $region19: #{forward.1} parent=1 // pred_check_branch
      %24 = sbr.rel (0) target = $region21
    $region20: #{forward.1} parent=1 // pred_region
      _
    $region21: #{forward.1} parent=1 // pred_fallthru
      _
    // Predicated region
    $region22: #{forward.1} parent=1 // pred_check
      _
    $region23: #{forward.1} parent=1 // pred_check_branch
      %26 = sbr.rel (0) target = $region25
    $region24: #{forward.1} parent=1 // pred_region
      _
    $region25: #{forward.1} parent=1 // pred_fallthru
      _
    // Predicated region
    $region26: #{forward.1} parent=1 // pred_check
      _
    $region27: #{forward.1} parent=1 // pred_check_branch
      %28 = sbr.rel (0) target = $region29
    $region28: #{forward.1} parent=1 // pred_region
      _
    $region29: #{forward.1} parent=1 // pred_fallthru
      _
    // Predicated region
    $region30: #{forward.1} parent=1 // pred_check
      _
    $region31: #{forward.1} parent=1 // pred_check_branch
      %30 = sbr.rel (0) target = $region33
    $region32: #{forward.1} parent=1 // pred_region
      _
    $region33: #{forward.1} parent=1 // pred_fallthru
      _
    // Predicated region
    $region34: #{forward.1} parent=1 // pred_check
      _
    $region35: #{forward.1} parent=1 // pred_check_branch
      %32 = sbr.rel (0) target = $region37
    $region36: #{forward.1} parent=1 // pred_region
      _
    $region37: #{forward.1} parent=1 // pred_fallthru
      _
    %vm33 = vcmask 31744
    %34 = vst.msk [vmem:[#allocation2] sm:$0xff] %vm33, 0.0
    %35 = vst.msk [vmem:[#allocation2 + $0x8] sm:$0xff] %vm33, 0.0
    %vm36 = vcmask 25600
    %37 = vst.msk [vmem:[#allocation2 + $0x10] sm:$0x3] %vm36, 0.0
    %38 = vst.msk [vmem:[#allocation2 + $0x18] sm:$0xff] %vm33, 0.0
    %39 = vst.msk [vmem:[#allocation2 + $0x20] sm:$0xff] %vm33, 0.0
    %40 = vst.msk [vmem:[#allocation2 + $0x28] sm:$0x3] %vm36, 0.0
    %41 = vst.msk [vmem:[#allocation2 + $0x30] sm:$0xff] %vm33, 0.0
    %42 = vst.msk [vmem:[#allocation2 + $0x38] sm:$0xff] %vm33, 0.0
    %43 = vst.msk [vmem:[#allocation2 + $0x40] sm:$0x3] %vm36, 0.0
    %44 = vst.msk [vmem:[#allocation2 + $0x48] sm:$0xff] %vm33, 0.0
    %45 = vst.msk [vmem:[#allocation2 + $0x50] sm:$0xff] %vm33, 0.0
    %46 = vst.msk [vmem:[#allocation2 + $0x58] sm:$0x3] %vm36, 0.0
    %47 = vst.msk [vmem:[#allocation2 + $0x60] sm:$0xff] %vm33, 0.0
    %48 = vst.msk [vmem:[#allocation2 + $0x68] sm:$0xff] %vm33, 0.0
    %49 = vst.msk [vmem:[#allocation2 + $0x70] sm:$0x3] %vm36, 0.0
    %50 = vst.msk [vmem:[#allocation2 + $0x78] sm:$0xff] %vm33, 0.0
    %51 = vst.msk [vmem:[#allocation2 + $0x80] sm:$0xff] %vm33, 0.0
    %52 = vst.msk [vmem:[#allocation2 + $0x88] sm:$0x3] %vm36, 0.0
    %53 = vst.msk [vmem:[#allocation2 + $0x90] sm:$0xff] %vm33, 0.0
    %54 = vst.msk [vmem:[#allocation2 + $0x98] sm:$0xff] %vm33, 0.0
    %55 = vst.msk [vmem:[#allocation2 + $0xa0] sm:$0x3] %vm36, 0.0
    %56 = vst.msk [vmem:[#allocation2 + $0xa8] sm:$0xff] %vm33, 0.0
    %57 = vst.msk [vmem:[#allocation2 + $0xb0] sm:$0xff] %vm33, 0.0
    %58 = vst.msk [vmem:[#allocation2 + $0xb8] sm:$0x3] %vm36, 0.0
    %59 = vst.msk [vmem:[#allocation2 + $0xc0] sm:$0xff] %vm33, 0.0
    %60 = vst.msk [vmem:[#allocation2 + $0xc8] sm:$0xff] %vm33, 0.0
    %61 = vst.msk [vmem:[#allocation2 + $0xd0] sm:$0x3] %vm36, 0.0
    %62 = vst.msk [vmem:[#allocation2 + $0xd8] sm:$0xff] %vm33, 0.0
    %63 = vst.msk [vmem:[#allocation2 + $0xe0] sm:$0xff] %vm33, 0.0
    %64 = vst.msk [vmem:[#allocation2 + $0xe8] sm:$0x3] %vm36, 0.0
    %65 = vst.msk [vmem:[#allocation2 + $0xf0] sm:$0xff] %vm33, 0.0
    %66 = vst.msk [vmem:[#allocation2 + $0xf8] sm:$0xff] %vm33, 0.0
    %67 = vst.msk [vmem:[#allocation2 + $0x100] sm:$0x3] %vm36, 0.0
    %68 = vst.msk [vmem:[#allocation2 + $0x108] sm:$0xff] %vm33, 0.0
    %69 = vst.msk [vmem:[#allocation2 + $0x110] sm:$0xff] %vm33, 0.0
    %70 = vst.msk [vmem:[#allocation2 + $0x118] sm:$0x3] %vm36, 0.0
    %71 = vst.msk [vmem:[#allocation2 + $0x120] sm:$0xff] %vm33, 0.0
    %72 = vst.msk [vmem:[#allocation2 + $0x128] sm:$0xff] %vm33, 0.0
    %73 = vst.msk [vmem:[#allocation2 + $0x130] sm:$0x3] %vm36, 0.0
    %74 = vst.msk [vmem:[#allocation2 + $0x138] sm:$0xff] %vm33, 0.0
    %75 = vst.msk [vmem:[#allocation2 + $0x140] sm:$0xff] %vm33, 0.0
    %76 = vst.msk [vmem:[#allocation2 + $0x148] sm:$0x3] %vm36, 0.0
    %77 = vst.msk [vmem:[#allocation2 + $0x150] sm:$0xff] %vm33, 0.0
    %78 = vst.msk [vmem:[#allocation2 + $0x158] sm:$0xff] %vm33, 0.0
    %79 = vst.msk [vmem:[#allocation2 + $0x160] sm:$0x3] %vm36, 0.0
    %80 = vst.msk [vmem:[#allocation2 + $0x168] sm:$0xff] %vm33, 0.0
    %81 = vst.msk [vmem:[#allocation2 + $0x170] sm:$0xff] %vm33, 0.0
    %82 = vst.msk [vmem:[#allocation2 + $0x178] sm:$0x3] %vm36, 0.0
    %83 = vst.msk [vmem:[#allocation2 + $0x180] sm:$0xff] %vm33, 0.0
    %84 = vst.msk [vmem:[#allocation2 + $0x188] sm:$0xff] %vm33, 0.0
    %85 = vst.msk [vmem:[#allocation2 + $0x190] sm:$0x3] %vm36, 0.0
    %86 = vst.msk [vmem:[#allocation2 + $0x198] sm:$0xff] %vm33, 0.0
    %87 = vst.msk [vmem:[#allocation2 + $0x1a0] sm:$0xff] %vm33, 0.0
    %88 = vst.msk [vmem:[#allocation2 + $0x1a8] sm:$0x3] %vm36, 0.0
    %89 = vst.msk [vmem:[#allocation2 + $0x1b0] sm:$0xff] %vm33, 0.0
    %90 = vst.msk [vmem:[#allocation2 + $0x1b8] sm:$0xff] %vm33, 0.0
    %91 = vst.msk [vmem:[#allocation2 + $0x1c0] sm:$0x3] %vm36, 0.0
    %92 = vst.msk [vmem:[#allocation2 + $0x1c8] sm:$0xff] %vm33, 0.0
    %93 = vst.msk [vmem:[#allocation2 + $0x1d0] sm:$0xff] %vm33, 0.0
    %94 = vst.msk [vmem:[#allocation2 + $0x1d8] sm:$0x3] %vm36, 0.0
    %95 = vst.msk [vmem:[#allocation2 + $0x1e0] sm:$0xff] %vm33, 0.0
    %96 = vst.msk [vmem:[#allocation2 + $0x1e8] sm:$0xff] %vm33, 0.0
    %97 = vst.msk [vmem:[#allocation2 + $0x1f0] sm:$0x3] %vm36, 0.0
    %98 = vst.msk [vmem:[#allocation2 + $0x1f8] sm:$0xff] %vm33, 0.0
    %99 = vst.msk [vmem:[#allocation2 + $0x200] sm:$0xff] %vm33, 0.0
    %100 = vst.msk [vmem:[#allocation2 + $0x208] sm:$0x3] %vm36, 0.0
    %101 = vst.msk [vmem:[#allocation2 + $0x210] sm:$0xff] %vm33, 0.0
    %102 = vst.msk [vmem:[#allocation2 + $0x218] sm:$0xff] %vm33, 0.0
    %103 = vst.msk [vmem:[#allocation2 + $0x220] sm:$0x3] %vm36, 0.0
    %104 = vst.msk [vmem:[#allocation2 + $0x228] sm:$0xff] %vm33, 0.0
    %105 = vst.msk [vmem:[#allocation2 + $0x230] sm:$0xff] %vm33, 0.0
    %106 = vst.msk [vmem:[#allocation2 + $0x238] sm:$0x3] %vm36, 0.0
    %107 = vst.msk [vmem:[#allocation2 + $0x240] sm:$0xff] %vm33, 0.0
    %108 = vst.msk [vmem:[#allocation2 + $0x248] sm:$0xff] %vm33, 0.0
    %109 = vst.msk [vmem:[#allocation2 + $0x250] sm:$0x3] %vm36, 0.0
    %110 = vst.msk [vmem:[#allocation2 + $0x258] sm:$0xff] %vm33, 0.0
    %111 = vst.msk [vmem:[#allocation2 + $0x260] sm:$0xff] %vm33, 0.0
    %112 = vst.msk [vmem:[#allocation2 + $0x268] sm:$0x3] %vm36, 0.0
    %113 = vst.msk [vmem:[#allocation2 + $0x270] sm:$0xff] %vm33, 0.0
    %114 = vst.msk [vmem:[#allocation2 + $0x278] sm:$0xff] %vm33, 0.0
    %115 = vst.msk [vmem:[#allocation2 + $0x280] sm:$0x3] %vm36, 0.0
    %116 = vst.msk [vmem:[#allocation2 + $0x288] sm:$0xff] %vm33, 0.0
    %117 = vst.msk [vmem:[#allocation2 + $0x290] sm:$0xff] %vm33, 0.0
    %118 = vst.msk [vmem:[#allocation2 + $0x298] sm:$0x3] %vm36, 0.0
    %119 = vst.msk [vmem:[#allocation2 + $0x2a0] sm:$0xff] %vm33, 0.0
    %120 = vst.msk [vmem:[#allocation2 + $0x2a8] sm:$0xff] %vm33, 0.0
    %121 = vst.msk [vmem:[#allocation2 + $0x2b0] sm:$0x3] %vm36, 0.0
    %122 = vst.msk [vmem:[#allocation2 + $0x2b8] sm:$0xff] %vm33, 0.0
    %123 = vst.msk [vmem:[#allocation2 + $0x2c0] sm:$0xff] %vm33, 0.0
    %124 = vst.msk [vmem:[#allocation2 + $0x2c8] sm:$0x3] %vm36, 0.0
    %125 = vst.msk [vmem:[#allocation2 + $0x2d0] sm:$0xff] %vm33, 0.0
    %126 = vst.msk [vmem:[#allocation2 + $0x2d8] sm:$0xff] %vm33, 0.0
    %127 = vst.msk [vmem:[#allocation2 + $0x2e0] sm:$0x3] %vm36, 0.0
    %128 = vst.msk [vmem:[#allocation2 + $0x2e8] sm:$0xff] %vm33, 0.0
    %129 = vst.msk [vmem:[#allocation2 + $0x2f0] sm:$0xff] %vm33, 0.0
    %130 = vst.msk [vmem:[#allocation2 + $0x2f8] sm:$0x3] %vm36, 0.0
    %131 = vst.msk [vmem:[#allocation2 + $0x300] sm:$0xff] %vm33, 0.0
    %132 = vst.msk [vmem:[#allocation2 + $0x308] sm:$0xff] %vm33, 0.0
    %133 = vst.msk [vmem:[#allocation2 + $0x310] sm:$0x3] %vm36, 0.0
    %134 = vst.msk [vmem:[#allocation2 + $0x318] sm:$0xff] %vm33, 0.0
    %135 = vst.msk [vmem:[#allocation2 + $0x320] sm:$0xff] %vm33, 0.0
    %136 = vst.msk [vmem:[#allocation2 + $0x328] sm:$0x3] %vm36, 0.0
    %137 = vst.msk [vmem:[#allocation2 + $0x330] sm:$0xff] %vm33, 0.0
    %138 = vst.msk [vmem:[#allocation2 + $0x338] sm:$0xff] %vm33, 0.0
    %139 = vst.msk [vmem:[#allocation2 + $0x340] sm:$0x3] %vm36, 0.0
    %140 = vst.msk [vmem:[#allocation2 + $0x348] sm:$0xff] %vm33, 0.0
    %141 = vst.msk [vmem:[#allocation2 + $0x350] sm:$0xff] %vm33, 0.0
    %142 = vst.msk [vmem:[#allocation2 + $0x358] sm:$0x3] %vm36, 0.0
    %vm143 = vcmask 130048
    %144 = vst.msk [vmem:[#allocation4] sm:$0xff] %vm143, 0.0
    %vm145 = vcmask 123904
    %146 = vst.msk [vmem:[#allocation4 + $0x8] sm:$0x3] %vm145, 0.0
    %147 = vst.msk [vmem:[#allocation4 + $0x10] sm:$0xff] %vm143, 0.0
    %148 = vst.msk [vmem:[#allocation4 + $0x18] sm:$0x3] %vm145, 0.0
    %149 = vst.msk [vmem:[#allocation4 + $0x20] sm:$0xff] %vm143, 0.0
    %150 = vst.msk [vmem:[#allocation4 + $0x28] sm:$0x3] %vm145, 0.0
    %151 = vst.msk [vmem:[#allocation4 + $0x30] sm:$0xff] %vm143, 0.0
    %152 = vst.msk [vmem:[#allocation4 + $0x38] sm:$0x3] %vm145, 0.0
    %153 = vst.msk [vmem:[#allocation4 + $0x40] sm:$0xff] %vm143, 0.0
    %154 = vst.msk [vmem:[#allocation4 + $0x48] sm:$0x3] %vm145, 0.0
    %155 = vst.msk [vmem:[#allocation4 + $0x50] sm:$0xff] %vm143, 0.0
    %156 = vst.msk [vmem:[#allocation4 + $0x58] sm:$0x3] %vm145, 0.0
    %157 = vst.msk [vmem:[#allocation4 + $0x60] sm:$0xff] %vm143, 0.0
    %158 = vst.msk [vmem:[#allocation4 + $0x68] sm:$0x3] %vm145, 0.0
    %159 = vst.msk [vmem:[#allocation4 + $0x70] sm:$0xff] %vm143, 0.0
    %160 = vst.msk [vmem:[#allocation4 + $0x78] sm:$0x3] %vm145, 0.0
    %161 = vst.msk [vmem:[#allocation4 + $0x80] sm:$0xff] %vm143, 0.0
    %162 = vst.msk [vmem:[#allocation4 + $0x88] sm:$0x3] %vm145, 0.0
    %163 = vst.msk [vmem:[#allocation4 + $0x90] sm:$0xff] %vm143, 0.0
    %164 = vst.msk [vmem:[#allocation4 + $0x98] sm:$0x3] %vm145, 0.0
    %165 = vst.msk [vmem:[#allocation4 + $0xa0] sm:$0xff] %vm143, 0.0
    %166 = vst.msk [vmem:[#allocation4 + $0xa8] sm:$0x3] %vm145, 0.0
    %167 = vst.msk [vmem:[#allocation4 + $0xb0] sm:$0xff] %vm143, 0.0
    %168 = vst.msk [vmem:[#allocation4 + $0xb8] sm:$0x3] %vm145, 0.0
    %169 = vst.msk [vmem:[#allocation4 + $0xc0] sm:$0xff] %vm143, 0.0
    %170 = vst.msk [vmem:[#allocation4 + $0xc8] sm:$0x3] %vm145, 0.0
    %171 = vst.msk [vmem:[#allocation4 + $0xd0] sm:$0xff] %vm143, 0.0
    %172 = vst.msk [vmem:[#allocation4 + $0xd8] sm:$0x3] %vm145, 0.0
    %173 = vst.msk [vmem:[#allocation4 + $0xe0] sm:$0xff] %vm143, 0.0
    %174 = vst.msk [vmem:[#allocation4 + $0xe8] sm:$0x3] %vm145, 0.0
    %175 = vst.msk [vmem:[#allocation4 + $0xf0] sm:$0xff] %vm143, 0.0
    %176 = vst.msk [vmem:[#allocation4 + $0xf8] sm:$0x3] %vm145, 0.0
    %177 = vst.msk [vmem:[#allocation4 + $0x100] sm:$0xff] %vm143, 0.0
    %178 = vst.msk [vmem:[#allocation4 + $0x108] sm:$0x3] %vm145, 0.0
    %179 = vst.msk [vmem:[#allocation4 + $0x110] sm:$0xff] %vm143, 0.0
    %180 = vst.msk [vmem:[#allocation4 + $0x118] sm:$0x3] %vm145, 0.0
    %181 = vst.msk [vmem:[#allocation4 + $0x120] sm:$0xff] %vm143, 0.0
    %182 = vst.msk [vmem:[#allocation4 + $0x128] sm:$0x3] %vm145, 0.0
    %183 = vst.msk [vmem:[#allocation4 + $0x130] sm:$0xff] %vm143, 0.0
    %184 = vst.msk [vmem:[#allocation4 + $0x138] sm:$0x3] %vm145, 0.0
    %v185 = vld [vmem:[%s0] sm:$0xff]
    %v186 = vld [vmem:[%s0 + $0x8] sm:$0xff]
    %v187 = vld [vmem:[%s0 + $0x10] sm:$0xff]
    %v188 = vld [vmem:[%s0 + $0x18] sm:$0xff]
    %v189 = vld [vmem:[%s0 + $0x20] sm:$0xff]
    %v190 = vld [vmem:[%s0 + $0x28] sm:$0xff]
    %v191 = vld [vmem:[%s0 + $0x30] sm:$0xff]
    %v192 = vld [vmem:[%s0 + $0x38] sm:$0xff]
    %v193 = vld [vmem:[%s0 + $0x40] sm:$0xff]
    %v194 = vld [vmem:[%s0 + $0x48] sm:$0xff]
    %v195 = vld [vmem:[%s0 + $0x50] sm:$0xff]
    %v196 = vld [vmem:[%s0 + $0x58] sm:$0xff]
    %v197 = vld [vmem:[%s0 + $0x60] sm:$0xff]
    %v198 = vld [vmem:[%s0 + $0x68] sm:$0xff]
    %v199 = vld [vmem:[%s0 + $0x70] sm:$0xff]
    %v200 = vld [vmem:[%s0 + $0x78] sm:$0xff]
    %v201 = vld [vmem:[%s0 + $0x80] sm:$0xff]
    %v202 = vld [vmem:[%s0 + $0x88] sm:$0xff]
    %v203 = vld [vmem:[%s0 + $0x90] sm:$0xff]
    %v204 = vld [vmem:[%s0 + $0x98] sm:$0xff]
    %v205 = vld [vmem:[%s0 + $0xa0] sm:$0xff]
    %v206 = vld [vmem:[%s0 + $0xa8] sm:$0xff]
    %v207 = vld [vmem:[%s0 + $0xb0] sm:$0xff]
    %v208 = vld [vmem:[%s0 + $0xb8] sm:$0xff]
    %v209 = vld [vmem:[%s0 + $0xc0] sm:$0xff]
    %v210 = vld [vmem:[%s0 + $0xc8] sm:$0xff]
    %v211 = vld [vmem:[%s0 + $0xd0] sm:$0xff]
    %v212 = vld [vmem:[%s0 + $0xd8] sm:$0xff]
    %v213 = vld [vmem:[%s0 + $0xe0] sm:$0xff]
    %v214 = vld [vmem:[%s0 + $0xe8] sm:$0xff]
    %v215 = vld [vmem:[%s0 + $0xf0] sm:$0xff]
    %v216 = vld [vmem:[%s0 + $0xf8] sm:$0xff]
    %s217 = scalar_lea.vmem [#allocation2], 24
    %218 = vst.msk [vmem:[%s217 + $0x1] sm:$0xff] %vm33, %v185
    %219 = vst.msk [vmem:[%s217 + $0x9] sm:$0xff] %vm33, %v186
    %220 = vst.msk [vmem:[%s217 + $0x19] sm:$0xff] %vm33, %v187
    %221 = vst.msk [vmem:[%s217 + $0x21] sm:$0xff] %vm33, %v188
    %222 = vst.msk [vmem:[%s217 + $0x31] sm:$0xff] %vm33, %v189
    %223 = vst.msk [vmem:[%s217 + $0x39] sm:$0xff] %vm33, %v190
    %224 = vst.msk [vmem:[%s217 + $0x49] sm:$0xff] %vm33, %v191
    %225 = vst.msk [vmem:[%s217 + $0x51] sm:$0xff] %vm33, %v192
    %226 = vst.msk [vmem:[%s217 + $0x61] sm:$0xff] %vm33, %v193
    %227 = vst.msk [vmem:[%s217 + $0x69] sm:$0xff] %vm33, %v194
    %228 = vst.msk [vmem:[%s217 + $0x79] sm:$0xff] %vm33, %v195
    %229 = vst.msk [vmem:[%s217 + $0x81] sm:$0xff] %vm33, %v196
    %230 = vst.msk [vmem:[%s217 + $0x91] sm:$0xff] %vm33, %v197
    %231 = vst.msk [vmem:[%s217 + $0x99] sm:$0xff] %vm33, %v198
    %232 = vst.msk [vmem:[%s217 + $0xa9] sm:$0xff] %vm33, %v199
    %233 = vst.msk [vmem:[%s217 + $0xb1] sm:$0xff] %vm33, %v200
    %234 = vst.msk [vmem:[%s217 + $0xc1] sm:$0xff] %vm33, %v201
    %235 = vst.msk [vmem:[%s217 + $0xc9] sm:$0xff] %vm33, %v202
    %236 = vst.msk [vmem:[%s217 + $0xd9] sm:$0xff] %vm33, %v203
    %237 = vst.msk [vmem:[%s217 + $0xe1] sm:$0xff] %vm33, %v204
    %238 = vst.msk [vmem:[%s217 + $0xf1] sm:$0xff] %vm33, %v205
    %239 = vst.msk [vmem:[%s217 + $0xf9] sm:$0xff] %vm33, %v206
    %240 = vst.msk [vmem:[%s217 + $0x109] sm:$0xff] %vm33, %v207
    %241 = vst.msk [vmem:[%s217 + $0x111] sm:$0xff] %vm33, %v208
    %242 = vst.msk [vmem:[%s217 + $0x121] sm:$0xff] %vm33, %v209
    %243 = vst.msk [vmem:[%s217 + $0x129] sm:$0xff] %vm33, %v210
    %244 = vst.msk [vmem:[%s217 + $0x139] sm:$0xff] %vm33, %v211
    %245 = vst.msk [vmem:[%s217 + $0x141] sm:$0xff] %vm33, %v212
    %246 = vst.msk [vmem:[%s217 + $0x151] sm:$0xff] %vm33, %v213
    %247 = vst.msk [vmem:[%s217 + $0x159] sm:$0xff] %vm33, %v214
    %248 = vst.msk [vmem:[%s217 + $0x169] sm:$0xff] %vm33, %v215
    %249 = vst.msk [vmem:[%s217 + $0x171] sm:$0xff] %vm33, %v216
    %s250 = scalar_lea.vmem %s0, 256
    %v251 = vld [vmem:[%s250] sm:$0xff]
    %v252 = vld [vmem:[%s250 + $0x8] sm:$0xff]
    %v253 = vld [vmem:[%s250 + $0x10] sm:$0xff]
    %v254 = vld [vmem:[%s250 + $0x18] sm:$0xff]
    %v255 = vld [vmem:[%s250 + $0x20] sm:$0xff]
    %v256 = vld [vmem:[%s250 + $0x28] sm:$0xff]
    %v257 = vld [vmem:[%s250 + $0x30] sm:$0xff]
    %v258 = vld [vmem:[%s250 + $0x38] sm:$0xff]
    %v259 = vld [vmem:[%s250 + $0x40] sm:$0xff]
    %v260 = vld [vmem:[%s250 + $0x48] sm:$0xff]
    %v261 = vld [vmem:[%s250 + $0x50] sm:$0xff]
    %v262 = vld [vmem:[%s250 + $0x58] sm:$0xff]
    %v263 = vld [vmem:[%s250 + $0x60] sm:$0xff]
    %v264 = vld [vmem:[%s250 + $0x68] sm:$0xff]
    %v265 = vld [vmem:[%s250 + $0x70] sm:$0xff]
    %v266 = vld [vmem:[%s250 + $0x78] sm:$0xff]
    %v267 = vld [vmem:[%s250 + $0x80] sm:$0xff]
    %v268 = vld [vmem:[%s250 + $0x88] sm:$0xff]
    %v269 = vld [vmem:[%s250 + $0x90] sm:$0xff]
    %v270 = vld [vmem:[%s250 + $0x98] sm:$0xff]
    %v271 = vld [vmem:[%s250 + $0xa0] sm:$0xff]
    %v272 = vld [vmem:[%s250 + $0xa8] sm:$0xff]
    %v273 = vld [vmem:[%s250 + $0xb0] sm:$0xff]
    %v274 = vld [vmem:[%s250 + $0xb8] sm:$0xff]
    %v275 = vld [vmem:[%s250 + $0xc0] sm:$0xff]
    %v276 = vld [vmem:[%s250 + $0xc8] sm:$0xff]
    %v277 = vld [vmem:[%s250 + $0xd0] sm:$0xff]
    %v278 = vld [vmem:[%s250 + $0xd8] sm:$0xff]
    %v279 = vld [vmem:[%s250 + $0xe0] sm:$0xff]
    %v280 = vld [vmem:[%s250 + $0xe8] sm:$0xff]
    %v281 = vld [vmem:[%s250 + $0xf0] sm:$0xff]
    %v282 = vld [vmem:[%s250 + $0xf8] sm:$0xff]
    %s283 = scalar_lea.vmem [#allocation2], 456
    %284 = vst.msk [vmem:[%s283 + $0x1] sm:$0xff] %vm33, %v251
    %285 = vst.msk [vmem:[%s283 + $0x9] sm:$0xff] %vm33, %v252
    %286 = vst.msk [vmem:[%s283 + $0x19] sm:$0xff] %vm33, %v253
    %287 = vst.msk [vmem:[%s283 + $0x21] sm:$0xff] %vm33, %v254
    %288 = vst.msk [vmem:[%s283 + $0x31] sm:$0xff] %vm33, %v255
    %289 = vst.msk [vmem:[%s283 + $0x39] sm:$0xff] %vm33, %v256
    %290 = vst.msk [vmem:[%s283 + $0x49] sm:$0xff] %vm33, %v257
    %291 = vst.msk [vmem:[%s283 + $0x51] sm:$0xff] %vm33, %v258
    %292 = vst.msk [vmem:[%s283 + $0x61] sm:$0xff] %vm33, %v259
    %293 = vst.msk [vmem:[%s283 + $0x69] sm:$0xff] %vm33, %v260
    %294 = vst.msk [vmem:[%s283 + $0x79] sm:$0xff] %vm33, %v261
    %295 = vst.msk [vmem:[%s283 + $0x81] sm:$0xff] %vm33, %v262
    %296 = vst.msk [vmem:[%s283 + $0x91] sm:$0xff] %vm33, %v263
    %297 = vst.msk [vmem:[%s283 + $0x99] sm:$0xff] %vm33, %v264
    %298 = vst.msk [vmem:[%s283 + $0xa9] sm:$0xff] %vm33, %v265
    %299 = vst.msk [vmem:[%s283 + $0xb1] sm:$0xff] %vm33, %v266
    %300 = vst.msk [vmem:[%s283 + $0xc1] sm:$0xff] %vm33, %v267
    %301 = vst.msk [vmem:[%s283 + $0xc9] sm:$0xff] %vm33, %v268
    %302 = vst.msk [vmem:[%s283 + $0xd9] sm:$0xff] %vm33, %v269
    %303 = vst.msk [vmem:[%s283 + $0xe1] sm:$0xff] %vm33, %v270
    %304 = vst.msk [vmem:[%s283 + $0xf1] sm:$0xff] %vm33, %v271
    %305 = vst.msk [vmem:[%s283 + $0xf9] sm:$0xff] %vm33, %v272
    %306 = vst.msk [vmem:[%s283 + $0x109] sm:$0xff] %vm33, %v273
    %307 = vst.msk [vmem:[%s283 + $0x111] sm:$0xff] %vm33, %v274
    %308 = vst.msk [vmem:[%s283 + $0x121] sm:$0xff] %vm33, %v275
    %309 = vst.msk [vmem:[%s283 + $0x129] sm:$0xff] %vm33, %v276
    %310 = vst.msk [vmem:[%s283 + $0x139] sm:$0xff] %vm33, %v277
    %311 = vst.msk [vmem:[%s283 + $0x141] sm:$0xff] %vm33, %v278
    %312 = vst.msk [vmem:[%s283 + $0x151] sm:$0xff] %vm33, %v279
    %313 = vst.msk [vmem:[%s283 + $0x159] sm:$0xff] %vm33, %v280
    %314 = vst.msk [vmem:[%s283 + $0x169] sm:$0xff] %vm33, %v281
    %315 = vst.msk [vmem:[%s283 + $0x171] sm:$0xff] %vm33, %v282
    %v316 = vld [vmem:[#allocation2] sm:$0xff]
    %v317 = vld [vmem:[#allocation2 + $0x8] sm:$0xff]
    %v318 = vld [vmem:[#allocation2 + $0x10] sm:$0x3]
    %v319 = vld [vmem:[#allocation2 + $0x18] sm:$0xff]
    %v320 = vld [vmem:[#allocation2 + $0x20] sm:$0xff]
    %v321 = vld [vmem:[#allocation2 + $0x28] sm:$0x3]
    %v322 = vld [vmem:[#allocation2 + $0x30] sm:$0xff]
    %v323 = vld [vmem:[#allocation2 + $0x38] sm:$0xff]
    %v324 = vld [vmem:[#allocation2 + $0x40] sm:$0x3]
    %v325 = vld [vmem:[#allocation2 + $0x48] sm:$0xff]
    %v326 = vld [vmem:[#allocation2 + $0x50] sm:$0xff]
    %v327 = vld [vmem:[#allocation2 + $0x58] sm:$0x3]
    %v328 = vld [vmem:[#allocation2 + $0x60] sm:$0xff]
    %v329 = vld [vmem:[#allocation2 + $0x68] sm:$0xff]
    %v330 = vld [vmem:[#allocation2 + $0x70] sm:$0x3]
    %v331 = vld [vmem:[#allocation2 + $0x78] sm:$0xff]
    %v332 = vld [vmem:[#allocation2 + $0x80] sm:$0xff]
    %v333 = vld [vmem:[#allocation2 + $0x88] sm:$0x3]
    %v334 = vld [vmem:[#allocation2 + $0x90] sm:$0xff]
    %v335 = vld [vmem:[#allocation2 + $0x98] sm:$0xff]
    %v336 = vld [vmem:[#allocation2 + $0xa0] sm:$0x3]
    %v337 = vld [vmem:[#allocation2 + $0xa8] sm:$0xff]
    %v338 = vld [vmem:[#allocation2 + $0xb0] sm:$0xff]
    %v339 = vld [vmem:[#allocation2 + $0xb8] sm:$0x3]
    %v340 = vld [vmem:[#allocation2 + $0xc0] sm:$0xff]
    %v341 = vld [vmem:[#allocation2 + $0xc8] sm:$0xff]
    %v342 = vld [vmem:[#allocation2 + $0xd0] sm:$0x3]
    %v343 = vld [vmem:[#allocation2 + $0xd8] sm:$0xff]
    %v344 = vld [vmem:[#allocation2 + $0xe0] sm:$0xff]
    %v345 = vld [vmem:[#allocation2 + $0xe8] sm:$0x3]
    %v346 = vld [vmem:[#allocation2 + $0xf0] sm:$0xff]
    %v347 = vld [vmem:[#allocation2 + $0xf8] sm:$0xff]
    %v348 = vld [vmem:[#allocation2 + $0x100] sm:$0x3]
    %v349 = vld [vmem:[#allocation2 + $0x108] sm:$0xff]
    %v350 = vld [vmem:[#allocation2 + $0x110] sm:$0xff]
    %v351 = vld [vmem:[#allocation2 + $0x118] sm:$0x3]
    %v352 = vld [vmem:[#allocation2 + $0x120] sm:$0xff]
    %v353 = vld [vmem:[#allocation2 + $0x128] sm:$0xff]
    %v354 = vld [vmem:[#allocation2 + $0x130] sm:$0x3]
    %v355 = vld [vmem:[#allocation2 + $0x138] sm:$0xff]
    %v356 = vld [vmem:[#allocation2 + $0x140] sm:$0xff]
    %v357 = vld [vmem:[#allocation2 + $0x148] sm:$0x3]
    %v358 = vld [vmem:[#allocation2 + $0x150] sm:$0xff]
    %v359 = vld [vmem:[#allocation2 + $0x158] sm:$0xff]
    %v360 = vld [vmem:[#allocation2 + $0x160] sm:$0x3]
    %v361 = vld [vmem:[#allocation2 + $0x168] sm:$0xff]
    %v362 = vld [vmem:[#allocation2 + $0x170] sm:$0xff]
    %v363 = vld [vmem:[#allocation2 + $0x178] sm:$0x3]
    %v364 = vld [vmem:[#allocation2 + $0x180] sm:$0xff]
    %v365 = vld [vmem:[#allocation2 + $0x188] sm:$0xff]
    %v366 = vld [vmem:[#allocation2 + $0x190] sm:$0x3]
    %v367 = vld [vmem:[#allocation2 + $0x198] sm:$0xff]
    %v368 = vld [vmem:[#allocation2 + $0x1a0] sm:$0xff]
    %v369 = vld [vmem:[#allocation2 + $0x1a8] sm:$0x3]
    %370 = vst.msk [vmem:[#allocation3] sm:$0xff] %vm33, %v316
    %371 = vst.msk [vmem:[#allocation3 + $0x8] sm:$0xff] %vm33, %v317
    %372 = vst.msk [vmem:[#allocation3 + $0x10] sm:$0xff] %vm33, %v319
    %373 = vst.msk [vmem:[#allocation3 + $0x18] sm:$0xff] %vm33, %v320
    %374 = vst.msk [vmem:[#allocation3 + $0x20] sm:$0xff] %vm33, %v322
    %375 = vst.msk [vmem:[#allocation3 + $0x28] sm:$0xff] %vm33, %v323
    %376 = vst.msk [vmem:[#allocation3 + $0x30] sm:$0xff] %vm33, %v325
    %377 = vst.msk [vmem:[#allocation3 + $0x38] sm:$0xff] %vm33, %v326
    %378 = vst.msk [vmem:[#allocation3 + $0x40] sm:$0xff] %vm33, %v328
    %379 = vst.msk [vmem:[#allocation3 + $0x48] sm:$0xff] %vm33, %v329
    %380 = vst.msk [vmem:[#allocation3 + $0x50] sm:$0xff] %vm33, %v331
    %381 = vst.msk [vmem:[#allocation3 + $0x58] sm:$0xff] %vm33, %v332
    %382 = vst.msk [vmem:[#allocation3 + $0x60] sm:$0xff] %vm33, %v334
    %383 = vst.msk [vmem:[#allocation3 + $0x68] sm:$0xff] %vm33, %v335
    %384 = vst.msk [vmem:[#allocation3 + $0x70] sm:$0xff] %vm33, %v337
    %385 = vst.msk [vmem:[#allocation3 + $0x78] sm:$0xff] %vm33, %v338
    %386 = vst.msk [vmem:[#allocation3 + $0x80] sm:$0xff] %vm33, %v340
    %387 = vst.msk [vmem:[#allocation3 + $0x88] sm:$0xff] %vm33, %v341
    %388 = vst.msk [vmem:[#allocation3 + $0x90] sm:$0xff] %vm33, %v343
    %389 = vst.msk [vmem:[#allocation3 + $0x98] sm:$0xff] %vm33, %v344
    %390 = vst.msk [vmem:[#allocation3 + $0xa0] sm:$0xff] %vm33, %v346
    %391 = vst.msk [vmem:[#allocation3 + $0xa8] sm:$0xff] %vm33, %v347
    %392 = vst.msk [vmem:[#allocation3 + $0xb0] sm:$0xff] %vm33, %v349
    %393 = vst.msk [vmem:[#allocation3 + $0xb8] sm:$0xff] %vm33, %v350
    %394 = vst.msk [vmem:[#allocation3 + $0xc0] sm:$0xff] %vm33, %v352
    %395 = vst.msk [vmem:[#allocation3 + $0xc8] sm:$0xff] %vm33, %v353
    %396 = vst.msk [vmem:[#allocation3 + $0xd0] sm:$0xff] %vm33, %v355
    %397 = vst.msk [vmem:[#allocation3 + $0xd8] sm:$0xff] %vm33, %v356
    %398 = vst.msk [vmem:[#allocation3 + $0xe0] sm:$0xff] %vm33, %v358
    %399 = vst.msk [vmem:[#allocation3 + $0xe8] sm:$0xff] %vm33, %v359
    %400 = vst.msk [vmem:[#allocation3 + $0xf0] sm:$0xff] %vm33, %v361
    %401 = vst.msk [vmem:[#allocation3 + $0xf8] sm:$0xff] %vm33, %v362
    %vm450 = vcmask 1046528
    %v451 = vrot.slane %v316, 1
    %v452 = vrot.slane %v317, 1
    %v453 = vsel %vm450, %v451, %v452
    %v454 = vrot.slane %v318, 1
    %v455 = vsel %vm450, %v452, %v454
    %v456 = vrot.slane %v319, 1
    %v457 = vrot.slane %v320, 1
    %v458 = vsel %vm450, %v456, %v457
    %v459 = vrot.slane %v321, 1
    %v460 = vsel %vm450, %v457, %v459
    %v461 = vrot.slane %v322, 1
    %v462 = vrot.slane %v323, 1
    %v463 = vsel %vm450, %v461, %v462
    %v464 = vrot.slane %v324, 1
    %v465 = vsel %vm450, %v462, %v464
    %v466 = vrot.slane %v325, 1
    %v467 = vrot.slane %v326, 1
    %v468 = vsel %vm450, %v466, %v467
    %v469 = vrot.slane %v327, 1
    %v470 = vsel %vm450, %v467, %v469
    %v471 = vrot.slane %v328, 1
    %v472 = vrot.slane %v329, 1
    %v473 = vsel %vm450, %v471, %v472
    %v474 = vrot.slane %v330, 1
    %v475 = vsel %vm450, %v472, %v474
    %v476 = vrot.slane %v331, 1
    %v477 = vrot.slane %v332, 1
    %v478 = vsel %vm450, %v476, %v477
    %v479 = vrot.slane %v333, 1
    %v480 = vsel %vm450, %v477, %v479
    %v481 = vrot.slane %v334, 1
    %v482 = vrot.slane %v335, 1
    %v483 = vsel %vm450, %v481, %v482
    %v484 = vrot.slane %v336, 1
    %v485 = vsel %vm450, %v482, %v484
    %v486 = vrot.slane %v337, 1
    %v487 = vrot.slane %v338, 1
    %v488 = vsel %vm450, %v486, %v487
    %v489 = vrot.slane %v339, 1
    %v490 = vsel %vm450, %v487, %v489
    %v491 = vrot.slane %v340, 1
    %v492 = vrot.slane %v341, 1
    %v493 = vsel %vm450, %v491, %v492
    %v494 = vrot.slane %v342, 1
    %v495 = vsel %vm450, %v492, %v494
    %v496 = vrot.slane %v343, 1
    %v497 = vrot.slane %v344, 1
    %v498 = vsel %vm450, %v496, %v497
    %v499 = vrot.slane %v345, 1
    %v500 = vsel %vm450, %v497, %v499
    %v501 = vrot.slane %v346, 1
    %v502 = vrot.slane %v347, 1
    %v503 = vsel %vm450, %v501, %v502
    %v504 = vrot.slane %v348, 1
    %v505 = vsel %vm450, %v502, %v504
    %v506 = vrot.slane %v349, 1
    %v507 = vrot.slane %v350, 1
    %v508 = vsel %vm450, %v506, %v507
    %v509 = vrot.slane %v351, 1
    %v510 = vsel %vm450, %v507, %v509
    %v511 = vrot.slane %v352, 1
    %v512 = vrot.slane %v353, 1
    %v513 = vsel %vm450, %v511, %v512
    %v514 = vrot.slane %v354, 1
    %v515 = vsel %vm450, %v512, %v514
    %v516 = vrot.slane %v355, 1
    %v517 = vrot.slane %v356, 1
    %v518 = vsel %vm450, %v516, %v517
    %v519 = vrot.slane %v357, 1
    %v520 = vsel %vm450, %v517, %v519
    %v521 = vrot.slane %v358, 1
    %v522 = vrot.slane %v359, 1
    %v523 = vsel %vm450, %v521, %v522
    %v524 = vrot.slane %v360, 1
    %v525 = vsel %vm450, %v522, %v524
    %v526 = vrot.slane %v361, 1
    %v527 = vrot.slane %v362, 1
    %v528 = vsel %vm450, %v526, %v527
    %v529 = vrot.slane %v363, 1
    %v530 = vsel %vm450, %v527, %v529
    %531 = vrot.lane.b32.xlu0 %v453, 4
    %v532 = vpop.permute.xlu0 %531
    %533 = vrot.lane.b32.xlu0 %v455, 4
    %v534 = vpop.permute.xlu0 %533
    %535 = vrot.lane.b32.xlu0 %v458, 4
    %v536 = vpop.permute.xlu0 %535
    %537 = vrot.lane.b32.xlu0 %v460, 4
    %v538 = vpop.permute.xlu0 %537
    %539 = vrot.lane.b32.xlu0 %v463, 4
    %v540 = vpop.permute.xlu0 %539
    %541 = vrot.lane.b32.xlu0 %v465, 4
    %v542 = vpop.permute.xlu0 %541
    %543 = vrot.lane.b32.xlu0 %v468, 4
    %v544 = vpop.permute.xlu0 %543
    %545 = vrot.lane.b32.xlu0 %v470, 4
    %v546 = vpop.permute.xlu0 %545
    %547 = vrot.lane.b32.xlu0 %v473, 4
    %v548 = vpop.permute.xlu0 %547
    %549 = vrot.lane.b32.xlu0 %v475, 4
    %v550 = vpop.permute.xlu0 %549
    %551 = vrot.lane.b32.xlu0 %v478, 4
    %v552 = vpop.permute.xlu0 %551
    %553 = vrot.lane.b32.xlu0 %v480, 4
    %v554 = vpop.permute.xlu0 %553
    %555 = vrot.lane.b32.xlu0 %v483, 4
    %v556 = vpop.permute.xlu0 %555
    %557 = vrot.lane.b32.xlu0 %v485, 4
    %v558 = vpop.permute.xlu0 %557
    %559 = vrot.lane.b32.xlu0 %v488, 4
    %v560 = vpop.permute.xlu0 %559
    %561 = vrot.lane.b32.xlu0 %v490, 4
    %v562 = vpop.permute.xlu0 %561
    %563 = vrot.lane.b32.xlu0 %v493, 4
    %v564 = vpop.permute.xlu0 %563
    %565 = vrot.lane.b32.xlu0 %v495, 4
    %v566 = vpop.permute.xlu0 %565
    %567 = vrot.lane.b32.xlu0 %v498, 4
    %v568 = vpop.permute.xlu0 %567
    %569 = vrot.lane.b32.xlu0 %v500, 4
    %v570 = vpop.permute.xlu0 %569
    %571 = vrot.lane.b32.xlu0 %v503, 4
    %v572 = vpop.permute.xlu0 %571
    %573 = vrot.lane.b32.xlu0 %v505, 4
    %v574 = vpop.permute.xlu0 %573
    %575 = vrot.lane.b32.xlu0 %v508, 4
    %v576 = vpop.permute.xlu0 %575
    %577 = vrot.lane.b32.xlu0 %v510, 4
    %v578 = vpop.permute.xlu0 %577
    %579 = vrot.lane.b32.xlu0 %v513, 4
    %v580 = vpop.permute.xlu0 %579
    %581 = vrot.lane.b32.xlu0 %v515, 4
    %v582 = vpop.permute.xlu0 %581
    %583 = vrot.lane.b32.xlu0 %v518, 4
    %v584 = vpop.permute.xlu0 %583
    %585 = vrot.lane.b32.xlu0 %v520, 4
    %v586 = vpop.permute.xlu0 %585
    %587 = vrot.lane.b32.xlu0 %v523, 4
    %v588 = vpop.permute.xlu0 %587
    %589 = vrot.lane.b32.xlu0 %v525, 4
    %v590 = vpop.permute.xlu0 %589
    %591 = vrot.lane.b32.xlu0 %v528, 4
    %v592 = vpop.permute.xlu0 %591
    %593 = vrot.lane.b32.xlu0 %v530, 4
    %v594 = vpop.permute.xlu0 %593
    %vm627 = vcmask 64544
    %628 = vst.msk [vmem:[#allocation3] sm:$0xff] %vm627, %v532
    %629 = vst.msk [vmem:[#allocation3 + $0x8] sm:$0xff] %vm627, %v534
    %630 = vst.msk [vmem:[#allocation3 + $0x10] sm:$0xff] %vm627, %v536
    %631 = vst.msk [vmem:[#allocation3 + $0x18] sm:$0xff] %vm627, %v538
    %632 = vst.msk [vmem:[#allocation3 + $0x20] sm:$0xff] %vm627, %v540
    %633 = vst.msk [vmem:[#allocation3 + $0x28] sm:$0xff] %vm627, %v542
    %634 = vst.msk [vmem:[#allocation3 + $0x30] sm:$0xff] %vm627, %v544
    %635 = vst.msk [vmem:[#allocation3 + $0x38] sm:$0xff] %vm627, %v546
    %636 = vst.msk [vmem:[#allocation3 + $0x40] sm:$0xff] %vm627, %v548
    %637 = vst.msk [vmem:[#allocation3 + $0x48] sm:$0xff] %vm627, %v550
    %638 = vst.msk [vmem:[#allocation3 + $0x50] sm:$0xff] %vm627, %v552
    %639 = vst.msk [vmem:[#allocation3 + $0x58] sm:$0xff] %vm627, %v554
    %640 = vst.msk [vmem:[#allocation3 + $0x60] sm:$0xff] %vm627, %v556
    %641 = vst.msk [vmem:[#allocation3 + $0x68] sm:$0xff] %vm627, %v558
    %642 = vst.msk [vmem:[#allocation3 + $0x70] sm:$0xff] %vm627, %v560
    %643 = vst.msk [vmem:[#allocation3 + $0x78] sm:$0xff] %vm627, %v562
    %644 = vst.msk [vmem:[#allocation3 + $0x80] sm:$0xff] %vm627, %v564
    %645 = vst.msk [vmem:[#allocation3 + $0x88] sm:$0xff] %vm627, %v566
    %646 = vst.msk [vmem:[#allocation3 + $0x90] sm:$0xff] %vm627, %v568
    %647 = vst.msk [vmem:[#allocation3 + $0x98] sm:$0xff] %vm627, %v570
    %648 = vst.msk [vmem:[#allocation3 + $0xa0] sm:$0xff] %vm627, %v572
    %649 = vst.msk [vmem:[#allocation3 + $0xa8] sm:$0xff] %vm627, %v574
    %650 = vst.msk [vmem:[#allocation3 + $0xb0] sm:$0xff] %vm627, %v576
    %651 = vst.msk [vmem:[#allocation3 + $0xb8] sm:$0xff] %vm627, %v578
    %652 = vst.msk [vmem:[#allocation3 + $0xc0] sm:$0xff] %vm627, %v580
    %653 = vst.msk [vmem:[#allocation3 + $0xc8] sm:$0xff] %vm627, %v582
    %654 = vst.msk [vmem:[#allocation3 + $0xd0] sm:$0xff] %vm627, %v584
    %655 = vst.msk [vmem:[#allocation3 + $0xd8] sm:$0xff] %vm627, %v586
    %656 = vst.msk [vmem:[#allocation3 + $0xe0] sm:$0xff] %vm627, %v588
    %657 = vst.msk [vmem:[#allocation3 + $0xe8] sm:$0xff] %vm627, %v590
    %658 = vst.msk [vmem:[#allocation3 + $0xf0] sm:$0xff] %vm627, %v592
    %659 = vst.msk [vmem:[#allocation3 + $0xf8] sm:$0xff] %vm627, %v594
    %vm660 = vcmask 1045504
    %v661 = vrot.slane %v316, 2
    %v662 = vrot.slane %v317, 2
    %v663 = vsel %vm660, %v661, %v662
    %v664 = vrot.slane %v318, 2
    %v665 = vsel %vm660, %v662, %v664
    %v666 = vrot.slane %v319, 2
    %v667 = vrot.slane %v320, 2
    %v668 = vsel %vm660, %v666, %v667
    %v669 = vrot.slane %v321, 2
    %v670 = vsel %vm660, %v667, %v669
    %v671 = vrot.slane %v322, 2
    %v672 = vrot.slane %v323, 2
    %v673 = vsel %vm660, %v671, %v672
    %v674 = vrot.slane %v324, 2
    %v675 = vsel %vm660, %v672, %v674
    %v676 = vrot.slane %v325, 2
    %v677 = vrot.slane %v326, 2
    %v678 = vsel %vm660, %v676, %v677
    %v679 = vrot.slane %v327, 2
    %v680 = vsel %vm660, %v677, %v679
    %v681 = vrot.slane %v328, 2
    %v682 = vrot.slane %v329, 2
    %v683 = vsel %vm660, %v681, %v682
    %v684 = vrot.slane %v330, 2
    %v685 = vsel %vm660, %v682, %v684
    %v686 = vrot.slane %v331, 2
    %v687 = vrot.slane %v332, 2
    %v688 = vsel %vm660, %v686, %v687
    %v689 = vrot.slane %v333, 2
    %v690 = vsel %vm660, %v687, %v689
    %v691 = vrot.slane %v334, 2
    %v692 = vrot.slane %v335, 2
    %v693 = vsel %vm660, %v691, %v692
    %v694 = vrot.slane %v336, 2
    %v695 = vsel %vm660, %v692, %v694
    %v696 = vrot.slane %v337, 2
    %v697 = vrot.slane %v338, 2
    %v698 = vsel %vm660, %v696, %v697
    %v699 = vrot.slane %v339, 2
    %v700 = vsel %vm660, %v697, %v699
    %v701 = vrot.slane %v340, 2
    %v702 = vrot.slane %v341, 2
    %v703 = vsel %vm660, %v701, %v702
    %v704 = vrot.slane %v342, 2
    %v705 = vsel %vm660, %v702, %v704
    %v706 = vrot.slane %v343, 2
    %v707 = vrot.slane %v344, 2
    %v708 = vsel %vm660, %v706, %v707
    %v709 = vrot.slane %v345, 2
    %v710 = vsel %vm660, %v707, %v709
    %v711 = vrot.slane %v346, 2
    %v712 = vrot.slane %v347, 2
    %v713 = vsel %vm660, %v711, %v712
    %v714 = vrot.slane %v348, 2
    %v715 = vsel %vm660, %v712, %v714
    %v716 = vrot.slane %v349, 2
    %v717 = vrot.slane %v350, 2
    %v718 = vsel %vm660, %v716, %v717
    %v719 = vrot.slane %v351, 2
    %v720 = vsel %vm660, %v717, %v719
    %v721 = vrot.slane %v352, 2
    %v722 = vrot.slane %v353, 2
    %v723 = vsel %vm660, %v721, %v722
    %v724 = vrot.slane %v354, 2
    %v725 = vsel %vm660, %v722, %v724
    %v726 = vrot.slane %v355, 2
    %v727 = vrot.slane %v356, 2
    %v728 = vsel %vm660, %v726, %v727
    %v729 = vrot.slane %v357, 2
    %v730 = vsel %vm660, %v727, %v729
    %v731 = vrot.slane %v358, 2
    %v732 = vrot.slane %v359, 2
    %v733 = vsel %vm660, %v731, %v732
    %v734 = vrot.slane %v360, 2
    %v735 = vsel %vm660, %v732, %v734
    %v736 = vrot.slane %v361, 2
    %v737 = vrot.slane %v362, 2
    %v738 = vsel %vm660, %v736, %v737
    %v739 = vrot.slane %v363, 2
    %v740 = vsel %vm660, %v737, %v739
    %741 = vrot.lane.b32.xlu0 %v663, 8
    %v742 = vpop.permute.xlu0 %741
    %743 = vrot.lane.b32.xlu0 %v665, 8
    %v744 = vpop.permute.xlu0 %743
    %745 = vrot.lane.b32.xlu0 %v668, 8
    %v746 = vpop.permute.xlu0 %745
    %747 = vrot.lane.b32.xlu0 %v670, 8
    %v748 = vpop.permute.xlu0 %747
    %749 = vrot.lane.b32.xlu0 %v673, 8
    %v750 = vpop.permute.xlu0 %749
    %751 = vrot.lane.b32.xlu0 %v675, 8
    %v752 = vpop.permute.xlu0 %751
    %753 = vrot.lane.b32.xlu0 %v678, 8
    %v754 = vpop.permute.xlu0 %753
    %755 = vrot.lane.b32.xlu0 %v680, 8
    %v756 = vpop.permute.xlu0 %755
    %757 = vrot.lane.b32.xlu0 %v683, 8
    %v758 = vpop.permute.xlu0 %757
    %759 = vrot.lane.b32.xlu0 %v685, 8
    %v760 = vpop.permute.xlu0 %759
    %761 = vrot.lane.b32.xlu0 %v688, 8
    %v762 = vpop.permute.xlu0 %761
    %763 = vrot.lane.b32.xlu0 %v690, 8
    %v764 = vpop.permute.xlu0 %763
    %765 = vrot.lane.b32.xlu0 %v693, 8
    %v766 = vpop.permute.xlu0 %765
    %767 = vrot.lane.b32.xlu0 %v695, 8
    %v768 = vpop.permute.xlu0 %767
    %769 = vrot.lane.b32.xlu0 %v698, 8
    %v770 = vpop.permute.xlu0 %769
    %771 = vrot.lane.b32.xlu0 %v700, 8
    %v772 = vpop.permute.xlu0 %771
    %773 = vrot.lane.b32.xlu0 %v703, 8
    %v774 = vpop.permute.xlu0 %773
    %775 = vrot.lane.b32.xlu0 %v705, 8
    %v776 = vpop.permute.xlu0 %775
    %777 = vrot.lane.b32.xlu0 %v708, 8
    %v778 = vpop.permute.xlu0 %777
    %779 = vrot.lane.b32.xlu0 %v710, 8
    %v780 = vpop.permute.xlu0 %779
    %781 = vrot.lane.b32.xlu0 %v713, 8
    %v782 = vpop.permute.xlu0 %781
    %783 = vrot.lane.b32.xlu0 %v715, 8
    %v784 = vpop.permute.xlu0 %783
    %785 = vrot.lane.b32.xlu0 %v718, 8
    %v786 = vpop.permute.xlu0 %785
    %787 = vrot.lane.b32.xlu0 %v720, 8
    %v788 = vpop.permute.xlu0 %787
    %789 = vrot.lane.b32.xlu0 %v723, 8
    %v790 = vpop.permute.xlu0 %789
    %791 = vrot.lane.b32.xlu0 %v725, 8
    %v792 = vpop.permute.xlu0 %791
    %793 = vrot.lane.b32.xlu0 %v728, 8
    %v794 = vpop.permute.xlu0 %793
    %795 = vrot.lane.b32.xlu0 %v730, 8
    %v796 = vpop.permute.xlu0 %795
    %797 = vrot.lane.b32.xlu0 %v733, 8
    %v798 = vpop.permute.xlu0 %797
    %799 = vrot.lane.b32.xlu0 %v735, 8
    %v800 = vpop.permute.xlu0 %799
    %801 = vrot.lane.b32.xlu0 %v738, 8
    %v802 = vpop.permute.xlu0 %801
    %803 = vrot.lane.b32.xlu0 %v740, 8
    %v804 = vpop.permute.xlu0 %803
    %vm837 = vcmask 97344
    %838 = vst.msk [vmem:[#allocation3] sm:$0xff] %vm837, %v742
    %839 = vst.msk [vmem:[#allocation3 + $0x8] sm:$0xff] %vm837, %v744
    %840 = vst.msk [vmem:[#allocation3 + $0x10] sm:$0xff] %vm837, %v746
    %841 = vst.msk [vmem:[#allocation3 + $0x18] sm:$0xff] %vm837, %v748
    %842 = vst.msk [vmem:[#allocation3 + $0x20] sm:$0xff] %vm837, %v750
    %843 = vst.msk [vmem:[#allocation3 + $0x28] sm:$0xff] %vm837, %v752
    %844 = vst.msk [vmem:[#allocation3 + $0x30] sm:$0xff] %vm837, %v754
    %845 = vst.msk [vmem:[#allocation3 + $0x38] sm:$0xff] %vm837, %v756
    %846 = vst.msk [vmem:[#allocation3 + $0x40] sm:$0xff] %vm837, %v758
    %847 = vst.msk [vmem:[#allocation3 + $0x48] sm:$0xff] %vm837, %v760
    %848 = vst.msk [vmem:[#allocation3 + $0x50] sm:$0xff] %vm837, %v762
    %849 = vst.msk [vmem:[#allocation3 + $0x58] sm:$0xff] %vm837, %v764
    %850 = vst.msk [vmem:[#allocation3 + $0x60] sm:$0xff] %vm837, %v766
    %851 = vst.msk [vmem:[#allocation3 + $0x68] sm:$0xff] %vm837, %v768
    %852 = vst.msk [vmem:[#allocation3 + $0x70] sm:$0xff] %vm837, %v770
    %853 = vst.msk [vmem:[#allocation3 + $0x78] sm:$0xff] %vm837, %v772
    %854 = vst.msk [vmem:[#allocation3 + $0x80] sm:$0xff] %vm837, %v774
    %855 = vst.msk [vmem:[#allocation3 + $0x88] sm:$0xff] %vm837, %v776
    %856 = vst.msk [vmem:[#allocation3 + $0x90] sm:$0xff] %vm837, %v778
    %857 = vst.msk [vmem:[#allocation3 + $0x98] sm:$0xff] %vm837, %v780
    %858 = vst.msk [vmem:[#allocation3 + $0xa0] sm:$0xff] %vm837, %v782
    %859 = vst.msk [vmem:[#allocation3 + $0xa8] sm:$0xff] %vm837, %v784
    %860 = vst.msk [vmem:[#allocation3 + $0xb0] sm:$0xff] %vm837, %v786
    %861 = vst.msk [vmem:[#allocation3 + $0xb8] sm:$0xff] %vm837, %v788
    %862 = vst.msk [vmem:[#allocation3 + $0xc0] sm:$0xff] %vm837, %v790
    %863 = vst.msk [vmem:[#allocation3 + $0xc8] sm:$0xff] %vm837, %v792
    %864 = vst.msk [vmem:[#allocation3 + $0xd0] sm:$0xff] %vm837, %v794
    %865 = vst.msk [vmem:[#allocation3 + $0xd8] sm:$0xff] %vm837, %v796
    %866 = vst.msk [vmem:[#allocation3 + $0xe0] sm:$0xff] %vm837, %v798
    %867 = vst.msk [vmem:[#allocation3 + $0xe8] sm:$0xff] %vm837, %v800
    %868 = vst.msk [vmem:[#allocation3 + $0xf0] sm:$0xff] %vm837, %v802
    %869 = vst.msk [vmem:[#allocation3 + $0xf8] sm:$0xff] %vm837, %v804
    %872 = vrot.lane.b32.xlu0 %v319, 12
    %v873 = vpop.permute.xlu0 %872
    %874 = vrot.lane.b32.xlu0 %v320, 12
    %v875 = vpop.permute.xlu0 %874
    %876 = vrot.lane.b32.xlu0 %v322, 12
    %v877 = vpop.permute.xlu0 %876
    %878 = vrot.lane.b32.xlu0 %v323, 12
    %v879 = vpop.permute.xlu0 %878
    %880 = vrot.lane.b32.xlu0 %v325, 12
    %v881 = vpop.permute.xlu0 %880
    %882 = vrot.lane.b32.xlu0 %v326, 12
    %v883 = vpop.permute.xlu0 %882
    %884 = vrot.lane.b32.xlu0 %v328, 12
    %v885 = vpop.permute.xlu0 %884
    %886 = vrot.lane.b32.xlu0 %v329, 12
    %v887 = vpop.permute.xlu0 %886
    %888 = vrot.lane.b32.xlu0 %v331, 12
    %v889 = vpop.permute.xlu0 %888
    %890 = vrot.lane.b32.xlu0 %v332, 12
    %v891 = vpop.permute.xlu0 %890
    %892 = vrot.lane.b32.xlu0 %v334, 12
    %v893 = vpop.permute.xlu0 %892
    %894 = vrot.lane.b32.xlu0 %v335, 12
    %v895 = vpop.permute.xlu0 %894
    %896 = vrot.lane.b32.xlu0 %v337, 12
    %v897 = vpop.permute.xlu0 %896
    %898 = vrot.lane.b32.xlu0 %v338, 12
    %v899 = vpop.permute.xlu0 %898
    %900 = vrot.lane.b32.xlu0 %v340, 12
    %v901 = vpop.permute.xlu0 %900
    %902 = vrot.lane.b32.xlu0 %v341, 12
    %v903 = vpop.permute.xlu0 %902
    %904 = vrot.lane.b32.xlu0 %v343, 12
    %v905 = vpop.permute.xlu0 %904
    %906 = vrot.lane.b32.xlu0 %v344, 12
    %v907 = vpop.permute.xlu0 %906
    %908 = vrot.lane.b32.xlu0 %v346, 12
    %v909 = vpop.permute.xlu0 %908
    %910 = vrot.lane.b32.xlu0 %v347, 12
    %v911 = vpop.permute.xlu0 %910
    %912 = vrot.lane.b32.xlu0 %v349, 12
    %v913 = vpop.permute.xlu0 %912
    %914 = vrot.lane.b32.xlu0 %v350, 12
    %v915 = vpop.permute.xlu0 %914
    %916 = vrot.lane.b32.xlu0 %v352, 12
    %v917 = vpop.permute.xlu0 %916
    %918 = vrot.lane.b32.xlu0 %v353, 12
    %v919 = vpop.permute.xlu0 %918
    %920 = vrot.lane.b32.xlu0 %v355, 12
    %v921 = vpop.permute.xlu0 %920
    %922 = vrot.lane.b32.xlu0 %v356, 12
    %v923 = vpop.permute.xlu0 %922
    %924 = vrot.lane.b32.xlu0 %v358, 12
    %v925 = vpop.permute.xlu0 %924
    %926 = vrot.lane.b32.xlu0 %v359, 12
    %v927 = vpop.permute.xlu0 %926
    %928 = vrot.lane.b32.xlu0 %v361, 12
    %v929 = vpop.permute.xlu0 %928
    %930 = vrot.lane.b32.xlu0 %v362, 12
    %v931 = vpop.permute.xlu0 %930
    %932 = vrot.lane.b32.xlu0 %v364, 12
    %v933 = vpop.permute.xlu0 %932
    %934 = vrot.lane.b32.xlu0 %v365, 12
    %v935 = vpop.permute.xlu0 %934
    %vm968 = vcmask 130144
    %969 = vst.msk [vmem:[#allocation3] sm:$0xff] %vm968, %v873
    %970 = vst.msk [vmem:[#allocation3 + $0x8] sm:$0xff] %vm968, %v875
    %971 = vst.msk [vmem:[#allocation3 + $0x10] sm:$0xff] %vm968, %v877
    %972 = vst.msk [vmem:[#allocation3 + $0x18] sm:$0xff] %vm968, %v879
    %973 = vst.msk [vmem:[#allocation3 + $0x20] sm:$0xff] %vm968, %v881
    %974 = vst.msk [vmem:[#allocation3 + $0x28] sm:$0xff] %vm968, %v883
    %975 = vst.msk [vmem:[#allocation3 + $0x30] sm:$0xff] %vm968, %v885
    %976 = vst.msk [vmem:[#allocation3 + $0x38] sm:$0xff] %vm968, %v887
    %977 = vst.msk [vmem:[#allocation3 + $0x40] sm:$0xff] %vm968, %v889
    %978 = vst.msk [vmem:[#allocation3 + $0x48] sm:$0xff] %vm968, %v891
    %979 = vst.msk [vmem:[#allocation3 + $0x50] sm:$0xff] %vm968, %v893
    %980 = vst.msk [vmem:[#allocation3 + $0x58] sm:$0xff] %vm968, %v895
    %981 = vst.msk [vmem:[#allocation3 + $0x60] sm:$0xff] %vm968, %v897
    %982 = vst.msk [vmem:[#allocation3 + $0x68] sm:$0xff] %vm968, %v899
    %983 = vst.msk [vmem:[#allocation3 + $0x70] sm:$0xff] %vm968, %v901
    %984 = vst.msk [vmem:[#allocation3 + $0x78] sm:$0xff] %vm968, %v903
    %985 = vst.msk [vmem:[#allocation3 + $0x80] sm:$0xff] %vm968, %v905
    %986 = vst.msk [vmem:[#allocation3 + $0x88] sm:$0xff] %vm968, %v907
    %987 = vst.msk [vmem:[#allocation3 + $0x90] sm:$0xff] %vm968, %v909
    %988 = vst.msk [vmem:[#allocation3 + $0x98] sm:$0xff] %vm968, %v911
    %989 = vst.msk [vmem:[#allocation3 + $0xa0] sm:$0xff] %vm968, %v913
    %990 = vst.msk [vmem:[#allocation3 + $0xa8] sm:$0xff] %vm968, %v915
    %991 = vst.msk [vmem:[#allocation3 + $0xb0] sm:$0xff] %vm968, %v917
    %992 = vst.msk [vmem:[#allocation3 + $0xb8] sm:$0xff] %vm968, %v919
    %993 = vst.msk [vmem:[#allocation3 + $0xc0] sm:$0xff] %vm968, %v921
    %994 = vst.msk [vmem:[#allocation3 + $0xc8] sm:$0xff] %vm968, %v923
    %995 = vst.msk [vmem:[#allocation3 + $0xd0] sm:$0xff] %vm968, %v925
    %996 = vst.msk [vmem:[#allocation3 + $0xd8] sm:$0xff] %vm968, %v927
    %997 = vst.msk [vmem:[#allocation3 + $0xe0] sm:$0xff] %vm968, %v929
    %998 = vst.msk [vmem:[#allocation3 + $0xe8] sm:$0xff] %vm968, %v931
    %999 = vst.msk [vmem:[#allocation3 + $0xf0] sm:$0xff] %vm968, %v933
    %1000 = vst.msk [vmem:[#allocation3 + $0xf8] sm:$0xff] %vm968, %v935
    %v1002 = vrot.slane %v364, 1
    %v1003 = vrot.slane %v365, 1
    %v1004 = vsel %vm450, %v1002, %v1003
    %v1005 = vrot.slane %v366, 1
    %v1006 = vsel %vm450, %v1003, %v1005
    %1007 = vrot.lane.b32.xlu0 %v458, 16
    %v1008 = vpop.permute.xlu0 %1007
    %1009 = vrot.lane.b32.xlu0 %v460, 16
    %v1010 = vpop.permute.xlu0 %1009
    %1011 = vrot.lane.b32.xlu0 %v463, 16
    %v1012 = vpop.permute.xlu0 %1011
    %1013 = vrot.lane.b32.xlu0 %v465, 16
    %v1014 = vpop.permute.xlu0 %1013
    %1015 = vrot.lane.b32.xlu0 %v468, 16
    %v1016 = vpop.permute.xlu0 %1015
    %1017 = vrot.lane.b32.xlu0 %v470, 16
    %v1018 = vpop.permute.xlu0 %1017
    %1019 = vrot.lane.b32.xlu0 %v473, 16
    %v1020 = vpop.permute.xlu0 %1019
    %1021 = vrot.lane.b32.xlu0 %v475, 16
    %v1022 = vpop.permute.xlu0 %1021
    %1023 = vrot.lane.b32.xlu0 %v478, 16
    %v1024 = vpop.permute.xlu0 %1023
    %1025 = vrot.lane.b32.xlu0 %v480, 16
    %v1026 = vpop.permute.xlu0 %1025
    %1027 = vrot.lane.b32.xlu0 %v483, 16
    %v1028 = vpop.permute.xlu0 %1027
    %1029 = vrot.lane.b32.xlu0 %v485, 16
    %v1030 = vpop.permute.xlu0 %1029
    %1031 = vrot.lane.b32.xlu0 %v488, 16
    %v1032 = vpop.permute.xlu0 %1031
    %1033 = vrot.lane.b32.xlu0 %v490, 16
    %v1034 = vpop.permute.xlu0 %1033
    %1035 = vrot.lane.b32.xlu0 %v493, 16
    %v1036 = vpop.permute.xlu0 %1035
    %1037 = vrot.lane.b32.xlu0 %v495, 16
    %v1038 = vpop.permute.xlu0 %1037
    %1039 = vrot.lane.b32.xlu0 %v498, 16
    %v1040 = vpop.permute.xlu0 %1039
    %1041 = vrot.lane.b32.xlu0 %v500, 16
    %v1042 = vpop.permute.xlu0 %1041
    %1043 = vrot.lane.b32.xlu0 %v503, 16
    %v1044 = vpop.permute.xlu0 %1043
    %1045 = vrot.lane.b32.xlu0 %v505, 16
    %v1046 = vpop.permute.xlu0 %1045
    %1047 = vrot.lane.b32.xlu0 %v508, 16
    %v1048 = vpop.permute.xlu0 %1047
    %1049 = vrot.lane.b32.xlu0 %v510, 16
    %v1050 = vpop.permute.xlu0 %1049
    %1051 = vrot.lane.b32.xlu0 %v513, 16
    %v1052 = vpop.permute.xlu0 %1051
    %1053 = vrot.lane.b32.xlu0 %v515, 16
    %v1054 = vpop.permute.xlu0 %1053
    %1055 = vrot.lane.b32.xlu0 %v518, 16
    %v1056 = vpop.permute.xlu0 %1055
    %1057 = vrot.lane.b32.xlu0 %v520, 16
    %v1058 = vpop.permute.xlu0 %1057
    %1059 = vrot.lane.b32.xlu0 %v523, 16
    %v1060 = vpop.permute.xlu0 %1059
    %1061 = vrot.lane.b32.xlu0 %v525, 16
    %v1062 = vpop.permute.xlu0 %1061
    %1063 = vrot.lane.b32.xlu0 %v528, 16
    %v1064 = vpop.permute.xlu0 %1063
    %1065 = vrot.lane.b32.xlu0 %v530, 16
    %v1066 = vpop.permute.xlu0 %1065
    %1067 = vrot.lane.b32.xlu0 %v1004, 16
    %v1068 = vpop.permute.xlu0 %1067
    %1069 = vrot.lane.b32.xlu0 %v1006, 16
    %v1070 = vpop.permute.xlu0 %1069
    %vm1103 = vcmask 162944
    %1104 = vst.msk [vmem:[#allocation3] sm:$0xff] %vm1103, %v1008
    %1105 = vst.msk [vmem:[#allocation3 + $0x8] sm:$0xff] %vm1103, %v1010
    %1106 = vst.msk [vmem:[#allocation3 + $0x10] sm:$0xff] %vm1103, %v1012
    %1107 = vst.msk [vmem:[#allocation3 + $0x18] sm:$0xff] %vm1103, %v1014
    %1108 = vst.msk [vmem:[#allocation3 + $0x20] sm:$0xff] %vm1103, %v1016
    %1109 = vst.msk [vmem:[#allocation3 + $0x28] sm:$0xff] %vm1103, %v1018
    %1110 = vst.msk [vmem:[#allocation3 + $0x30] sm:$0xff] %vm1103, %v1020
    %1111 = vst.msk [vmem:[#allocation3 + $0x38] sm:$0xff] %vm1103, %v1022
    %1112 = vst.msk [vmem:[#allocation3 + $0x40] sm:$0xff] %vm1103, %v1024
    %1113 = vst.msk [vmem:[#allocation3 + $0x48] sm:$0xff] %vm1103, %v1026
    %1114 = vst.msk [vmem:[#allocation3 + $0x50] sm:$0xff] %vm1103, %v1028
    %1115 = vst.msk [vmem:[#allocation3 + $0x58] sm:$0xff] %vm1103, %v1030
    %1116 = vst.msk [vmem:[#allocation3 + $0x60] sm:$0xff] %vm1103, %v1032
    %1117 = vst.msk [vmem:[#allocation3 + $0x68] sm:$0xff] %vm1103, %v1034
    %1118 = vst.msk [vmem:[#allocation3 + $0x70] sm:$0xff] %vm1103, %v1036
    %1119 = vst.msk [vmem:[#allocation3 + $0x78] sm:$0xff] %vm1103, %v1038
    %1120 = vst.msk [vmem:[#allocation3 + $0x80] sm:$0xff] %vm1103, %v1040
    %1121 = vst.msk [vmem:[#allocation3 + $0x88] sm:$0xff] %vm1103, %v1042
    %1122 = vst.msk [vmem:[#allocation3 + $0x90] sm:$0xff] %vm1103, %v1044
    %1123 = vst.msk [vmem:[#allocation3 + $0x98] sm:$0xff] %vm1103, %v1046
    %1124 = vst.msk [vmem:[#allocation3 + $0xa0] sm:$0xff] %vm1103, %v1048
    %1125 = vst.msk [vmem:[#allocation3 + $0xa8] sm:$0xff] %vm1103, %v1050
    %1126 = vst.msk [vmem:[#allocation3 + $0xb0] sm:$0xff] %vm1103, %v1052
    %1127 = vst.msk [vmem:[#allocation3 + $0xb8] sm:$0xff] %vm1103, %v1054
    %1128 = vst.msk [vmem:[#allocation3 + $0xc0] sm:$0xff] %vm1103, %v1056
    %1129 = vst.msk [vmem:[#allocation3 + $0xc8] sm:$0xff] %vm1103, %v1058
    %1130 = vst.msk [vmem:[#allocation3 + $0xd0] sm:$0xff] %vm1103, %v1060
    %1131 = vst.msk [vmem:[#allocation3 + $0xd8] sm:$0xff] %vm1103, %v1062
    %1132 = vst.msk [vmem:[#allocation3 + $0xe0] sm:$0xff] %vm1103, %v1064
    %1133 = vst.msk [vmem:[#allocation3 + $0xe8] sm:$0xff] %vm1103, %v1066
    %1134 = vst.msk [vmem:[#allocation3 + $0xf0] sm:$0xff] %vm1103, %v1068
    %1135 = vst.msk [vmem:[#allocation3 + $0xf8] sm:$0xff] %vm1103, %v1070
    %v1136 = vrot.slane %v364, 2
    %v1137 = vrot.slane %v365, 2
    %v1138 = vsel %vm660, %v1136, %v1137
    %v1139 = vrot.slane %v366, 2
    %v1140 = vsel %vm660, %v1137, %v1139
    %1141 = vrot.lane.b32.xlu0 %v668, 20
    %v1142 = vpop.permute.xlu0 %1141
    %1143 = vrot.lane.b32.xlu0 %v670, 20
    %v1144 = vpop.permute.xlu0 %1143
    %1145 = vrot.lane.b32.xlu0 %v673, 20
    %v1146 = vpop.permute.xlu0 %1145
    %1147 = vrot.lane.b32.xlu0 %v675, 20
    %v1148 = vpop.permute.xlu0 %1147
    %1149 = vrot.lane.b32.xlu0 %v678, 20
    %v1150 = vpop.permute.xlu0 %1149
    %1151 = vrot.lane.b32.xlu0 %v680, 20
    %v1152 = vpop.permute.xlu0 %1151
    %1153 = vrot.lane.b32.xlu0 %v683, 20
    %v1154 = vpop.permute.xlu0 %1153
    %1155 = vrot.lane.b32.xlu0 %v685, 20
    %v1156 = vpop.permute.xlu0 %1155
    %1157 = vrot.lane.b32.xlu0 %v688, 20
    %v1158 = vpop.permute.xlu0 %1157
    %1159 = vrot.lane.b32.xlu0 %v690, 20
    %v1160 = vpop.permute.xlu0 %1159
    %1161 = vrot.lane.b32.xlu0 %v693, 20
    %v1162 = vpop.permute.xlu0 %1161
    %1163 = vrot.lane.b32.xlu0 %v695, 20
    %v1164 = vpop.permute.xlu0 %1163
    %1165 = vrot.lane.b32.xlu0 %v698, 20
    %v1166 = vpop.permute.xlu0 %1165
    %1167 = vrot.lane.b32.xlu0 %v700, 20
    %v1168 = vpop.permute.xlu0 %1167
    %1169 = vrot.lane.b32.xlu0 %v703, 20
    %v1170 = vpop.permute.xlu0 %1169
    %1171 = vrot.lane.b32.xlu0 %v705, 20
    %v1172 = vpop.permute.xlu0 %1171
    %1173 = vrot.lane.b32.xlu0 %v708, 20
    %v1174 = vpop.permute.xlu0 %1173
    %1175 = vrot.lane.b32.xlu0 %v710, 20
    %v1176 = vpop.permute.xlu0 %1175
    %1177 = vrot.lane.b32.xlu0 %v713, 20
    %v1178 = vpop.permute.xlu0 %1177
    %1179 = vrot.lane.b32.xlu0 %v715, 20
    %v1180 = vpop.permute.xlu0 %1179
    %1181 = vrot.lane.b32.xlu0 %v718, 20
    %v1182 = vpop.permute.xlu0 %1181
    %1183 = vrot.lane.b32.xlu0 %v720, 20
    %v1184 = vpop.permute.xlu0 %1183
    %1185 = vrot.lane.b32.xlu0 %v723, 20
    %v1186 = vpop.permute.xlu0 %1185
    %1187 = vrot.lane.b32.xlu0 %v725, 20
    %v1188 = vpop.permute.xlu0 %1187
    %1189 = vrot.lane.b32.xlu0 %v728, 20
    %v1190 = vpop.permute.xlu0 %1189
    %1191 = vrot.lane.b32.xlu0 %v730, 20
    %v1192 = vpop.permute.xlu0 %1191
    %1193 = vrot.lane.b32.xlu0 %v733, 20
    %v1194 = vpop.permute.xlu0 %1193
    %1195 = vrot.lane.b32.xlu0 %v735, 20
    %v1196 = vpop.permute.xlu0 %1195
    %1197 = vrot.lane.b32.xlu0 %v738, 20
    %v1198 = vpop.permute.xlu0 %1197
    %1199 = vrot.lane.b32.xlu0 %v740, 20
    %v1200 = vpop.permute.xlu0 %1199
    %1201 = vrot.lane.b32.xlu0 %v1138, 20
    %v1202 = vpop.permute.xlu0 %1201
    %1203 = vrot.lane.b32.xlu0 %v1140, 20
    %v1204 = vpop.permute.xlu0 %1203
    %vm1237 = vcmask 195744
    %1238 = vst.msk [vmem:[#allocation3] sm:$0xff] %vm1237, %v1142
    %1239 = vst.msk [vmem:[#allocation3 + $0x8] sm:$0xff] %vm1237, %v1144
    %1240 = vst.msk [vmem:[#allocation3 + $0x10] sm:$0xff] %vm1237, %v1146
    %1241 = vst.msk [vmem:[#allocation3 + $0x18] sm:$0xff] %vm1237, %v1148
    %1242 = vst.msk [vmem:[#allocation3 + $0x20] sm:$0xff] %vm1237, %v1150
    %1243 = vst.msk [vmem:[#allocation3 + $0x28] sm:$0xff] %vm1237, %v1152
    %1244 = vst.msk [vmem:[#allocation3 + $0x30] sm:$0xff] %vm1237, %v1154
    %1245 = vst.msk [vmem:[#allocation3 + $0x38] sm:$0xff] %vm1237, %v1156
    %1246 = vst.msk [vmem:[#allocation3 + $0x40] sm:$0xff] %vm1237, %v1158
    %1247 = vst.msk [vmem:[#allocation3 + $0x48] sm:$0xff] %vm1237, %v1160
    %1248 = vst.msk [vmem:[#allocation3 + $0x50] sm:$0xff] %vm1237, %v1162
    %1249 = vst.msk [vmem:[#allocation3 + $0x58] sm:$0xff] %vm1237, %v1164
    %1250 = vst.msk [vmem:[#allocation3 + $0x60] sm:$0xff] %vm1237, %v1166
    %1251 = vst.msk [vmem:[#allocation3 + $0x68] sm:$0xff] %vm1237, %v1168
    %1252 = vst.msk [vmem:[#allocation3 + $0x70] sm:$0xff] %vm1237, %v1170
    %1253 = vst.msk [vmem:[#allocation3 + $0x78] sm:$0xff] %vm1237, %v1172
    %1254 = vst.msk [vmem:[#allocation3 + $0x80] sm:$0xff] %vm1237, %v1174
    %1255 = vst.msk [vmem:[#allocation3 + $0x88] sm:$0xff] %vm1237, %v1176
    %1256 = vst.msk [vmem:[#allocation3 + $0x90] sm:$0xff] %vm1237, %v1178
    %1257 = vst.msk [vmem:[#allocation3 + $0x98] sm:$0xff] %vm1237, %v1180
    %1258 = vst.msk [vmem:[#allocation3 + $0xa0] sm:$0xff] %vm1237, %v1182
    %1259 = vst.msk [vmem:[#allocation3 + $0xa8] sm:$0xff] %vm1237, %v1184
    %1260 = vst.msk [vmem:[#allocation3 + $0xb0] sm:$0xff] %vm1237, %v1186
    %1261 = vst.msk [vmem:[#allocation3 + $0xb8] sm:$0xff] %vm1237, %v1188
    %1262 = vst.msk [vmem:[#allocation3 + $0xc0] sm:$0xff] %vm1237, %v1190
    %1263 = vst.msk [vmem:[#allocation3 + $0xc8] sm:$0xff] %vm1237, %v1192
    %1264 = vst.msk [vmem:[#allocation3 + $0xd0] sm:$0xff] %vm1237, %v1194
    %1265 = vst.msk [vmem:[#allocation3 + $0xd8] sm:$0xff] %vm1237, %v1196
    %1266 = vst.msk [vmem:[#allocation3 + $0xe0] sm:$0xff] %vm1237, %v1198
    %1267 = vst.msk [vmem:[#allocation3 + $0xe8] sm:$0xff] %vm1237, %v1200
    %1268 = vst.msk [vmem:[#allocation3 + $0xf0] sm:$0xff] %vm1237, %v1202
    %1269 = vst.msk [vmem:[#allocation3 + $0xf8] sm:$0xff] %vm1237, %v1204
    %1272 = vrot.lane.b32.xlu0 %v322, 24
    %v1273 = vpop.permute.xlu0 %1272
    %1274 = vrot.lane.b32.xlu0 %v323, 24
    %v1275 = vpop.permute.xlu0 %1274
    %1276 = vrot.lane.b32.xlu0 %v325, 24
    %v1277 = vpop.permute.xlu0 %1276
    %1278 = vrot.lane.b32.xlu0 %v326, 24
    %v1279 = vpop.permute.xlu0 %1278
    %1280 = vrot.lane.b32.xlu0 %v328, 24
    %v1281 = vpop.permute.xlu0 %1280
    %1282 = vrot.lane.b32.xlu0 %v329, 24
    %v1283 = vpop.permute.xlu0 %1282
    %1284 = vrot.lane.b32.xlu0 %v331, 24
    %v1285 = vpop.permute.xlu0 %1284
    %1286 = vrot.lane.b32.xlu0 %v332, 24
    %v1287 = vpop.permute.xlu0 %1286
    %1288 = vrot.lane.b32.xlu0 %v334, 24
    %v1289 = vpop.permute.xlu0 %1288
    %1290 = vrot.lane.b32.xlu0 %v335, 24
    %v1291 = vpop.permute.xlu0 %1290
    %1292 = vrot.lane.b32.xlu0 %v337, 24
    %v1293 = vpop.permute.xlu0 %1292
    %1294 = vrot.lane.b32.xlu0 %v338, 24
    %v1295 = vpop.permute.xlu0 %1294
    %1296 = vrot.lane.b32.xlu0 %v340, 24
    %v1297 = vpop.permute.xlu0 %1296
    %1298 = vrot.lane.b32.xlu0 %v341, 24
    %v1299 = vpop.permute.xlu0 %1298
    %1300 = vrot.lane.b32.xlu0 %v343, 24
    %v1301 = vpop.permute.xlu0 %1300
    %1302 = vrot.lane.b32.xlu0 %v344, 24
    %v1303 = vpop.permute.xlu0 %1302
    %1304 = vrot.lane.b32.xlu0 %v346, 24
    %v1305 = vpop.permute.xlu0 %1304
    %1306 = vrot.lane.b32.xlu0 %v347, 24
    %v1307 = vpop.permute.xlu0 %1306
    %1308 = vrot.lane.b32.xlu0 %v349, 24
    %v1309 = vpop.permute.xlu0 %1308
    %1310 = vrot.lane.b32.xlu0 %v350, 24
    %v1311 = vpop.permute.xlu0 %1310
    %1312 = vrot.lane.b32.xlu0 %v352, 24
    %v1313 = vpop.permute.xlu0 %1312
    %1314 = vrot.lane.b32.xlu0 %v353, 24
    %v1315 = vpop.permute.xlu0 %1314
    %1316 = vrot.lane.b32.xlu0 %v355, 24
    %v1317 = vpop.permute.xlu0 %1316
    %1318 = vrot.lane.b32.xlu0 %v356, 24
    %v1319 = vpop.permute.xlu0 %1318
    %1320 = vrot.lane.b32.xlu0 %v358, 24
    %v1321 = vpop.permute.xlu0 %1320
    %1322 = vrot.lane.b32.xlu0 %v359, 24
    %v1323 = vpop.permute.xlu0 %1322
    %1324 = vrot.lane.b32.xlu0 %v361, 24
    %v1325 = vpop.permute.xlu0 %1324
    %1326 = vrot.lane.b32.xlu0 %v362, 24
    %v1327 = vpop.permute.xlu0 %1326
    %1328 = vrot.lane.b32.xlu0 %v364, 24
    %v1329 = vpop.permute.xlu0 %1328
    %1330 = vrot.lane.b32.xlu0 %v365, 24
    %v1331 = vpop.permute.xlu0 %1330
    %1332 = vrot.lane.b32.xlu0 %v367, 24
    %v1333 = vpop.permute.xlu0 %1332
    %1334 = vrot.lane.b32.xlu0 %v368, 24
    %v1335 = vpop.permute.xlu0 %1334
    %vm1368 = vcmask 228544
    %1369 = vst.msk [vmem:[#allocation3] sm:$0xff] %vm1368, %v1273
    %1370 = vst.msk [vmem:[#allocation3 + $0x8] sm:$0xff] %vm1368, %v1275
    %1371 = vst.msk [vmem:[#allocation3 + $0x10] sm:$0xff] %vm1368, %v1277
    %1372 = vst.msk [vmem:[#allocation3 + $0x18] sm:$0xff] %vm1368, %v1279
    %1373 = vst.msk [vmem:[#allocation3 + $0x20] sm:$0xff] %vm1368, %v1281
    %1374 = vst.msk [vmem:[#allocation3 + $0x28] sm:$0xff] %vm1368, %v1283
    %1375 = vst.msk [vmem:[#allocation3 + $0x30] sm:$0xff] %vm1368, %v1285
    %1376 = vst.msk [vmem:[#allocation3 + $0x38] sm:$0xff] %vm1368, %v1287
    %1377 = vst.msk [vmem:[#allocation3 + $0x40] sm:$0xff] %vm1368, %v1289
    %1378 = vst.msk [vmem:[#allocation3 + $0x48] sm:$0xff] %vm1368, %v1291
    %1379 = vst.msk [vmem:[#allocation3 + $0x50] sm:$0xff] %vm1368, %v1293
    %1380 = vst.msk [vmem:[#allocation3 + $0x58] sm:$0xff] %vm1368, %v1295
    %1381 = vst.msk [vmem:[#allocation3 + $0x60] sm:$0xff] %vm1368, %v1297
    %1382 = vst.msk [vmem:[#allocation3 + $0x68] sm:$0xff] %vm1368, %v1299
    %1383 = vst.msk [vmem:[#allocation3 + $0x70] sm:$0xff] %vm1368, %v1301
    %1384 = vst.msk [vmem:[#allocation3 + $0x78] sm:$0xff] %vm1368, %v1303
    %1385 = vst.msk [vmem:[#allocation3 + $0x80] sm:$0xff] %vm1368, %v1305
    %1386 = vst.msk [vmem:[#allocation3 + $0x88] sm:$0xff] %vm1368, %v1307
    %1387 = vst.msk [vmem:[#allocation3 + $0x90] sm:$0xff] %vm1368, %v1309
    %1388 = vst.msk [vmem:[#allocation3 + $0x98] sm:$0xff] %vm1368, %v1311
    %1389 = vst.msk [vmem:[#allocation3 + $0xa0] sm:$0xff] %vm1368, %v1313
    %1390 = vst.msk [vmem:[#allocation3 + $0xa8] sm:$0xff] %vm1368, %v1315
    %1391 = vst.msk [vmem:[#allocation3 + $0xb0] sm:$0xff] %vm1368, %v1317
    %1392 = vst.msk [vmem:[#allocation3 + $0xb8] sm:$0xff] %vm1368, %v1319
    %1393 = vst.msk [vmem:[#allocation3 + $0xc0] sm:$0xff] %vm1368, %v1321
    %1394 = vst.msk [vmem:[#allocation3 + $0xc8] sm:$0xff] %vm1368, %v1323
    %1395 = vst.msk [vmem:[#allocation3 + $0xd0] sm:$0xff] %vm1368, %v1325
    %1396 = vst.msk [vmem:[#allocation3 + $0xd8] sm:$0xff] %vm1368, %v1327
    %1397 = vst.msk [vmem:[#allocation3 + $0xe0] sm:$0xff] %vm1368, %v1329
    %1398 = vst.msk [vmem:[#allocation3 + $0xe8] sm:$0xff] %vm1368, %v1331
    %1399 = vst.msk [vmem:[#allocation3 + $0xf0] sm:$0xff] %vm1368, %v1333
    %1400 = vst.msk [vmem:[#allocation3 + $0xf8] sm:$0xff] %vm1368, %v1335
    %v1402 = vrot.slane %v367, 1
    %v1403 = vrot.slane %v368, 1
    %v1404 = vsel %vm450, %v1402, %v1403
    %v1405 = vrot.slane %v369, 1
    %v1406 = vsel %vm450, %v1403, %v1405
    %1407 = vrot.lane.b32.xlu0 %v463, 28
    %v1408 = vpop.permute.xlu0 %1407
    %1409 = vrot.lane.b32.xlu0 %v465, 28
    %v1410 = vpop.permute.xlu0 %1409
    %1411 = vrot.lane.b32.xlu0 %v468, 28
    %v1412 = vpop.permute.xlu0 %1411
    %1413 = vrot.lane.b32.xlu0 %v470, 28
    %v1414 = vpop.permute.xlu0 %1413
    %1415 = vrot.lane.b32.xlu0 %v473, 28
    %v1416 = vpop.permute.xlu0 %1415
    %1417 = vrot.lane.b32.xlu0 %v475, 28
    %v1418 = vpop.permute.xlu0 %1417
    %1419 = vrot.lane.b32.xlu0 %v478, 28
    %v1420 = vpop.permute.xlu0 %1419
    %1421 = vrot.lane.b32.xlu0 %v480, 28
    %v1422 = vpop.permute.xlu0 %1421
    %1423 = vrot.lane.b32.xlu0 %v483, 28
    %v1424 = vpop.permute.xlu0 %1423
    %1425 = vrot.lane.b32.xlu0 %v485, 28
    %v1426 = vpop.permute.xlu0 %1425
    %1427 = vrot.lane.b32.xlu0 %v488, 28
    %v1428 = vpop.permute.xlu0 %1427
    %1429 = vrot.lane.b32.xlu0 %v490, 28
    %v1430 = vpop.permute.xlu0 %1429
    %1431 = vrot.lane.b32.xlu0 %v493, 28
    %v1432 = vpop.permute.xlu0 %1431
    %1433 = vrot.lane.b32.xlu0 %v495, 28
    %v1434 = vpop.permute.xlu0 %1433
    %1435 = vrot.lane.b32.xlu0 %v498, 28
    %v1436 = vpop.permute.xlu0 %1435
    %1437 = vrot.lane.b32.xlu0 %v500, 28
    %v1438 = vpop.permute.xlu0 %1437
    %1439 = vrot.lane.b32.xlu0 %v503, 28
    %v1440 = vpop.permute.xlu0 %1439
    %1441 = vrot.lane.b32.xlu0 %v505, 28
    %v1442 = vpop.permute.xlu0 %1441
    %1443 = vrot.lane.b32.xlu0 %v508, 28
    %v1444 = vpop.permute.xlu0 %1443
    %1445 = vrot.lane.b32.xlu0 %v510, 28
    %v1446 = vpop.permute.xlu0 %1445
    %1447 = vrot.lane.b32.xlu0 %v513, 28
    %v1448 = vpop.permute.xlu0 %1447
    %1449 = vrot.lane.b32.xlu0 %v515, 28
    %v1450 = vpop.permute.xlu0 %1449
    %1451 = vrot.lane.b32.xlu0 %v518, 28
    %v1452 = vpop.permute.xlu0 %1451
    %1453 = vrot.lane.b32.xlu0 %v520, 28
    %v1454 = vpop.permute.xlu0 %1453
    %1455 = vrot.lane.b32.xlu0 %v523, 28
    %v1456 = vpop.permute.xlu0 %1455
    %1457 = vrot.lane.b32.xlu0 %v525, 28
    %v1458 = vpop.permute.xlu0 %1457
    %1459 = vrot.lane.b32.xlu0 %v528, 28
    %v1460 = vpop.permute.xlu0 %1459
    %1461 = vrot.lane.b32.xlu0 %v530, 28
    %v1462 = vpop.permute.xlu0 %1461
    %1463 = vrot.lane.b32.xlu0 %v1004, 28
    %v1464 = vpop.permute.xlu0 %1463
    %1465 = vrot.lane.b32.xlu0 %v1006, 28
    %v1466 = vpop.permute.xlu0 %1465
    %1467 = vrot.lane.b32.xlu0 %v1404, 28
    %v1468 = vpop.permute.xlu0 %1467
    %1469 = vrot.lane.b32.xlu0 %v1406, 28
    %v1470 = vpop.permute.xlu0 %1469
    %vm1503 = vcmask 261344
    %1504 = vst.msk [vmem:[#allocation3] sm:$0xff] %vm1503, %v1408
    %1505 = vst.msk [vmem:[#allocation3 + $0x8] sm:$0xff] %vm1503, %v1410
    %1506 = vst.msk [vmem:[#allocation3 + $0x10] sm:$0xff] %vm1503, %v1412
    %1507 = vst.msk [vmem:[#allocation3 + $0x18] sm:$0xff] %vm1503, %v1414
    %1508 = vst.msk [vmem:[#allocation3 + $0x20] sm:$0xff] %vm1503, %v1416
    %1509 = vst.msk [vmem:[#allocation3 + $0x28] sm:$0xff] %vm1503, %v1418
    %1510 = vst.msk [vmem:[#allocation3 + $0x30] sm:$0xff] %vm1503, %v1420
    %1511 = vst.msk [vmem:[#allocation3 + $0x38] sm:$0xff] %vm1503, %v1422
    %1512 = vst.msk [vmem:[#allocation3 + $0x40] sm:$0xff] %vm1503, %v1424
    %1513 = vst.msk [vmem:[#allocation3 + $0x48] sm:$0xff] %vm1503, %v1426
    %1514 = vst.msk [vmem:[#allocation3 + $0x50] sm:$0xff] %vm1503, %v1428
    %1515 = vst.msk [vmem:[#allocation3 + $0x58] sm:$0xff] %vm1503, %v1430
    %1516 = vst.msk [vmem:[#allocation3 + $0x60] sm:$0xff] %vm1503, %v1432
    %1517 = vst.msk [vmem:[#allocation3 + $0x68] sm:$0xff] %vm1503, %v1434
    %1518 = vst.msk [vmem:[#allocation3 + $0x70] sm:$0xff] %vm1503, %v1436
    %1519 = vst.msk [vmem:[#allocation3 + $0x78] sm:$0xff] %vm1503, %v1438
    %1520 = vst.msk [vmem:[#allocation3 + $0x80] sm:$0xff] %vm1503, %v1440
    %1521 = vst.msk [vmem:[#allocation3 + $0x88] sm:$0xff] %vm1503, %v1442
    %1522 = vst.msk [vmem:[#allocation3 + $0x90] sm:$0xff] %vm1503, %v1444
    %1523 = vst.msk [vmem:[#allocation3 + $0x98] sm:$0xff] %vm1503, %v1446
    %1524 = vst.msk [vmem:[#allocation3 + $0xa0] sm:$0xff] %vm1503, %v1448
    %1525 = vst.msk [vmem:[#allocation3 + $0xa8] sm:$0xff] %vm1503, %v1450
    %1526 = vst.msk [vmem:[#allocation3 + $0xb0] sm:$0xff] %vm1503, %v1452
    %1527 = vst.msk [vmem:[#allocation3 + $0xb8] sm:$0xff] %vm1503, %v1454
    %1528 = vst.msk [vmem:[#allocation3 + $0xc0] sm:$0xff] %vm1503, %v1456
    %1529 = vst.msk [vmem:[#allocation3 + $0xc8] sm:$0xff] %vm1503, %v1458
    %1530 = vst.msk [vmem:[#allocation3 + $0xd0] sm:$0xff] %vm1503, %v1460
    %1531 = vst.msk [vmem:[#allocation3 + $0xd8] sm:$0xff] %vm1503, %v1462
    %1532 = vst.msk [vmem:[#allocation3 + $0xe0] sm:$0xff] %vm1503, %v1464
    %1533 = vst.msk [vmem:[#allocation3 + $0xe8] sm:$0xff] %vm1503, %v1466
    %1534 = vst.msk [vmem:[#allocation3 + $0xf0] sm:$0xff] %vm1503, %v1468
    %1535 = vst.msk [vmem:[#allocation3 + $0xf8] sm:$0xff] %vm1503, %v1470
    %v1536 = vrot.slane %v367, 2
    %v1537 = vrot.slane %v368, 2
    %v1538 = vsel %vm660, %v1536, %v1537
    %v1539 = vrot.slane %v369, 2
    %v1540 = vsel %vm660, %v1537, %v1539
    %1541 = vrot.lane.b32.xlu0 %v673, 32
    %v1542 = vpop.permute.xlu0 %1541
    %1543 = vrot.lane.b32.xlu0 %v675, 32
    %v1544 = vpop.permute.xlu0 %1543
    %1545 = vrot.lane.b32.xlu0 %v678, 32
    %v1546 = vpop.permute.xlu0 %1545
    %1547 = vrot.lane.b32.xlu0 %v680, 32
    %v1548 = vpop.permute.xlu0 %1547
    %1549 = vrot.lane.b32.xlu0 %v683, 32
    %v1550 = vpop.permute.xlu0 %1549
    %1551 = vrot.lane.b32.xlu0 %v685, 32
    %v1552 = vpop.permute.xlu0 %1551
    %1553 = vrot.lane.b32.xlu0 %v688, 32
    %v1554 = vpop.permute.xlu0 %1553
    %1555 = vrot.lane.b32.xlu0 %v690, 32
    %v1556 = vpop.permute.xlu0 %1555
    %1557 = vrot.lane.b32.xlu0 %v693, 32
    %v1558 = vpop.permute.xlu0 %1557
    %1559 = vrot.lane.b32.xlu0 %v695, 32
    %v1560 = vpop.permute.xlu0 %1559
    %1561 = vrot.lane.b32.xlu0 %v698, 32
    %v1562 = vpop.permute.xlu0 %1561
    %1563 = vrot.lane.b32.xlu0 %v700, 32
    %v1564 = vpop.permute.xlu0 %1563
    %1565 = vrot.lane.b32.xlu0 %v703, 32
    %v1566 = vpop.permute.xlu0 %1565
    %1567 = vrot.lane.b32.xlu0 %v705, 32
    %v1568 = vpop.permute.xlu0 %1567
    %1569 = vrot.lane.b32.xlu0 %v708, 32
    %v1570 = vpop.permute.xlu0 %1569
    %1571 = vrot.lane.b32.xlu0 %v710, 32
    %v1572 = vpop.permute.xlu0 %1571
    %1573 = vrot.lane.b32.xlu0 %v713, 32
    %v1574 = vpop.permute.xlu0 %1573
    %1575 = vrot.lane.b32.xlu0 %v715, 32
    %v1576 = vpop.permute.xlu0 %1575
    %1577 = vrot.lane.b32.xlu0 %v718, 32
    %v1578 = vpop.permute.xlu0 %1577
    %1579 = vrot.lane.b32.xlu0 %v720, 32
    %v1580 = vpop.permute.xlu0 %1579
    %1581 = vrot.lane.b32.xlu0 %v723, 32
    %v1582 = vpop.permute.xlu0 %1581
    %1583 = vrot.lane.b32.xlu0 %v725, 32
    %v1584 = vpop.permute.xlu0 %1583
    %1585 = vrot.lane.b32.xlu0 %v728, 32
    %v1586 = vpop.permute.xlu0 %1585
    %1587 = vrot.lane.b32.xlu0 %v730, 32
    %v1588 = vpop.permute.xlu0 %1587
    %1589 = vrot.lane.b32.xlu0 %v733, 32
    %v1590 = vpop.permute.xlu0 %1589
    %1591 = vrot.lane.b32.xlu0 %v735, 32
    %v1592 = vpop.permute.xlu0 %1591
    %1593 = vrot.lane.b32.xlu0 %v738, 32
    %v1594 = vpop.permute.xlu0 %1593
    %1595 = vrot.lane.b32.xlu0 %v740, 32
    %v1596 = vpop.permute.xlu0 %1595
    %1597 = vrot.lane.b32.xlu0 %v1138, 32
    %v1598 = vpop.permute.xlu0 %1597
    %1599 = vrot.lane.b32.xlu0 %v1140, 32
    %v1600 = vpop.permute.xlu0 %1599
    %1601 = vrot.lane.b32.xlu0 %v1538, 32
    %v1602 = vpop.permute.xlu0 %1601
    %1603 = vrot.lane.b32.xlu0 %v1540, 32
    %v1604 = vpop.permute.xlu0 %1603
    %vm1637 = vcmask 294144
    %1638 = vst.msk [vmem:[#allocation3] sm:$0xff] %vm1637, %v1542
    %1639 = vst.msk [vmem:[#allocation3 + $0x8] sm:$0xff] %vm1637, %v1544
    %1640 = vst.msk [vmem:[#allocation3 + $0x10] sm:$0xff] %vm1637, %v1546
    %1641 = vst.msk [vmem:[#allocation3 + $0x18] sm:$0xff] %vm1637, %v1548
    %1642 = vst.msk [vmem:[#allocation3 + $0x20] sm:$0xff] %vm1637, %v1550
    %1643 = vst.msk [vmem:[#allocation3 + $0x28] sm:$0xff] %vm1637, %v1552
    %1644 = vst.msk [vmem:[#allocation3 + $0x30] sm:$0xff] %vm1637, %v1554
    %1645 = vst.msk [vmem:[#allocation3 + $0x38] sm:$0xff] %vm1637, %v1556
    %1646 = vst.msk [vmem:[#allocation3 + $0x40] sm:$0xff] %vm1637, %v1558
    %1647 = vst.msk [vmem:[#allocation3 + $0x48] sm:$0xff] %vm1637, %v1560
    %1648 = vst.msk [vmem:[#allocation3 + $0x50] sm:$0xff] %vm1637, %v1562
    %1649 = vst.msk [vmem:[#allocation3 + $0x58] sm:$0xff] %vm1637, %v1564
    %1650 = vst.msk [vmem:[#allocation3 + $0x60] sm:$0xff] %vm1637, %v1566
    %1651 = vst.msk [vmem:[#allocation3 + $0x68] sm:$0xff] %vm1637, %v1568
    %1652 = vst.msk [vmem:[#allocation3 + $0x70] sm:$0xff] %vm1637, %v1570
    %1653 = vst.msk [vmem:[#allocation3 + $0x78] sm:$0xff] %vm1637, %v1572
    %1654 = vst.msk [vmem:[#allocation3 + $0x80] sm:$0xff] %vm1637, %v1574
    %1655 = vst.msk [vmem:[#allocation3 + $0x88] sm:$0xff] %vm1637, %v1576
    %1656 = vst.msk [vmem:[#allocation3 + $0x90] sm:$0xff] %vm1637, %v1578
    %1657 = vst.msk [vmem:[#allocation3 + $0x98] sm:$0xff] %vm1637, %v1580
    %1658 = vst.msk [vmem:[#allocation3 + $0xa0] sm:$0xff] %vm1637, %v1582
    %1659 = vst.msk [vmem:[#allocation3 + $0xa8] sm:$0xff] %vm1637, %v1584
    %1660 = vst.msk [vmem:[#allocation3 + $0xb0] sm:$0xff] %vm1637, %v1586
    %1661 = vst.msk [vmem:[#allocation3 + $0xb8] sm:$0xff] %vm1637, %v1588
    %1662 = vst.msk [vmem:[#allocation3 + $0xc0] sm:$0xff] %vm1637, %v1590
    %1663 = vst.msk [vmem:[#allocation3 + $0xc8] sm:$0xff] %vm1637, %v1592
    %1664 = vst.msk [vmem:[#allocation3 + $0xd0] sm:$0xff] %vm1637, %v1594
    %1665 = vst.msk [vmem:[#allocation3 + $0xd8] sm:$0xff] %vm1637, %v1596
    %1666 = vst.msk [vmem:[#allocation3 + $0xe0] sm:$0xff] %vm1637, %v1598
    %1667 = vst.msk [vmem:[#allocation3 + $0xe8] sm:$0xff] %vm1637, %v1600
    %1668 = vst.msk [vmem:[#allocation3 + $0xf0] sm:$0xff] %vm1637, %v1602
    %1669 = vst.msk [vmem:[#allocation3 + $0xf8] sm:$0xff] %vm1637, %v1604
    %s1670 = scalar_lea.vmem [#allocation2], 432
    %v1671 = vld [vmem:[%s1670] sm:$0xff]
    %v1672 = vld [vmem:[%s1670 + $0x8] sm:$0xff]
    %v1673 = vld [vmem:[%s1670 + $0x10] sm:$0x3]
    %v1674 = vld [vmem:[%s1670 + $0x18] sm:$0xff]
    %v1675 = vld [vmem:[%s1670 + $0x20] sm:$0xff]
    %v1676 = vld [vmem:[%s1670 + $0x28] sm:$0x3]
    %v1677 = vld [vmem:[%s1670 + $0x30] sm:$0xff]
    %v1678 = vld [vmem:[%s1670 + $0x38] sm:$0xff]
    %v1679 = vld [vmem:[%s1670 + $0x40] sm:$0x3]
    %v1680 = vld [vmem:[%s1670 + $0x48] sm:$0xff]
    %v1681 = vld [vmem:[%s1670 + $0x50] sm:$0xff]
    %v1682 = vld [vmem:[%s1670 + $0x58] sm:$0x3]
    %v1683 = vld [vmem:[%s1670 + $0x60] sm:$0xff]
    %v1684 = vld [vmem:[%s1670 + $0x68] sm:$0xff]
    %v1685 = vld [vmem:[%s1670 + $0x70] sm:$0x3]
    %v1686 = vld [vmem:[%s1670 + $0x78] sm:$0xff]
    %v1687 = vld [vmem:[%s1670 + $0x80] sm:$0xff]
    %v1688 = vld [vmem:[%s1670 + $0x88] sm:$0x3]
    %v1689 = vld [vmem:[%s1670 + $0x90] sm:$0xff]
    %v1690 = vld [vmem:[%s1670 + $0x98] sm:$0xff]
    %v1691 = vld [vmem:[%s1670 + $0xa0] sm:$0x3]
    %v1692 = vld [vmem:[%s1670 + $0xa8] sm:$0xff]
    %v1693 = vld [vmem:[%s1670 + $0xb0] sm:$0xff]
    %v1694 = vld [vmem:[%s1670 + $0xb8] sm:$0x3]
    %v1695 = vld [vmem:[%s1670 + $0xc0] sm:$0xff]
    %v1696 = vld [vmem:[%s1670 + $0xc8] sm:$0xff]
    %v1697 = vld [vmem:[%s1670 + $0xd0] sm:$0x3]
    %v1698 = vld [vmem:[%s1670 + $0xd8] sm:$0xff]
    %v1699 = vld [vmem:[%s1670 + $0xe0] sm:$0xff]
    %v1700 = vld [vmem:[%s1670 + $0xe8] sm:$0x3]
    %v1701 = vld [vmem:[%s1670 + $0xf0] sm:$0xff]
    %v1702 = vld [vmem:[%s1670 + $0xf8] sm:$0xff]
    %v1703 = vld [vmem:[%s1670 + $0x100] sm:$0x3]
    %v1704 = vld [vmem:[%s1670 + $0x108] sm:$0xff]
    %v1705 = vld [vmem:[%s1670 + $0x110] sm:$0xff]
    %v1706 = vld [vmem:[%s1670 + $0x118] sm:$0x3]
    %v1707 = vld [vmem:[%s1670 + $0x120] sm:$0xff]
    %v1708 = vld [vmem:[%s1670 + $0x128] sm:$0xff]
    %v1709 = vld [vmem:[%s1670 + $0x130] sm:$0x3]
    %v1710 = vld [vmem:[%s1670 + $0x138] sm:$0xff]
    %v1711 = vld [vmem:[%s1670 + $0x140] sm:$0xff]
    %v1712 = vld [vmem:[%s1670 + $0x148] sm:$0x3]
    %v1713 = vld [vmem:[%s1670 + $0x150] sm:$0xff]
    %v1714 = vld [vmem:[%s1670 + $0x158] sm:$0xff]
    %v1715 = vld [vmem:[%s1670 + $0x160] sm:$0x3]
    %v1716 = vld [vmem:[%s1670 + $0x168] sm:$0xff]
    %v1717 = vld [vmem:[%s1670 + $0x170] sm:$0xff]
    %v1718 = vld [vmem:[%s1670 + $0x178] sm:$0x3]
    %v1719 = vld [vmem:[%s1670 + $0x180] sm:$0xff]
    %v1720 = vld [vmem:[%s1670 + $0x188] sm:$0xff]
    %v1721 = vld [vmem:[%s1670 + $0x190] sm:$0x3]
    %v1722 = vld [vmem:[%s1670 + $0x198] sm:$0xff]
    %v1723 = vld [vmem:[%s1670 + $0x1a0] sm:$0xff]
    %v1724 = vld [vmem:[%s1670 + $0x1a8] sm:$0x3]
    %1725 = vst.msk [vmem:[#allocation3 + $0x100] sm:$0xff] %vm33, %v1671
    %1726 = vst.msk [vmem:[#allocation3 + $0x108] sm:$0xff] %vm33, %v1672
    %1727 = vst.msk [vmem:[#allocation3 + $0x110] sm:$0xff] %vm33, %v1674
    %1728 = vst.msk [vmem:[#allocation3 + $0x118] sm:$0xff] %vm33, %v1675
    %1729 = vst.msk [vmem:[#allocation3 + $0x120] sm:$0xff] %vm33, %v1677
    %1730 = vst.msk [vmem:[#allocation3 + $0x128] sm:$0xff] %vm33, %v1678
    %1731 = vst.msk [vmem:[#allocation3 + $0x130] sm:$0xff] %vm33, %v1680
    %1732 = vst.msk [vmem:[#allocation3 + $0x138] sm:$0xff] %vm33, %v1681
    %1733 = vst.msk [vmem:[#allocation3 + $0x140] sm:$0xff] %vm33, %v1683
    %1734 = vst.msk [vmem:[#allocation3 + $0x148] sm:$0xff] %vm33, %v1684
    %1735 = vst.msk [vmem:[#allocation3 + $0x150] sm:$0xff] %vm33, %v1686
    %1736 = vst.msk [vmem:[#allocation3 + $0x158] sm:$0xff] %vm33, %v1687
    %1737 = vst.msk [vmem:[#allocation3 + $0x160] sm:$0xff] %vm33, %v1689
    %1738 = vst.msk [vmem:[#allocation3 + $0x168] sm:$0xff] %vm33, %v1690
    %1739 = vst.msk [vmem:[#allocation3 + $0x170] sm:$0xff] %vm33, %v1692
    %1740 = vst.msk [vmem:[#allocation3 + $0x178] sm:$0xff] %vm33, %v1693
    %1741 = vst.msk [vmem:[#allocation3 + $0x180] sm:$0xff] %vm33, %v1695
    %1742 = vst.msk [vmem:[#allocation3 + $0x188] sm:$0xff] %vm33, %v1696
    %1743 = vst.msk [vmem:[#allocation3 + $0x190] sm:$0xff] %vm33, %v1698
    %1744 = vst.msk [vmem:[#allocation3 + $0x198] sm:$0xff] %vm33, %v1699
    %1745 = vst.msk [vmem:[#allocation3 + $0x1a0] sm:$0xff] %vm33, %v1701
    %1746 = vst.msk [vmem:[#allocation3 + $0x1a8] sm:$0xff] %vm33, %v1702
    %1747 = vst.msk [vmem:[#allocation3 + $0x1b0] sm:$0xff] %vm33, %v1704
    %1748 = vst.msk [vmem:[#allocation3 + $0x1b8] sm:$0xff] %vm33, %v1705
    %1749 = vst.msk [vmem:[#allocation3 + $0x1c0] sm:$0xff] %vm33, %v1707
    %1750 = vst.msk [vmem:[#allocation3 + $0x1c8] sm:$0xff] %vm33, %v1708
    %1751 = vst.msk [vmem:[#allocation3 + $0x1d0] sm:$0xff] %vm33, %v1710
    %1752 = vst.msk [vmem:[#allocation3 + $0x1d8] sm:$0xff] %vm33, %v1711
    %1753 = vst.msk [vmem:[#allocation3 + $0x1e0] sm:$0xff] %vm33, %v1713
    %1754 = vst.msk [vmem:[#allocation3 + $0x1e8] sm:$0xff] %vm33, %v1714
    %1755 = vst.msk [vmem:[#allocation3 + $0x1f0] sm:$0xff] %vm33, %v1716
    %1756 = vst.msk [vmem:[#allocation3 + $0x1f8] sm:$0xff] %vm33, %v1717
    %v1805 = vrot.slane %v1671, 1
    %v1806 = vrot.slane %v1672, 1
    %v1807 = vsel %vm450, %v1805, %v1806
    %v1808 = vrot.slane %v1673, 1
    %v1809 = vsel %vm450, %v1806, %v1808
    %v1810 = vrot.slane %v1674, 1
    %v1811 = vrot.slane %v1675, 1
    %v1812 = vsel %vm450, %v1810, %v1811
    %v1813 = vrot.slane %v1676, 1
    %v1814 = vsel %vm450, %v1811, %v1813
    %v1815 = vrot.slane %v1677, 1
    %v1816 = vrot.slane %v1678, 1
    %v1817 = vsel %vm450, %v1815, %v1816
    %v1818 = vrot.slane %v1679, 1
    %v1819 = vsel %vm450, %v1816, %v1818
    %v1820 = vrot.slane %v1680, 1
    %v1821 = vrot.slane %v1681, 1
    %v1822 = vsel %vm450, %v1820, %v1821
    %v1823 = vrot.slane %v1682, 1
    %v1824 = vsel %vm450, %v1821, %v1823
    %v1825 = vrot.slane %v1683, 1
    %v1826 = vrot.slane %v1684, 1
    %v1827 = vsel %vm450, %v1825, %v1826
    %v1828 = vrot.slane %v1685, 1
    %v1829 = vsel %vm450, %v1826, %v1828
    %v1830 = vrot.slane %v1686, 1
    %v1831 = vrot.slane %v1687, 1
    %v1832 = vsel %vm450, %v1830, %v1831
    %v1833 = vrot.slane %v1688, 1
    %v1834 = vsel %vm450, %v1831, %v1833
    %v1835 = vrot.slane %v1689, 1
    %v1836 = vrot.slane %v1690, 1
    %v1837 = vsel %vm450, %v1835, %v1836
    %v1838 = vrot.slane %v1691, 1
    %v1839 = vsel %vm450, %v1836, %v1838
    %v1840 = vrot.slane %v1692, 1
    %v1841 = vrot.slane %v1693, 1
    %v1842 = vsel %vm450, %v1840, %v1841
    %v1843 = vrot.slane %v1694, 1
    %v1844 = vsel %vm450, %v1841, %v1843
    %v1845 = vrot.slane %v1695, 1
    %v1846 = vrot.slane %v1696, 1
    %v1847 = vsel %vm450, %v1845, %v1846
    %v1848 = vrot.slane %v1697, 1
    %v1849 = vsel %vm450, %v1846, %v1848
    %v1850 = vrot.slane %v1698, 1
    %v1851 = vrot.slane %v1699, 1
    %v1852 = vsel %vm450, %v1850, %v1851
    %v1853 = vrot.slane %v1700, 1
    %v1854 = vsel %vm450, %v1851, %v1853
    %v1855 = vrot.slane %v1701, 1
    %v1856 = vrot.slane %v1702, 1
    %v1857 = vsel %vm450, %v1855, %v1856
    %v1858 = vrot.slane %v1703, 1
    %v1859 = vsel %vm450, %v1856, %v1858
    %v1860 = vrot.slane %v1704, 1
    %v1861 = vrot.slane %v1705, 1
    %v1862 = vsel %vm450, %v1860, %v1861
    %v1863 = vrot.slane %v1706, 1
    %v1864 = vsel %vm450, %v1861, %v1863
    %v1865 = vrot.slane %v1707, 1
    %v1866 = vrot.slane %v1708, 1
    %v1867 = vsel %vm450, %v1865, %v1866
    %v1868 = vrot.slane %v1709, 1
    %v1869 = vsel %vm450, %v1866, %v1868
    %v1870 = vrot.slane %v1710, 1
    %v1871 = vrot.slane %v1711, 1
    %v1872 = vsel %vm450, %v1870, %v1871
    %v1873 = vrot.slane %v1712, 1
    %v1874 = vsel %vm450, %v1871, %v1873
    %v1875 = vrot.slane %v1713, 1
    %v1876 = vrot.slane %v1714, 1
    %v1877 = vsel %vm450, %v1875, %v1876
    %v1878 = vrot.slane %v1715, 1
    %v1879 = vsel %vm450, %v1876, %v1878
    %v1880 = vrot.slane %v1716, 1
    %v1881 = vrot.slane %v1717, 1
    %v1882 = vsel %vm450, %v1880, %v1881
    %v1883 = vrot.slane %v1718, 1
    %v1884 = vsel %vm450, %v1881, %v1883
    %1885 = vrot.lane.b32.xlu0 %v1807, 4
    %v1886 = vpop.permute.xlu0 %1885
    %1887 = vrot.lane.b32.xlu0 %v1809, 4
    %v1888 = vpop.permute.xlu0 %1887
    %1889 = vrot.lane.b32.xlu0 %v1812, 4
    %v1890 = vpop.permute.xlu0 %1889
    %1891 = vrot.lane.b32.xlu0 %v1814, 4
    %v1892 = vpop.permute.xlu0 %1891
    %1893 = vrot.lane.b32.xlu0 %v1817, 4
    %v1894 = vpop.permute.xlu0 %1893
    %1895 = vrot.lane.b32.xlu0 %v1819, 4
    %v1896 = vpop.permute.xlu0 %1895
    %1897 = vrot.lane.b32.xlu0 %v1822, 4
    %v1898 = vpop.permute.xlu0 %1897
    %1899 = vrot.lane.b32.xlu0 %v1824, 4
    %v1900 = vpop.permute.xlu0 %1899
    %1901 = vrot.lane.b32.xlu0 %v1827, 4
    %v1902 = vpop.permute.xlu0 %1901
    %1903 = vrot.lane.b32.xlu0 %v1829, 4
    %v1904 = vpop.permute.xlu0 %1903
    %1905 = vrot.lane.b32.xlu0 %v1832, 4
    %v1906 = vpop.permute.xlu0 %1905
    %1907 = vrot.lane.b32.xlu0 %v1834, 4
    %v1908 = vpop.permute.xlu0 %1907
    %1909 = vrot.lane.b32.xlu0 %v1837, 4
    %v1910 = vpop.permute.xlu0 %1909
    %1911 = vrot.lane.b32.xlu0 %v1839, 4
    %v1912 = vpop.permute.xlu0 %1911
    %1913 = vrot.lane.b32.xlu0 %v1842, 4
    %v1914 = vpop.permute.xlu0 %1913
    %1915 = vrot.lane.b32.xlu0 %v1844, 4
    %v1916 = vpop.permute.xlu0 %1915
    %1917 = vrot.lane.b32.xlu0 %v1847, 4
    %v1918 = vpop.permute.xlu0 %1917
    %1919 = vrot.lane.b32.xlu0 %v1849, 4
    %v1920 = vpop.permute.xlu0 %1919
    %1921 = vrot.lane.b32.xlu0 %v1852, 4
    %v1922 = vpop.permute.xlu0 %1921
    %1923 = vrot.lane.b32.xlu0 %v1854, 4
    %v1924 = vpop.permute.xlu0 %1923
    %1925 = vrot.lane.b32.xlu0 %v1857, 4
    %v1926 = vpop.permute.xlu0 %1925
    %1927 = vrot.lane.b32.xlu0 %v1859, 4
    %v1928 = vpop.permute.xlu0 %1927
    %1929 = vrot.lane.b32.xlu0 %v1862, 4
    %v1930 = vpop.permute.xlu0 %1929
    %1931 = vrot.lane.b32.xlu0 %v1864, 4
    %v1932 = vpop.permute.xlu0 %1931
    %1933 = vrot.lane.b32.xlu0 %v1867, 4
    %v1934 = vpop.permute.xlu0 %1933
    %1935 = vrot.lane.b32.xlu0 %v1869, 4
    %v1936 = vpop.permute.xlu0 %1935
    %1937 = vrot.lane.b32.xlu0 %v1872, 4
    %v1938 = vpop.permute.xlu0 %1937
    %1939 = vrot.lane.b32.xlu0 %v1874, 4
    %v1940 = vpop.permute.xlu0 %1939
    %1941 = vrot.lane.b32.xlu0 %v1877, 4
    %v1942 = vpop.permute.xlu0 %1941
    %1943 = vrot.lane.b32.xlu0 %v1879, 4
    %v1944 = vpop.permute.xlu0 %1943
    %1945 = vrot.lane.b32.xlu0 %v1882, 4
    %v1946 = vpop.permute.xlu0 %1945
    %1947 = vrot.lane.b32.xlu0 %v1884, 4
    %v1948 = vpop.permute.xlu0 %1947
    %1981 = vst.msk [vmem:[#allocation3 + $0x100] sm:$0xff] %vm627, %v1886
    %1982 = vst.msk [vmem:[#allocation3 + $0x108] sm:$0xff] %vm627, %v1888
    %1983 = vst.msk [vmem:[#allocation3 + $0x110] sm:$0xff] %vm627, %v1890
    %1984 = vst.msk [vmem:[#allocation3 + $0x118] sm:$0xff] %vm627, %v1892
    %1985 = vst.msk [vmem:[#allocation3 + $0x120] sm:$0xff] %vm627, %v1894
    %1986 = vst.msk [vmem:[#allocation3 + $0x128] sm:$0xff] %vm627, %v1896
    %1987 = vst.msk [vmem:[#allocation3 + $0x130] sm:$0xff] %vm627, %v1898
    %1988 = vst.msk [vmem:[#allocation3 + $0x138] sm:$0xff] %vm627, %v1900
    %1989 = vst.msk [vmem:[#allocation3 + $0x140] sm:$0xff] %vm627, %v1902
    %1990 = vst.msk [vmem:[#allocation3 + $0x148] sm:$0xff] %vm627, %v1904
    %1991 = vst.msk [vmem:[#allocation3 + $0x150] sm:$0xff] %vm627, %v1906
    %1992 = vst.msk [vmem:[#allocation3 + $0x158] sm:$0xff] %vm627, %v1908
    %1993 = vst.msk [vmem:[#allocation3 + $0x160] sm:$0xff] %vm627, %v1910
    %1994 = vst.msk [vmem:[#allocation3 + $0x168] sm:$0xff] %vm627, %v1912
    %1995 = vst.msk [vmem:[#allocation3 + $0x170] sm:$0xff] %vm627, %v1914
    %1996 = vst.msk [vmem:[#allocation3 + $0x178] sm:$0xff] %vm627, %v1916
    %1997 = vst.msk [vmem:[#allocation3 + $0x180] sm:$0xff] %vm627, %v1918
    %1998 = vst.msk [vmem:[#allocation3 + $0x188] sm:$0xff] %vm627, %v1920
    %1999 = vst.msk [vmem:[#allocation3 + $0x190] sm:$0xff] %vm627, %v1922
    %2000 = vst.msk [vmem:[#allocation3 + $0x198] sm:$0xff] %vm627, %v1924
    %2001 = vst.msk [vmem:[#allocation3 + $0x1a0] sm:$0xff] %vm627, %v1926
    %2002 = vst.msk [vmem:[#allocation3 + $0x1a8] sm:$0xff] %vm627, %v1928
    %2003 = vst.msk [vmem:[#allocation3 + $0x1b0] sm:$0xff] %vm627, %v1930
    %2004 = vst.msk [vmem:[#allocation3 + $0x1b8] sm:$0xff] %vm627, %v1932
    %2005 = vst.msk [vmem:[#allocation3 + $0x1c0] sm:$0xff] %vm627, %v1934
    %2006 = vst.msk [vmem:[#allocation3 + $0x1c8] sm:$0xff] %vm627, %v1936
    %2007 = vst.msk [vmem:[#allocation3 + $0x1d0] sm:$0xff] %vm627, %v1938
    %2008 = vst.msk [vmem:[#allocation3 + $0x1d8] sm:$0xff] %vm627, %v1940
    %2009 = vst.msk [vmem:[#allocation3 + $0x1e0] sm:$0xff] %vm627, %v1942
    %2010 = vst.msk [vmem:[#allocation3 + $0x1e8] sm:$0xff] %vm627, %v1944
    %2011 = vst.msk [vmem:[#allocation3 + $0x1f0] sm:$0xff] %vm627, %v1946
    %2012 = vst.msk [vmem:[#allocation3 + $0x1f8] sm:$0xff] %vm627, %v1948
    %v2013 = vrot.slane %v1671, 2
    %v2014 = vrot.slane %v1672, 2
    %v2015 = vsel %vm660, %v2013, %v2014
    %v2016 = vrot.slane %v1673, 2
    %v2017 = vsel %vm660, %v2014, %v2016
    %v2018 = vrot.slane %v1674, 2
    %v2019 = vrot.slane %v1675, 2
    %v2020 = vsel %vm660, %v2018, %v2019
    %v2021 = vrot.slane %v1676, 2
    %v2022 = vsel %vm660, %v2019, %v2021
    %v2023 = vrot.slane %v1677, 2
    %v2024 = vrot.slane %v1678, 2
    %v2025 = vsel %vm660, %v2023, %v2024
    %v2026 = vrot.slane %v1679, 2
    %v2027 = vsel %vm660, %v2024, %v2026
    %v2028 = vrot.slane %v1680, 2
    %v2029 = vrot.slane %v1681, 2
    %v2030 = vsel %vm660, %v2028, %v2029
    %v2031 = vrot.slane %v1682, 2
    %v2032 = vsel %vm660, %v2029, %v2031
    %v2033 = vrot.slane %v1683, 2
    %v2034 = vrot.slane %v1684, 2
    %v2035 = vsel %vm660, %v2033, %v2034
    %v2036 = vrot.slane %v1685, 2
    %v2037 = vsel %vm660, %v2034, %v2036
    %v2038 = vrot.slane %v1686, 2
    %v2039 = vrot.slane %v1687, 2
    %v2040 = vsel %vm660, %v2038, %v2039
    %v2041 = vrot.slane %v1688, 2
    %v2042 = vsel %vm660, %v2039, %v2041
    %v2043 = vrot.slane %v1689, 2
    %v2044 = vrot.slane %v1690, 2
    %v2045 = vsel %vm660, %v2043, %v2044
    %v2046 = vrot.slane %v1691, 2
    %v2047 = vsel %vm660, %v2044, %v2046
    %v2048 = vrot.slane %v1692, 2
    %v2049 = vrot.slane %v1693, 2
    %v2050 = vsel %vm660, %v2048, %v2049
    %v2051 = vrot.slane %v1694, 2
    %v2052 = vsel %vm660, %v2049, %v2051
    %v2053 = vrot.slane %v1695, 2
    %v2054 = vrot.slane %v1696, 2
    %v2055 = vsel %vm660, %v2053, %v2054
    %v2056 = vrot.slane %v1697, 2
    %v2057 = vsel %vm660, %v2054, %v2056
    %v2058 = vrot.slane %v1698, 2
    %v2059 = vrot.slane %v1699, 2
    %v2060 = vsel %vm660, %v2058, %v2059
    %v2061 = vrot.slane %v1700, 2
    %v2062 = vsel %vm660, %v2059, %v2061
    %v2063 = vrot.slane %v1701, 2
    %v2064 = vrot.slane %v1702, 2
    %v2065 = vsel %vm660, %v2063, %v2064
    %v2066 = vrot.slane %v1703, 2
    %v2067 = vsel %vm660, %v2064, %v2066
    %v2068 = vrot.slane %v1704, 2
    %v2069 = vrot.slane %v1705, 2
    %v2070 = vsel %vm660, %v2068, %v2069
    %v2071 = vrot.slane %v1706, 2
    %v2072 = vsel %vm660, %v2069, %v2071
    %v2073 = vrot.slane %v1707, 2
    %v2074 = vrot.slane %v1708, 2
    %v2075 = vsel %vm660, %v2073, %v2074
    %v2076 = vrot.slane %v1709, 2
    %v2077 = vsel %vm660, %v2074, %v2076
    %v2078 = vrot.slane %v1710, 2
    %v2079 = vrot.slane %v1711, 2
    %v2080 = vsel %vm660, %v2078, %v2079
    %v2081 = vrot.slane %v1712, 2
    %v2082 = vsel %vm660, %v2079, %v2081
    %v2083 = vrot.slane %v1713, 2
    %v2084 = vrot.slane %v1714, 2
    %v2085 = vsel %vm660, %v2083, %v2084
    %v2086 = vrot.slane %v1715, 2
    %v2087 = vsel %vm660, %v2084, %v2086
    %v2088 = vrot.slane %v1716, 2
    %v2089 = vrot.slane %v1717, 2
    %v2090 = vsel %vm660, %v2088, %v2089
    %v2091 = vrot.slane %v1718, 2
    %v2092 = vsel %vm660, %v2089, %v2091
    %2093 = vrot.lane.b32.xlu0 %v2015, 8
    %v2094 = vpop.permute.xlu0 %2093
    %2095 = vrot.lane.b32.xlu0 %v2017, 8
    %v2096 = vpop.permute.xlu0 %2095
    %2097 = vrot.lane.b32.xlu0 %v2020, 8
    %v2098 = vpop.permute.xlu0 %2097
    %2099 = vrot.lane.b32.xlu0 %v2022, 8
    %v2100 = vpop.permute.xlu0 %2099
    %2101 = vrot.lane.b32.xlu0 %v2025, 8
    %v2102 = vpop.permute.xlu0 %2101
    %2103 = vrot.lane.b32.xlu0 %v2027, 8
    %v2104 = vpop.permute.xlu0 %2103
    %2105 = vrot.lane.b32.xlu0 %v2030, 8
    %v2106 = vpop.permute.xlu0 %2105
    %2107 = vrot.lane.b32.xlu0 %v2032, 8
    %v2108 = vpop.permute.xlu0 %2107
    %2109 = vrot.lane.b32.xlu0 %v2035, 8
    %v2110 = vpop.permute.xlu0 %2109
    %2111 = vrot.lane.b32.xlu0 %v2037, 8
    %v2112 = vpop.permute.xlu0 %2111
    %2113 = vrot.lane.b32.xlu0 %v2040, 8
    %v2114 = vpop.permute.xlu0 %2113
    %2115 = vrot.lane.b32.xlu0 %v2042, 8
    %v2116 = vpop.permute.xlu0 %2115
    %2117 = vrot.lane.b32.xlu0 %v2045, 8
    %v2118 = vpop.permute.xlu0 %2117
    %2119 = vrot.lane.b32.xlu0 %v2047, 8
    %v2120 = vpop.permute.xlu0 %2119
    %2121 = vrot.lane.b32.xlu0 %v2050, 8
    %v2122 = vpop.permute.xlu0 %2121
    %2123 = vrot.lane.b32.xlu0 %v2052, 8
    %v2124 = vpop.permute.xlu0 %2123
    %2125 = vrot.lane.b32.xlu0 %v2055, 8
    %v2126 = vpop.permute.xlu0 %2125
    %2127 = vrot.lane.b32.xlu0 %v2057, 8
    %v2128 = vpop.permute.xlu0 %2127
    %2129 = vrot.lane.b32.xlu0 %v2060, 8
    %v2130 = vpop.permute.xlu0 %2129
    %2131 = vrot.lane.b32.xlu0 %v2062, 8
    %v2132 = vpop.permute.xlu0 %2131
    %2133 = vrot.lane.b32.xlu0 %v2065, 8
    %v2134 = vpop.permute.xlu0 %2133
    %2135 = vrot.lane.b32.xlu0 %v2067, 8
    %v2136 = vpop.permute.xlu0 %2135
    %2137 = vrot.lane.b32.xlu0 %v2070, 8
    %v2138 = vpop.permute.xlu0 %2137
    %2139 = vrot.lane.b32.xlu0 %v2072, 8
    %v2140 = vpop.permute.xlu0 %2139
    %2141 = vrot.lane.b32.xlu0 %v2075, 8
    %v2142 = vpop.permute.xlu0 %2141
    %2143 = vrot.lane.b32.xlu0 %v2077, 8
    %v2144 = vpop.permute.xlu0 %2143
    %2145 = vrot.lane.b32.xlu0 %v2080, 8
    %v2146 = vpop.permute.xlu0 %2145
    %2147 = vrot.lane.b32.xlu0 %v2082, 8
    %v2148 = vpop.permute.xlu0 %2147
    %2149 = vrot.lane.b32.xlu0 %v2085, 8
    %v2150 = vpop.permute.xlu0 %2149
    %2151 = vrot.lane.b32.xlu0 %v2087, 8
    %v2152 = vpop.permute.xlu0 %2151
    %2153 = vrot.lane.b32.xlu0 %v2090, 8
    %v2154 = vpop.permute.xlu0 %2153
    %2155 = vrot.lane.b32.xlu0 %v2092, 8
    %v2156 = vpop.permute.xlu0 %2155
    %2189 = vst.msk [vmem:[#allocation3 + $0x100] sm:$0xff] %vm837, %v2094
    %2190 = vst.msk [vmem:[#allocation3 + $0x108] sm:$0xff] %vm837, %v2096
    %2191 = vst.msk [vmem:[#allocation3 + $0x110] sm:$0xff] %vm837, %v2098
    %2192 = vst.msk [vmem:[#allocation3 + $0x118] sm:$0xff] %vm837, %v2100
    %2193 = vst.msk [vmem:[#allocation3 + $0x120] sm:$0xff] %vm837, %v2102
    %2194 = vst.msk [vmem:[#allocation3 + $0x128] sm:$0xff] %vm837, %v2104
    %2195 = vst.msk [vmem:[#allocation3 + $0x130] sm:$0xff] %vm837, %v2106
    %2196 = vst.msk [vmem:[#allocation3 + $0x138] sm:$0xff] %vm837, %v2108
    %2197 = vst.msk [vmem:[#allocation3 + $0x140] sm:$0xff] %vm837, %v2110
    %2198 = vst.msk [vmem:[#allocation3 + $0x148] sm:$0xff] %vm837, %v2112
    %2199 = vst.msk [vmem:[#allocation3 + $0x150] sm:$0xff] %vm837, %v2114
    %2200 = vst.msk [vmem:[#allocation3 + $0x158] sm:$0xff] %vm837, %v2116
    %2201 = vst.msk [vmem:[#allocation3 + $0x160] sm:$0xff] %vm837, %v2118
    %2202 = vst.msk [vmem:[#allocation3 + $0x168] sm:$0xff] %vm837, %v2120
    %2203 = vst.msk [vmem:[#allocation3 + $0x170] sm:$0xff] %vm837, %v2122
    %2204 = vst.msk [vmem:[#allocation3 + $0x178] sm:$0xff] %vm837, %v2124
    %2205 = vst.msk [vmem:[#allocation3 + $0x180] sm:$0xff] %vm837, %v2126
    %2206 = vst.msk [vmem:[#allocation3 + $0x188] sm:$0xff] %vm837, %v2128
    %2207 = vst.msk [vmem:[#allocation3 + $0x190] sm:$0xff] %vm837, %v2130
    %2208 = vst.msk [vmem:[#allocation3 + $0x198] sm:$0xff] %vm837, %v2132
    %2209 = vst.msk [vmem:[#allocation3 + $0x1a0] sm:$0xff] %vm837, %v2134
    %2210 = vst.msk [vmem:[#allocation3 + $0x1a8] sm:$0xff] %vm837, %v2136
    %2211 = vst.msk [vmem:[#allocation3 + $0x1b0] sm:$0xff] %vm837, %v2138
    %2212 = vst.msk [vmem:[#allocation3 + $0x1b8] sm:$0xff] %vm837, %v2140
    %2213 = vst.msk [vmem:[#allocation3 + $0x1c0] sm:$0xff] %vm837, %v2142
    %2214 = vst.msk [vmem:[#allocation3 + $0x1c8] sm:$0xff] %vm837, %v2144
    %2215 = vst.msk [vmem:[#allocation3 + $0x1d0] sm:$0xff] %vm837, %v2146
    %2216 = vst.msk [vmem:[#allocation3 + $0x1d8] sm:$0xff] %vm837, %v2148
    %2217 = vst.msk [vmem:[#allocation3 + $0x1e0] sm:$0xff] %vm837, %v2150
    %2218 = vst.msk [vmem:[#allocation3 + $0x1e8] sm:$0xff] %vm837, %v2152
    %2219 = vst.msk [vmem:[#allocation3 + $0x1f0] sm:$0xff] %vm837, %v2154
    %2220 = vst.msk [vmem:[#allocation3 + $0x1f8] sm:$0xff] %vm837, %v2156
    %2223 = vrot.lane.b32.xlu0 %v1674, 12
    %v2224 = vpop.permute.xlu0 %2223
    %2225 = vrot.lane.b32.xlu0 %v1675, 12
    %v2226 = vpop.permute.xlu0 %2225
    %2227 = vrot.lane.b32.xlu0 %v1677, 12
    %v2228 = vpop.permute.xlu0 %2227
    %2229 = vrot.lane.b32.xlu0 %v1678, 12
    %v2230 = vpop.permute.xlu0 %2229
    %2231 = vrot.lane.b32.xlu0 %v1680, 12
    %v2232 = vpop.permute.xlu0 %2231
    %2233 = vrot.lane.b32.xlu0 %v1681, 12
    %v2234 = vpop.permute.xlu0 %2233
    %2235 = vrot.lane.b32.xlu0 %v1683, 12
    %v2236 = vpop.permute.xlu0 %2235
    %2237 = vrot.lane.b32.xlu0 %v1684, 12
    %v2238 = vpop.permute.xlu0 %2237
    %2239 = vrot.lane.b32.xlu0 %v1686, 12
    %v2240 = vpop.permute.xlu0 %2239
    %2241 = vrot.lane.b32.xlu0 %v1687, 12
    %v2242 = vpop.permute.xlu0 %2241
    %2243 = vrot.lane.b32.xlu0 %v1689, 12
    %v2244 = vpop.permute.xlu0 %2243
    %2245 = vrot.lane.b32.xlu0 %v1690, 12
    %v2246 = vpop.permute.xlu0 %2245
    %2247 = vrot.lane.b32.xlu0 %v1692, 12
    %v2248 = vpop.permute.xlu0 %2247
    %2249 = vrot.lane.b32.xlu0 %v1693, 12
    %v2250 = vpop.permute.xlu0 %2249
    %2251 = vrot.lane.b32.xlu0 %v1695, 12
    %v2252 = vpop.permute.xlu0 %2251
    %2253 = vrot.lane.b32.xlu0 %v1696, 12
    %v2254 = vpop.permute.xlu0 %2253
    %2255 = vrot.lane.b32.xlu0 %v1698, 12
    %v2256 = vpop.permute.xlu0 %2255
    %2257 = vrot.lane.b32.xlu0 %v1699, 12
    %v2258 = vpop.permute.xlu0 %2257
    %2259 = vrot.lane.b32.xlu0 %v1701, 12
    %v2260 = vpop.permute.xlu0 %2259
    %2261 = vrot.lane.b32.xlu0 %v1702, 12
    %v2262 = vpop.permute.xlu0 %2261
    %2263 = vrot.lane.b32.xlu0 %v1704, 12
    %v2264 = vpop.permute.xlu0 %2263
    %2265 = vrot.lane.b32.xlu0 %v1705, 12
    %v2266 = vpop.permute.xlu0 %2265
    %2267 = vrot.lane.b32.xlu0 %v1707, 12
    %v2268 = vpop.permute.xlu0 %2267
    %2269 = vrot.lane.b32.xlu0 %v1708, 12
    %v2270 = vpop.permute.xlu0 %2269
    %2271 = vrot.lane.b32.xlu0 %v1710, 12
    %v2272 = vpop.permute.xlu0 %2271
    %2273 = vrot.lane.b32.xlu0 %v1711, 12
    %v2274 = vpop.permute.xlu0 %2273
    %2275 = vrot.lane.b32.xlu0 %v1713, 12
    %v2276 = vpop.permute.xlu0 %2275
    %2277 = vrot.lane.b32.xlu0 %v1714, 12
    %v2278 = vpop.permute.xlu0 %2277
    %2279 = vrot.lane.b32.xlu0 %v1716, 12
    %v2280 = vpop.permute.xlu0 %2279
    %2281 = vrot.lane.b32.xlu0 %v1717, 12
    %v2282 = vpop.permute.xlu0 %2281
    %2283 = vrot.lane.b32.xlu0 %v1719, 12
    %v2284 = vpop.permute.xlu0 %2283
    %2285 = vrot.lane.b32.xlu0 %v1720, 12
    %v2286 = vpop.permute.xlu0 %2285
    %2319 = vst.msk [vmem:[#allocation3 + $0x100] sm:$0xff] %vm968, %v2224
    %2320 = vst.msk [vmem:[#allocation3 + $0x108] sm:$0xff] %vm968, %v2226
    %2321 = vst.msk [vmem:[#allocation3 + $0x110] sm:$0xff] %vm968, %v2228
    %2322 = vst.msk [vmem:[#allocation3 + $0x118] sm:$0xff] %vm968, %v2230
    %2323 = vst.msk [vmem:[#allocation3 + $0x120] sm:$0xff] %vm968, %v2232
    %2324 = vst.msk [vmem:[#allocation3 + $0x128] sm:$0xff] %vm968, %v2234
    %2325 = vst.msk [vmem:[#allocation3 + $0x130] sm:$0xff] %vm968, %v2236
    %2326 = vst.msk [vmem:[#allocation3 + $0x138] sm:$0xff] %vm968, %v2238
    %2327 = vst.msk [vmem:[#allocation3 + $0x140] sm:$0xff] %vm968, %v2240
    %2328 = vst.msk [vmem:[#allocation3 + $0x148] sm:$0xff] %vm968, %v2242
    %2329 = vst.msk [vmem:[#allocation3 + $0x150] sm:$0xff] %vm968, %v2244
    %2330 = vst.msk [vmem:[#allocation3 + $0x158] sm:$0xff] %vm968, %v2246
    %2331 = vst.msk [vmem:[#allocation3 + $0x160] sm:$0xff] %vm968, %v2248
    %2332 = vst.msk [vmem:[#allocation3 + $0x168] sm:$0xff] %vm968, %v2250
    %2333 = vst.msk [vmem:[#allocation3 + $0x170] sm:$0xff] %vm968, %v2252
    %2334 = vst.msk [vmem:[#allocation3 + $0x178] sm:$0xff] %vm968, %v2254
    %2335 = vst.msk [vmem:[#allocation3 + $0x180] sm:$0xff] %vm968, %v2256
    %2336 = vst.msk [vmem:[#allocation3 + $0x188] sm:$0xff] %vm968, %v2258
    %2337 = vst.msk [vmem:[#allocation3 + $0x190] sm:$0xff] %vm968, %v2260
    %2338 = vst.msk [vmem:[#allocation3 + $0x198] sm:$0xff] %vm968, %v2262
    %2339 = vst.msk [vmem:[#allocation3 + $0x1a0] sm:$0xff] %vm968, %v2264
    %2340 = vst.msk [vmem:[#allocation3 + $0x1a8] sm:$0xff] %vm968, %v2266
    %2341 = vst.msk [vmem:[#allocation3 + $0x1b0] sm:$0xff] %vm968, %v2268
    %2342 = vst.msk [vmem:[#allocation3 + $0x1b8] sm:$0xff] %vm968, %v2270
    %2343 = vst.msk [vmem:[#allocation3 + $0x1c0] sm:$0xff] %vm968, %v2272
    %2344 = vst.msk [vmem:[#allocation3 + $0x1c8] sm:$0xff] %vm968, %v2274
    %2345 = vst.msk [vmem:[#allocation3 + $0x1d0] sm:$0xff] %vm968, %v2276
    %2346 = vst.msk [vmem:[#allocation3 + $0x1d8] sm:$0xff] %vm968, %v2278
    %2347 = vst.msk [vmem:[#allocation3 + $0x1e0] sm:$0xff] %vm968, %v2280
    %2348 = vst.msk [vmem:[#allocation3 + $0x1e8] sm:$0xff] %vm968, %v2282
    %2349 = vst.msk [vmem:[#allocation3 + $0x1f0] sm:$0xff] %vm968, %v2284
    %2350 = vst.msk [vmem:[#allocation3 + $0x1f8] sm:$0xff] %vm968, %v2286
    %v2352 = vrot.slane %v1719, 1
    %v2353 = vrot.slane %v1720, 1
    %v2354 = vsel %vm450, %v2352, %v2353
    %v2355 = vrot.slane %v1721, 1
    %v2356 = vsel %vm450, %v2353, %v2355
    %2357 = vrot.lane.b32.xlu0 %v1812, 16
    %v2358 = vpop.permute.xlu0 %2357
    %2359 = vrot.lane.b32.xlu0 %v1814, 16
    %v2360 = vpop.permute.xlu0 %2359
    %2361 = vrot.lane.b32.xlu0 %v1817, 16
    %v2362 = vpop.permute.xlu0 %2361
    %2363 = vrot.lane.b32.xlu0 %v1819, 16
    %v2364 = vpop.permute.xlu0 %2363
    %2365 = vrot.lane.b32.xlu0 %v1822, 16
    %v2366 = vpop.permute.xlu0 %2365
    %2367 = vrot.lane.b32.xlu0 %v1824, 16
    %v2368 = vpop.permute.xlu0 %2367
    %2369 = vrot.lane.b32.xlu0 %v1827, 16
    %v2370 = vpop.permute.xlu0 %2369
    %2371 = vrot.lane.b32.xlu0 %v1829, 16
    %v2372 = vpop.permute.xlu0 %2371
    %2373 = vrot.lane.b32.xlu0 %v1832, 16
    %v2374 = vpop.permute.xlu0 %2373
    %2375 = vrot.lane.b32.xlu0 %v1834, 16
    %v2376 = vpop.permute.xlu0 %2375
    %2377 = vrot.lane.b32.xlu0 %v1837, 16
    %v2378 = vpop.permute.xlu0 %2377
    %2379 = vrot.lane.b32.xlu0 %v1839, 16
    %v2380 = vpop.permute.xlu0 %2379
    %2381 = vrot.lane.b32.xlu0 %v1842, 16
    %v2382 = vpop.permute.xlu0 %2381
    %2383 = vrot.lane.b32.xlu0 %v1844, 16
    %v2384 = vpop.permute.xlu0 %2383
    %2385 = vrot.lane.b32.xlu0 %v1847, 16
    %v2386 = vpop.permute.xlu0 %2385
    %2387 = vrot.lane.b32.xlu0 %v1849, 16
    %v2388 = vpop.permute.xlu0 %2387
    %2389 = vrot.lane.b32.xlu0 %v1852, 16
    %v2390 = vpop.permute.xlu0 %2389
    %2391 = vrot.lane.b32.xlu0 %v1854, 16
    %v2392 = vpop.permute.xlu0 %2391
    %2393 = vrot.lane.b32.xlu0 %v1857, 16
    %v2394 = vpop.permute.xlu0 %2393
    %2395 = vrot.lane.b32.xlu0 %v1859, 16
    %v2396 = vpop.permute.xlu0 %2395
    %2397 = vrot.lane.b32.xlu0 %v1862, 16
    %v2398 = vpop.permute.xlu0 %2397
    %2399 = vrot.lane.b32.xlu0 %v1864, 16
    %v2400 = vpop.permute.xlu0 %2399
    %2401 = vrot.lane.b32.xlu0 %v1867, 16
    %v2402 = vpop.permute.xlu0 %2401
    %2403 = vrot.lane.b32.xlu0 %v1869, 16
    %v2404 = vpop.permute.xlu0 %2403
    %2405 = vrot.lane.b32.xlu0 %v1872, 16
    %v2406 = vpop.permute.xlu0 %2405
    %2407 = vrot.lane.b32.xlu0 %v1874, 16
    %v2408 = vpop.permute.xlu0 %2407
    %2409 = vrot.lane.b32.xlu0 %v1877, 16
    %v2410 = vpop.permute.xlu0 %2409
    %2411 = vrot.lane.b32.xlu0 %v1879, 16
    %v2412 = vpop.permute.xlu0 %2411
    %2413 = vrot.lane.b32.xlu0 %v1882, 16
    %v2414 = vpop.permute.xlu0 %2413
    %2415 = vrot.lane.b32.xlu0 %v1884, 16
    %v2416 = vpop.permute.xlu0 %2415
    %2417 = vrot.lane.b32.xlu0 %v2354, 16
    %v2418 = vpop.permute.xlu0 %2417
    %2419 = vrot.lane.b32.xlu0 %v2356, 16
    %v2420 = vpop.permute.xlu0 %2419
    %2453 = vst.msk [vmem:[#allocation3 + $0x100] sm:$0xff] %vm1103, %v2358
    %2454 = vst.msk [vmem:[#allocation3 + $0x108] sm:$0xff] %vm1103, %v2360
    %2455 = vst.msk [vmem:[#allocation3 + $0x110] sm:$0xff] %vm1103, %v2362
    %2456 = vst.msk [vmem:[#allocation3 + $0x118] sm:$0xff] %vm1103, %v2364
    %2457 = vst.msk [vmem:[#allocation3 + $0x120] sm:$0xff] %vm1103, %v2366
    %2458 = vst.msk [vmem:[#allocation3 + $0x128] sm:$0xff] %vm1103, %v2368
    %2459 = vst.msk [vmem:[#allocation3 + $0x130] sm:$0xff] %vm1103, %v2370
    %2460 = vst.msk [vmem:[#allocation3 + $0x138] sm:$0xff] %vm1103, %v2372
    %2461 = vst.msk [vmem:[#allocation3 + $0x140] sm:$0xff] %vm1103, %v2374
    %2462 = vst.msk [vmem:[#allocation3 + $0x148] sm:$0xff] %vm1103, %v2376
    %2463 = vst.msk [vmem:[#allocation3 + $0x150] sm:$0xff] %vm1103, %v2378
    %2464 = vst.msk [vmem:[#allocation3 + $0x158] sm:$0xff] %vm1103, %v2380
    %2465 = vst.msk [vmem:[#allocation3 + $0x160] sm:$0xff] %vm1103, %v2382
    %2466 = vst.msk [vmem:[#allocation3 + $0x168] sm:$0xff] %vm1103, %v2384
    %2467 = vst.msk [vmem:[#allocation3 + $0x170] sm:$0xff] %vm1103, %v2386
    %2468 = vst.msk [vmem:[#allocation3 + $0x178] sm:$0xff] %vm1103, %v2388
    %2469 = vst.msk [vmem:[#allocation3 + $0x180] sm:$0xff] %vm1103, %v2390
    %2470 = vst.msk [vmem:[#allocation3 + $0x188] sm:$0xff] %vm1103, %v2392
    %2471 = vst.msk [vmem:[#allocation3 + $0x190] sm:$0xff] %vm1103, %v2394
    %2472 = vst.msk [vmem:[#allocation3 + $0x198] sm:$0xff] %vm1103, %v2396
    %2473 = vst.msk [vmem:[#allocation3 + $0x1a0] sm:$0xff] %vm1103, %v2398
    %2474 = vst.msk [vmem:[#allocation3 + $0x1a8] sm:$0xff] %vm1103, %v2400
    %2475 = vst.msk [vmem:[#allocation3 + $0x1b0] sm:$0xff] %vm1103, %v2402
    %2476 = vst.msk [vmem:[#allocation3 + $0x1b8] sm:$0xff] %vm1103, %v2404
    %2477 = vst.msk [vmem:[#allocation3 + $0x1c0] sm:$0xff] %vm1103, %v2406
    %2478 = vst.msk [vmem:[#allocation3 + $0x1c8] sm:$0xff] %vm1103, %v2408
    %2479 = vst.msk [vmem:[#allocation3 + $0x1d0] sm:$0xff] %vm1103, %v2410
    %2480 = vst.msk [vmem:[#allocation3 + $0x1d8] sm:$0xff] %vm1103, %v2412
    %2481 = vst.msk [vmem:[#allocation3 + $0x1e0] sm:$0xff] %vm1103, %v2414
    %2482 = vst.msk [vmem:[#allocation3 + $0x1e8] sm:$0xff] %vm1103, %v2416
    %2483 = vst.msk [vmem:[#allocation3 + $0x1f0] sm:$0xff] %vm1103, %v2418
    %2484 = vst.msk [vmem:[#allocation3 + $0x1f8] sm:$0xff] %vm1103, %v2420
    %v2485 = vrot.slane %v1719, 2
    %v2486 = vrot.slane %v1720, 2
    %v2487 = vsel %vm660, %v2485, %v2486
    %v2488 = vrot.slane %v1721, 2
    %v2489 = vsel %vm660, %v2486, %v2488
    %2490 = vrot.lane.b32.xlu0 %v2020, 20
    %v2491 = vpop.permute.xlu0 %2490
    %2492 = vrot.lane.b32.xlu0 %v2022, 20
    %v2493 = vpop.permute.xlu0 %2492
    %2494 = vrot.lane.b32.xlu0 %v2025, 20
    %v2495 = vpop.permute.xlu0 %2494
    %2496 = vrot.lane.b32.xlu0 %v2027, 20
    %v2497 = vpop.permute.xlu0 %2496
    %2498 = vrot.lane.b32.xlu0 %v2030, 20
    %v2499 = vpop.permute.xlu0 %2498
    %2500 = vrot.lane.b32.xlu0 %v2032, 20
    %v2501 = vpop.permute.xlu0 %2500
    %2502 = vrot.lane.b32.xlu0 %v2035, 20
    %v2503 = vpop.permute.xlu0 %2502
    %2504 = vrot.lane.b32.xlu0 %v2037, 20
    %v2505 = vpop.permute.xlu0 %2504
    %2506 = vrot.lane.b32.xlu0 %v2040, 20
    %v2507 = vpop.permute.xlu0 %2506
    %2508 = vrot.lane.b32.xlu0 %v2042, 20
    %v2509 = vpop.permute.xlu0 %2508
    %2510 = vrot.lane.b32.xlu0 %v2045, 20
    %v2511 = vpop.permute.xlu0 %2510
    %2512 = vrot.lane.b32.xlu0 %v2047, 20
    %v2513 = vpop.permute.xlu0 %2512
    %2514 = vrot.lane.b32.xlu0 %v2050, 20
    %v2515 = vpop.permute.xlu0 %2514
    %2516 = vrot.lane.b32.xlu0 %v2052, 20
    %v2517 = vpop.permute.xlu0 %2516
    %2518 = vrot.lane.b32.xlu0 %v2055, 20
    %v2519 = vpop.permute.xlu0 %2518
    %2520 = vrot.lane.b32.xlu0 %v2057, 20
    %v2521 = vpop.permute.xlu0 %2520
    %2522 = vrot.lane.b32.xlu0 %v2060, 20
    %v2523 = vpop.permute.xlu0 %2522
    %2524 = vrot.lane.b32.xlu0 %v2062, 20
    %v2525 = vpop.permute.xlu0 %2524
    %2526 = vrot.lane.b32.xlu0 %v2065, 20
    %v2527 = vpop.permute.xlu0 %2526
    %2528 = vrot.lane.b32.xlu0 %v2067, 20
    %v2529 = vpop.permute.xlu0 %2528
    %2530 = vrot.lane.b32.xlu0 %v2070, 20
    %v2531 = vpop.permute.xlu0 %2530
    %2532 = vrot.lane.b32.xlu0 %v2072, 20
    %v2533 = vpop.permute.xlu0 %2532
    %2534 = vrot.lane.b32.xlu0 %v2075, 20
    %v2535 = vpop.permute.xlu0 %2534
    %2536 = vrot.lane.b32.xlu0 %v2077, 20
    %v2537 = vpop.permute.xlu0 %2536
    %2538 = vrot.lane.b32.xlu0 %v2080, 20
    %v2539 = vpop.permute.xlu0 %2538
    %2540 = vrot.lane.b32.xlu0 %v2082, 20
    %v2541 = vpop.permute.xlu0 %2540
    %2542 = vrot.lane.b32.xlu0 %v2085, 20
    %v2543 = vpop.permute.xlu0 %2542
    %2544 = vrot.lane.b32.xlu0 %v2087, 20
    %v2545 = vpop.permute.xlu0 %2544
    %2546 = vrot.lane.b32.xlu0 %v2090, 20
    %v2547 = vpop.permute.xlu0 %2546
    %2548 = vrot.lane.b32.xlu0 %v2092, 20
    %v2549 = vpop.permute.xlu0 %2548
    %2550 = vrot.lane.b32.xlu0 %v2487, 20
    %v2551 = vpop.permute.xlu0 %2550
    %2552 = vrot.lane.b32.xlu0 %v2489, 20
    %v2553 = vpop.permute.xlu0 %2552
    %2586 = vst.msk [vmem:[#allocation3 + $0x100] sm:$0xff] %vm1237, %v2491
    %2587 = vst.msk [vmem:[#allocation3 + $0x108] sm:$0xff] %vm1237, %v2493
    %2588 = vst.msk [vmem:[#allocation3 + $0x110] sm:$0xff] %vm1237, %v2495
    %2589 = vst.msk [vmem:[#allocation3 + $0x118] sm:$0xff] %vm1237, %v2497
    %2590 = vst.msk [vmem:[#allocation3 + $0x120] sm:$0xff] %vm1237, %v2499
    %2591 = vst.msk [vmem:[#allocation3 + $0x128] sm:$0xff] %vm1237, %v2501
    %2592 = vst.msk [vmem:[#allocation3 + $0x130] sm:$0xff] %vm1237, %v2503
    %2593 = vst.msk [vmem:[#allocation3 + $0x138] sm:$0xff] %vm1237, %v2505
    %2594 = vst.msk [vmem:[#allocation3 + $0x140] sm:$0xff] %vm1237, %v2507
    %2595 = vst.msk [vmem:[#allocation3 + $0x148] sm:$0xff] %vm1237, %v2509
    %2596 = vst.msk [vmem:[#allocation3 + $0x150] sm:$0xff] %vm1237, %v2511
    %2597 = vst.msk [vmem:[#allocation3 + $0x158] sm:$0xff] %vm1237, %v2513
    %2598 = vst.msk [vmem:[#allocation3 + $0x160] sm:$0xff] %vm1237, %v2515
    %2599 = vst.msk [vmem:[#allocation3 + $0x168] sm:$0xff] %vm1237, %v2517
    %2600 = vst.msk [vmem:[#allocation3 + $0x170] sm:$0xff] %vm1237, %v2519
    %2601 = vst.msk [vmem:[#allocation3 + $0x178] sm:$0xff] %vm1237, %v2521
    %2602 = vst.msk [vmem:[#allocation3 + $0x180] sm:$0xff] %vm1237, %v2523
    %2603 = vst.msk [vmem:[#allocation3 + $0x188] sm:$0xff] %vm1237, %v2525
    %2604 = vst.msk [vmem:[#allocation3 + $0x190] sm:$0xff] %vm1237, %v2527
    %2605 = vst.msk [vmem:[#allocation3 + $0x198] sm:$0xff] %vm1237, %v2529
    %2606 = vst.msk [vmem:[#allocation3 + $0x1a0] sm:$0xff] %vm1237, %v2531
    %2607 = vst.msk [vmem:[#allocation3 + $0x1a8] sm:$0xff] %vm1237, %v2533
    %2608 = vst.msk [vmem:[#allocation3 + $0x1b0] sm:$0xff] %vm1237, %v2535
    %2609 = vst.msk [vmem:[#allocation3 + $0x1b8] sm:$0xff] %vm1237, %v2537
    %2610 = vst.msk [vmem:[#allocation3 + $0x1c0] sm:$0xff] %vm1237, %v2539
    %2611 = vst.msk [vmem:[#allocation3 + $0x1c8] sm:$0xff] %vm1237, %v2541
    %2612 = vst.msk [vmem:[#allocation3 + $0x1d0] sm:$0xff] %vm1237, %v2543
    %2613 = vst.msk [vmem:[#allocation3 + $0x1d8] sm:$0xff] %vm1237, %v2545
    %2614 = vst.msk [vmem:[#allocation3 + $0x1e0] sm:$0xff] %vm1237, %v2547
    %2615 = vst.msk [vmem:[#allocation3 + $0x1e8] sm:$0xff] %vm1237, %v2549
    %2616 = vst.msk [vmem:[#allocation3 + $0x1f0] sm:$0xff] %vm1237, %v2551
    %2617 = vst.msk [vmem:[#allocation3 + $0x1f8] sm:$0xff] %vm1237, %v2553
    %2620 = vrot.lane.b32.xlu0 %v1677, 24
    %v2621 = vpop.permute.xlu0 %2620
    %2622 = vrot.lane.b32.xlu0 %v1678, 24
    %v2623 = vpop.permute.xlu0 %2622
    %2624 = vrot.lane.b32.xlu0 %v1680, 24
    %v2625 = vpop.permute.xlu0 %2624
    %2626 = vrot.lane.b32.xlu0 %v1681, 24
    %v2627 = vpop.permute.xlu0 %2626
    %2628 = vrot.lane.b32.xlu0 %v1683, 24
    %v2629 = vpop.permute.xlu0 %2628
    %2630 = vrot.lane.b32.xlu0 %v1684, 24
    %v2631 = vpop.permute.xlu0 %2630
    %2632 = vrot.lane.b32.xlu0 %v1686, 24
    %v2633 = vpop.permute.xlu0 %2632
    %2634 = vrot.lane.b32.xlu0 %v1687, 24
    %v2635 = vpop.permute.xlu0 %2634
    %2636 = vrot.lane.b32.xlu0 %v1689, 24
    %v2637 = vpop.permute.xlu0 %2636
    %2638 = vrot.lane.b32.xlu0 %v1690, 24
    %v2639 = vpop.permute.xlu0 %2638
    %2640 = vrot.lane.b32.xlu0 %v1692, 24
    %v2641 = vpop.permute.xlu0 %2640
    %2642 = vrot.lane.b32.xlu0 %v1693, 24
    %v2643 = vpop.permute.xlu0 %2642
    %2644 = vrot.lane.b32.xlu0 %v1695, 24
    %v2645 = vpop.permute.xlu0 %2644
    %2646 = vrot.lane.b32.xlu0 %v1696, 24
    %v2647 = vpop.permute.xlu0 %2646
    %2648 = vrot.lane.b32.xlu0 %v1698, 24
    %v2649 = vpop.permute.xlu0 %2648
    %2650 = vrot.lane.b32.xlu0 %v1699, 24
    %v2651 = vpop.permute.xlu0 %2650
    %2652 = vrot.lane.b32.xlu0 %v1701, 24
    %v2653 = vpop.permute.xlu0 %2652
    %2654 = vrot.lane.b32.xlu0 %v1702, 24
    %v2655 = vpop.permute.xlu0 %2654
    %2656 = vrot.lane.b32.xlu0 %v1704, 24
    %v2657 = vpop.permute.xlu0 %2656
    %2658 = vrot.lane.b32.xlu0 %v1705, 24
    %v2659 = vpop.permute.xlu0 %2658
    %2660 = vrot.lane.b32.xlu0 %v1707, 24
    %v2661 = vpop.permute.xlu0 %2660
    %2662 = vrot.lane.b32.xlu0 %v1708, 24
    %v2663 = vpop.permute.xlu0 %2662
    %2664 = vrot.lane.b32.xlu0 %v1710, 24
    %v2665 = vpop.permute.xlu0 %2664
    %2666 = vrot.lane.b32.xlu0 %v1711, 24
    %v2667 = vpop.permute.xlu0 %2666
    %2668 = vrot.lane.b32.xlu0 %v1713, 24
    %v2669 = vpop.permute.xlu0 %2668
    %2670 = vrot.lane.b32.xlu0 %v1714, 24
    %v2671 = vpop.permute.xlu0 %2670
    %2672 = vrot.lane.b32.xlu0 %v1716, 24
    %v2673 = vpop.permute.xlu0 %2672
    %2674 = vrot.lane.b32.xlu0 %v1717, 24
    %v2675 = vpop.permute.xlu0 %2674
    %2676 = vrot.lane.b32.xlu0 %v1719, 24
    %v2677 = vpop.permute.xlu0 %2676
    %2678 = vrot.lane.b32.xlu0 %v1720, 24
    %v2679 = vpop.permute.xlu0 %2678
    %2680 = vrot.lane.b32.xlu0 %v1722, 24
    %v2681 = vpop.permute.xlu0 %2680
    %2682 = vrot.lane.b32.xlu0 %v1723, 24
    %v2683 = vpop.permute.xlu0 %2682
    %2716 = vst.msk [vmem:[#allocation3 + $0x100] sm:$0xff] %vm1368, %v2621
    %2717 = vst.msk [vmem:[#allocation3 + $0x108] sm:$0xff] %vm1368, %v2623
    %2718 = vst.msk [vmem:[#allocation3 + $0x110] sm:$0xff] %vm1368, %v2625
    %2719 = vst.msk [vmem:[#allocation3 + $0x118] sm:$0xff] %vm1368, %v2627
    %2720 = vst.msk [vmem:[#allocation3 + $0x120] sm:$0xff] %vm1368, %v2629
    %2721 = vst.msk [vmem:[#allocation3 + $0x128] sm:$0xff] %vm1368, %v2631
    %2722 = vst.msk [vmem:[#allocation3 + $0x130] sm:$0xff] %vm1368, %v2633
    %2723 = vst.msk [vmem:[#allocation3 + $0x138] sm:$0xff] %vm1368, %v2635
    %2724 = vst.msk [vmem:[#allocation3 + $0x140] sm:$0xff] %vm1368, %v2637
    %2725 = vst.msk [vmem:[#allocation3 + $0x148] sm:$0xff] %vm1368, %v2639
    %2726 = vst.msk [vmem:[#allocation3 + $0x150] sm:$0xff] %vm1368, %v2641
    %2727 = vst.msk [vmem:[#allocation3 + $0x158] sm:$0xff] %vm1368, %v2643
    %2728 = vst.msk [vmem:[#allocation3 + $0x160] sm:$0xff] %vm1368, %v2645
    %2729 = vst.msk [vmem:[#allocation3 + $0x168] sm:$0xff] %vm1368, %v2647
    %2730 = vst.msk [vmem:[#allocation3 + $0x170] sm:$0xff] %vm1368, %v2649
    %2731 = vst.msk [vmem:[#allocation3 + $0x178] sm:$0xff] %vm1368, %v2651
    %2732 = vst.msk [vmem:[#allocation3 + $0x180] sm:$0xff] %vm1368, %v2653
    %2733 = vst.msk [vmem:[#allocation3 + $0x188] sm:$0xff] %vm1368, %v2655
    %2734 = vst.msk [vmem:[#allocation3 + $0x190] sm:$0xff] %vm1368, %v2657
    %2735 = vst.msk [vmem:[#allocation3 + $0x198] sm:$0xff] %vm1368, %v2659
    %2736 = vst.msk [vmem:[#allocation3 + $0x1a0] sm:$0xff] %vm1368, %v2661
    %2737 = vst.msk [vmem:[#allocation3 + $0x1a8] sm:$0xff] %vm1368, %v2663
    %2738 = vst.msk [vmem:[#allocation3 + $0x1b0] sm:$0xff] %vm1368, %v2665
    %2739 = vst.msk [vmem:[#allocation3 + $0x1b8] sm:$0xff] %vm1368, %v2667
    %2740 = vst.msk [vmem:[#allocation3 + $0x1c0] sm:$0xff] %vm1368, %v2669
    %2741 = vst.msk [vmem:[#allocation3 + $0x1c8] sm:$0xff] %vm1368, %v2671
    %2742 = vst.msk [vmem:[#allocation3 + $0x1d0] sm:$0xff] %vm1368, %v2673
    %2743 = vst.msk [vmem:[#allocation3 + $0x1d8] sm:$0xff] %vm1368, %v2675
    %2744 = vst.msk [vmem:[#allocation3 + $0x1e0] sm:$0xff] %vm1368, %v2677
    %2745 = vst.msk [vmem:[#allocation3 + $0x1e8] sm:$0xff] %vm1368, %v2679
    %2746 = vst.msk [vmem:[#allocation3 + $0x1f0] sm:$0xff] %vm1368, %v2681
    %2747 = vst.msk [vmem:[#allocation3 + $0x1f8] sm:$0xff] %vm1368, %v2683
    %v2749 = vrot.slane %v1722, 1
    %v2750 = vrot.slane %v1723, 1
    %v2751 = vsel %vm450, %v2749, %v2750
    %v2752 = vrot.slane %v1724, 1
    %v2753 = vsel %vm450, %v2750, %v2752
    %2754 = vrot.lane.b32.xlu0 %v1817, 28
    %v2755 = vpop.permute.xlu0 %2754
    %2756 = vrot.lane.b32.xlu0 %v1819, 28
    %v2757 = vpop.permute.xlu0 %2756
    %2758 = vrot.lane.b32.xlu0 %v1822, 28
    %v2759 = vpop.permute.xlu0 %2758
    %2760 = vrot.lane.b32.xlu0 %v1824, 28
    %v2761 = vpop.permute.xlu0 %2760
    %2762 = vrot.lane.b32.xlu0 %v1827, 28
    %v2763 = vpop.permute.xlu0 %2762
    %2764 = vrot.lane.b32.xlu0 %v1829, 28
    %v2765 = vpop.permute.xlu0 %2764
    %2766 = vrot.lane.b32.xlu0 %v1832, 28
    %v2767 = vpop.permute.xlu0 %2766
    %2768 = vrot.lane.b32.xlu0 %v1834, 28
    %v2769 = vpop.permute.xlu0 %2768
    %2770 = vrot.lane.b32.xlu0 %v1837, 28
    %v2771 = vpop.permute.xlu0 %2770
    %2772 = vrot.lane.b32.xlu0 %v1839, 28
    %v2773 = vpop.permute.xlu0 %2772
    %2774 = vrot.lane.b32.xlu0 %v1842, 28
    %v2775 = vpop.permute.xlu0 %2774
    %2776 = vrot.lane.b32.xlu0 %v1844, 28
    %v2777 = vpop.permute.xlu0 %2776
    %2778 = vrot.lane.b32.xlu0 %v1847, 28
    %v2779 = vpop.permute.xlu0 %2778
    %2780 = vrot.lane.b32.xlu0 %v1849, 28
    %v2781 = vpop.permute.xlu0 %2780
    %2782 = vrot.lane.b32.xlu0 %v1852, 28
    %v2783 = vpop.permute.xlu0 %2782
    %2784 = vrot.lane.b32.xlu0 %v1854, 28
    %v2785 = vpop.permute.xlu0 %2784
    %2786 = vrot.lane.b32.xlu0 %v1857, 28
    %v2787 = vpop.permute.xlu0 %2786
    %2788 = vrot.lane.b32.xlu0 %v1859, 28
    %v2789 = vpop.permute.xlu0 %2788
    %2790 = vrot.lane.b32.xlu0 %v1862, 28
    %v2791 = vpop.permute.xlu0 %2790
    %2792 = vrot.lane.b32.xlu0 %v1864, 28
    %v2793 = vpop.permute.xlu0 %2792
    %2794 = vrot.lane.b32.xlu0 %v1867, 28
    %v2795 = vpop.permute.xlu0 %2794
    %2796 = vrot.lane.b32.xlu0 %v1869, 28
    %v2797 = vpop.permute.xlu0 %2796
    %2798 = vrot.lane.b32.xlu0 %v1872, 28
    %v2799 = vpop.permute.xlu0 %2798
    %2800 = vrot.lane.b32.xlu0 %v1874, 28
    %v2801 = vpop.permute.xlu0 %2800
    %2802 = vrot.lane.b32.xlu0 %v1877, 28
    %v2803 = vpop.permute.xlu0 %2802
    %2804 = vrot.lane.b32.xlu0 %v1879, 28
    %v2805 = vpop.permute.xlu0 %2804
    %2806 = vrot.lane.b32.xlu0 %v1882, 28
    %v2807 = vpop.permute.xlu0 %2806
    %2808 = vrot.lane.b32.xlu0 %v1884, 28
    %v2809 = vpop.permute.xlu0 %2808
    %2810 = vrot.lane.b32.xlu0 %v2354, 28
    %v2811 = vpop.permute.xlu0 %2810
    %2812 = vrot.lane.b32.xlu0 %v2356, 28
    %v2813 = vpop.permute.xlu0 %2812
    %2814 = vrot.lane.b32.xlu0 %v2751, 28
    %v2815 = vpop.permute.xlu0 %2814
    %2816 = vrot.lane.b32.xlu0 %v2753, 28
    %v2817 = vpop.permute.xlu0 %2816
    %2850 = vst.msk [vmem:[#allocation3 + $0x100] sm:$0xff] %vm1503, %v2755
    %2851 = vst.msk [vmem:[#allocation3 + $0x108] sm:$0xff] %vm1503, %v2757
    %2852 = vst.msk [vmem:[#allocation3 + $0x110] sm:$0xff] %vm1503, %v2759
    %2853 = vst.msk [vmem:[#allocation3 + $0x118] sm:$0xff] %vm1503, %v2761
    %2854 = vst.msk [vmem:[#allocation3 + $0x120] sm:$0xff] %vm1503, %v2763
    %2855 = vst.msk [vmem:[#allocation3 + $0x128] sm:$0xff] %vm1503, %v2765
    %2856 = vst.msk [vmem:[#allocation3 + $0x130] sm:$0xff] %vm1503, %v2767
    %2857 = vst.msk [vmem:[#allocation3 + $0x138] sm:$0xff] %vm1503, %v2769
    %2858 = vst.msk [vmem:[#allocation3 + $0x140] sm:$0xff] %vm1503, %v2771
    %2859 = vst.msk [vmem:[#allocation3 + $0x148] sm:$0xff] %vm1503, %v2773
    %2860 = vst.msk [vmem:[#allocation3 + $0x150] sm:$0xff] %vm1503, %v2775
    %2861 = vst.msk [vmem:[#allocation3 + $0x158] sm:$0xff] %vm1503, %v2777
    %2862 = vst.msk [vmem:[#allocation3 + $0x160] sm:$0xff] %vm1503, %v2779
    %2863 = vst.msk [vmem:[#allocation3 + $0x168] sm:$0xff] %vm1503, %v2781
    %2864 = vst.msk [vmem:[#allocation3 + $0x170] sm:$0xff] %vm1503, %v2783
    %2865 = vst.msk [vmem:[#allocation3 + $0x178] sm:$0xff] %vm1503, %v2785
    %2866 = vst.msk [vmem:[#allocation3 + $0x180] sm:$0xff] %vm1503, %v2787
    %2867 = vst.msk [vmem:[#allocation3 + $0x188] sm:$0xff] %vm1503, %v2789
    %2868 = vst.msk [vmem:[#allocation3 + $0x190] sm:$0xff] %vm1503, %v2791
    %2869 = vst.msk [vmem:[#allocation3 + $0x198] sm:$0xff] %vm1503, %v2793
    %2870 = vst.msk [vmem:[#allocation3 + $0x1a0] sm:$0xff] %vm1503, %v2795
    %2871 = vst.msk [vmem:[#allocation3 + $0x1a8] sm:$0xff] %vm1503, %v2797
    %2872 = vst.msk [vmem:[#allocation3 + $0x1b0] sm:$0xff] %vm1503, %v2799
    %2873 = vst.msk [vmem:[#allocation3 + $0x1b8] sm:$0xff] %vm1503, %v2801
    %2874 = vst.msk [vmem:[#allocation3 + $0x1c0] sm:$0xff] %vm1503, %v2803
    %2875 = vst.msk [vmem:[#allocation3 + $0x1c8] sm:$0xff] %vm1503, %v2805
    %2876 = vst.msk [vmem:[#allocation3 + $0x1d0] sm:$0xff] %vm1503, %v2807
    %2877 = vst.msk [vmem:[#allocation3 + $0x1d8] sm:$0xff] %vm1503, %v2809
    %2878 = vst.msk [vmem:[#allocation3 + $0x1e0] sm:$0xff] %vm1503, %v2811
    %2879 = vst.msk [vmem:[#allocation3 + $0x1e8] sm:$0xff] %vm1503, %v2813
    %2880 = vst.msk [vmem:[#allocation3 + $0x1f0] sm:$0xff] %vm1503, %v2815
    %2881 = vst.msk [vmem:[#allocation3 + $0x1f8] sm:$0xff] %vm1503, %v2817
    %v2882 = vrot.slane %v1722, 2
    %v2883 = vrot.slane %v1723, 2
    %v2884 = vsel %vm660, %v2882, %v2883
    %v2885 = vrot.slane %v1724, 2
    %v2886 = vsel %vm660, %v2883, %v2885
    %2887 = vrot.lane.b32.xlu0 %v2025, 32
    %v2888 = vpop.permute.xlu0 %2887
    %2889 = vrot.lane.b32.xlu0 %v2027, 32
    %v2890 = vpop.permute.xlu0 %2889
    %2891 = vrot.lane.b32.xlu0 %v2030, 32
    %v2892 = vpop.permute.xlu0 %2891
    %2893 = vrot.lane.b32.xlu0 %v2032, 32
    %v2894 = vpop.permute.xlu0 %2893
    %2895 = vrot.lane.b32.xlu0 %v2035, 32
    %v2896 = vpop.permute.xlu0 %2895
    %2897 = vrot.lane.b32.xlu0 %v2037, 32
    %v2898 = vpop.permute.xlu0 %2897
    %2899 = vrot.lane.b32.xlu0 %v2040, 32
    %v2900 = vpop.permute.xlu0 %2899
    %2901 = vrot.lane.b32.xlu0 %v2042, 32
    %v2902 = vpop.permute.xlu0 %2901
    %2903 = vrot.lane.b32.xlu0 %v2045, 32
    %v2904 = vpop.permute.xlu0 %2903
    %2905 = vrot.lane.b32.xlu0 %v2047, 32
    %v2906 = vpop.permute.xlu0 %2905
    %2907 = vrot.lane.b32.xlu0 %v2050, 32
    %v2908 = vpop.permute.xlu0 %2907
    %2909 = vrot.lane.b32.xlu0 %v2052, 32
    %v2910 = vpop.permute.xlu0 %2909
    %2911 = vrot.lane.b32.xlu0 %v2055, 32
    %v2912 = vpop.permute.xlu0 %2911
    %2913 = vrot.lane.b32.xlu0 %v2057, 32
    %v2914 = vpop.permute.xlu0 %2913
    %2915 = vrot.lane.b32.xlu0 %v2060, 32
    %v2916 = vpop.permute.xlu0 %2915
    %2917 = vrot.lane.b32.xlu0 %v2062, 32
    %v2918 = vpop.permute.xlu0 %2917
    %2919 = vrot.lane.b32.xlu0 %v2065, 32
    %v2920 = vpop.permute.xlu0 %2919
    %2921 = vrot.lane.b32.xlu0 %v2067, 32
    %v2922 = vpop.permute.xlu0 %2921
    %2923 = vrot.lane.b32.xlu0 %v2070, 32
    %v2924 = vpop.permute.xlu0 %2923
    %2925 = vrot.lane.b32.xlu0 %v2072, 32
    %v2926 = vpop.permute.xlu0 %2925
    %2927 = vrot.lane.b32.xlu0 %v2075, 32
    %v2928 = vpop.permute.xlu0 %2927
    %2929 = vrot.lane.b32.xlu0 %v2077, 32
    %v2930 = vpop.permute.xlu0 %2929
    %2931 = vrot.lane.b32.xlu0 %v2080, 32
    %v2932 = vpop.permute.xlu0 %2931
    %2933 = vrot.lane.b32.xlu0 %v2082, 32
    %v2934 = vpop.permute.xlu0 %2933
    %2935 = vrot.lane.b32.xlu0 %v2085, 32
    %v2936 = vpop.permute.xlu0 %2935
    %2937 = vrot.lane.b32.xlu0 %v2087, 32
    %v2938 = vpop.permute.xlu0 %2937
    %2939 = vrot.lane.b32.xlu0 %v2090, 32
    %v2940 = vpop.permute.xlu0 %2939
    %2941 = vrot.lane.b32.xlu0 %v2092, 32
    %v2942 = vpop.permute.xlu0 %2941
    %2943 = vrot.lane.b32.xlu0 %v2487, 32
    %v2944 = vpop.permute.xlu0 %2943
    %2945 = vrot.lane.b32.xlu0 %v2489, 32
    %v2946 = vpop.permute.xlu0 %2945
    %2947 = vrot.lane.b32.xlu0 %v2884, 32
    %v2948 = vpop.permute.xlu0 %2947
    %2949 = vrot.lane.b32.xlu0 %v2886, 32
    %v2950 = vpop.permute.xlu0 %2949
    %2983 = vst.msk [vmem:[#allocation3 + $0x100] sm:$0xff] %vm1637, %v2888
    %2984 = vst.msk [vmem:[#allocation3 + $0x108] sm:$0xff] %vm1637, %v2890
    %2985 = vst.msk [vmem:[#allocation3 + $0x110] sm:$0xff] %vm1637, %v2892
    %2986 = vst.msk [vmem:[#allocation3 + $0x118] sm:$0xff] %vm1637, %v2894
    %2987 = vst.msk [vmem:[#allocation3 + $0x120] sm:$0xff] %vm1637, %v2896
    %2988 = vst.msk [vmem:[#allocation3 + $0x128] sm:$0xff] %vm1637, %v2898
    %2989 = vst.msk [vmem:[#allocation3 + $0x130] sm:$0xff] %vm1637, %v2900
    %2990 = vst.msk [vmem:[#allocation3 + $0x138] sm:$0xff] %vm1637, %v2902
    %2991 = vst.msk [vmem:[#allocation3 + $0x140] sm:$0xff] %vm1637, %v2904
    %2992 = vst.msk [vmem:[#allocation3 + $0x148] sm:$0xff] %vm1637, %v2906
    %2993 = vst.msk [vmem:[#allocation3 + $0x150] sm:$0xff] %vm1637, %v2908
    %2994 = vst.msk [vmem:[#allocation3 + $0x158] sm:$0xff] %vm1637, %v2910
    %2995 = vst.msk [vmem:[#allocation3 + $0x160] sm:$0xff] %vm1637, %v2912
    %2996 = vst.msk [vmem:[#allocation3 + $0x168] sm:$0xff] %vm1637, %v2914
    %2997 = vst.msk [vmem:[#allocation3 + $0x170] sm:$0xff] %vm1637, %v2916
    %2998 = vst.msk [vmem:[#allocation3 + $0x178] sm:$0xff] %vm1637, %v2918
    %2999 = vst.msk [vmem:[#allocation3 + $0x180] sm:$0xff] %vm1637, %v2920
    %3000 = vst.msk [vmem:[#allocation3 + $0x188] sm:$0xff] %vm1637, %v2922
    %3001 = vst.msk [vmem:[#allocation3 + $0x190] sm:$0xff] %vm1637, %v2924
    %3002 = vst.msk [vmem:[#allocation3 + $0x198] sm:$0xff] %vm1637, %v2926
    %3003 = vst.msk [vmem:[#allocation3 + $0x1a0] sm:$0xff] %vm1637, %v2928
    %3004 = vst.msk [vmem:[#allocation3 + $0x1a8] sm:$0xff] %vm1637, %v2930
    %3005 = vst.msk [vmem:[#allocation3 + $0x1b0] sm:$0xff] %vm1637, %v2932
    %3006 = vst.msk [vmem:[#allocation3 + $0x1b8] sm:$0xff] %vm1637, %v2934
    %3007 = vst.msk [vmem:[#allocation3 + $0x1c0] sm:$0xff] %vm1637, %v2936
    %3008 = vst.msk [vmem:[#allocation3 + $0x1c8] sm:$0xff] %vm1637, %v2938
    %3009 = vst.msk [vmem:[#allocation3 + $0x1d0] sm:$0xff] %vm1637, %v2940
    %3010 = vst.msk [vmem:[#allocation3 + $0x1d8] sm:$0xff] %vm1637, %v2942
    %3011 = vst.msk [vmem:[#allocation3 + $0x1e0] sm:$0xff] %vm1637, %v2944
    %3012 = vst.msk [vmem:[#allocation3 + $0x1e8] sm:$0xff] %vm1637, %v2946
    %3013 = vst.msk [vmem:[#allocation3 + $0x1f0] sm:$0xff] %vm1637, %v2948
    %3014 = vst.msk [vmem:[#allocation3 + $0x1f8] sm:$0xff] %vm1637, %v2950
    %v3015 = vld [vmem:[#allocation3] sm:$0xff]
    %v3016 = vld [vmem:[#allocation3 + $0x8] sm:$0xff]
    %v3017 = vld [vmem:[#allocation3 + $0x10] sm:$0xff]
    %v3018 = vld [vmem:[#allocation3 + $0x18] sm:$0xff]
    %v3019 = vld [vmem:[#allocation3 + $0x20] sm:$0xff]
    %v3020 = vld [vmem:[#allocation3 + $0x28] sm:$0xff]
    %v3021 = vld [vmem:[#allocation3 + $0x30] sm:$0xff]
    %v3022 = vld [vmem:[#allocation3 + $0x38] sm:$0xff]
    %v3023 = vld [vmem:[#allocation3 + $0x40] sm:$0xff]
    %v3024 = vld [vmem:[#allocation3 + $0x48] sm:$0xff]
    %v3025 = vld [vmem:[#allocation3 + $0x50] sm:$0xff]
    %v3026 = vld [vmem:[#allocation3 + $0x58] sm:$0xff]
    %v3027 = vld [vmem:[#allocation3 + $0x60] sm:$0xff]
    %v3028 = vld [vmem:[#allocation3 + $0x68] sm:$0xff]
    %v3029 = vld [vmem:[#allocation3 + $0x70] sm:$0xff]
    %v3030 = vld [vmem:[#allocation3 + $0x78] sm:$0xff]
    %v3031 = vld [vmem:[#allocation3 + $0x80] sm:$0xff]
    %v3032 = vld [vmem:[#allocation3 + $0x88] sm:$0xff]
    %v3033 = vld [vmem:[#allocation3 + $0x90] sm:$0xff]
    %v3034 = vld [vmem:[#allocation3 + $0x98] sm:$0xff]
    %v3035 = vld [vmem:[#allocation3 + $0xa0] sm:$0xff]
    %v3036 = vld [vmem:[#allocation3 + $0xa8] sm:$0xff]
    %v3037 = vld [vmem:[#allocation3 + $0xb0] sm:$0xff]
    %v3038 = vld [vmem:[#allocation3 + $0xb8] sm:$0xff]
    %v3039 = vld [vmem:[#allocation3 + $0xc0] sm:$0xff]
    %v3040 = vld [vmem:[#allocation3 + $0xc8] sm:$0xff]
    %v3041 = vld [vmem:[#allocation3 + $0xd0] sm:$0xff]
    %v3042 = vld [vmem:[#allocation3 + $0xd8] sm:$0xff]
    %v3043 = vld [vmem:[#allocation3 + $0xe0] sm:$0xff]
    %v3044 = vld [vmem:[#allocation3 + $0xe8] sm:$0xff]
    %v3045 = vld [vmem:[#allocation3 + $0xf0] sm:$0xff]
    %v3046 = vld [vmem:[#allocation3 + $0xf8] sm:$0xff]
    %v3047 = vld [vmem:[#allocation3 + $0x100] sm:$0xff]
    %v3048 = vld [vmem:[#allocation3 + $0x108] sm:$0xff]
    %v3049 = vld [vmem:[#allocation3 + $0x110] sm:$0xff]
    %v3050 = vld [vmem:[#allocation3 + $0x118] sm:$0xff]
    %v3051 = vld [vmem:[#allocation3 + $0x120] sm:$0xff]
    %v3052 = vld [vmem:[#allocation3 + $0x128] sm:$0xff]
    %v3053 = vld [vmem:[#allocation3 + $0x130] sm:$0xff]
    %v3054 = vld [vmem:[#allocation3 + $0x138] sm:$0xff]
    %v3055 = vld [vmem:[#allocation3 + $0x140] sm:$0xff]
    %v3056 = vld [vmem:[#allocation3 + $0x148] sm:$0xff]
    %v3057 = vld [vmem:[#allocation3 + $0x150] sm:$0xff]
    %v3058 = vld [vmem:[#allocation3 + $0x158] sm:$0xff]
    %v3059 = vld [vmem:[#allocation3 + $0x160] sm:$0xff]
    %v3060 = vld [vmem:[#allocation3 + $0x168] sm:$0xff]
    %v3061 = vld [vmem:[#allocation3 + $0x170] sm:$0xff]
    %v3062 = vld [vmem:[#allocation3 + $0x178] sm:$0xff]
    %v3063 = vld [vmem:[#allocation3 + $0x180] sm:$0xff]
    %v3064 = vld [vmem:[#allocation3 + $0x188] sm:$0xff]
    %v3065 = vld [vmem:[#allocation3 + $0x190] sm:$0xff]
    %v3066 = vld [vmem:[#allocation3 + $0x198] sm:$0xff]
    %v3067 = vld [vmem:[#allocation3 + $0x1a0] sm:$0xff]
    %v3068 = vld [vmem:[#allocation3 + $0x1a8] sm:$0xff]
    %v3069 = vld [vmem:[#allocation3 + $0x1b0] sm:$0xff]
    %v3070 = vld [vmem:[#allocation3 + $0x1b8] sm:$0xff]
    %v3071 = vld [vmem:[#allocation3 + $0x1c0] sm:$0xff]
    %v3072 = vld [vmem:[#allocation3 + $0x1c8] sm:$0xff]
    %v3073 = vld [vmem:[#allocation3 + $0x1d0] sm:$0xff]
    %v3074 = vld [vmem:[#allocation3 + $0x1d8] sm:$0xff]
    %v3075 = vld [vmem:[#allocation3 + $0x1e0] sm:$0xff]
    %v3076 = vld [vmem:[#allocation3 + $0x1e8] sm:$0xff]
    %v3077 = vld [vmem:[#allocation3 + $0x1f0] sm:$0xff]
    %v3078 = vld [vmem:[#allocation3 + $0x1f8] sm:$0xff]
    %v3079 = vld [vmem:[%s1] sm:$0xff]
    %v3080 = vld [vmem:[%s1 + $0x8] sm:$0xff]
    %v3081 = vld [vmem:[%s1 + $0x10] sm:$0xff]
    %v3082 = vld [vmem:[%s1 + $0x18] sm:$0xff]
    %v3083 = vld [vmem:[%s1 + $0x20] sm:$0xf]
    %v3084 = vld [vmem:[%s2] sm:$0x1]
    %v3086 = vperm.slane %v3084, 0
    %vm3088 = vcmask 293888
    %v3090 = vsel %vm3088, %v3015, 0
    %v3093 = vsel %vm3088, %v3016, 0
    %v3096 = vsel %vm3088, %v3017, 0
    %v3099 = vsel %vm3088, %v3018, 0
    %v3102 = vsel %vm3088, %v3019, 0
    %v3105 = vsel %vm3088, %v3020, 0
    %v3108 = vsel %vm3088, %v3021, 0
    %v3111 = vsel %vm3088, %v3022, 0
    %v3114 = vsel %vm3088, %v3023, 0
    %v3117 = vsel %vm3088, %v3024, 0
    %v3120 = vsel %vm3088, %v3025, 0
    %v3123 = vsel %vm3088, %v3026, 0
    %v3126 = vsel %vm3088, %v3027, 0
    %v3129 = vsel %vm3088, %v3028, 0
    %v3132 = vsel %vm3088, %v3029, 0
    %v3135 = vsel %vm3088, %v3030, 0
    %v3138 = vsel %vm3088, %v3031, 0
    %v3141 = vsel %vm3088, %v3032, 0
    %v3144 = vsel %vm3088, %v3033, 0
    %v3147 = vsel %vm3088, %v3034, 0
    %v3150 = vsel %vm3088, %v3035, 0
    %v3153 = vsel %vm3088, %v3036, 0
    %v3156 = vsel %vm3088, %v3037, 0
    %v3159 = vsel %vm3088, %v3038, 0
    %v3162 = vsel %vm3088, %v3039, 0
    %v3165 = vsel %vm3088, %v3040, 0
    %v3168 = vsel %vm3088, %v3041, 0
    %v3171 = vsel %vm3088, %v3042, 0
    %v3174 = vsel %vm3088, %v3043, 0
    %v3177 = vsel %vm3088, %v3044, 0
    %v3180 = vsel %vm3088, %v3045, 0
    %v3183 = vsel %vm3088, %v3046, 0
    %v3186 = vsel %vm3088, %v3047, 0
    %v3189 = vsel %vm3088, %v3048, 0
    %v3192 = vsel %vm3088, %v3049, 0
    %v3195 = vsel %vm3088, %v3050, 0
    %v3198 = vsel %vm3088, %v3051, 0
    %v3201 = vsel %vm3088, %v3052, 0
    %v3204 = vsel %vm3088, %v3053, 0
    %v3207 = vsel %vm3088, %v3054, 0
    %v3210 = vsel %vm3088, %v3055, 0
    %v3213 = vsel %vm3088, %v3056, 0
    %v3216 = vsel %vm3088, %v3057, 0
    %v3219 = vsel %vm3088, %v3058, 0
    %v3222 = vsel %vm3088, %v3059, 0
    %v3225 = vsel %vm3088, %v3060, 0
    %v3228 = vsel %vm3088, %v3061, 0
    %v3231 = vsel %vm3088, %v3062, 0
    %v3234 = vsel %vm3088, %v3063, 0
    %v3237 = vsel %vm3088, %v3064, 0
    %v3240 = vsel %vm3088, %v3065, 0
    %v3243 = vsel %vm3088, %v3066, 0
    %v3246 = vsel %vm3088, %v3067, 0
    %v3249 = vsel %vm3088, %v3068, 0
    %v3252 = vsel %vm3088, %v3069, 0
    %v3255 = vsel %vm3088, %v3070, 0
    %v3258 = vsel %vm3088, %v3071, 0
    %v3261 = vsel %vm3088, %v3072, 0
    %v3264 = vsel %vm3088, %v3073, 0
    %v3267 = vsel %vm3088, %v3074, 0
    %v3270 = vsel %vm3088, %v3075, 0
    %v3273 = vsel %vm3088, %v3076, 0
    %v3276 = vsel %vm3088, %v3077, 0
    %v3279 = vsel %vm3088, %v3078, 0
    %vm3281 = vcmask 1043456
    %v3283 = vsel %vm3281, %v3083, 0
    %3285 = vmatpush.msra.mxu0 0.0
    %3286 = vmatpush.msra.mxu0 0.0
    %3287 = vmatpush.msra.mxu0 0.0
    %3288 = vmatpush.msra.mxu0 0.0
    %3289 = vmatpush.msra.mxu0 0.0
    %3290 = vmatpush.msra.mxu0 0.0
    %3291 = vmatpush.msra.mxu0 0.0
    %3292 = vmatpush.msra.mxu0 0.0
    %3293 = vmatpush.msra.mxu0 0.0
    %3294 = vmatpush.msra.mxu0 0.0
    %3295 = vmatpush.msra.mxu0 0.0
    %3296 = vmatpush.msra.mxu0 %v3283
    %3297 = vmatpush.msra.mxu0 %v3082
    %3298 = vmatpush.msra.mxu0 %v3081
    %3299 = vmatpush.msra.mxu0 %v3080
    %3300 = vmatpush.msra.mxu0 %v3079
    %3301 = vmatmul.f32.gmra.mxu0 %v3090
    %v3302 = vpop.f32.mrf.mxu0
    %v3303 = vadd.f32 %v3086, %v3302
    %3304 = vmatmul.f32.gmra.mxu0 %v3093
    %v3305 = vpop.f32.mrf.mxu0
    %v3306 = vadd.f32 %v3086, %v3305
    %3307 = vmatmul.f32.gmra.mxu0 %v3096
    %v3308 = vpop.f32.mrf.mxu0
    %v3309 = vadd.f32 %v3086, %v3308
    %3310 = vmatmul.f32.gmra.mxu0 %v3099
    %v3311 = vpop.f32.mrf.mxu0
    %v3312 = vadd.f32 %v3086, %v3311
    %3313 = vmatmul.f32.gmra.mxu0 %v3102
    %v3314 = vpop.f32.mrf.mxu0
    %v3315 = vadd.f32 %v3086, %v3314
    %3316 = vmatmul.f32.gmra.mxu0 %v3105
    %v3317 = vpop.f32.mrf.mxu0
    %v3318 = vadd.f32 %v3086, %v3317
    %3319 = vmatmul.f32.gmra.mxu0 %v3108
    %v3320 = vpop.f32.mrf.mxu0
    %v3321 = vadd.f32 %v3086, %v3320
    %3322 = vmatmul.f32.gmra.mxu0 %v3111
    %v3323 = vpop.f32.mrf.mxu0
    %v3324 = vadd.f32 %v3086, %v3323
    %3325 = vmatmul.f32.gmra.mxu0 %v3114
    %v3326 = vpop.f32.mrf.mxu0
    %v3327 = vadd.f32 %v3086, %v3326
    %3328 = vmatmul.f32.gmra.mxu0 %v3117
    %v3329 = vpop.f32.mrf.mxu0
    %v3330 = vadd.f32 %v3086, %v3329
    %3331 = vmatmul.f32.gmra.mxu0 %v3120
    %v3332 = vpop.f32.mrf.mxu0
    %v3333 = vadd.f32 %v3086, %v3332
    %3334 = vmatmul.f32.gmra.mxu0 %v3123
    %v3335 = vpop.f32.mrf.mxu0
    %v3336 = vadd.f32 %v3086, %v3335
    %3337 = vmatmul.f32.gmra.mxu0 %v3126
    %v3338 = vpop.f32.mrf.mxu0
    %v3339 = vadd.f32 %v3086, %v3338
    %3340 = vmatmul.f32.gmra.mxu0 %v3129
    %v3341 = vpop.f32.mrf.mxu0
    %v3342 = vadd.f32 %v3086, %v3341
    %3343 = vmatmul.f32.gmra.mxu0 %v3132
    %v3344 = vpop.f32.mrf.mxu0
    %v3345 = vadd.f32 %v3086, %v3344
    %3346 = vmatmul.f32.gmra.mxu0 %v3135
    %v3347 = vpop.f32.mrf.mxu0
    %v3348 = vadd.f32 %v3086, %v3347
    %3349 = vmatmul.f32.gmra.mxu0 %v3138
    %v3350 = vpop.f32.mrf.mxu0
    %v3351 = vadd.f32 %v3086, %v3350
    %3352 = vmatmul.f32.gmra.mxu0 %v3141
    %v3353 = vpop.f32.mrf.mxu0
    %v3354 = vadd.f32 %v3086, %v3353
    %3355 = vmatmul.f32.gmra.mxu0 %v3144
    %v3356 = vpop.f32.mrf.mxu0
    %v3357 = vadd.f32 %v3086, %v3356
    %3358 = vmatmul.f32.gmra.mxu0 %v3147
    %v3359 = vpop.f32.mrf.mxu0
    %v3360 = vadd.f32 %v3086, %v3359
    %3361 = vmatmul.f32.gmra.mxu0 %v3150
    %v3362 = vpop.f32.mrf.mxu0
    %v3363 = vadd.f32 %v3086, %v3362
    %3364 = vmatmul.f32.gmra.mxu0 %v3153
    %v3365 = vpop.f32.mrf.mxu0
    %v3366 = vadd.f32 %v3086, %v3365
    %3367 = vmatmul.f32.gmra.mxu0 %v3156
    %v3368 = vpop.f32.mrf.mxu0
    %v3369 = vadd.f32 %v3086, %v3368
    %3370 = vmatmul.f32.gmra.mxu0 %v3159
    %v3371 = vpop.f32.mrf.mxu0
    %v3372 = vadd.f32 %v3086, %v3371
    %3373 = vmatmul.f32.gmra.mxu0 %v3162
    %v3374 = vpop.f32.mrf.mxu0
    %v3375 = vadd.f32 %v3086, %v3374
    %3376 = vmatmul.f32.gmra.mxu0 %v3165
    %v3377 = vpop.f32.mrf.mxu0
    %v3378 = vadd.f32 %v3086, %v3377
    %3379 = vmatmul.f32.gmra.mxu0 %v3168
    %v3380 = vpop.f32.mrf.mxu0
    %v3381 = vadd.f32 %v3086, %v3380
    %3382 = vmatmul.f32.gmra.mxu0 %v3171
    %v3383 = vpop.f32.mrf.mxu0
    %v3384 = vadd.f32 %v3086, %v3383
    %3385 = vmatmul.f32.gmra.mxu0 %v3174
    %v3386 = vpop.f32.mrf.mxu0
    %v3387 = vadd.f32 %v3086, %v3386
    %3388 = vmatmul.f32.gmra.mxu0 %v3177
    %v3389 = vpop.f32.mrf.mxu0
    %v3390 = vadd.f32 %v3086, %v3389
    %3391 = vmatmul.f32.gmra.mxu0 %v3180
    %v3392 = vpop.f32.mrf.mxu0
    %v3393 = vadd.f32 %v3086, %v3392
    %3394 = vmatmul.f32.gmra.mxu0 %v3183
    %v3395 = vpop.f32.mrf.mxu0
    %v3396 = vadd.f32 %v3086, %v3395
    %3397 = vmatmul.f32.gmra.mxu0 %v3186
    %v3398 = vpop.f32.mrf.mxu0
    %v3399 = vadd.f32 %v3086, %v3398
    %3400 = vmatmul.f32.gmra.mxu0 %v3189
    %v3401 = vpop.f32.mrf.mxu0
    %v3402 = vadd.f32 %v3086, %v3401
    %3403 = vmatmul.f32.gmra.mxu0 %v3192
    %v3404 = vpop.f32.mrf.mxu0
    %v3405 = vadd.f32 %v3086, %v3404
    %3406 = vmatmul.f32.gmra.mxu0 %v3195
    %v3407 = vpop.f32.mrf.mxu0
    %v3408 = vadd.f32 %v3086, %v3407
    %3409 = vmatmul.f32.gmra.mxu0 %v3198
    %v3410 = vpop.f32.mrf.mxu0
    %v3411 = vadd.f32 %v3086, %v3410
    %3412 = vmatmul.f32.gmra.mxu0 %v3201
    %v3413 = vpop.f32.mrf.mxu0
    %v3414 = vadd.f32 %v3086, %v3413
    %3415 = vmatmul.f32.gmra.mxu0 %v3204
    %v3416 = vpop.f32.mrf.mxu0
    %v3417 = vadd.f32 %v3086, %v3416
    %3418 = vmatmul.f32.gmra.mxu0 %v3207
    %v3419 = vpop.f32.mrf.mxu0
    %v3420 = vadd.f32 %v3086, %v3419
    %3421 = vmatmul.f32.gmra.mxu0 %v3210
    %v3422 = vpop.f32.mrf.mxu0
    %v3423 = vadd.f32 %v3086, %v3422
    %3424 = vmatmul.f32.gmra.mxu0 %v3213
    %v3425 = vpop.f32.mrf.mxu0
    %v3426 = vadd.f32 %v3086, %v3425
    %3427 = vmatmul.f32.gmra.mxu0 %v3216
    %v3428 = vpop.f32.mrf.mxu0
    %v3429 = vadd.f32 %v3086, %v3428
    %3430 = vmatmul.f32.gmra.mxu0 %v3219
    %v3431 = vpop.f32.mrf.mxu0
    %v3432 = vadd.f32 %v3086, %v3431
    %3433 = vmatmul.f32.gmra.mxu0 %v3222
    %v3434 = vpop.f32.mrf.mxu0
    %v3435 = vadd.f32 %v3086, %v3434
    %3436 = vmatmul.f32.gmra.mxu0 %v3225
    %v3437 = vpop.f32.mrf.mxu0
    %v3438 = vadd.f32 %v3086, %v3437
    %3439 = vmatmul.f32.gmra.mxu0 %v3228
    %v3440 = vpop.f32.mrf.mxu0
    %v3441 = vadd.f32 %v3086, %v3440
    %3442 = vmatmul.f32.gmra.mxu0 %v3231
    %v3443 = vpop.f32.mrf.mxu0
    %v3444 = vadd.f32 %v3086, %v3443
    %3445 = vmatmul.f32.gmra.mxu0 %v3234
    %v3446 = vpop.f32.mrf.mxu0
    %v3447 = vadd.f32 %v3086, %v3446
    %3448 = vmatmul.f32.gmra.mxu0 %v3237
    %v3449 = vpop.f32.mrf.mxu0
    %v3450 = vadd.f32 %v3086, %v3449
    %3451 = vmatmul.f32.gmra.mxu0 %v3240
    %v3452 = vpop.f32.mrf.mxu0
    %v3453 = vadd.f32 %v3086, %v3452
    %3454 = vmatmul.f32.gmra.mxu0 %v3243
    %v3455 = vpop.f32.mrf.mxu0
    %v3456 = vadd.f32 %v3086, %v3455
    %3457 = vmatmul.f32.gmra.mxu0 %v3246
    %v3458 = vpop.f32.mrf.mxu0
    %v3459 = vadd.f32 %v3086, %v3458
    %3460 = vmatmul.f32.gmra.mxu0 %v3249
    %v3461 = vpop.f32.mrf.mxu0
    %v3462 = vadd.f32 %v3086, %v3461
    %3463 = vmatmul.f32.gmra.mxu0 %v3252
    %v3464 = vpop.f32.mrf.mxu0
    %v3465 = vadd.f32 %v3086, %v3464
    %3466 = vmatmul.f32.gmra.mxu0 %v3255
    %v3467 = vpop.f32.mrf.mxu0
    %v3468 = vadd.f32 %v3086, %v3467
    %3469 = vmatmul.f32.gmra.mxu0 %v3258
    %v3470 = vpop.f32.mrf.mxu0
    %v3471 = vadd.f32 %v3086, %v3470
    %3472 = vmatmul.f32.gmra.mxu0 %v3261
    %v3473 = vpop.f32.mrf.mxu0
    %v3474 = vadd.f32 %v3086, %v3473
    %3475 = vmatmul.f32.gmra.mxu0 %v3264
    %v3476 = vpop.f32.mrf.mxu0
    %v3477 = vadd.f32 %v3086, %v3476
    %3478 = vmatmul.f32.gmra.mxu0 %v3267
    %v3479 = vpop.f32.mrf.mxu0
    %v3480 = vadd.f32 %v3086, %v3479
    %3481 = vmatmul.f32.gmra.mxu0 %v3270
    %v3482 = vpop.f32.mrf.mxu0
    %v3483 = vadd.f32 %v3086, %v3482
    %3484 = vmatmul.f32.gmra.mxu0 %v3273
    %v3485 = vpop.f32.mrf.mxu0
    %v3486 = vadd.f32 %v3086, %v3485
    %3487 = vmatmul.f32.gmra.mxu0 %v3276
    %v3488 = vpop.f32.mrf.mxu0
    %v3489 = vadd.f32 %v3086, %v3488
    %3490 = vmatmul.f32.gmra.mxu0 %v3279
    %v3491 = vpop.f32.mrf.mxu0
    %v3492 = vadd.f32 %v3086, %v3491
    %3493 = vdwg.mxu0
    %v3494 = vmax.f32 %v3303, 0.0
    %v3495 = vmax.f32 %v3306, 0.0
    %v3496 = vmax.f32 %v3309, 0.0
    %v3497 = vmax.f32 %v3312, 0.0
    %v3498 = vmax.f32 %v3315, 0.0
    %v3499 = vmax.f32 %v3318, 0.0
    %v3500 = vmax.f32 %v3321, 0.0
    %v3501 = vmax.f32 %v3324, 0.0
    %v3502 = vmax.f32 %v3327, 0.0
    %v3503 = vmax.f32 %v3330, 0.0
    %v3504 = vmax.f32 %v3333, 0.0
    %v3505 = vmax.f32 %v3336, 0.0
    %v3506 = vmax.f32 %v3339, 0.0
    %v3507 = vmax.f32 %v3342, 0.0
    %v3508 = vmax.f32 %v3345, 0.0
    %v3509 = vmax.f32 %v3348, 0.0
    %v3510 = vmax.f32 %v3351, 0.0
    %v3511 = vmax.f32 %v3354, 0.0
    %v3512 = vmax.f32 %v3357, 0.0
    %v3513 = vmax.f32 %v3360, 0.0
    %v3514 = vmax.f32 %v3363, 0.0
    %v3515 = vmax.f32 %v3366, 0.0
    %v3516 = vmax.f32 %v3369, 0.0
    %v3517 = vmax.f32 %v3372, 0.0
    %v3518 = vmax.f32 %v3375, 0.0
    %v3519 = vmax.f32 %v3378, 0.0
    %v3520 = vmax.f32 %v3381, 0.0
    %v3521 = vmax.f32 %v3384, 0.0
    %v3522 = vmax.f32 %v3387, 0.0
    %v3523 = vmax.f32 %v3390, 0.0
    %v3524 = vmax.f32 %v3393, 0.0
    %v3525 = vmax.f32 %v3396, 0.0
    %v3526 = vmax.f32 %v3399, 0.0
    %v3527 = vmax.f32 %v3402, 0.0
    %v3528 = vmax.f32 %v3405, 0.0
    %v3529 = vmax.f32 %v3408, 0.0
    %v3530 = vmax.f32 %v3411, 0.0
    %v3531 = vmax.f32 %v3414, 0.0
    %v3532 = vmax.f32 %v3417, 0.0
    %v3533 = vmax.f32 %v3420, 0.0
    %v3534 = vmax.f32 %v3423, 0.0
    %v3535 = vmax.f32 %v3426, 0.0
    %v3536 = vmax.f32 %v3429, 0.0
    %v3537 = vmax.f32 %v3432, 0.0
    %v3538 = vmax.f32 %v3435, 0.0
    %v3539 = vmax.f32 %v3438, 0.0
    %v3540 = vmax.f32 %v3441, 0.0
    %v3541 = vmax.f32 %v3444, 0.0
    %v3542 = vmax.f32 %v3447, 0.0
    %v3543 = vmax.f32 %v3450, 0.0
    %v3544 = vmax.f32 %v3453, 0.0
    %v3545 = vmax.f32 %v3456, 0.0
    %v3546 = vmax.f32 %v3459, 0.0
    %v3547 = vmax.f32 %v3462, 0.0
    %v3548 = vmax.f32 %v3465, 0.0
    %v3549 = vmax.f32 %v3468, 0.0
    %v3550 = vmax.f32 %v3471, 0.0
    %v3551 = vmax.f32 %v3474, 0.0
    %v3552 = vmax.f32 %v3477, 0.0
    %v3553 = vmax.f32 %v3480, 0.0
    %v3554 = vmax.f32 %v3483, 0.0
    %v3555 = vmax.f32 %v3486, 0.0
    %v3556 = vmax.f32 %v3489, 0.0
    %v3557 = vmax.f32 %v3492, 0.0
    %v3622 = vrot.slane %v3494, 2
    %v3623 = vrot.slane %v3494, 4
    %v3624 = vrot.slane %v3494, 6
    %v3625 = vrot.slane %v3495, 2
    %v3626 = vrot.slane %v3495, 4
    %v3627 = vrot.slane %v3495, 6
    %v3628 = vrot.slane %v3496, 2
    %v3629 = vrot.slane %v3496, 4
    %v3630 = vrot.slane %v3496, 6
    %v3631 = vrot.slane %v3497, 2
    %v3632 = vrot.slane %v3497, 4
    %v3633 = vrot.slane %v3497, 6
    %v3634 = vrot.slane %v3498, 2
    %v3635 = vrot.slane %v3498, 4
    %v3636 = vrot.slane %v3498, 6
    %v3637 = vrot.slane %v3499, 2
    %v3638 = vrot.slane %v3499, 4
    %v3639 = vrot.slane %v3499, 6
    %v3640 = vrot.slane %v3500, 2
    %v3641 = vrot.slane %v3500, 4
    %v3642 = vrot.slane %v3500, 6
    %v3643 = vrot.slane %v3501, 2
    %v3644 = vrot.slane %v3501, 4
    %v3645 = vrot.slane %v3501, 6
    %v3646 = vrot.slane %v3502, 2
    %v3647 = vrot.slane %v3502, 4
    %v3648 = vrot.slane %v3502, 6
    %v3649 = vrot.slane %v3503, 2
    %v3650 = vrot.slane %v3503, 4
    %v3651 = vrot.slane %v3503, 6
    %v3652 = vrot.slane %v3504, 2
    %v3653 = vrot.slane %v3504, 4
    %v3654 = vrot.slane %v3504, 6
    %v3655 = vrot.slane %v3505, 2
    %v3656 = vrot.slane %v3505, 4
    %v3657 = vrot.slane %v3505, 6
    %v3658 = vrot.slane %v3506, 2
    %v3659 = vrot.slane %v3506, 4
    %v3660 = vrot.slane %v3506, 6
    %v3661 = vrot.slane %v3507, 2
    %v3662 = vrot.slane %v3507, 4
    %v3663 = vrot.slane %v3507, 6
    %v3664 = vrot.slane %v3508, 2
    %v3665 = vrot.slane %v3508, 4
    %v3666 = vrot.slane %v3508, 6
    %v3667 = vrot.slane %v3509, 2
    %v3668 = vrot.slane %v3509, 4
    %v3669 = vrot.slane %v3509, 6
    %v3670 = vrot.slane %v3510, 2
    %v3671 = vrot.slane %v3510, 4
    %v3672 = vrot.slane %v3510, 6
    %v3673 = vrot.slane %v3511, 2
    %v3674 = vrot.slane %v3511, 4
    %v3675 = vrot.slane %v3511, 6
    %v3676 = vrot.slane %v3512, 2
    %v3677 = vrot.slane %v3512, 4
    %v3678 = vrot.slane %v3512, 6
    %v3679 = vrot.slane %v3513, 2
    %v3680 = vrot.slane %v3513, 4
    %v3681 = vrot.slane %v3513, 6
    %v3682 = vrot.slane %v3514, 2
    %v3683 = vrot.slane %v3514, 4
    %v3684 = vrot.slane %v3514, 6
    %v3685 = vrot.slane %v3515, 2
    %v3686 = vrot.slane %v3515, 4
    %v3687 = vrot.slane %v3515, 6
    %v3688 = vrot.slane %v3516, 2
    %v3689 = vrot.slane %v3516, 4
    %v3690 = vrot.slane %v3516, 6
    %v3691 = vrot.slane %v3517, 2
    %v3692 = vrot.slane %v3517, 4
    %v3693 = vrot.slane %v3517, 6
    %v3694 = vrot.slane %v3518, 2
    %v3695 = vrot.slane %v3518, 4
    %v3696 = vrot.slane %v3518, 6
    %v3697 = vrot.slane %v3519, 2
    %v3698 = vrot.slane %v3519, 4
    %v3699 = vrot.slane %v3519, 6
    %v3700 = vrot.slane %v3520, 2
    %v3701 = vrot.slane %v3520, 4
    %v3702 = vrot.slane %v3520, 6
    %v3703 = vrot.slane %v3521, 2
    %v3704 = vrot.slane %v3521, 4
    %v3705 = vrot.slane %v3521, 6
    %v3706 = vrot.slane %v3522, 2
    %v3707 = vrot.slane %v3522, 4
    %v3708 = vrot.slane %v3522, 6
    %v3709 = vrot.slane %v3523, 2
    %v3710 = vrot.slane %v3523, 4
    %v3711 = vrot.slane %v3523, 6
    %v3712 = vrot.slane %v3524, 2
    %v3713 = vrot.slane %v3524, 4
    %v3714 = vrot.slane %v3524, 6
    %v3715 = vrot.slane %v3525, 2
    %v3716 = vrot.slane %v3525, 4
    %v3717 = vrot.slane %v3525, 6
    %v3718 = vrot.slane %v3526, 2
    %v3719 = vrot.slane %v3526, 4
    %v3720 = vrot.slane %v3526, 6
    %v3721 = vrot.slane %v3527, 2
    %v3722 = vrot.slane %v3527, 4
    %v3723 = vrot.slane %v3527, 6
    %v3724 = vrot.slane %v3528, 2
    %v3725 = vrot.slane %v3528, 4
    %v3726 = vrot.slane %v3528, 6
    %v3727 = vrot.slane %v3529, 2
    %v3728 = vrot.slane %v3529, 4
    %v3729 = vrot.slane %v3529, 6
    %v3730 = vrot.slane %v3530, 2
    %v3731 = vrot.slane %v3530, 4
    %v3732 = vrot.slane %v3530, 6
    %v3733 = vrot.slane %v3531, 2
    %v3734 = vrot.slane %v3531, 4
    %v3735 = vrot.slane %v3531, 6
    %v3736 = vrot.slane %v3532, 2
    %v3737 = vrot.slane %v3532, 4
    %v3738 = vrot.slane %v3532, 6
    %v3739 = vrot.slane %v3533, 2
    %v3740 = vrot.slane %v3533, 4
    %v3741 = vrot.slane %v3533, 6
    %v3742 = vrot.slane %v3534, 2
    %v3743 = vrot.slane %v3534, 4
    %v3744 = vrot.slane %v3534, 6
    %v3745 = vrot.slane %v3535, 2
    %v3746 = vrot.slane %v3535, 4
    %v3747 = vrot.slane %v3535, 6
    %v3748 = vrot.slane %v3536, 2
    %v3749 = vrot.slane %v3536, 4
    %v3750 = vrot.slane %v3536, 6
    %v3751 = vrot.slane %v3537, 2
    %v3752 = vrot.slane %v3537, 4
    %v3753 = vrot.slane %v3537, 6
    %v3754 = vrot.slane %v3538, 2
    %v3755 = vrot.slane %v3538, 4
    %v3756 = vrot.slane %v3538, 6
    %v3757 = vrot.slane %v3539, 2
    %v3758 = vrot.slane %v3539, 4
    %v3759 = vrot.slane %v3539, 6
    %v3760 = vrot.slane %v3540, 2
    %v3761 = vrot.slane %v3540, 4
    %v3762 = vrot.slane %v3540, 6
    %v3763 = vrot.slane %v3541, 2
    %v3764 = vrot.slane %v3541, 4
    %v3765 = vrot.slane %v3541, 6
    %v3766 = vrot.slane %v3542, 2
    %v3767 = vrot.slane %v3542, 4
    %v3768 = vrot.slane %v3542, 6
    %v3769 = vrot.slane %v3543, 2
    %v3770 = vrot.slane %v3543, 4
    %v3771 = vrot.slane %v3543, 6
    %v3772 = vrot.slane %v3544, 2
    %v3773 = vrot.slane %v3544, 4
    %v3774 = vrot.slane %v3544, 6
    %v3775 = vrot.slane %v3545, 2
    %v3776 = vrot.slane %v3545, 4
    %v3777 = vrot.slane %v3545, 6
    %v3778 = vrot.slane %v3546, 2
    %v3779 = vrot.slane %v3546, 4
    %v3780 = vrot.slane %v3546, 6
    %v3781 = vrot.slane %v3547, 2
    %v3782 = vrot.slane %v3547, 4
    %v3783 = vrot.slane %v3547, 6
    %v3784 = vrot.slane %v3548, 2
    %v3785 = vrot.slane %v3548, 4
    %v3786 = vrot.slane %v3548, 6
    %v3787 = vrot.slane %v3549, 2
    %v3788 = vrot.slane %v3549, 4
    %v3789 = vrot.slane %v3549, 6
    %v3790 = vrot.slane %v3550, 2
    %v3791 = vrot.slane %v3550, 4
    %v3792 = vrot.slane %v3550, 6
    %v3793 = vrot.slane %v3551, 2
    %v3794 = vrot.slane %v3551, 4
    %v3795 = vrot.slane %v3551, 6
    %v3796 = vrot.slane %v3552, 2
    %v3797 = vrot.slane %v3552, 4
    %v3798 = vrot.slane %v3552, 6
    %v3799 = vrot.slane %v3553, 2
    %v3800 = vrot.slane %v3553, 4
    %v3801 = vrot.slane %v3553, 6
    %v3802 = vrot.slane %v3554, 2
    %v3803 = vrot.slane %v3554, 4
    %v3804 = vrot.slane %v3554, 6
    %v3805 = vrot.slane %v3555, 2
    %v3806 = vrot.slane %v3555, 4
    %v3807 = vrot.slane %v3555, 6
    %v3808 = vrot.slane %v3556, 2
    %v3809 = vrot.slane %v3556, 4
    %v3810 = vrot.slane %v3556, 6
    %v3811 = vrot.slane %v3557, 2
    %v3812 = vrot.slane %v3557, 4
    %v3813 = vrot.slane %v3557, 6
    %v4006 = vsel %vm145, %v3494, -inf
    %v4007 = vrot.slane %v4006, 4
    %v4008 = vmax.f32 %v4006, %v4007
    %v4009 = vrot.slane %v4008, 2
    %v4010 = vmax.f32 %v4008, %v4009
    %v4011 = vrot.slane %v4010, 1
    %v4012 = vmax.f32 %v4010, %v4011
    %v4013 = vsel %vm145, %v3622, -inf
    %v4014 = vrot.slane %v4013, 4
    %v4015 = vmax.f32 %v4013, %v4014
    %v4016 = vrot.slane %v4015, 2
    %v4017 = vmax.f32 %v4015, %v4016
    %v4018 = vrot.slane %v4017, 1
    %v4019 = vmax.f32 %v4017, %v4018
    %v4020 = vsel %vm145, %v3623, -inf
    %v4021 = vrot.slane %v4020, 4
    %v4022 = vmax.f32 %v4020, %v4021
    %v4023 = vrot.slane %v4022, 2
    %v4024 = vmax.f32 %v4022, %v4023
    %v4025 = vrot.slane %v4024, 1
    %v4026 = vmax.f32 %v4024, %v4025
    %v4027 = vsel %vm145, %v3624, -inf
    %v4028 = vrot.slane %v4027, 4
    %v4029 = vmax.f32 %v4027, %v4028
    %v4030 = vrot.slane %v4029, 2
    %v4031 = vmax.f32 %v4029, %v4030
    %v4032 = vrot.slane %v4031, 1
    %v4033 = vmax.f32 %v4031, %v4032
    %v4034 = vsel %vm145, %v3495, -inf
    %v4035 = vrot.slane %v4034, 4
    %v4036 = vmax.f32 %v4034, %v4035
    %v4037 = vrot.slane %v4036, 2
    %v4038 = vmax.f32 %v4036, %v4037
    %v4039 = vrot.slane %v4038, 1
    %v4040 = vmax.f32 %v4038, %v4039
    %v4041 = vsel %vm145, %v3625, -inf
    %v4042 = vrot.slane %v4041, 4
    %v4043 = vmax.f32 %v4041, %v4042
    %v4044 = vrot.slane %v4043, 2
    %v4045 = vmax.f32 %v4043, %v4044
    %v4046 = vrot.slane %v4045, 1
    %v4047 = vmax.f32 %v4045, %v4046
    %v4048 = vsel %vm145, %v3626, -inf
    %v4049 = vrot.slane %v4048, 4
    %v4050 = vmax.f32 %v4048, %v4049
    %v4051 = vrot.slane %v4050, 2
    %v4052 = vmax.f32 %v4050, %v4051
    %v4053 = vrot.slane %v4052, 1
    %v4054 = vmax.f32 %v4052, %v4053
    %v4055 = vsel %vm145, %v3627, -inf
    %v4056 = vrot.slane %v4055, 4
    %v4057 = vmax.f32 %v4055, %v4056
    %v4058 = vrot.slane %v4057, 2
    %v4059 = vmax.f32 %v4057, %v4058
    %v4060 = vrot.slane %v4059, 1
    %v4061 = vmax.f32 %v4059, %v4060
    %v4062 = vsel %vm145, %v3496, -inf
    %v4063 = vrot.slane %v4062, 4
    %v4064 = vmax.f32 %v4062, %v4063
    %v4065 = vrot.slane %v4064, 2
    %v4066 = vmax.f32 %v4064, %v4065
    %v4067 = vrot.slane %v4066, 1
    %v4068 = vmax.f32 %v4066, %v4067
    %v4069 = vsel %vm145, %v3628, -inf
    %v4070 = vrot.slane %v4069, 4
    %v4071 = vmax.f32 %v4069, %v4070
    %v4072 = vrot.slane %v4071, 2
    %v4073 = vmax.f32 %v4071, %v4072
    %v4074 = vrot.slane %v4073, 1
    %v4075 = vmax.f32 %v4073, %v4074
    %v4076 = vsel %vm145, %v3629, -inf
    %v4077 = vrot.slane %v4076, 4
    %v4078 = vmax.f32 %v4076, %v4077
    %v4079 = vrot.slane %v4078, 2
    %v4080 = vmax.f32 %v4078, %v4079
    %v4081 = vrot.slane %v4080, 1
    %v4082 = vmax.f32 %v4080, %v4081
    %v4083 = vsel %vm145, %v3630, -inf
    %v4084 = vrot.slane %v4083, 4
    %v4085 = vmax.f32 %v4083, %v4084
    %v4086 = vrot.slane %v4085, 2
    %v4087 = vmax.f32 %v4085, %v4086
    %v4088 = vrot.slane %v4087, 1
    %v4089 = vmax.f32 %v4087, %v4088
    %v4090 = vsel %vm145, %v3497, -inf
    %v4091 = vrot.slane %v4090, 4
    %v4092 = vmax.f32 %v4090, %v4091
    %v4093 = vrot.slane %v4092, 2
    %v4094 = vmax.f32 %v4092, %v4093
    %v4095 = vrot.slane %v4094, 1
    %v4096 = vmax.f32 %v4094, %v4095
    %v4097 = vsel %vm145, %v3631, -inf
    %v4098 = vrot.slane %v4097, 4
    %v4099 = vmax.f32 %v4097, %v4098
    %v4100 = vrot.slane %v4099, 2
    %v4101 = vmax.f32 %v4099, %v4100
    %v4102 = vrot.slane %v4101, 1
    %v4103 = vmax.f32 %v4101, %v4102
    %v4104 = vsel %vm145, %v3632, -inf
    %v4105 = vrot.slane %v4104, 4
    %v4106 = vmax.f32 %v4104, %v4105
    %v4107 = vrot.slane %v4106, 2
    %v4108 = vmax.f32 %v4106, %v4107
    %v4109 = vrot.slane %v4108, 1
    %v4110 = vmax.f32 %v4108, %v4109
    %v4111 = vsel %vm145, %v3633, -inf
    %v4112 = vrot.slane %v4111, 4
    %v4113 = vmax.f32 %v4111, %v4112
    %v4114 = vrot.slane %v4113, 2
    %v4115 = vmax.f32 %v4113, %v4114
    %v4116 = vrot.slane %v4115, 1
    %v4117 = vmax.f32 %v4115, %v4116
    %v4118 = vsel %vm145, %v3498, -inf
    %v4119 = vrot.slane %v4118, 4
    %v4120 = vmax.f32 %v4118, %v4119
    %v4121 = vrot.slane %v4120, 2
    %v4122 = vmax.f32 %v4120, %v4121
    %v4123 = vrot.slane %v4122, 1
    %v4124 = vmax.f32 %v4122, %v4123
    %v4125 = vsel %vm145, %v3634, -inf
    %v4126 = vrot.slane %v4125, 4
    %v4127 = vmax.f32 %v4125, %v4126
    %v4128 = vrot.slane %v4127, 2
    %v4129 = vmax.f32 %v4127, %v4128
    %v4130 = vrot.slane %v4129, 1
    %v4131 = vmax.f32 %v4129, %v4130
    %v4132 = vsel %vm145, %v3635, -inf
    %v4133 = vrot.slane %v4132, 4
    %v4134 = vmax.f32 %v4132, %v4133
    %v4135 = vrot.slane %v4134, 2
    %v4136 = vmax.f32 %v4134, %v4135
    %v4137 = vrot.slane %v4136, 1
    %v4138 = vmax.f32 %v4136, %v4137
    %v4139 = vsel %vm145, %v3636, -inf
    %v4140 = vrot.slane %v4139, 4
    %v4141 = vmax.f32 %v4139, %v4140
    %v4142 = vrot.slane %v4141, 2
    %v4143 = vmax.f32 %v4141, %v4142
    %v4144 = vrot.slane %v4143, 1
    %v4145 = vmax.f32 %v4143, %v4144
    %v4146 = vsel %vm145, %v3499, -inf
    %v4147 = vrot.slane %v4146, 4
    %v4148 = vmax.f32 %v4146, %v4147
    %v4149 = vrot.slane %v4148, 2
    %v4150 = vmax.f32 %v4148, %v4149
    %v4151 = vrot.slane %v4150, 1
    %v4152 = vmax.f32 %v4150, %v4151
    %v4153 = vsel %vm145, %v3637, -inf
    %v4154 = vrot.slane %v4153, 4
    %v4155 = vmax.f32 %v4153, %v4154
    %v4156 = vrot.slane %v4155, 2
    %v4157 = vmax.f32 %v4155, %v4156
    %v4158 = vrot.slane %v4157, 1
    %v4159 = vmax.f32 %v4157, %v4158
    %v4160 = vsel %vm145, %v3638, -inf
    %v4161 = vrot.slane %v4160, 4
    %v4162 = vmax.f32 %v4160, %v4161
    %v4163 = vrot.slane %v4162, 2
    %v4164 = vmax.f32 %v4162, %v4163
    %v4165 = vrot.slane %v4164, 1
    %v4166 = vmax.f32 %v4164, %v4165
    %v4167 = vsel %vm145, %v3639, -inf
    %v4168 = vrot.slane %v4167, 4
    %v4169 = vmax.f32 %v4167, %v4168
    %v4170 = vrot.slane %v4169, 2
    %v4171 = vmax.f32 %v4169, %v4170
    %v4172 = vrot.slane %v4171, 1
    %v4173 = vmax.f32 %v4171, %v4172
    %v4174 = vsel %vm145, %v3500, -inf
    %v4175 = vrot.slane %v4174, 4
    %v4176 = vmax.f32 %v4174, %v4175
    %v4177 = vrot.slane %v4176, 2
    %v4178 = vmax.f32 %v4176, %v4177
    %v4179 = vrot.slane %v4178, 1
    %v4180 = vmax.f32 %v4178, %v4179
    %v4181 = vsel %vm145, %v3640, -inf
    %v4182 = vrot.slane %v4181, 4
    %v4183 = vmax.f32 %v4181, %v4182
    %v4184 = vrot.slane %v4183, 2
    %v4185 = vmax.f32 %v4183, %v4184
    %v4186 = vrot.slane %v4185, 1
    %v4187 = vmax.f32 %v4185, %v4186
    %v4188 = vsel %vm145, %v3641, -inf
    %v4189 = vrot.slane %v4188, 4
    %v4190 = vmax.f32 %v4188, %v4189
    %v4191 = vrot.slane %v4190, 2
    %v4192 = vmax.f32 %v4190, %v4191
    %v4193 = vrot.slane %v4192, 1
    %v4194 = vmax.f32 %v4192, %v4193
    %v4195 = vsel %vm145, %v3642, -inf
    %v4196 = vrot.slane %v4195, 4
    %v4197 = vmax.f32 %v4195, %v4196
    %v4198 = vrot.slane %v4197, 2
    %v4199 = vmax.f32 %v4197, %v4198
    %v4200 = vrot.slane %v4199, 1
    %v4201 = vmax.f32 %v4199, %v4200
    %v4202 = vsel %vm145, %v3501, -inf
    %v4203 = vrot.slane %v4202, 4
    %v4204 = vmax.f32 %v4202, %v4203
    %v4205 = vrot.slane %v4204, 2
    %v4206 = vmax.f32 %v4204, %v4205
    %v4207 = vrot.slane %v4206, 1
    %v4208 = vmax.f32 %v4206, %v4207
    %v4209 = vsel %vm145, %v3643, -inf
    %v4210 = vrot.slane %v4209, 4
    %v4211 = vmax.f32 %v4209, %v4210
    %v4212 = vrot.slane %v4211, 2
    %v4213 = vmax.f32 %v4211, %v4212
    %v4214 = vrot.slane %v4213, 1
    %v4215 = vmax.f32 %v4213, %v4214
    %v4216 = vsel %vm145, %v3644, -inf
    %v4217 = vrot.slane %v4216, 4
    %v4218 = vmax.f32 %v4216, %v4217
    %v4219 = vrot.slane %v4218, 2
    %v4220 = vmax.f32 %v4218, %v4219
    %v4221 = vrot.slane %v4220, 1
    %v4222 = vmax.f32 %v4220, %v4221
    %v4223 = vsel %vm145, %v3645, -inf
    %v4224 = vrot.slane %v4223, 4
    %v4225 = vmax.f32 %v4223, %v4224
    %v4226 = vrot.slane %v4225, 2
    %v4227 = vmax.f32 %v4225, %v4226
    %v4228 = vrot.slane %v4227, 1
    %v4229 = vmax.f32 %v4227, %v4228
    %v4230 = vsel %vm145, %v3502, -inf
    %v4231 = vrot.slane %v4230, 4
    %v4232 = vmax.f32 %v4230, %v4231
    %v4233 = vrot.slane %v4232, 2
    %v4234 = vmax.f32 %v4232, %v4233
    %v4235 = vrot.slane %v4234, 1
    %v4236 = vmax.f32 %v4234, %v4235
    %v4237 = vsel %vm145, %v3646, -inf
    %v4238 = vrot.slane %v4237, 4
    %v4239 = vmax.f32 %v4237, %v4238
    %v4240 = vrot.slane %v4239, 2
    %v4241 = vmax.f32 %v4239, %v4240
    %v4242 = vrot.slane %v4241, 1
    %v4243 = vmax.f32 %v4241, %v4242
    %v4244 = vsel %vm145, %v3647, -inf
    %v4245 = vrot.slane %v4244, 4
    %v4246 = vmax.f32 %v4244, %v4245
    %v4247 = vrot.slane %v4246, 2
    %v4248 = vmax.f32 %v4246, %v4247
    %v4249 = vrot.slane %v4248, 1
    %v4250 = vmax.f32 %v4248, %v4249
    %v4251 = vsel %vm145, %v3648, -inf
    %v4252 = vrot.slane %v4251, 4
    %v4253 = vmax.f32 %v4251, %v4252
    %v4254 = vrot.slane %v4253, 2
    %v4255 = vmax.f32 %v4253, %v4254
    %v4256 = vrot.slane %v4255, 1
    %v4257 = vmax.f32 %v4255, %v4256
    %v4258 = vsel %vm145, %v3503, -inf
    %v4259 = vrot.slane %v4258, 4
    %v4260 = vmax.f32 %v4258, %v4259
    %v4261 = vrot.slane %v4260, 2
    %v4262 = vmax.f32 %v4260, %v4261
    %v4263 = vrot.slane %v4262, 1
    %v4264 = vmax.f32 %v4262, %v4263
    %v4265 = vsel %vm145, %v3649, -inf
    %v4266 = vrot.slane %v4265, 4
    %v4267 = vmax.f32 %v4265, %v4266
    %v4268 = vrot.slane %v4267, 2
    %v4269 = vmax.f32 %v4267, %v4268
    %v4270 = vrot.slane %v4269, 1
    %v4271 = vmax.f32 %v4269, %v4270
    %v4272 = vsel %vm145, %v3650, -inf
    %v4273 = vrot.slane %v4272, 4
    %v4274 = vmax.f32 %v4272, %v4273
    %v4275 = vrot.slane %v4274, 2
    %v4276 = vmax.f32 %v4274, %v4275
    %v4277 = vrot.slane %v4276, 1
    %v4278 = vmax.f32 %v4276, %v4277
    %v4279 = vsel %vm145, %v3651, -inf
    %v4280 = vrot.slane %v4279, 4
    %v4281 = vmax.f32 %v4279, %v4280
    %v4282 = vrot.slane %v4281, 2
    %v4283 = vmax.f32 %v4281, %v4282
    %v4284 = vrot.slane %v4283, 1
    %v4285 = vmax.f32 %v4283, %v4284
    %v4286 = vsel %vm145, %v3504, -inf
    %v4287 = vrot.slane %v4286, 4
    %v4288 = vmax.f32 %v4286, %v4287
    %v4289 = vrot.slane %v4288, 2
    %v4290 = vmax.f32 %v4288, %v4289
    %v4291 = vrot.slane %v4290, 1
    %v4292 = vmax.f32 %v4290, %v4291
    %v4293 = vsel %vm145, %v3652, -inf
    %v4294 = vrot.slane %v4293, 4
    %v4295 = vmax.f32 %v4293, %v4294
    %v4296 = vrot.slane %v4295, 2
    %v4297 = vmax.f32 %v4295, %v4296
    %v4298 = vrot.slane %v4297, 1
    %v4299 = vmax.f32 %v4297, %v4298
    %v4300 = vsel %vm145, %v3653, -inf
    %v4301 = vrot.slane %v4300, 4
    %v4302 = vmax.f32 %v4300, %v4301
    %v4303 = vrot.slane %v4302, 2
    %v4304 = vmax.f32 %v4302, %v4303
    %v4305 = vrot.slane %v4304, 1
    %v4306 = vmax.f32 %v4304, %v4305
    %v4307 = vsel %vm145, %v3654, -inf
    %v4308 = vrot.slane %v4307, 4
    %v4309 = vmax.f32 %v4307, %v4308
    %v4310 = vrot.slane %v4309, 2
    %v4311 = vmax.f32 %v4309, %v4310
    %v4312 = vrot.slane %v4311, 1
    %v4313 = vmax.f32 %v4311, %v4312
    %v4314 = vsel %vm145, %v3505, -inf
    %v4315 = vrot.slane %v4314, 4
    %v4316 = vmax.f32 %v4314, %v4315
    %v4317 = vrot.slane %v4316, 2
    %v4318 = vmax.f32 %v4316, %v4317
    %v4319 = vrot.slane %v4318, 1
    %v4320 = vmax.f32 %v4318, %v4319
    %v4321 = vsel %vm145, %v3655, -inf
    %v4322 = vrot.slane %v4321, 4
    %v4323 = vmax.f32 %v4321, %v4322
    %v4324 = vrot.slane %v4323, 2
    %v4325 = vmax.f32 %v4323, %v4324
    %v4326 = vrot.slane %v4325, 1
    %v4327 = vmax.f32 %v4325, %v4326
    %v4328 = vsel %vm145, %v3656, -inf
    %v4329 = vrot.slane %v4328, 4
    %v4330 = vmax.f32 %v4328, %v4329
    %v4331 = vrot.slane %v4330, 2
    %v4332 = vmax.f32 %v4330, %v4331
    %v4333 = vrot.slane %v4332, 1
    %v4334 = vmax.f32 %v4332, %v4333
    %v4335 = vsel %vm145, %v3657, -inf
    %v4336 = vrot.slane %v4335, 4
    %v4337 = vmax.f32 %v4335, %v4336
    %v4338 = vrot.slane %v4337, 2
    %v4339 = vmax.f32 %v4337, %v4338
    %v4340 = vrot.slane %v4339, 1
    %v4341 = vmax.f32 %v4339, %v4340
    %v4342 = vsel %vm145, %v3506, -inf
    %v4343 = vrot.slane %v4342, 4
    %v4344 = vmax.f32 %v4342, %v4343
    %v4345 = vrot.slane %v4344, 2
    %v4346 = vmax.f32 %v4344, %v4345
    %v4347 = vrot.slane %v4346, 1
    %v4348 = vmax.f32 %v4346, %v4347
    %v4349 = vsel %vm145, %v3658, -inf
    %v4350 = vrot.slane %v4349, 4
    %v4351 = vmax.f32 %v4349, %v4350
    %v4352 = vrot.slane %v4351, 2
    %v4353 = vmax.f32 %v4351, %v4352
    %v4354 = vrot.slane %v4353, 1
    %v4355 = vmax.f32 %v4353, %v4354
    %v4356 = vsel %vm145, %v3659, -inf
    %v4357 = vrot.slane %v4356, 4
    %v4358 = vmax.f32 %v4356, %v4357
    %v4359 = vrot.slane %v4358, 2
    %v4360 = vmax.f32 %v4358, %v4359
    %v4361 = vrot.slane %v4360, 1
    %v4362 = vmax.f32 %v4360, %v4361
    %v4363 = vsel %vm145, %v3660, -inf
    %v4364 = vrot.slane %v4363, 4
    %v4365 = vmax.f32 %v4363, %v4364
    %v4366 = vrot.slane %v4365, 2
    %v4367 = vmax.f32 %v4365, %v4366
    %v4368 = vrot.slane %v4367, 1
    %v4369 = vmax.f32 %v4367, %v4368
    %v4370 = vsel %vm145, %v3507, -inf
    %v4371 = vrot.slane %v4370, 4
    %v4372 = vmax.f32 %v4370, %v4371
    %v4373 = vrot.slane %v4372, 2
    %v4374 = vmax.f32 %v4372, %v4373
    %v4375 = vrot.slane %v4374, 1
    %v4376 = vmax.f32 %v4374, %v4375
    %v4377 = vsel %vm145, %v3661, -inf
    %v4378 = vrot.slane %v4377, 4
    %v4379 = vmax.f32 %v4377, %v4378
    %v4380 = vrot.slane %v4379, 2
    %v4381 = vmax.f32 %v4379, %v4380
    %v4382 = vrot.slane %v4381, 1
    %v4383 = vmax.f32 %v4381, %v4382
    %v4384 = vsel %vm145, %v3662, -inf
    %v4385 = vrot.slane %v4384, 4
    %v4386 = vmax.f32 %v4384, %v4385
    %v4387 = vrot.slane %v4386, 2
    %v4388 = vmax.f32 %v4386, %v4387
    %v4389 = vrot.slane %v4388, 1
    %v4390 = vmax.f32 %v4388, %v4389
    %v4391 = vsel %vm145, %v3663, -inf
    %v4392 = vrot.slane %v4391, 4
    %v4393 = vmax.f32 %v4391, %v4392
    %v4394 = vrot.slane %v4393, 2
    %v4395 = vmax.f32 %v4393, %v4394
    %v4396 = vrot.slane %v4395, 1
    %v4397 = vmax.f32 %v4395, %v4396
    %v4398 = vsel %vm145, %v3508, -inf
    %v4399 = vrot.slane %v4398, 4
    %v4400 = vmax.f32 %v4398, %v4399
    %v4401 = vrot.slane %v4400, 2
    %v4402 = vmax.f32 %v4400, %v4401
    %v4403 = vrot.slane %v4402, 1
    %v4404 = vmax.f32 %v4402, %v4403
    %v4405 = vsel %vm145, %v3664, -inf
    %v4406 = vrot.slane %v4405, 4
    %v4407 = vmax.f32 %v4405, %v4406
    %v4408 = vrot.slane %v4407, 2
    %v4409 = vmax.f32 %v4407, %v4408
    %v4410 = vrot.slane %v4409, 1
    %v4411 = vmax.f32 %v4409, %v4410
    %v4412 = vsel %vm145, %v3665, -inf
    %v4413 = vrot.slane %v4412, 4
    %v4414 = vmax.f32 %v4412, %v4413
    %v4415 = vrot.slane %v4414, 2
    %v4416 = vmax.f32 %v4414, %v4415
    %v4417 = vrot.slane %v4416, 1
    %v4418 = vmax.f32 %v4416, %v4417
    %v4419 = vsel %vm145, %v3666, -inf
    %v4420 = vrot.slane %v4419, 4
    %v4421 = vmax.f32 %v4419, %v4420
    %v4422 = vrot.slane %v4421, 2
    %v4423 = vmax.f32 %v4421, %v4422
    %v4424 = vrot.slane %v4423, 1
    %v4425 = vmax.f32 %v4423, %v4424
    %v4426 = vsel %vm145, %v3509, -inf
    %v4427 = vrot.slane %v4426, 4
    %v4428 = vmax.f32 %v4426, %v4427
    %v4429 = vrot.slane %v4428, 2
    %v4430 = vmax.f32 %v4428, %v4429
    %v4431 = vrot.slane %v4430, 1
    %v4432 = vmax.f32 %v4430, %v4431
    %v4433 = vsel %vm145, %v3667, -inf
    %v4434 = vrot.slane %v4433, 4
    %v4435 = vmax.f32 %v4433, %v4434
    %v4436 = vrot.slane %v4435, 2
    %v4437 = vmax.f32 %v4435, %v4436
    %v4438 = vrot.slane %v4437, 1
    %v4439 = vmax.f32 %v4437, %v4438
    %v4440 = vsel %vm145, %v3668, -inf
    %v4441 = vrot.slane %v4440, 4
    %v4442 = vmax.f32 %v4440, %v4441
    %v4443 = vrot.slane %v4442, 2
    %v4444 = vmax.f32 %v4442, %v4443
    %v4445 = vrot.slane %v4444, 1
    %v4446 = vmax.f32 %v4444, %v4445
    %v4447 = vsel %vm145, %v3669, -inf
    %v4448 = vrot.slane %v4447, 4
    %v4449 = vmax.f32 %v4447, %v4448
    %v4450 = vrot.slane %v4449, 2
    %v4451 = vmax.f32 %v4449, %v4450
    %v4452 = vrot.slane %v4451, 1
    %v4453 = vmax.f32 %v4451, %v4452
    %v4454 = vsel %vm145, %v3510, -inf
    %v4455 = vrot.slane %v4454, 4
    %v4456 = vmax.f32 %v4454, %v4455
    %v4457 = vrot.slane %v4456, 2
    %v4458 = vmax.f32 %v4456, %v4457
    %v4459 = vrot.slane %v4458, 1
    %v4460 = vmax.f32 %v4458, %v4459
    %v4461 = vsel %vm145, %v3670, -inf
    %v4462 = vrot.slane %v4461, 4
    %v4463 = vmax.f32 %v4461, %v4462
    %v4464 = vrot.slane %v4463, 2
    %v4465 = vmax.f32 %v4463, %v4464
    %v4466 = vrot.slane %v4465, 1
    %v4467 = vmax.f32 %v4465, %v4466
    %v4468 = vsel %vm145, %v3671, -inf
    %v4469 = vrot.slane %v4468, 4
    %v4470 = vmax.f32 %v4468, %v4469
    %v4471 = vrot.slane %v4470, 2
    %v4472 = vmax.f32 %v4470, %v4471
    %v4473 = vrot.slane %v4472, 1
    %v4474 = vmax.f32 %v4472, %v4473
    %v4475 = vsel %vm145, %v3672, -inf
    %v4476 = vrot.slane %v4475, 4
    %v4477 = vmax.f32 %v4475, %v4476
    %v4478 = vrot.slane %v4477, 2
    %v4479 = vmax.f32 %v4477, %v4478
    %v4480 = vrot.slane %v4479, 1
    %v4481 = vmax.f32 %v4479, %v4480
    %v4482 = vsel %vm145, %v3511, -inf
    %v4483 = vrot.slane %v4482, 4
    %v4484 = vmax.f32 %v4482, %v4483
    %v4485 = vrot.slane %v4484, 2
    %v4486 = vmax.f32 %v4484, %v4485
    %v4487 = vrot.slane %v4486, 1
    %v4488 = vmax.f32 %v4486, %v4487
    %v4489 = vsel %vm145, %v3673, -inf
    %v4490 = vrot.slane %v4489, 4
    %v4491 = vmax.f32 %v4489, %v4490
    %v4492 = vrot.slane %v4491, 2
    %v4493 = vmax.f32 %v4491, %v4492
    %v4494 = vrot.slane %v4493, 1
    %v4495 = vmax.f32 %v4493, %v4494
    %v4496 = vsel %vm145, %v3674, -inf
    %v4497 = vrot.slane %v4496, 4
    %v4498 = vmax.f32 %v4496, %v4497
    %v4499 = vrot.slane %v4498, 2
    %v4500 = vmax.f32 %v4498, %v4499
    %v4501 = vrot.slane %v4500, 1
    %v4502 = vmax.f32 %v4500, %v4501
    %v4503 = vsel %vm145, %v3675, -inf
    %v4504 = vrot.slane %v4503, 4
    %v4505 = vmax.f32 %v4503, %v4504
    %v4506 = vrot.slane %v4505, 2
    %v4507 = vmax.f32 %v4505, %v4506
    %v4508 = vrot.slane %v4507, 1
    %v4509 = vmax.f32 %v4507, %v4508
    %v4510 = vsel %vm145, %v3512, -inf
    %v4511 = vrot.slane %v4510, 4
    %v4512 = vmax.f32 %v4510, %v4511
    %v4513 = vrot.slane %v4512, 2
    %v4514 = vmax.f32 %v4512, %v4513
    %v4515 = vrot.slane %v4514, 1
    %v4516 = vmax.f32 %v4514, %v4515
    %v4517 = vsel %vm145, %v3676, -inf
    %v4518 = vrot.slane %v4517, 4
    %v4519 = vmax.f32 %v4517, %v4518
    %v4520 = vrot.slane %v4519, 2
    %v4521 = vmax.f32 %v4519, %v4520
    %v4522 = vrot.slane %v4521, 1
    %v4523 = vmax.f32 %v4521, %v4522
    %v4524 = vsel %vm145, %v3677, -inf
    %v4525 = vrot.slane %v4524, 4
    %v4526 = vmax.f32 %v4524, %v4525
    %v4527 = vrot.slane %v4526, 2
    %v4528 = vmax.f32 %v4526, %v4527
    %v4529 = vrot.slane %v4528, 1
    %v4530 = vmax.f32 %v4528, %v4529
    %v4531 = vsel %vm145, %v3678, -inf
    %v4532 = vrot.slane %v4531, 4
    %v4533 = vmax.f32 %v4531, %v4532
    %v4534 = vrot.slane %v4533, 2
    %v4535 = vmax.f32 %v4533, %v4534
    %v4536 = vrot.slane %v4535, 1
    %v4537 = vmax.f32 %v4535, %v4536
    %v4538 = vsel %vm145, %v3513, -inf
    %v4539 = vrot.slane %v4538, 4
    %v4540 = vmax.f32 %v4538, %v4539
    %v4541 = vrot.slane %v4540, 2
    %v4542 = vmax.f32 %v4540, %v4541
    %v4543 = vrot.slane %v4542, 1
    %v4544 = vmax.f32 %v4542, %v4543
    %v4545 = vsel %vm145, %v3679, -inf
    %v4546 = vrot.slane %v4545, 4
    %v4547 = vmax.f32 %v4545, %v4546
    %v4548 = vrot.slane %v4547, 2
    %v4549 = vmax.f32 %v4547, %v4548
    %v4550 = vrot.slane %v4549, 1
    %v4551 = vmax.f32 %v4549, %v4550
    %v4552 = vsel %vm145, %v3680, -inf
    %v4553 = vrot.slane %v4552, 4
    %v4554 = vmax.f32 %v4552, %v4553
    %v4555 = vrot.slane %v4554, 2
    %v4556 = vmax.f32 %v4554, %v4555
    %v4557 = vrot.slane %v4556, 1
    %v4558 = vmax.f32 %v4556, %v4557
    %v4559 = vsel %vm145, %v3681, -inf
    %v4560 = vrot.slane %v4559, 4
    %v4561 = vmax.f32 %v4559, %v4560
    %v4562 = vrot.slane %v4561, 2
    %v4563 = vmax.f32 %v4561, %v4562
    %v4564 = vrot.slane %v4563, 1
    %v4565 = vmax.f32 %v4563, %v4564
    %v4566 = vsel %vm145, %v3514, -inf
    %v4567 = vrot.slane %v4566, 4
    %v4568 = vmax.f32 %v4566, %v4567
    %v4569 = vrot.slane %v4568, 2
    %v4570 = vmax.f32 %v4568, %v4569
    %v4571 = vrot.slane %v4570, 1
    %v4572 = vmax.f32 %v4570, %v4571
    %v4573 = vsel %vm145, %v3682, -inf
    %v4574 = vrot.slane %v4573, 4
    %v4575 = vmax.f32 %v4573, %v4574
    %v4576 = vrot.slane %v4575, 2
    %v4577 = vmax.f32 %v4575, %v4576
    %v4578 = vrot.slane %v4577, 1
    %v4579 = vmax.f32 %v4577, %v4578
    %v4580 = vsel %vm145, %v3683, -inf
    %v4581 = vrot.slane %v4580, 4
    %v4582 = vmax.f32 %v4580, %v4581
    %v4583 = vrot.slane %v4582, 2
    %v4584 = vmax.f32 %v4582, %v4583
    %v4585 = vrot.slane %v4584, 1
    %v4586 = vmax.f32 %v4584, %v4585
    %v4587 = vsel %vm145, %v3684, -inf
    %v4588 = vrot.slane %v4587, 4
    %v4589 = vmax.f32 %v4587, %v4588
    %v4590 = vrot.slane %v4589, 2
    %v4591 = vmax.f32 %v4589, %v4590
    %v4592 = vrot.slane %v4591, 1
    %v4593 = vmax.f32 %v4591, %v4592
    %v4594 = vsel %vm145, %v3515, -inf
    %v4595 = vrot.slane %v4594, 4
    %v4596 = vmax.f32 %v4594, %v4595
    %v4597 = vrot.slane %v4596, 2
    %v4598 = vmax.f32 %v4596, %v4597
    %v4599 = vrot.slane %v4598, 1
    %v4600 = vmax.f32 %v4598, %v4599
    %v4601 = vsel %vm145, %v3685, -inf
    %v4602 = vrot.slane %v4601, 4
    %v4603 = vmax.f32 %v4601, %v4602
    %v4604 = vrot.slane %v4603, 2
    %v4605 = vmax.f32 %v4603, %v4604
    %v4606 = vrot.slane %v4605, 1
    %v4607 = vmax.f32 %v4605, %v4606
    %v4608 = vsel %vm145, %v3686, -inf
    %v4609 = vrot.slane %v4608, 4
    %v4610 = vmax.f32 %v4608, %v4609
    %v4611 = vrot.slane %v4610, 2
    %v4612 = vmax.f32 %v4610, %v4611
    %v4613 = vrot.slane %v4612, 1
    %v4614 = vmax.f32 %v4612, %v4613
    %v4615 = vsel %vm145, %v3687, -inf
    %v4616 = vrot.slane %v4615, 4
    %v4617 = vmax.f32 %v4615, %v4616
    %v4618 = vrot.slane %v4617, 2
    %v4619 = vmax.f32 %v4617, %v4618
    %v4620 = vrot.slane %v4619, 1
    %v4621 = vmax.f32 %v4619, %v4620
    %v4622 = vsel %vm145, %v3516, -inf
    %v4623 = vrot.slane %v4622, 4
    %v4624 = vmax.f32 %v4622, %v4623
    %v4625 = vrot.slane %v4624, 2
    %v4626 = vmax.f32 %v4624, %v4625
    %v4627 = vrot.slane %v4626, 1
    %v4628 = vmax.f32 %v4626, %v4627
    %v4629 = vsel %vm145, %v3688, -inf
    %v4630 = vrot.slane %v4629, 4
    %v4631 = vmax.f32 %v4629, %v4630
    %v4632 = vrot.slane %v4631, 2
    %v4633 = vmax.f32 %v4631, %v4632
    %v4634 = vrot.slane %v4633, 1
    %v4635 = vmax.f32 %v4633, %v4634
    %v4636 = vsel %vm145, %v3689, -inf
    %v4637 = vrot.slane %v4636, 4
    %v4638 = vmax.f32 %v4636, %v4637
    %v4639 = vrot.slane %v4638, 2
    %v4640 = vmax.f32 %v4638, %v4639
    %v4641 = vrot.slane %v4640, 1
    %v4642 = vmax.f32 %v4640, %v4641
    %v4643 = vsel %vm145, %v3690, -inf
    %v4644 = vrot.slane %v4643, 4
    %v4645 = vmax.f32 %v4643, %v4644
    %v4646 = vrot.slane %v4645, 2
    %v4647 = vmax.f32 %v4645, %v4646
    %v4648 = vrot.slane %v4647, 1
    %v4649 = vmax.f32 %v4647, %v4648
    %v4650 = vsel %vm145, %v3517, -inf
    %v4651 = vrot.slane %v4650, 4
    %v4652 = vmax.f32 %v4650, %v4651
    %v4653 = vrot.slane %v4652, 2
    %v4654 = vmax.f32 %v4652, %v4653
    %v4655 = vrot.slane %v4654, 1
    %v4656 = vmax.f32 %v4654, %v4655
    %v4657 = vsel %vm145, %v3691, -inf
    %v4658 = vrot.slane %v4657, 4
    %v4659 = vmax.f32 %v4657, %v4658
    %v4660 = vrot.slane %v4659, 2
    %v4661 = vmax.f32 %v4659, %v4660
    %v4662 = vrot.slane %v4661, 1
    %v4663 = vmax.f32 %v4661, %v4662
    %v4664 = vsel %vm145, %v3692, -inf
    %v4665 = vrot.slane %v4664, 4
    %v4666 = vmax.f32 %v4664, %v4665
    %v4667 = vrot.slane %v4666, 2
    %v4668 = vmax.f32 %v4666, %v4667
    %v4669 = vrot.slane %v4668, 1
    %v4670 = vmax.f32 %v4668, %v4669
    %v4671 = vsel %vm145, %v3693, -inf
    %v4672 = vrot.slane %v4671, 4
    %v4673 = vmax.f32 %v4671, %v4672
    %v4674 = vrot.slane %v4673, 2
    %v4675 = vmax.f32 %v4673, %v4674
    %v4676 = vrot.slane %v4675, 1
    %v4677 = vmax.f32 %v4675, %v4676
    %v4678 = vsel %vm145, %v3518, -inf
    %v4679 = vrot.slane %v4678, 4
    %v4680 = vmax.f32 %v4678, %v4679
    %v4681 = vrot.slane %v4680, 2
    %v4682 = vmax.f32 %v4680, %v4681
    %v4683 = vrot.slane %v4682, 1
    %v4684 = vmax.f32 %v4682, %v4683
    %v4685 = vsel %vm145, %v3694, -inf
    %v4686 = vrot.slane %v4685, 4
    %v4687 = vmax.f32 %v4685, %v4686
    %v4688 = vrot.slane %v4687, 2
    %v4689 = vmax.f32 %v4687, %v4688
    %v4690 = vrot.slane %v4689, 1
    %v4691 = vmax.f32 %v4689, %v4690
    %v4692 = vsel %vm145, %v3695, -inf
    %v4693 = vrot.slane %v4692, 4
    %v4694 = vmax.f32 %v4692, %v4693
    %v4695 = vrot.slane %v4694, 2
    %v4696 = vmax.f32 %v4694, %v4695
    %v4697 = vrot.slane %v4696, 1
    %v4698 = vmax.f32 %v4696, %v4697
    %v4699 = vsel %vm145, %v3696, -inf
    %v4700 = vrot.slane %v4699, 4
    %v4701 = vmax.f32 %v4699, %v4700
    %v4702 = vrot.slane %v4701, 2
    %v4703 = vmax.f32 %v4701, %v4702
    %v4704 = vrot.slane %v4703, 1
    %v4705 = vmax.f32 %v4703, %v4704
    %v4706 = vsel %vm145, %v3519, -inf
    %v4707 = vrot.slane %v4706, 4
    %v4708 = vmax.f32 %v4706, %v4707
    %v4709 = vrot.slane %v4708, 2
    %v4710 = vmax.f32 %v4708, %v4709
    %v4711 = vrot.slane %v4710, 1
    %v4712 = vmax.f32 %v4710, %v4711
    %v4713 = vsel %vm145, %v3697, -inf
    %v4714 = vrot.slane %v4713, 4
    %v4715 = vmax.f32 %v4713, %v4714
    %v4716 = vrot.slane %v4715, 2
    %v4717 = vmax.f32 %v4715, %v4716
    %v4718 = vrot.slane %v4717, 1
    %v4719 = vmax.f32 %v4717, %v4718
    %v4720 = vsel %vm145, %v3698, -inf
    %v4721 = vrot.slane %v4720, 4
    %v4722 = vmax.f32 %v4720, %v4721
    %v4723 = vrot.slane %v4722, 2
    %v4724 = vmax.f32 %v4722, %v4723
    %v4725 = vrot.slane %v4724, 1
    %v4726 = vmax.f32 %v4724, %v4725
    %v4727 = vsel %vm145, %v3699, -inf
    %v4728 = vrot.slane %v4727, 4
    %v4729 = vmax.f32 %v4727, %v4728
    %v4730 = vrot.slane %v4729, 2
    %v4731 = vmax.f32 %v4729, %v4730
    %v4732 = vrot.slane %v4731, 1
    %v4733 = vmax.f32 %v4731, %v4732
    %v4734 = vsel %vm145, %v3520, -inf
    %v4735 = vrot.slane %v4734, 4
    %v4736 = vmax.f32 %v4734, %v4735
    %v4737 = vrot.slane %v4736, 2
    %v4738 = vmax.f32 %v4736, %v4737
    %v4739 = vrot.slane %v4738, 1
    %v4740 = vmax.f32 %v4738, %v4739
    %v4741 = vsel %vm145, %v3700, -inf
    %v4742 = vrot.slane %v4741, 4
    %v4743 = vmax.f32 %v4741, %v4742
    %v4744 = vrot.slane %v4743, 2
    %v4745 = vmax.f32 %v4743, %v4744
    %v4746 = vrot.slane %v4745, 1
    %v4747 = vmax.f32 %v4745, %v4746
    %v4748 = vsel %vm145, %v3701, -inf
    %v4749 = vrot.slane %v4748, 4
    %v4750 = vmax.f32 %v4748, %v4749
    %v4751 = vrot.slane %v4750, 2
    %v4752 = vmax.f32 %v4750, %v4751
    %v4753 = vrot.slane %v4752, 1
    %v4754 = vmax.f32 %v4752, %v4753
    %v4755 = vsel %vm145, %v3702, -inf
    %v4756 = vrot.slane %v4755, 4
    %v4757 = vmax.f32 %v4755, %v4756
    %v4758 = vrot.slane %v4757, 2
    %v4759 = vmax.f32 %v4757, %v4758
    %v4760 = vrot.slane %v4759, 1
    %v4761 = vmax.f32 %v4759, %v4760
    %v4762 = vsel %vm145, %v3521, -inf
    %v4763 = vrot.slane %v4762, 4
    %v4764 = vmax.f32 %v4762, %v4763
    %v4765 = vrot.slane %v4764, 2
    %v4766 = vmax.f32 %v4764, %v4765
    %v4767 = vrot.slane %v4766, 1
    %v4768 = vmax.f32 %v4766, %v4767
    %v4769 = vsel %vm145, %v3703, -inf
    %v4770 = vrot.slane %v4769, 4
    %v4771 = vmax.f32 %v4769, %v4770
    %v4772 = vrot.slane %v4771, 2
    %v4773 = vmax.f32 %v4771, %v4772
    %v4774 = vrot.slane %v4773, 1
    %v4775 = vmax.f32 %v4773, %v4774
    %v4776 = vsel %vm145, %v3704, -inf
    %v4777 = vrot.slane %v4776, 4
    %v4778 = vmax.f32 %v4776, %v4777
    %v4779 = vrot.slane %v4778, 2
    %v4780 = vmax.f32 %v4778, %v4779
    %v4781 = vrot.slane %v4780, 1
    %v4782 = vmax.f32 %v4780, %v4781
    %v4783 = vsel %vm145, %v3705, -inf
    %v4784 = vrot.slane %v4783, 4
    %v4785 = vmax.f32 %v4783, %v4784
    %v4786 = vrot.slane %v4785, 2
    %v4787 = vmax.f32 %v4785, %v4786
    %v4788 = vrot.slane %v4787, 1
    %v4789 = vmax.f32 %v4787, %v4788
    %v4790 = vsel %vm145, %v3522, -inf
    %v4791 = vrot.slane %v4790, 4
    %v4792 = vmax.f32 %v4790, %v4791
    %v4793 = vrot.slane %v4792, 2
    %v4794 = vmax.f32 %v4792, %v4793
    %v4795 = vrot.slane %v4794, 1
    %v4796 = vmax.f32 %v4794, %v4795
    %v4797 = vsel %vm145, %v3706, -inf
    %v4798 = vrot.slane %v4797, 4
    %v4799 = vmax.f32 %v4797, %v4798
    %v4800 = vrot.slane %v4799, 2
    %v4801 = vmax.f32 %v4799, %v4800
    %v4802 = vrot.slane %v4801, 1
    %v4803 = vmax.f32 %v4801, %v4802
    %v4804 = vsel %vm145, %v3707, -inf
    %v4805 = vrot.slane %v4804, 4
    %v4806 = vmax.f32 %v4804, %v4805
    %v4807 = vrot.slane %v4806, 2
    %v4808 = vmax.f32 %v4806, %v4807
    %v4809 = vrot.slane %v4808, 1
    %v4810 = vmax.f32 %v4808, %v4809
    %v4811 = vsel %vm145, %v3708, -inf
    %v4812 = vrot.slane %v4811, 4
    %v4813 = vmax.f32 %v4811, %v4812
    %v4814 = vrot.slane %v4813, 2
    %v4815 = vmax.f32 %v4813, %v4814
    %v4816 = vrot.slane %v4815, 1
    %v4817 = vmax.f32 %v4815, %v4816
    %v4818 = vsel %vm145, %v3523, -inf
    %v4819 = vrot.slane %v4818, 4
    %v4820 = vmax.f32 %v4818, %v4819
    %v4821 = vrot.slane %v4820, 2
    %v4822 = vmax.f32 %v4820, %v4821
    %v4823 = vrot.slane %v4822, 1
    %v4824 = vmax.f32 %v4822, %v4823
    %v4825 = vsel %vm145, %v3709, -inf
    %v4826 = vrot.slane %v4825, 4
    %v4827 = vmax.f32 %v4825, %v4826
    %v4828 = vrot.slane %v4827, 2
    %v4829 = vmax.f32 %v4827, %v4828
    %v4830 = vrot.slane %v4829, 1
    %v4831 = vmax.f32 %v4829, %v4830
    %v4832 = vsel %vm145, %v3710, -inf
    %v4833 = vrot.slane %v4832, 4
    %v4834 = vmax.f32 %v4832, %v4833
    %v4835 = vrot.slane %v4834, 2
    %v4836 = vmax.f32 %v4834, %v4835
    %v4837 = vrot.slane %v4836, 1
    %v4838 = vmax.f32 %v4836, %v4837
    %v4839 = vsel %vm145, %v3711, -inf
    %v4840 = vrot.slane %v4839, 4
    %v4841 = vmax.f32 %v4839, %v4840
    %v4842 = vrot.slane %v4841, 2
    %v4843 = vmax.f32 %v4841, %v4842
    %v4844 = vrot.slane %v4843, 1
    %v4845 = vmax.f32 %v4843, %v4844
    %v4846 = vsel %vm145, %v3524, -inf
    %v4847 = vrot.slane %v4846, 4
    %v4848 = vmax.f32 %v4846, %v4847
    %v4849 = vrot.slane %v4848, 2
    %v4850 = vmax.f32 %v4848, %v4849
    %v4851 = vrot.slane %v4850, 1
    %v4852 = vmax.f32 %v4850, %v4851
    %v4853 = vsel %vm145, %v3712, -inf
    %v4854 = vrot.slane %v4853, 4
    %v4855 = vmax.f32 %v4853, %v4854
    %v4856 = vrot.slane %v4855, 2
    %v4857 = vmax.f32 %v4855, %v4856
    %v4858 = vrot.slane %v4857, 1
    %v4859 = vmax.f32 %v4857, %v4858
    %v4860 = vsel %vm145, %v3713, -inf
    %v4861 = vrot.slane %v4860, 4
    %v4862 = vmax.f32 %v4860, %v4861
    %v4863 = vrot.slane %v4862, 2
    %v4864 = vmax.f32 %v4862, %v4863
    %v4865 = vrot.slane %v4864, 1
    %v4866 = vmax.f32 %v4864, %v4865
    %v4867 = vsel %vm145, %v3714, -inf
    %v4868 = vrot.slane %v4867, 4
    %v4869 = vmax.f32 %v4867, %v4868
    %v4870 = vrot.slane %v4869, 2
    %v4871 = vmax.f32 %v4869, %v4870
    %v4872 = vrot.slane %v4871, 1
    %v4873 = vmax.f32 %v4871, %v4872
    %v4874 = vsel %vm145, %v3525, -inf
    %v4875 = vrot.slane %v4874, 4
    %v4876 = vmax.f32 %v4874, %v4875
    %v4877 = vrot.slane %v4876, 2
    %v4878 = vmax.f32 %v4876, %v4877
    %v4879 = vrot.slane %v4878, 1
    %v4880 = vmax.f32 %v4878, %v4879
    %v4881 = vsel %vm145, %v3715, -inf
    %v4882 = vrot.slane %v4881, 4
    %v4883 = vmax.f32 %v4881, %v4882
    %v4884 = vrot.slane %v4883, 2
    %v4885 = vmax.f32 %v4883, %v4884
    %v4886 = vrot.slane %v4885, 1
    %v4887 = vmax.f32 %v4885, %v4886
    %v4888 = vsel %vm145, %v3716, -inf
    %v4889 = vrot.slane %v4888, 4
    %v4890 = vmax.f32 %v4888, %v4889
    %v4891 = vrot.slane %v4890, 2
    %v4892 = vmax.f32 %v4890, %v4891
    %v4893 = vrot.slane %v4892, 1
    %v4894 = vmax.f32 %v4892, %v4893
    %v4895 = vsel %vm145, %v3717, -inf
    %v4896 = vrot.slane %v4895, 4
    %v4897 = vmax.f32 %v4895, %v4896
    %v4898 = vrot.slane %v4897, 2
    %v4899 = vmax.f32 %v4897, %v4898
    %v4900 = vrot.slane %v4899, 1
    %v4901 = vmax.f32 %v4899, %v4900
    %v4902 = vsel %vm145, %v3526, -inf
    %v4903 = vrot.slane %v4902, 4
    %v4904 = vmax.f32 %v4902, %v4903
    %v4905 = vrot.slane %v4904, 2
    %v4906 = vmax.f32 %v4904, %v4905
    %v4907 = vrot.slane %v4906, 1
    %v4908 = vmax.f32 %v4906, %v4907
    %v4909 = vsel %vm145, %v3718, -inf
    %v4910 = vrot.slane %v4909, 4
    %v4911 = vmax.f32 %v4909, %v4910
    %v4912 = vrot.slane %v4911, 2
    %v4913 = vmax.f32 %v4911, %v4912
    %v4914 = vrot.slane %v4913, 1
    %v4915 = vmax.f32 %v4913, %v4914
    %v4916 = vsel %vm145, %v3719, -inf
    %v4917 = vrot.slane %v4916, 4
    %v4918 = vmax.f32 %v4916, %v4917
    %v4919 = vrot.slane %v4918, 2
    %v4920 = vmax.f32 %v4918, %v4919
    %v4921 = vrot.slane %v4920, 1
    %v4922 = vmax.f32 %v4920, %v4921
    %v4923 = vsel %vm145, %v3720, -inf
    %v4924 = vrot.slane %v4923, 4
    %v4925 = vmax.f32 %v4923, %v4924
    %v4926 = vrot.slane %v4925, 2
    %v4927 = vmax.f32 %v4925, %v4926
    %v4928 = vrot.slane %v4927, 1
    %v4929 = vmax.f32 %v4927, %v4928
    %v4930 = vsel %vm145, %v3527, -inf
    %v4931 = vrot.slane %v4930, 4
    %v4932 = vmax.f32 %v4930, %v4931
    %v4933 = vrot.slane %v4932, 2
    %v4934 = vmax.f32 %v4932, %v4933
    %v4935 = vrot.slane %v4934, 1
    %v4936 = vmax.f32 %v4934, %v4935
    %v4937 = vsel %vm145, %v3721, -inf
    %v4938 = vrot.slane %v4937, 4
    %v4939 = vmax.f32 %v4937, %v4938
    %v4940 = vrot.slane %v4939, 2
    %v4941 = vmax.f32 %v4939, %v4940
    %v4942 = vrot.slane %v4941, 1
    %v4943 = vmax.f32 %v4941, %v4942
    %v4944 = vsel %vm145, %v3722, -inf
    %v4945 = vrot.slane %v4944, 4
    %v4946 = vmax.f32 %v4944, %v4945
    %v4947 = vrot.slane %v4946, 2
    %v4948 = vmax.f32 %v4946, %v4947
    %v4949 = vrot.slane %v4948, 1
    %v4950 = vmax.f32 %v4948, %v4949
    %v4951 = vsel %vm145, %v3723, -inf
    %v4952 = vrot.slane %v4951, 4
    %v4953 = vmax.f32 %v4951, %v4952
    %v4954 = vrot.slane %v4953, 2
    %v4955 = vmax.f32 %v4953, %v4954
    %v4956 = vrot.slane %v4955, 1
    %v4957 = vmax.f32 %v4955, %v4956
    %v4958 = vsel %vm145, %v3528, -inf
    %v4959 = vrot.slane %v4958, 4
    %v4960 = vmax.f32 %v4958, %v4959
    %v4961 = vrot.slane %v4960, 2
    %v4962 = vmax.f32 %v4960, %v4961
    %v4963 = vrot.slane %v4962, 1
    %v4964 = vmax.f32 %v4962, %v4963
    %v4965 = vsel %vm145, %v3724, -inf
    %v4966 = vrot.slane %v4965, 4
    %v4967 = vmax.f32 %v4965, %v4966
    %v4968 = vrot.slane %v4967, 2
    %v4969 = vmax.f32 %v4967, %v4968
    %v4970 = vrot.slane %v4969, 1
    %v4971 = vmax.f32 %v4969, %v4970
    %v4972 = vsel %vm145, %v3725, -inf
    %v4973 = vrot.slane %v4972, 4
    %v4974 = vmax.f32 %v4972, %v4973
    %v4975 = vrot.slane %v4974, 2
    %v4976 = vmax.f32 %v4974, %v4975
    %v4977 = vrot.slane %v4976, 1
    %v4978 = vmax.f32 %v4976, %v4977
    %v4979 = vsel %vm145, %v3726, -inf
    %v4980 = vrot.slane %v4979, 4
    %v4981 = vmax.f32 %v4979, %v4980
    %v4982 = vrot.slane %v4981, 2
    %v4983 = vmax.f32 %v4981, %v4982
    %v4984 = vrot.slane %v4983, 1
    %v4985 = vmax.f32 %v4983, %v4984
    %v4986 = vsel %vm145, %v3529, -inf
    %v4987 = vrot.slane %v4986, 4
    %v4988 = vmax.f32 %v4986, %v4987
    %v4989 = vrot.slane %v4988, 2
    %v4990 = vmax.f32 %v4988, %v4989
    %v4991 = vrot.slane %v4990, 1
    %v4992 = vmax.f32 %v4990, %v4991
    %v4993 = vsel %vm145, %v3727, -inf
    %v4994 = vrot.slane %v4993, 4
    %v4995 = vmax.f32 %v4993, %v4994
    %v4996 = vrot.slane %v4995, 2
    %v4997 = vmax.f32 %v4995, %v4996
    %v4998 = vrot.slane %v4997, 1
    %v4999 = vmax.f32 %v4997, %v4998
    %v5000 = vsel %vm145, %v3728, -inf
    %v5001 = vrot.slane %v5000, 4
    %v5002 = vmax.f32 %v5000, %v5001
    %v5003 = vrot.slane %v5002, 2
    %v5004 = vmax.f32 %v5002, %v5003
    %v5005 = vrot.slane %v5004, 1
    %v5006 = vmax.f32 %v5004, %v5005
    %v5007 = vsel %vm145, %v3729, -inf
    %v5008 = vrot.slane %v5007, 4
    %v5009 = vmax.f32 %v5007, %v5008
    %v5010 = vrot.slane %v5009, 2
    %v5011 = vmax.f32 %v5009, %v5010
    %v5012 = vrot.slane %v5011, 1
    %v5013 = vmax.f32 %v5011, %v5012
    %v5014 = vsel %vm145, %v3530, -inf
    %v5015 = vrot.slane %v5014, 4
    %v5016 = vmax.f32 %v5014, %v5015
    %v5017 = vrot.slane %v5016, 2
    %v5018 = vmax.f32 %v5016, %v5017
    %v5019 = vrot.slane %v5018, 1
    %v5020 = vmax.f32 %v5018, %v5019
    %v5021 = vsel %vm145, %v3730, -inf
    %v5022 = vrot.slane %v5021, 4
    %v5023 = vmax.f32 %v5021, %v5022
    %v5024 = vrot.slane %v5023, 2
    %v5025 = vmax.f32 %v5023, %v5024
    %v5026 = vrot.slane %v5025, 1
    %v5027 = vmax.f32 %v5025, %v5026
    %v5028 = vsel %vm145, %v3731, -inf
    %v5029 = vrot.slane %v5028, 4
    %v5030 = vmax.f32 %v5028, %v5029
    %v5031 = vrot.slane %v5030, 2
    %v5032 = vmax.f32 %v5030, %v5031
    %v5033 = vrot.slane %v5032, 1
    %v5034 = vmax.f32 %v5032, %v5033
    %v5035 = vsel %vm145, %v3732, -inf
    %v5036 = vrot.slane %v5035, 4
    %v5037 = vmax.f32 %v5035, %v5036
    %v5038 = vrot.slane %v5037, 2
    %v5039 = vmax.f32 %v5037, %v5038
    %v5040 = vrot.slane %v5039, 1
    %v5041 = vmax.f32 %v5039, %v5040
    %v5042 = vsel %vm145, %v3531, -inf
    %v5043 = vrot.slane %v5042, 4
    %v5044 = vmax.f32 %v5042, %v5043
    %v5045 = vrot.slane %v5044, 2
    %v5046 = vmax.f32 %v5044, %v5045
    %v5047 = vrot.slane %v5046, 1
    %v5048 = vmax.f32 %v5046, %v5047
    %v5049 = vsel %vm145, %v3733, -inf
    %v5050 = vrot.slane %v5049, 4
    %v5051 = vmax.f32 %v5049, %v5050
    %v5052 = vrot.slane %v5051, 2
    %v5053 = vmax.f32 %v5051, %v5052
    %v5054 = vrot.slane %v5053, 1
    %v5055 = vmax.f32 %v5053, %v5054
    %v5056 = vsel %vm145, %v3734, -inf
    %v5057 = vrot.slane %v5056, 4
    %v5058 = vmax.f32 %v5056, %v5057
    %v5059 = vrot.slane %v5058, 2
    %v5060 = vmax.f32 %v5058, %v5059
    %v5061 = vrot.slane %v5060, 1
    %v5062 = vmax.f32 %v5060, %v5061
    %v5063 = vsel %vm145, %v3735, -inf
    %v5064 = vrot.slane %v5063, 4
    %v5065 = vmax.f32 %v5063, %v5064
    %v5066 = vrot.slane %v5065, 2
    %v5067 = vmax.f32 %v5065, %v5066
    %v5068 = vrot.slane %v5067, 1
    %v5069 = vmax.f32 %v5067, %v5068
    %v5070 = vsel %vm145, %v3532, -inf
    %v5071 = vrot.slane %v5070, 4
    %v5072 = vmax.f32 %v5070, %v5071
    %v5073 = vrot.slane %v5072, 2
    %v5074 = vmax.f32 %v5072, %v5073
    %v5075 = vrot.slane %v5074, 1
    %v5076 = vmax.f32 %v5074, %v5075
    %v5077 = vsel %vm145, %v3736, -inf
    %v5078 = vrot.slane %v5077, 4
    %v5079 = vmax.f32 %v5077, %v5078
    %v5080 = vrot.slane %v5079, 2
    %v5081 = vmax.f32 %v5079, %v5080
    %v5082 = vrot.slane %v5081, 1
    %v5083 = vmax.f32 %v5081, %v5082
    %v5084 = vsel %vm145, %v3737, -inf
    %v5085 = vrot.slane %v5084, 4
    %v5086 = vmax.f32 %v5084, %v5085
    %v5087 = vrot.slane %v5086, 2
    %v5088 = vmax.f32 %v5086, %v5087
    %v5089 = vrot.slane %v5088, 1
    %v5090 = vmax.f32 %v5088, %v5089
    %v5091 = vsel %vm145, %v3738, -inf
    %v5092 = vrot.slane %v5091, 4
    %v5093 = vmax.f32 %v5091, %v5092
    %v5094 = vrot.slane %v5093, 2
    %v5095 = vmax.f32 %v5093, %v5094
    %v5096 = vrot.slane %v5095, 1
    %v5097 = vmax.f32 %v5095, %v5096
    %v5098 = vsel %vm145, %v3533, -inf
    %v5099 = vrot.slane %v5098, 4
    %v5100 = vmax.f32 %v5098, %v5099
    %v5101 = vrot.slane %v5100, 2
    %v5102 = vmax.f32 %v5100, %v5101
    %v5103 = vrot.slane %v5102, 1
    %v5104 = vmax.f32 %v5102, %v5103
    %v5105 = vsel %vm145, %v3739, -inf
    %v5106 = vrot.slane %v5105, 4
    %v5107 = vmax.f32 %v5105, %v5106
    %v5108 = vrot.slane %v5107, 2
    %v5109 = vmax.f32 %v5107, %v5108
    %v5110 = vrot.slane %v5109, 1
    %v5111 = vmax.f32 %v5109, %v5110
    %v5112 = vsel %vm145, %v3740, -inf
    %v5113 = vrot.slane %v5112, 4
    %v5114 = vmax.f32 %v5112, %v5113
    %v5115 = vrot.slane %v5114, 2
    %v5116 = vmax.f32 %v5114, %v5115
    %v5117 = vrot.slane %v5116, 1
    %v5118 = vmax.f32 %v5116, %v5117
    %v5119 = vsel %vm145, %v3741, -inf
    %v5120 = vrot.slane %v5119, 4
    %v5121 = vmax.f32 %v5119, %v5120
    %v5122 = vrot.slane %v5121, 2
    %v5123 = vmax.f32 %v5121, %v5122
    %v5124 = vrot.slane %v5123, 1
    %v5125 = vmax.f32 %v5123, %v5124
    %v5126 = vsel %vm145, %v3534, -inf
    %v5127 = vrot.slane %v5126, 4
    %v5128 = vmax.f32 %v5126, %v5127
    %v5129 = vrot.slane %v5128, 2
    %v5130 = vmax.f32 %v5128, %v5129
    %v5131 = vrot.slane %v5130, 1
    %v5132 = vmax.f32 %v5130, %v5131
    %v5133 = vsel %vm145, %v3742, -inf
    %v5134 = vrot.slane %v5133, 4
    %v5135 = vmax.f32 %v5133, %v5134
    %v5136 = vrot.slane %v5135, 2
    %v5137 = vmax.f32 %v5135, %v5136
    %v5138 = vrot.slane %v5137, 1
    %v5139 = vmax.f32 %v5137, %v5138
    %v5140 = vsel %vm145, %v3743, -inf
    %v5141 = vrot.slane %v5140, 4
    %v5142 = vmax.f32 %v5140, %v5141
    %v5143 = vrot.slane %v5142, 2
    %v5144 = vmax.f32 %v5142, %v5143
    %v5145 = vrot.slane %v5144, 1
    %v5146 = vmax.f32 %v5144, %v5145
    %v5147 = vsel %vm145, %v3744, -inf
    %v5148 = vrot.slane %v5147, 4
    %v5149 = vmax.f32 %v5147, %v5148
    %v5150 = vrot.slane %v5149, 2
    %v5151 = vmax.f32 %v5149, %v5150
    %v5152 = vrot.slane %v5151, 1
    %v5153 = vmax.f32 %v5151, %v5152
    %v5154 = vsel %vm145, %v3535, -inf
    %v5155 = vrot.slane %v5154, 4
    %v5156 = vmax.f32 %v5154, %v5155
    %v5157 = vrot.slane %v5156, 2
    %v5158 = vmax.f32 %v5156, %v5157
    %v5159 = vrot.slane %v5158, 1
    %v5160 = vmax.f32 %v5158, %v5159
    %v5161 = vsel %vm145, %v3745, -inf
    %v5162 = vrot.slane %v5161, 4
    %v5163 = vmax.f32 %v5161, %v5162
    %v5164 = vrot.slane %v5163, 2
    %v5165 = vmax.f32 %v5163, %v5164
    %v5166 = vrot.slane %v5165, 1
    %v5167 = vmax.f32 %v5165, %v5166
    %v5168 = vsel %vm145, %v3746, -inf
    %v5169 = vrot.slane %v5168, 4
    %v5170 = vmax.f32 %v5168, %v5169
    %v5171 = vrot.slane %v5170, 2
    %v5172 = vmax.f32 %v5170, %v5171
    %v5173 = vrot.slane %v5172, 1
    %v5174 = vmax.f32 %v5172, %v5173
    %v5175 = vsel %vm145, %v3747, -inf
    %v5176 = vrot.slane %v5175, 4
    %v5177 = vmax.f32 %v5175, %v5176
    %v5178 = vrot.slane %v5177, 2
    %v5179 = vmax.f32 %v5177, %v5178
    %v5180 = vrot.slane %v5179, 1
    %v5181 = vmax.f32 %v5179, %v5180
    %v5182 = vsel %vm145, %v3536, -inf
    %v5183 = vrot.slane %v5182, 4
    %v5184 = vmax.f32 %v5182, %v5183
    %v5185 = vrot.slane %v5184, 2
    %v5186 = vmax.f32 %v5184, %v5185
    %v5187 = vrot.slane %v5186, 1
    %v5188 = vmax.f32 %v5186, %v5187
    %v5189 = vsel %vm145, %v3748, -inf
    %v5190 = vrot.slane %v5189, 4
    %v5191 = vmax.f32 %v5189, %v5190
    %v5192 = vrot.slane %v5191, 2
    %v5193 = vmax.f32 %v5191, %v5192
    %v5194 = vrot.slane %v5193, 1
    %v5195 = vmax.f32 %v5193, %v5194
    %v5196 = vsel %vm145, %v3749, -inf
    %v5197 = vrot.slane %v5196, 4
    %v5198 = vmax.f32 %v5196, %v5197
    %v5199 = vrot.slane %v5198, 2
    %v5200 = vmax.f32 %v5198, %v5199
    %v5201 = vrot.slane %v5200, 1
    %v5202 = vmax.f32 %v5200, %v5201
    %v5203 = vsel %vm145, %v3750, -inf
    %v5204 = vrot.slane %v5203, 4
    %v5205 = vmax.f32 %v5203, %v5204
    %v5206 = vrot.slane %v5205, 2
    %v5207 = vmax.f32 %v5205, %v5206
    %v5208 = vrot.slane %v5207, 1
    %v5209 = vmax.f32 %v5207, %v5208
    %v5210 = vsel %vm145, %v3537, -inf
    %v5211 = vrot.slane %v5210, 4
    %v5212 = vmax.f32 %v5210, %v5211
    %v5213 = vrot.slane %v5212, 2
    %v5214 = vmax.f32 %v5212, %v5213
    %v5215 = vrot.slane %v5214, 1
    %v5216 = vmax.f32 %v5214, %v5215
    %v5217 = vsel %vm145, %v3751, -inf
    %v5218 = vrot.slane %v5217, 4
    %v5219 = vmax.f32 %v5217, %v5218
    %v5220 = vrot.slane %v5219, 2
    %v5221 = vmax.f32 %v5219, %v5220
    %v5222 = vrot.slane %v5221, 1
    %v5223 = vmax.f32 %v5221, %v5222
    %v5224 = vsel %vm145, %v3752, -inf
    %v5225 = vrot.slane %v5224, 4
    %v5226 = vmax.f32 %v5224, %v5225
    %v5227 = vrot.slane %v5226, 2
    %v5228 = vmax.f32 %v5226, %v5227
    %v5229 = vrot.slane %v5228, 1
    %v5230 = vmax.f32 %v5228, %v5229
    %v5231 = vsel %vm145, %v3753, -inf
    %v5232 = vrot.slane %v5231, 4
    %v5233 = vmax.f32 %v5231, %v5232
    %v5234 = vrot.slane %v5233, 2
    %v5235 = vmax.f32 %v5233, %v5234
    %v5236 = vrot.slane %v5235, 1
    %v5237 = vmax.f32 %v5235, %v5236
    %v5238 = vsel %vm145, %v3538, -inf
    %v5239 = vrot.slane %v5238, 4
    %v5240 = vmax.f32 %v5238, %v5239
    %v5241 = vrot.slane %v5240, 2
    %v5242 = vmax.f32 %v5240, %v5241
    %v5243 = vrot.slane %v5242, 1
    %v5244 = vmax.f32 %v5242, %v5243
    %v5245 = vsel %vm145, %v3754, -inf
    %v5246 = vrot.slane %v5245, 4
    %v5247 = vmax.f32 %v5245, %v5246
    %v5248 = vrot.slane %v5247, 2
    %v5249 = vmax.f32 %v5247, %v5248
    %v5250 = vrot.slane %v5249, 1
    %v5251 = vmax.f32 %v5249, %v5250
    %v5252 = vsel %vm145, %v3755, -inf
    %v5253 = vrot.slane %v5252, 4
    %v5254 = vmax.f32 %v5252, %v5253
    %v5255 = vrot.slane %v5254, 2
    %v5256 = vmax.f32 %v5254, %v5255
    %v5257 = vrot.slane %v5256, 1
    %v5258 = vmax.f32 %v5256, %v5257
    %v5259 = vsel %vm145, %v3756, -inf
    %v5260 = vrot.slane %v5259, 4
    %v5261 = vmax.f32 %v5259, %v5260
    %v5262 = vrot.slane %v5261, 2
    %v5263 = vmax.f32 %v5261, %v5262
    %v5264 = vrot.slane %v5263, 1
    %v5265 = vmax.f32 %v5263, %v5264
    %v5266 = vsel %vm145, %v3539, -inf
    %v5267 = vrot.slane %v5266, 4
    %v5268 = vmax.f32 %v5266, %v5267
    %v5269 = vrot.slane %v5268, 2
    %v5270 = vmax.f32 %v5268, %v5269
    %v5271 = vrot.slane %v5270, 1
    %v5272 = vmax.f32 %v5270, %v5271
    %v5273 = vsel %vm145, %v3757, -inf
    %v5274 = vrot.slane %v5273, 4
    %v5275 = vmax.f32 %v5273, %v5274
    %v5276 = vrot.slane %v5275, 2
    %v5277 = vmax.f32 %v5275, %v5276
    %v5278 = vrot.slane %v5277, 1
    %v5279 = vmax.f32 %v5277, %v5278
    %v5280 = vsel %vm145, %v3758, -inf
    %v5281 = vrot.slane %v5280, 4
    %v5282 = vmax.f32 %v5280, %v5281
    %v5283 = vrot.slane %v5282, 2
    %v5284 = vmax.f32 %v5282, %v5283
    %v5285 = vrot.slane %v5284, 1
    %v5286 = vmax.f32 %v5284, %v5285
    %v5287 = vsel %vm145, %v3759, -inf
    %v5288 = vrot.slane %v5287, 4
    %v5289 = vmax.f32 %v5287, %v5288
    %v5290 = vrot.slane %v5289, 2
    %v5291 = vmax.f32 %v5289, %v5290
    %v5292 = vrot.slane %v5291, 1
    %v5293 = vmax.f32 %v5291, %v5292
    %v5294 = vsel %vm145, %v3540, -inf
    %v5295 = vrot.slane %v5294, 4
    %v5296 = vmax.f32 %v5294, %v5295
    %v5297 = vrot.slane %v5296, 2
    %v5298 = vmax.f32 %v5296, %v5297
    %v5299 = vrot.slane %v5298, 1
    %v5300 = vmax.f32 %v5298, %v5299
    %v5301 = vsel %vm145, %v3760, -inf
    %v5302 = vrot.slane %v5301, 4
    %v5303 = vmax.f32 %v5301, %v5302
    %v5304 = vrot.slane %v5303, 2
    %v5305 = vmax.f32 %v5303, %v5304
    %v5306 = vrot.slane %v5305, 1
    %v5307 = vmax.f32 %v5305, %v5306
    %v5308 = vsel %vm145, %v3761, -inf
    %v5309 = vrot.slane %v5308, 4
    %v5310 = vmax.f32 %v5308, %v5309
    %v5311 = vrot.slane %v5310, 2
    %v5312 = vmax.f32 %v5310, %v5311
    %v5313 = vrot.slane %v5312, 1
    %v5314 = vmax.f32 %v5312, %v5313
    %v5315 = vsel %vm145, %v3762, -inf
    %v5316 = vrot.slane %v5315, 4
    %v5317 = vmax.f32 %v5315, %v5316
    %v5318 = vrot.slane %v5317, 2
    %v5319 = vmax.f32 %v5317, %v5318
    %v5320 = vrot.slane %v5319, 1
    %v5321 = vmax.f32 %v5319, %v5320
    %v5322 = vsel %vm145, %v3541, -inf
    %v5323 = vrot.slane %v5322, 4
    %v5324 = vmax.f32 %v5322, %v5323
    %v5325 = vrot.slane %v5324, 2
    %v5326 = vmax.f32 %v5324, %v5325
    %v5327 = vrot.slane %v5326, 1
    %v5328 = vmax.f32 %v5326, %v5327
    %v5329 = vsel %vm145, %v3763, -inf
    %v5330 = vrot.slane %v5329, 4
    %v5331 = vmax.f32 %v5329, %v5330
    %v5332 = vrot.slane %v5331, 2
    %v5333 = vmax.f32 %v5331, %v5332
    %v5334 = vrot.slane %v5333, 1
    %v5335 = vmax.f32 %v5333, %v5334
    %v5336 = vsel %vm145, %v3764, -inf
    %v5337 = vrot.slane %v5336, 4
    %v5338 = vmax.f32 %v5336, %v5337
    %v5339 = vrot.slane %v5338, 2
    %v5340 = vmax.f32 %v5338, %v5339
    %v5341 = vrot.slane %v5340, 1
    %v5342 = vmax.f32 %v5340, %v5341
    %v5343 = vsel %vm145, %v3765, -inf
    %v5344 = vrot.slane %v5343, 4
    %v5345 = vmax.f32 %v5343, %v5344
    %v5346 = vrot.slane %v5345, 2
    %v5347 = vmax.f32 %v5345, %v5346
    %v5348 = vrot.slane %v5347, 1
    %v5349 = vmax.f32 %v5347, %v5348
    %v5350 = vsel %vm145, %v3542, -inf
    %v5351 = vrot.slane %v5350, 4
    %v5352 = vmax.f32 %v5350, %v5351
    %v5353 = vrot.slane %v5352, 2
    %v5354 = vmax.f32 %v5352, %v5353
    %v5355 = vrot.slane %v5354, 1
    %v5356 = vmax.f32 %v5354, %v5355
    %v5357 = vsel %vm145, %v3766, -inf
    %v5358 = vrot.slane %v5357, 4
    %v5359 = vmax.f32 %v5357, %v5358
    %v5360 = vrot.slane %v5359, 2
    %v5361 = vmax.f32 %v5359, %v5360
    %v5362 = vrot.slane %v5361, 1
    %v5363 = vmax.f32 %v5361, %v5362
    %v5364 = vsel %vm145, %v3767, -inf
    %v5365 = vrot.slane %v5364, 4
    %v5366 = vmax.f32 %v5364, %v5365
    %v5367 = vrot.slane %v5366, 2
    %v5368 = vmax.f32 %v5366, %v5367
    %v5369 = vrot.slane %v5368, 1
    %v5370 = vmax.f32 %v5368, %v5369
    %v5371 = vsel %vm145, %v3768, -inf
    %v5372 = vrot.slane %v5371, 4
    %v5373 = vmax.f32 %v5371, %v5372
    %v5374 = vrot.slane %v5373, 2
    %v5375 = vmax.f32 %v5373, %v5374
    %v5376 = vrot.slane %v5375, 1
    %v5377 = vmax.f32 %v5375, %v5376
    %v5378 = vsel %vm145, %v3543, -inf
    %v5379 = vrot.slane %v5378, 4
    %v5380 = vmax.f32 %v5378, %v5379
    %v5381 = vrot.slane %v5380, 2
    %v5382 = vmax.f32 %v5380, %v5381
    %v5383 = vrot.slane %v5382, 1
    %v5384 = vmax.f32 %v5382, %v5383
    %v5385 = vsel %vm145, %v3769, -inf
    %v5386 = vrot.slane %v5385, 4
    %v5387 = vmax.f32 %v5385, %v5386
    %v5388 = vrot.slane %v5387, 2
    %v5389 = vmax.f32 %v5387, %v5388
    %v5390 = vrot.slane %v5389, 1
    %v5391 = vmax.f32 %v5389, %v5390
    %v5392 = vsel %vm145, %v3770, -inf
    %v5393 = vrot.slane %v5392, 4
    %v5394 = vmax.f32 %v5392, %v5393
    %v5395 = vrot.slane %v5394, 2
    %v5396 = vmax.f32 %v5394, %v5395
    %v5397 = vrot.slane %v5396, 1
    %v5398 = vmax.f32 %v5396, %v5397
    %v5399 = vsel %vm145, %v3771, -inf
    %v5400 = vrot.slane %v5399, 4
    %v5401 = vmax.f32 %v5399, %v5400
    %v5402 = vrot.slane %v5401, 2
    %v5403 = vmax.f32 %v5401, %v5402
    %v5404 = vrot.slane %v5403, 1
    %v5405 = vmax.f32 %v5403, %v5404
    %v5406 = vsel %vm145, %v3544, -inf
    %v5407 = vrot.slane %v5406, 4
    %v5408 = vmax.f32 %v5406, %v5407
    %v5409 = vrot.slane %v5408, 2
    %v5410 = vmax.f32 %v5408, %v5409
    %v5411 = vrot.slane %v5410, 1
    %v5412 = vmax.f32 %v5410, %v5411
    %v5413 = vsel %vm145, %v3772, -inf
    %v5414 = vrot.slane %v5413, 4
    %v5415 = vmax.f32 %v5413, %v5414
    %v5416 = vrot.slane %v5415, 2
    %v5417 = vmax.f32 %v5415, %v5416
    %v5418 = vrot.slane %v5417, 1
    %v5419 = vmax.f32 %v5417, %v5418
    %v5420 = vsel %vm145, %v3773, -inf
    %v5421 = vrot.slane %v5420, 4
    %v5422 = vmax.f32 %v5420, %v5421
    %v5423 = vrot.slane %v5422, 2
    %v5424 = vmax.f32 %v5422, %v5423
    %v5425 = vrot.slane %v5424, 1
    %v5426 = vmax.f32 %v5424, %v5425
    %v5427 = vsel %vm145, %v3774, -inf
    %v5428 = vrot.slane %v5427, 4
    %v5429 = vmax.f32 %v5427, %v5428
    %v5430 = vrot.slane %v5429, 2
    %v5431 = vmax.f32 %v5429, %v5430
    %v5432 = vrot.slane %v5431, 1
    %v5433 = vmax.f32 %v5431, %v5432
    %v5434 = vsel %vm145, %v3545, -inf
    %v5435 = vrot.slane %v5434, 4
    %v5436 = vmax.f32 %v5434, %v5435
    %v5437 = vrot.slane %v5436, 2
    %v5438 = vmax.f32 %v5436, %v5437
    %v5439 = vrot.slane %v5438, 1
    %v5440 = vmax.f32 %v5438, %v5439
    %v5441 = vsel %vm145, %v3775, -inf
    %v5442 = vrot.slane %v5441, 4
    %v5443 = vmax.f32 %v5441, %v5442
    %v5444 = vrot.slane %v5443, 2
    %v5445 = vmax.f32 %v5443, %v5444
    %v5446 = vrot.slane %v5445, 1
    %v5447 = vmax.f32 %v5445, %v5446
    %v5448 = vsel %vm145, %v3776, -inf
    %v5449 = vrot.slane %v5448, 4
    %v5450 = vmax.f32 %v5448, %v5449
    %v5451 = vrot.slane %v5450, 2
    %v5452 = vmax.f32 %v5450, %v5451
    %v5453 = vrot.slane %v5452, 1
    %v5454 = vmax.f32 %v5452, %v5453
    %v5455 = vsel %vm145, %v3777, -inf
    %v5456 = vrot.slane %v5455, 4
    %v5457 = vmax.f32 %v5455, %v5456
    %v5458 = vrot.slane %v5457, 2
    %v5459 = vmax.f32 %v5457, %v5458
    %v5460 = vrot.slane %v5459, 1
    %v5461 = vmax.f32 %v5459, %v5460
    %v5462 = vsel %vm145, %v3546, -inf
    %v5463 = vrot.slane %v5462, 4
    %v5464 = vmax.f32 %v5462, %v5463
    %v5465 = vrot.slane %v5464, 2
    %v5466 = vmax.f32 %v5464, %v5465
    %v5467 = vrot.slane %v5466, 1
    %v5468 = vmax.f32 %v5466, %v5467
    %v5469 = vsel %vm145, %v3778, -inf
    %v5470 = vrot.slane %v5469, 4
    %v5471 = vmax.f32 %v5469, %v5470
    %v5472 = vrot.slane %v5471, 2
    %v5473 = vmax.f32 %v5471, %v5472
    %v5474 = vrot.slane %v5473, 1
    %v5475 = vmax.f32 %v5473, %v5474
    %v5476 = vsel %vm145, %v3779, -inf
    %v5477 = vrot.slane %v5476, 4
    %v5478 = vmax.f32 %v5476, %v5477
    %v5479 = vrot.slane %v5478, 2
    %v5480 = vmax.f32 %v5478, %v5479
    %v5481 = vrot.slane %v5480, 1
    %v5482 = vmax.f32 %v5480, %v5481
    %v5483 = vsel %vm145, %v3780, -inf
    %v5484 = vrot.slane %v5483, 4
    %v5485 = vmax.f32 %v5483, %v5484
    %v5486 = vrot.slane %v5485, 2
    %v5487 = vmax.f32 %v5485, %v5486
    %v5488 = vrot.slane %v5487, 1
    %v5489 = vmax.f32 %v5487, %v5488
    %v5490 = vsel %vm145, %v3547, -inf
    %v5491 = vrot.slane %v5490, 4
    %v5492 = vmax.f32 %v5490, %v5491
    %v5493 = vrot.slane %v5492, 2
    %v5494 = vmax.f32 %v5492, %v5493
    %v5495 = vrot.slane %v5494, 1
    %v5496 = vmax.f32 %v5494, %v5495
    %v5497 = vsel %vm145, %v3781, -inf
    %v5498 = vrot.slane %v5497, 4
    %v5499 = vmax.f32 %v5497, %v5498
    %v5500 = vrot.slane %v5499, 2
    %v5501 = vmax.f32 %v5499, %v5500
    %v5502 = vrot.slane %v5501, 1
    %v5503 = vmax.f32 %v5501, %v5502
    %v5504 = vsel %vm145, %v3782, -inf
    %v5505 = vrot.slane %v5504, 4
    %v5506 = vmax.f32 %v5504, %v5505
    %v5507 = vrot.slane %v5506, 2
    %v5508 = vmax.f32 %v5506, %v5507
    %v5509 = vrot.slane %v5508, 1
    %v5510 = vmax.f32 %v5508, %v5509
    %v5511 = vsel %vm145, %v3783, -inf
    %v5512 = vrot.slane %v5511, 4
    %v5513 = vmax.f32 %v5511, %v5512
    %v5514 = vrot.slane %v5513, 2
    %v5515 = vmax.f32 %v5513, %v5514
    %v5516 = vrot.slane %v5515, 1
    %v5517 = vmax.f32 %v5515, %v5516
    %v5518 = vsel %vm145, %v3548, -inf
    %v5519 = vrot.slane %v5518, 4
    %v5520 = vmax.f32 %v5518, %v5519
    %v5521 = vrot.slane %v5520, 2
    %v5522 = vmax.f32 %v5520, %v5521
    %v5523 = vrot.slane %v5522, 1
    %v5524 = vmax.f32 %v5522, %v5523
    %v5525 = vsel %vm145, %v3784, -inf
    %v5526 = vrot.slane %v5525, 4
    %v5527 = vmax.f32 %v5525, %v5526
    %v5528 = vrot.slane %v5527, 2
    %v5529 = vmax.f32 %v5527, %v5528
    %v5530 = vrot.slane %v5529, 1
    %v5531 = vmax.f32 %v5529, %v5530
    %v5532 = vsel %vm145, %v3785, -inf
    %v5533 = vrot.slane %v5532, 4
    %v5534 = vmax.f32 %v5532, %v5533
    %v5535 = vrot.slane %v5534, 2
    %v5536 = vmax.f32 %v5534, %v5535
    %v5537 = vrot.slane %v5536, 1
    %v5538 = vmax.f32 %v5536, %v5537
    %v5539 = vsel %vm145, %v3786, -inf
    %v5540 = vrot.slane %v5539, 4
    %v5541 = vmax.f32 %v5539, %v5540
    %v5542 = vrot.slane %v5541, 2
    %v5543 = vmax.f32 %v5541, %v5542
    %v5544 = vrot.slane %v5543, 1
    %v5545 = vmax.f32 %v5543, %v5544
    %v5546 = vsel %vm145, %v3549, -inf
    %v5547 = vrot.slane %v5546, 4
    %v5548 = vmax.f32 %v5546, %v5547
    %v5549 = vrot.slane %v5548, 2
    %v5550 = vmax.f32 %v5548, %v5549
    %v5551 = vrot.slane %v5550, 1
    %v5552 = vmax.f32 %v5550, %v5551
    %v5553 = vsel %vm145, %v3787, -inf
    %v5554 = vrot.slane %v5553, 4
    %v5555 = vmax.f32 %v5553, %v5554
    %v5556 = vrot.slane %v5555, 2
    %v5557 = vmax.f32 %v5555, %v5556
    %v5558 = vrot.slane %v5557, 1
    %v5559 = vmax.f32 %v5557, %v5558
    %v5560 = vsel %vm145, %v3788, -inf
    %v5561 = vrot.slane %v5560, 4
    %v5562 = vmax.f32 %v5560, %v5561
    %v5563 = vrot.slane %v5562, 2
    %v5564 = vmax.f32 %v5562, %v5563
    %v5565 = vrot.slane %v5564, 1
    %v5566 = vmax.f32 %v5564, %v5565
    %v5567 = vsel %vm145, %v3789, -inf
    %v5568 = vrot.slane %v5567, 4
    %v5569 = vmax.f32 %v5567, %v5568
    %v5570 = vrot.slane %v5569, 2
    %v5571 = vmax.f32 %v5569, %v5570
    %v5572 = vrot.slane %v5571, 1
    %v5573 = vmax.f32 %v5571, %v5572
    %v5574 = vsel %vm145, %v3550, -inf
    %v5575 = vrot.slane %v5574, 4
    %v5576 = vmax.f32 %v5574, %v5575
    %v5577 = vrot.slane %v5576, 2
    %v5578 = vmax.f32 %v5576, %v5577
    %v5579 = vrot.slane %v5578, 1
    %v5580 = vmax.f32 %v5578, %v5579
    %v5581 = vsel %vm145, %v3790, -inf
    %v5582 = vrot.slane %v5581, 4
    %v5583 = vmax.f32 %v5581, %v5582
    %v5584 = vrot.slane %v5583, 2
    %v5585 = vmax.f32 %v5583, %v5584
    %v5586 = vrot.slane %v5585, 1
    %v5587 = vmax.f32 %v5585, %v5586
    %v5588 = vsel %vm145, %v3791, -inf
    %v5589 = vrot.slane %v5588, 4
    %v5590 = vmax.f32 %v5588, %v5589
    %v5591 = vrot.slane %v5590, 2
    %v5592 = vmax.f32 %v5590, %v5591
    %v5593 = vrot.slane %v5592, 1
    %v5594 = vmax.f32 %v5592, %v5593
    %v5595 = vsel %vm145, %v3792, -inf
    %v5596 = vrot.slane %v5595, 4
    %v5597 = vmax.f32 %v5595, %v5596
    %v5598 = vrot.slane %v5597, 2
    %v5599 = vmax.f32 %v5597, %v5598
    %v5600 = vrot.slane %v5599, 1
    %v5601 = vmax.f32 %v5599, %v5600
    %v5602 = vsel %vm145, %v3551, -inf
    %v5603 = vrot.slane %v5602, 4
    %v5604 = vmax.f32 %v5602, %v5603
    %v5605 = vrot.slane %v5604, 2
    %v5606 = vmax.f32 %v5604, %v5605
    %v5607 = vrot.slane %v5606, 1
    %v5608 = vmax.f32 %v5606, %v5607
    %v5609 = vsel %vm145, %v3793, -inf
    %v5610 = vrot.slane %v5609, 4
    %v5611 = vmax.f32 %v5609, %v5610
    %v5612 = vrot.slane %v5611, 2
    %v5613 = vmax.f32 %v5611, %v5612
    %v5614 = vrot.slane %v5613, 1
    %v5615 = vmax.f32 %v5613, %v5614
    %v5616 = vsel %vm145, %v3794, -inf
    %v5617 = vrot.slane %v5616, 4
    %v5618 = vmax.f32 %v5616, %v5617
    %v5619 = vrot.slane %v5618, 2
    %v5620 = vmax.f32 %v5618, %v5619
    %v5621 = vrot.slane %v5620, 1
    %v5622 = vmax.f32 %v5620, %v5621
    %v5623 = vsel %vm145, %v3795, -inf
    %v5624 = vrot.slane %v5623, 4
    %v5625 = vmax.f32 %v5623, %v5624
    %v5626 = vrot.slane %v5625, 2
    %v5627 = vmax.f32 %v5625, %v5626
    %v5628 = vrot.slane %v5627, 1
    %v5629 = vmax.f32 %v5627, %v5628
    %v5630 = vsel %vm145, %v3552, -inf
    %v5631 = vrot.slane %v5630, 4
    %v5632 = vmax.f32 %v5630, %v5631
    %v5633 = vrot.slane %v5632, 2
    %v5634 = vmax.f32 %v5632, %v5633
    %v5635 = vrot.slane %v5634, 1
    %v5636 = vmax.f32 %v5634, %v5635
    %v5637 = vsel %vm145, %v3796, -inf
    %v5638 = vrot.slane %v5637, 4
    %v5639 = vmax.f32 %v5637, %v5638
    %v5640 = vrot.slane %v5639, 2
    %v5641 = vmax.f32 %v5639, %v5640
    %v5642 = vrot.slane %v5641, 1
    %v5643 = vmax.f32 %v5641, %v5642
    %v5644 = vsel %vm145, %v3797, -inf
    %v5645 = vrot.slane %v5644, 4
    %v5646 = vmax.f32 %v5644, %v5645
    %v5647 = vrot.slane %v5646, 2
    %v5648 = vmax.f32 %v5646, %v5647
    %v5649 = vrot.slane %v5648, 1
    %v5650 = vmax.f32 %v5648, %v5649
    %v5651 = vsel %vm145, %v3798, -inf
    %v5652 = vrot.slane %v5651, 4
    %v5653 = vmax.f32 %v5651, %v5652
    %v5654 = vrot.slane %v5653, 2
    %v5655 = vmax.f32 %v5653, %v5654
    %v5656 = vrot.slane %v5655, 1
    %v5657 = vmax.f32 %v5655, %v5656
    %v5658 = vsel %vm145, %v3553, -inf
    %v5659 = vrot.slane %v5658, 4
    %v5660 = vmax.f32 %v5658, %v5659
    %v5661 = vrot.slane %v5660, 2
    %v5662 = vmax.f32 %v5660, %v5661
    %v5663 = vrot.slane %v5662, 1
    %v5664 = vmax.f32 %v5662, %v5663
    %v5665 = vsel %vm145, %v3799, -inf
    %v5666 = vrot.slane %v5665, 4
    %v5667 = vmax.f32 %v5665, %v5666
    %v5668 = vrot.slane %v5667, 2
    %v5669 = vmax.f32 %v5667, %v5668
    %v5670 = vrot.slane %v5669, 1
    %v5671 = vmax.f32 %v5669, %v5670
    %v5672 = vsel %vm145, %v3800, -inf
    %v5673 = vrot.slane %v5672, 4
    %v5674 = vmax.f32 %v5672, %v5673
    %v5675 = vrot.slane %v5674, 2
    %v5676 = vmax.f32 %v5674, %v5675
    %v5677 = vrot.slane %v5676, 1
    %v5678 = vmax.f32 %v5676, %v5677
    %v5679 = vsel %vm145, %v3801, -inf
    %v5680 = vrot.slane %v5679, 4
    %v5681 = vmax.f32 %v5679, %v5680
    %v5682 = vrot.slane %v5681, 2
    %v5683 = vmax.f32 %v5681, %v5682
    %v5684 = vrot.slane %v5683, 1
    %v5685 = vmax.f32 %v5683, %v5684
    %v5686 = vsel %vm145, %v3554, -inf
    %v5687 = vrot.slane %v5686, 4
    %v5688 = vmax.f32 %v5686, %v5687
    %v5689 = vrot.slane %v5688, 2
    %v5690 = vmax.f32 %v5688, %v5689
    %v5691 = vrot.slane %v5690, 1
    %v5692 = vmax.f32 %v5690, %v5691
    %v5693 = vsel %vm145, %v3802, -inf
    %v5694 = vrot.slane %v5693, 4
    %v5695 = vmax.f32 %v5693, %v5694
    %v5696 = vrot.slane %v5695, 2
    %v5697 = vmax.f32 %v5695, %v5696
    %v5698 = vrot.slane %v5697, 1
    %v5699 = vmax.f32 %v5697, %v5698
    %v5700 = vsel %vm145, %v3803, -inf
    %v5701 = vrot.slane %v5700, 4
    %v5702 = vmax.f32 %v5700, %v5701
    %v5703 = vrot.slane %v5702, 2
    %v5704 = vmax.f32 %v5702, %v5703
    %v5705 = vrot.slane %v5704, 1
    %v5706 = vmax.f32 %v5704, %v5705
    %v5707 = vsel %vm145, %v3804, -inf
    %v5708 = vrot.slane %v5707, 4
    %v5709 = vmax.f32 %v5707, %v5708
    %v5710 = vrot.slane %v5709, 2
    %v5711 = vmax.f32 %v5709, %v5710
    %v5712 = vrot.slane %v5711, 1
    %v5713 = vmax.f32 %v5711, %v5712
    %v5714 = vsel %vm145, %v3555, -inf
    %v5715 = vrot.slane %v5714, 4
    %v5716 = vmax.f32 %v5714, %v5715
    %v5717 = vrot.slane %v5716, 2
    %v5718 = vmax.f32 %v5716, %v5717
    %v5719 = vrot.slane %v5718, 1
    %v5720 = vmax.f32 %v5718, %v5719
    %v5721 = vsel %vm145, %v3805, -inf
    %v5722 = vrot.slane %v5721, 4
    %v5723 = vmax.f32 %v5721, %v5722
    %v5724 = vrot.slane %v5723, 2
    %v5725 = vmax.f32 %v5723, %v5724
    %v5726 = vrot.slane %v5725, 1
    %v5727 = vmax.f32 %v5725, %v5726
    %v5728 = vsel %vm145, %v3806, -inf
    %v5729 = vrot.slane %v5728, 4
    %v5730 = vmax.f32 %v5728, %v5729
    %v5731 = vrot.slane %v5730, 2
    %v5732 = vmax.f32 %v5730, %v5731
    %v5733 = vrot.slane %v5732, 1
    %v5734 = vmax.f32 %v5732, %v5733
    %v5735 = vsel %vm145, %v3807, -inf
    %v5736 = vrot.slane %v5735, 4
    %v5737 = vmax.f32 %v5735, %v5736
    %v5738 = vrot.slane %v5737, 2
    %v5739 = vmax.f32 %v5737, %v5738
    %v5740 = vrot.slane %v5739, 1
    %v5741 = vmax.f32 %v5739, %v5740
    %v5742 = vsel %vm145, %v3556, -inf
    %v5743 = vrot.slane %v5742, 4
    %v5744 = vmax.f32 %v5742, %v5743
    %v5745 = vrot.slane %v5744, 2
    %v5746 = vmax.f32 %v5744, %v5745
    %v5747 = vrot.slane %v5746, 1
    %v5748 = vmax.f32 %v5746, %v5747
    %v5749 = vsel %vm145, %v3808, -inf
    %v5750 = vrot.slane %v5749, 4
    %v5751 = vmax.f32 %v5749, %v5750
    %v5752 = vrot.slane %v5751, 2
    %v5753 = vmax.f32 %v5751, %v5752
    %v5754 = vrot.slane %v5753, 1
    %v5755 = vmax.f32 %v5753, %v5754
    %v5756 = vsel %vm145, %v3809, -inf
    %v5757 = vrot.slane %v5756, 4
    %v5758 = vmax.f32 %v5756, %v5757
    %v5759 = vrot.slane %v5758, 2
    %v5760 = vmax.f32 %v5758, %v5759
    %v5761 = vrot.slane %v5760, 1
    %v5762 = vmax.f32 %v5760, %v5761
    %v5763 = vsel %vm145, %v3810, -inf
    %v5764 = vrot.slane %v5763, 4
    %v5765 = vmax.f32 %v5763, %v5764
    %v5766 = vrot.slane %v5765, 2
    %v5767 = vmax.f32 %v5765, %v5766
    %v5768 = vrot.slane %v5767, 1
    %v5769 = vmax.f32 %v5767, %v5768
    %v5770 = vsel %vm145, %v3557, -inf
    %v5771 = vrot.slane %v5770, 4
    %v5772 = vmax.f32 %v5770, %v5771
    %v5773 = vrot.slane %v5772, 2
    %v5774 = vmax.f32 %v5772, %v5773
    %v5775 = vrot.slane %v5774, 1
    %v5776 = vmax.f32 %v5774, %v5775
    %v5777 = vsel %vm145, %v3811, -inf
    %v5778 = vrot.slane %v5777, 4
    %v5779 = vmax.f32 %v5777, %v5778
    %v5780 = vrot.slane %v5779, 2
    %v5781 = vmax.f32 %v5779, %v5780
    %v5782 = vrot.slane %v5781, 1
    %v5783 = vmax.f32 %v5781, %v5782
    %v5784 = vsel %vm145, %v3812, -inf
    %v5785 = vrot.slane %v5784, 4
    %v5786 = vmax.f32 %v5784, %v5785
    %v5787 = vrot.slane %v5786, 2
    %v5788 = vmax.f32 %v5786, %v5787
    %v5789 = vrot.slane %v5788, 1
    %v5790 = vmax.f32 %v5788, %v5789
    %v5791 = vsel %vm145, %v3813, -inf
    %v5792 = vrot.slane %v5791, 4
    %v5793 = vmax.f32 %v5791, %v5792
    %v5794 = vrot.slane %v5793, 2
    %v5795 = vmax.f32 %v5793, %v5794
    %v5796 = vrot.slane %v5795, 1
    %v5797 = vmax.f32 %v5795, %v5796
    %v5798 = vsel %vm143, %v4012, -inf
    %v5799 = vsel %vm143, %v4068, -inf
    %v5800 = vmax.f32 %v5798, %v5799
    %v5801 = vsel %vm143, %v4019, -inf
    %v5802 = vsel %vm143, %v4075, -inf
    %v5803 = vmax.f32 %v5801, %v5802
    %v5804 = vsel %vm143, %v4026, -inf
    %v5805 = vsel %vm143, %v4082, -inf
    %v5806 = vmax.f32 %v5804, %v5805
    %v5807 = vsel %vm143, %v4033, -inf
    %v5808 = vsel %vm143, %v4089, -inf
    %v5809 = vmax.f32 %v5807, %v5808
    %v5810 = vsel %vm143, %v4040, -inf
    %v5811 = vsel %vm143, %v4096, -inf
    %v5812 = vmax.f32 %v5810, %v5811
    %v5813 = vsel %vm143, %v4047, -inf
    %v5814 = vsel %vm143, %v4103, -inf
    %v5815 = vmax.f32 %v5813, %v5814
    %v5816 = vsel %vm143, %v4054, -inf
    %v5817 = vsel %vm143, %v4110, -inf
    %v5818 = vmax.f32 %v5816, %v5817
    %v5819 = vsel %vm143, %v4061, -inf
    %v5820 = vsel %vm143, %v4117, -inf
    %v5821 = vmax.f32 %v5819, %v5820
    %v5822 = vsel %vm143, %v4124, -inf
    %v5823 = vsel %vm143, %v4180, -inf
    %v5824 = vmax.f32 %v5822, %v5823
    %v5825 = vsel %vm143, %v4131, -inf
    %v5826 = vsel %vm143, %v4187, -inf
    %v5827 = vmax.f32 %v5825, %v5826
    %v5828 = vsel %vm143, %v4138, -inf
    %v5829 = vsel %vm143, %v4194, -inf
    %v5830 = vmax.f32 %v5828, %v5829
    %v5831 = vsel %vm143, %v4145, -inf
    %v5832 = vsel %vm143, %v4201, -inf
    %v5833 = vmax.f32 %v5831, %v5832
    %v5834 = vsel %vm143, %v4152, -inf
    %v5835 = vsel %vm143, %v4208, -inf
    %v5836 = vmax.f32 %v5834, %v5835
    %v5837 = vsel %vm143, %v4159, -inf
    %v5838 = vsel %vm143, %v4215, -inf
    %v5839 = vmax.f32 %v5837, %v5838
    %v5840 = vsel %vm143, %v4166, -inf
    %v5841 = vsel %vm143, %v4222, -inf
    %v5842 = vmax.f32 %v5840, %v5841
    %v5843 = vsel %vm143, %v4173, -inf
    %v5844 = vsel %vm143, %v4229, -inf
    %v5845 = vmax.f32 %v5843, %v5844
    %v5846 = vsel %vm143, %v4236, -inf
    %v5847 = vsel %vm143, %v4292, -inf
    %v5848 = vmax.f32 %v5846, %v5847
    %v5849 = vsel %vm143, %v4243, -inf
    %v5850 = vsel %vm143, %v4299, -inf
    %v5851 = vmax.f32 %v5849, %v5850
    %v5852 = vsel %vm143, %v4250, -inf
    %v5853 = vsel %vm143, %v4306, -inf
    %v5854 = vmax.f32 %v5852, %v5853
    %v5855 = vsel %vm143, %v4257, -inf
    %v5856 = vsel %vm143, %v4313, -inf
    %v5857 = vmax.f32 %v5855, %v5856
    %v5858 = vsel %vm143, %v4264, -inf
    %v5859 = vsel %vm143, %v4320, -inf
    %v5860 = vmax.f32 %v5858, %v5859
    %v5861 = vsel %vm143, %v4271, -inf
    %v5862 = vsel %vm143, %v4327, -inf
    %v5863 = vmax.f32 %v5861, %v5862
    %v5864 = vsel %vm143, %v4278, -inf
    %v5865 = vsel %vm143, %v4334, -inf
    %v5866 = vmax.f32 %v5864, %v5865
    %v5867 = vsel %vm143, %v4285, -inf
    %v5868 = vsel %vm143, %v4341, -inf
    %v5869 = vmax.f32 %v5867, %v5868
    %v5870 = vsel %vm143, %v4348, -inf
    %v5871 = vsel %vm143, %v4404, -inf
    %v5872 = vmax.f32 %v5870, %v5871
    %v5873 = vsel %vm143, %v4355, -inf
    %v5874 = vsel %vm143, %v4411, -inf
    %v5875 = vmax.f32 %v5873, %v5874
    %v5876 = vsel %vm143, %v4362, -inf
    %v5877 = vsel %vm143, %v4418, -inf
    %v5878 = vmax.f32 %v5876, %v5877
    %v5879 = vsel %vm143, %v4369, -inf
    %v5880 = vsel %vm143, %v4425, -inf
    %v5881 = vmax.f32 %v5879, %v5880
    %v5882 = vsel %vm143, %v4376, -inf
    %v5883 = vsel %vm143, %v4432, -inf
    %v5884 = vmax.f32 %v5882, %v5883
    %v5885 = vsel %vm143, %v4383, -inf
    %v5886 = vsel %vm143, %v4439, -inf
    %v5887 = vmax.f32 %v5885, %v5886
    %v5888 = vsel %vm143, %v4390, -inf
    %v5889 = vsel %vm143, %v4446, -inf
    %v5890 = vmax.f32 %v5888, %v5889
    %v5891 = vsel %vm143, %v4397, -inf
    %v5892 = vsel %vm143, %v4453, -inf
    %v5893 = vmax.f32 %v5891, %v5892
    %v5894 = vsel %vm143, %v4460, -inf
    %v5895 = vsel %vm143, %v4516, -inf
    %v5896 = vmax.f32 %v5894, %v5895
    %v5897 = vsel %vm143, %v4467, -inf
    %v5898 = vsel %vm143, %v4523, -inf
    %v5899 = vmax.f32 %v5897, %v5898
    %v5900 = vsel %vm143, %v4474, -inf
    %v5901 = vsel %vm143, %v4530, -inf
    %v5902 = vmax.f32 %v5900, %v5901
    %v5903 = vsel %vm143, %v4481, -inf
    %v5904 = vsel %vm143, %v4537, -inf
    %v5905 = vmax.f32 %v5903, %v5904
    %v5906 = vsel %vm143, %v4488, -inf
    %v5907 = vsel %vm143, %v4544, -inf
    %v5908 = vmax.f32 %v5906, %v5907
    %v5909 = vsel %vm143, %v4495, -inf
    %v5910 = vsel %vm143, %v4551, -inf
    %v5911 = vmax.f32 %v5909, %v5910
    %v5912 = vsel %vm143, %v4502, -inf
    %v5913 = vsel %vm143, %v4558, -inf
    %v5914 = vmax.f32 %v5912, %v5913
    %v5915 = vsel %vm143, %v4509, -inf
    %v5916 = vsel %vm143, %v4565, -inf
    %v5917 = vmax.f32 %v5915, %v5916
    %v5918 = vsel %vm143, %v4572, -inf
    %v5919 = vsel %vm143, %v4628, -inf
    %v5920 = vmax.f32 %v5918, %v5919
    %v5921 = vsel %vm143, %v4579, -inf
    %v5922 = vsel %vm143, %v4635, -inf
    %v5923 = vmax.f32 %v5921, %v5922
    %v5924 = vsel %vm143, %v4586, -inf
    %v5925 = vsel %vm143, %v4642, -inf
    %v5926 = vmax.f32 %v5924, %v5925
    %v5927 = vsel %vm143, %v4593, -inf
    %v5928 = vsel %vm143, %v4649, -inf
    %v5929 = vmax.f32 %v5927, %v5928
    %v5930 = vsel %vm143, %v4600, -inf
    %v5931 = vsel %vm143, %v4656, -inf
    %v5932 = vmax.f32 %v5930, %v5931
    %v5933 = vsel %vm143, %v4607, -inf
    %v5934 = vsel %vm143, %v4663, -inf
    %v5935 = vmax.f32 %v5933, %v5934
    %v5936 = vsel %vm143, %v4614, -inf
    %v5937 = vsel %vm143, %v4670, -inf
    %v5938 = vmax.f32 %v5936, %v5937
    %v5939 = vsel %vm143, %v4621, -inf
    %v5940 = vsel %vm143, %v4677, -inf
    %v5941 = vmax.f32 %v5939, %v5940
    %v5942 = vsel %vm143, %v4684, -inf
    %v5943 = vsel %vm143, %v4740, -inf
    %v5944 = vmax.f32 %v5942, %v5943
    %v5945 = vsel %vm143, %v4691, -inf
    %v5946 = vsel %vm143, %v4747, -inf
    %v5947 = vmax.f32 %v5945, %v5946
    %v5948 = vsel %vm143, %v4698, -inf
    %v5949 = vsel %vm143, %v4754, -inf
    %v5950 = vmax.f32 %v5948, %v5949
    %v5951 = vsel %vm143, %v4705, -inf
    %v5952 = vsel %vm143, %v4761, -inf
    %v5953 = vmax.f32 %v5951, %v5952
    %v5954 = vsel %vm143, %v4712, -inf
    %v5955 = vsel %vm143, %v4768, -inf
    %v5956 = vmax.f32 %v5954, %v5955
    %v5957 = vsel %vm143, %v4719, -inf
    %v5958 = vsel %vm143, %v4775, -inf
    %v5959 = vmax.f32 %v5957, %v5958
    %v5960 = vsel %vm143, %v4726, -inf
    %v5961 = vsel %vm143, %v4782, -inf
    %v5962 = vmax.f32 %v5960, %v5961
    %v5963 = vsel %vm143, %v4733, -inf
    %v5964 = vsel %vm143, %v4789, -inf
    %v5965 = vmax.f32 %v5963, %v5964
    %v5966 = vsel %vm143, %v4796, -inf
    %v5967 = vsel %vm143, %v4852, -inf
    %v5968 = vmax.f32 %v5966, %v5967
    %v5969 = vsel %vm143, %v4803, -inf
    %v5970 = vsel %vm143, %v4859, -inf
    %v5971 = vmax.f32 %v5969, %v5970
    %v5972 = vsel %vm143, %v4810, -inf
    %v5973 = vsel %vm143, %v4866, -inf
    %v5974 = vmax.f32 %v5972, %v5973
    %v5975 = vsel %vm143, %v4817, -inf
    %v5976 = vsel %vm143, %v4873, -inf
    %v5977 = vmax.f32 %v5975, %v5976
    %v5978 = vsel %vm143, %v4824, -inf
    %v5979 = vsel %vm143, %v4880, -inf
    %v5980 = vmax.f32 %v5978, %v5979
    %v5981 = vsel %vm143, %v4831, -inf
    %v5982 = vsel %vm143, %v4887, -inf
    %v5983 = vmax.f32 %v5981, %v5982
    %v5984 = vsel %vm143, %v4838, -inf
    %v5985 = vsel %vm143, %v4894, -inf
    %v5986 = vmax.f32 %v5984, %v5985
    %v5987 = vsel %vm143, %v4845, -inf
    %v5988 = vsel %vm143, %v4901, -inf
    %v5989 = vmax.f32 %v5987, %v5988
    %v5990 = vsel %vm143, %v4908, -inf
    %v5991 = vsel %vm143, %v4964, -inf
    %v5992 = vmax.f32 %v5990, %v5991
    %v5993 = vsel %vm143, %v4915, -inf
    %v5994 = vsel %vm143, %v4971, -inf
    %v5995 = vmax.f32 %v5993, %v5994
    %v5996 = vsel %vm143, %v4922, -inf
    %v5997 = vsel %vm143, %v4978, -inf
    %v5998 = vmax.f32 %v5996, %v5997
    %v5999 = vsel %vm143, %v4929, -inf
    %v6000 = vsel %vm143, %v4985, -inf
    %v6001 = vmax.f32 %v5999, %v6000
    %v6002 = vsel %vm143, %v4936, -inf
    %v6003 = vsel %vm143, %v4992, -inf
    %v6004 = vmax.f32 %v6002, %v6003
    %v6005 = vsel %vm143, %v4943, -inf
    %v6006 = vsel %vm143, %v4999, -inf
    %v6007 = vmax.f32 %v6005, %v6006
    %v6008 = vsel %vm143, %v4950, -inf
    %v6009 = vsel %vm143, %v5006, -inf
    %v6010 = vmax.f32 %v6008, %v6009
    %v6011 = vsel %vm143, %v4957, -inf
    %v6012 = vsel %vm143, %v5013, -inf
    %v6013 = vmax.f32 %v6011, %v6012
    %v6014 = vsel %vm143, %v5020, -inf
    %v6015 = vsel %vm143, %v5076, -inf
    %v6016 = vmax.f32 %v6014, %v6015
    %v6017 = vsel %vm143, %v5027, -inf
    %v6018 = vsel %vm143, %v5083, -inf
    %v6019 = vmax.f32 %v6017, %v6018
    %v6020 = vsel %vm143, %v5034, -inf
    %v6021 = vsel %vm143, %v5090, -inf
    %v6022 = vmax.f32 %v6020, %v6021
    %v6023 = vsel %vm143, %v5041, -inf
    %v6024 = vsel %vm143, %v5097, -inf
    %v6025 = vmax.f32 %v6023, %v6024
    %v6026 = vsel %vm143, %v5048, -inf
    %v6027 = vsel %vm143, %v5104, -inf
    %v6028 = vmax.f32 %v6026, %v6027
    %v6029 = vsel %vm143, %v5055, -inf
    %v6030 = vsel %vm143, %v5111, -inf
    %v6031 = vmax.f32 %v6029, %v6030
    %v6032 = vsel %vm143, %v5062, -inf
    %v6033 = vsel %vm143, %v5118, -inf
    %v6034 = vmax.f32 %v6032, %v6033
    %v6035 = vsel %vm143, %v5069, -inf
    %v6036 = vsel %vm143, %v5125, -inf
    %v6037 = vmax.f32 %v6035, %v6036
    %v6038 = vsel %vm143, %v5132, -inf
    %v6039 = vsel %vm143, %v5188, -inf
    %v6040 = vmax.f32 %v6038, %v6039
    %v6041 = vsel %vm143, %v5139, -inf
    %v6042 = vsel %vm143, %v5195, -inf
    %v6043 = vmax.f32 %v6041, %v6042
    %v6044 = vsel %vm143, %v5146, -inf
    %v6045 = vsel %vm143, %v5202, -inf
    %v6046 = vmax.f32 %v6044, %v6045
    %v6047 = vsel %vm143, %v5153, -inf
    %v6048 = vsel %vm143, %v5209, -inf
    %v6049 = vmax.f32 %v6047, %v6048
    %v6050 = vsel %vm143, %v5160, -inf
    %v6051 = vsel %vm143, %v5216, -inf
    %v6052 = vmax.f32 %v6050, %v6051
    %v6053 = vsel %vm143, %v5167, -inf
    %v6054 = vsel %vm143, %v5223, -inf
    %v6055 = vmax.f32 %v6053, %v6054
    %v6056 = vsel %vm143, %v5174, -inf
    %v6057 = vsel %vm143, %v5230, -inf
    %v6058 = vmax.f32 %v6056, %v6057
    %v6059 = vsel %vm143, %v5181, -inf
    %v6060 = vsel %vm143, %v5237, -inf
    %v6061 = vmax.f32 %v6059, %v6060
    %v6062 = vsel %vm143, %v5244, -inf
    %v6063 = vsel %vm143, %v5300, -inf
    %v6064 = vmax.f32 %v6062, %v6063
    %v6065 = vsel %vm143, %v5251, -inf
    %v6066 = vsel %vm143, %v5307, -inf
    %v6067 = vmax.f32 %v6065, %v6066
    %v6068 = vsel %vm143, %v5258, -inf
    %v6069 = vsel %vm143, %v5314, -inf
    %v6070 = vmax.f32 %v6068, %v6069
    %v6071 = vsel %vm143, %v5265, -inf
    %v6072 = vsel %vm143, %v5321, -inf
    %v6073 = vmax.f32 %v6071, %v6072
    %v6074 = vsel %vm143, %v5272, -inf
    %v6075 = vsel %vm143, %v5328, -inf
    %v6076 = vmax.f32 %v6074, %v6075
    %v6077 = vsel %vm143, %v5279, -inf
    %v6078 = vsel %vm143, %v5335, -inf
    %v6079 = vmax.f32 %v6077, %v6078
    %v6080 = vsel %vm143, %v5286, -inf
    %v6081 = vsel %vm143, %v5342, -inf
    %v6082 = vmax.f32 %v6080, %v6081
    %v6083 = vsel %vm143, %v5293, -inf
    %v6084 = vsel %vm143, %v5349, -inf
    %v6085 = vmax.f32 %v6083, %v6084
    %v6086 = vsel %vm143, %v5356, -inf
    %v6087 = vsel %vm143, %v5412, -inf
    %v6088 = vmax.f32 %v6086, %v6087
    %v6089 = vsel %vm143, %v5363, -inf
    %v6090 = vsel %vm143, %v5419, -inf
    %v6091 = vmax.f32 %v6089, %v6090
    %v6092 = vsel %vm143, %v5370, -inf
    %v6093 = vsel %vm143, %v5426, -inf
    %v6094 = vmax.f32 %v6092, %v6093
    %v6095 = vsel %vm143, %v5377, -inf
    %v6096 = vsel %vm143, %v5433, -inf
    %v6097 = vmax.f32 %v6095, %v6096
    %v6098 = vsel %vm143, %v5384, -inf
    %v6099 = vsel %vm143, %v5440, -inf
    %v6100 = vmax.f32 %v6098, %v6099
    %v6101 = vsel %vm143, %v5391, -inf
    %v6102 = vsel %vm143, %v5447, -inf
    %v6103 = vmax.f32 %v6101, %v6102
    %v6104 = vsel %vm143, %v5398, -inf
    %v6105 = vsel %vm143, %v5454, -inf
    %v6106 = vmax.f32 %v6104, %v6105
    %v6107 = vsel %vm143, %v5405, -inf
    %v6108 = vsel %vm143, %v5461, -inf
    %v6109 = vmax.f32 %v6107, %v6108
    %v6110 = vsel %vm143, %v5468, -inf
    %v6111 = vsel %vm143, %v5524, -inf
    %v6112 = vmax.f32 %v6110, %v6111
    %v6113 = vsel %vm143, %v5475, -inf
    %v6114 = vsel %vm143, %v5531, -inf
    %v6115 = vmax.f32 %v6113, %v6114
    %v6116 = vsel %vm143, %v5482, -inf
    %v6117 = vsel %vm143, %v5538, -inf
    %v6118 = vmax.f32 %v6116, %v6117
    %v6119 = vsel %vm143, %v5489, -inf
    %v6120 = vsel %vm143, %v5545, -inf
    %v6121 = vmax.f32 %v6119, %v6120
    %v6122 = vsel %vm143, %v5496, -inf
    %v6123 = vsel %vm143, %v5552, -inf
    %v6124 = vmax.f32 %v6122, %v6123
    %v6125 = vsel %vm143, %v5503, -inf
    %v6126 = vsel %vm143, %v5559, -inf
    %v6127 = vmax.f32 %v6125, %v6126
    %v6128 = vsel %vm143, %v5510, -inf
    %v6129 = vsel %vm143, %v5566, -inf
    %v6130 = vmax.f32 %v6128, %v6129
    %v6131 = vsel %vm143, %v5517, -inf
    %v6132 = vsel %vm143, %v5573, -inf
    %v6133 = vmax.f32 %v6131, %v6132
    %v6134 = vsel %vm143, %v5580, -inf
    %v6135 = vsel %vm143, %v5636, -inf
    %v6136 = vmax.f32 %v6134, %v6135
    %v6137 = vsel %vm143, %v5587, -inf
    %v6138 = vsel %vm143, %v5643, -inf
    %v6139 = vmax.f32 %v6137, %v6138
    %v6140 = vsel %vm143, %v5594, -inf
    %v6141 = vsel %vm143, %v5650, -inf
    %v6142 = vmax.f32 %v6140, %v6141
    %v6143 = vsel %vm143, %v5601, -inf
    %v6144 = vsel %vm143, %v5657, -inf
    %v6145 = vmax.f32 %v6143, %v6144
    %v6146 = vsel %vm143, %v5608, -inf
    %v6147 = vsel %vm143, %v5664, -inf
    %v6148 = vmax.f32 %v6146, %v6147
    %v6149 = vsel %vm143, %v5615, -inf
    %v6150 = vsel %vm143, %v5671, -inf
    %v6151 = vmax.f32 %v6149, %v6150
    %v6152 = vsel %vm143, %v5622, -inf
    %v6153 = vsel %vm143, %v5678, -inf
    %v6154 = vmax.f32 %v6152, %v6153
    %v6155 = vsel %vm143, %v5629, -inf
    %v6156 = vsel %vm143, %v5685, -inf
    %v6157 = vmax.f32 %v6155, %v6156
    %v6158 = vsel %vm143, %v5692, -inf
    %v6159 = vsel %vm143, %v5748, -inf
    %v6160 = vmax.f32 %v6158, %v6159
    %v6161 = vsel %vm143, %v5699, -inf
    %v6162 = vsel %vm143, %v5755, -inf
    %v6163 = vmax.f32 %v6161, %v6162
    %v6164 = vsel %vm143, %v5706, -inf
    %v6165 = vsel %vm143, %v5762, -inf
    %v6166 = vmax.f32 %v6164, %v6165
    %v6167 = vsel %vm143, %v5713, -inf
    %v6168 = vsel %vm143, %v5769, -inf
    %v6169 = vmax.f32 %v6167, %v6168
    %v6170 = vsel %vm143, %v5720, -inf
    %v6171 = vsel %vm143, %v5776, -inf
    %v6172 = vmax.f32 %v6170, %v6171
    %v6173 = vsel %vm143, %v5727, -inf
    %v6174 = vsel %vm143, %v5783, -inf
    %v6175 = vmax.f32 %v6173, %v6174
    %v6176 = vsel %vm143, %v5734, -inf
    %v6177 = vsel %vm143, %v5790, -inf
    %v6178 = vmax.f32 %v6176, %v6177
    %v6179 = vsel %vm143, %v5741, -inf
    %v6180 = vsel %vm143, %v5797, -inf
    %v6181 = vmax.f32 %v6179, %v6180
    %vm6246 = vcmask 1041409
    %v6247 = vsel %vm6246, %v5803, %v5800
    %vm6248 = vcmask 1042434
    %v6249 = vsel %vm6248, %v5806, %v6247
    %vm6250 = vcmask 1043459
    %v6251 = vsel %vm6250, %v5809, %v6249
    %vm6252 = vcmask 1044484
    %v6253 = vsel %vm6252, %v5812, %v6251
    %vm6254 = vcmask 1045509
    %v6255 = vsel %vm6254, %v5815, %v6253
    %vm6256 = vcmask 1046534
    %v6257 = vsel %vm6256, %v5818, %v6255
    %vm6258 = vcmask 1047559
    %v6259 = vsel %vm6258, %v5821, %v6257
    %v6260 = vsel %vm6246, %v5827, %v5824
    %v6261 = vsel %vm6248, %v5830, %v6260
    %v6262 = vsel %vm6250, %v5833, %v6261
    %v6263 = vsel %vm6252, %v5836, %v6262
    %v6264 = vsel %vm6254, %v5839, %v6263
    %v6265 = vsel %vm6256, %v5842, %v6264
    %v6266 = vsel %vm6258, %v5845, %v6265
    %v6267 = vsel %vm6246, %v5851, %v5848
    %v6268 = vsel %vm6248, %v5854, %v6267
    %v6269 = vsel %vm6250, %v5857, %v6268
    %v6270 = vsel %vm6252, %v5860, %v6269
    %v6271 = vsel %vm6254, %v5863, %v6270
    %v6272 = vsel %vm6256, %v5866, %v6271
    %v6273 = vsel %vm6258, %v5869, %v6272
    %v6274 = vsel %vm6246, %v5875, %v5872
    %v6275 = vsel %vm6248, %v5878, %v6274
    %v6276 = vsel %vm6250, %v5881, %v6275
    %v6277 = vsel %vm6252, %v5884, %v6276
    %v6278 = vsel %vm6254, %v5887, %v6277
    %v6279 = vsel %vm6256, %v5890, %v6278
    %v6280 = vsel %vm6258, %v5893, %v6279
    %v6281 = vsel %vm6246, %v5899, %v5896
    %v6282 = vsel %vm6248, %v5902, %v6281
    %v6283 = vsel %vm6250, %v5905, %v6282
    %v6284 = vsel %vm6252, %v5908, %v6283
    %v6285 = vsel %vm6254, %v5911, %v6284
    %v6286 = vsel %vm6256, %v5914, %v6285
    %v6287 = vsel %vm6258, %v5917, %v6286
    %v6288 = vsel %vm6246, %v5923, %v5920
    %v6289 = vsel %vm6248, %v5926, %v6288
    %v6290 = vsel %vm6250, %v5929, %v6289
    %v6291 = vsel %vm6252, %v5932, %v6290
    %v6292 = vsel %vm6254, %v5935, %v6291
    %v6293 = vsel %vm6256, %v5938, %v6292
    %v6294 = vsel %vm6258, %v5941, %v6293
    %v6295 = vsel %vm6246, %v5947, %v5944
    %v6296 = vsel %vm6248, %v5950, %v6295
    %v6297 = vsel %vm6250, %v5953, %v6296
    %v6298 = vsel %vm6252, %v5956, %v6297
    %v6299 = vsel %vm6254, %v5959, %v6298
    %v6300 = vsel %vm6256, %v5962, %v6299
    %v6301 = vsel %vm6258, %v5965, %v6300
    %v6302 = vsel %vm6246, %v5971, %v5968
    %v6303 = vsel %vm6248, %v5974, %v6302
    %v6304 = vsel %vm6250, %v5977, %v6303
    %v6305 = vsel %vm6252, %v5980, %v6304
    %v6306 = vsel %vm6254, %v5983, %v6305
    %v6307 = vsel %vm6256, %v5986, %v6306
    %v6308 = vsel %vm6258, %v5989, %v6307
    %s6317 = scalar_lea.vmem [#allocation4], 16
    %6318 = vst.msk [vmem:[%s6317 + $0x1] sm:$0xff] %vm143, %v6259
    %6319 = vst.msk [vmem:[%s6317 + $0x11] sm:$0xff] %vm143, %v6266
    %6320 = vst.msk [vmem:[%s6317 + $0x21] sm:$0xff] %vm143, %v6273
    %6321 = vst.msk [vmem:[%s6317 + $0x31] sm:$0xff] %vm143, %v6280
    %6322 = vst.msk [vmem:[%s6317 + $0x41] sm:$0xff] %vm143, %v6287
    %6323 = vst.msk [vmem:[%s6317 + $0x51] sm:$0xff] %vm143, %v6294
    %6324 = vst.msk [vmem:[%s6317 + $0x61] sm:$0xff] %vm143, %v6301
    %6325 = vst.msk [vmem:[%s6317 + $0x71] sm:$0xff] %vm143, %v6308
    %v6390 = vsel %vm6246, %v5995, %v5992
    %v6391 = vsel %vm6248, %v5998, %v6390
    %v6392 = vsel %vm6250, %v6001, %v6391
    %v6393 = vsel %vm6252, %v6004, %v6392
    %v6394 = vsel %vm6254, %v6007, %v6393
    %v6395 = vsel %vm6256, %v6010, %v6394
    %v6396 = vsel %vm6258, %v6013, %v6395
    %v6397 = vsel %vm6246, %v6019, %v6016
    %v6398 = vsel %vm6248, %v6022, %v6397
    %v6399 = vsel %vm6250, %v6025, %v6398
    %v6400 = vsel %vm6252, %v6028, %v6399
    %v6401 = vsel %vm6254, %v6031, %v6400
    %v6402 = vsel %vm6256, %v6034, %v6401
    %v6403 = vsel %vm6258, %v6037, %v6402
    %v6404 = vsel %vm6246, %v6043, %v6040
    %v6405 = vsel %vm6248, %v6046, %v6404
    %v6406 = vsel %vm6250, %v6049, %v6405
    %v6407 = vsel %vm6252, %v6052, %v6406
    %v6408 = vsel %vm6254, %v6055, %v6407
    %v6409 = vsel %vm6256, %v6058, %v6408
    %v6410 = vsel %vm6258, %v6061, %v6409
    %v6411 = vsel %vm6246, %v6067, %v6064
    %v6412 = vsel %vm6248, %v6070, %v6411
    %v6413 = vsel %vm6250, %v6073, %v6412
    %v6414 = vsel %vm6252, %v6076, %v6413
    %v6415 = vsel %vm6254, %v6079, %v6414
    %v6416 = vsel %vm6256, %v6082, %v6415
    %v6417 = vsel %vm6258, %v6085, %v6416
    %v6418 = vsel %vm6246, %v6091, %v6088
    %v6419 = vsel %vm6248, %v6094, %v6418
    %v6420 = vsel %vm6250, %v6097, %v6419
    %v6421 = vsel %vm6252, %v6100, %v6420
    %v6422 = vsel %vm6254, %v6103, %v6421
    %v6423 = vsel %vm6256, %v6106, %v6422
    %v6424 = vsel %vm6258, %v6109, %v6423
    %v6425 = vsel %vm6246, %v6115, %v6112
    %v6426 = vsel %vm6248, %v6118, %v6425
    %v6427 = vsel %vm6250, %v6121, %v6426
    %v6428 = vsel %vm6252, %v6124, %v6427
    %v6429 = vsel %vm6254, %v6127, %v6428
    %v6430 = vsel %vm6256, %v6130, %v6429
    %v6431 = vsel %vm6258, %v6133, %v6430
    %v6432 = vsel %vm6246, %v6139, %v6136
    %v6433 = vsel %vm6248, %v6142, %v6432
    %v6434 = vsel %vm6250, %v6145, %v6433
    %v6435 = vsel %vm6252, %v6148, %v6434
    %v6436 = vsel %vm6254, %v6151, %v6435
    %v6437 = vsel %vm6256, %v6154, %v6436
    %v6438 = vsel %vm6258, %v6157, %v6437
    %v6439 = vsel %vm6246, %v6163, %v6160
    %v6440 = vsel %vm6248, %v6166, %v6439
    %v6441 = vsel %vm6250, %v6169, %v6440
    %v6442 = vsel %vm6252, %v6172, %v6441
    %v6443 = vsel %vm6254, %v6175, %v6442
    %v6444 = vsel %vm6256, %v6178, %v6443
    %v6445 = vsel %vm6258, %v6181, %v6444
    %s6454 = scalar_lea.vmem [#allocation4], 176
    %6455 = vst.msk [vmem:[%s6454 + $0x1] sm:$0xff] %vm143, %v6396
    %6456 = vst.msk [vmem:[%s6454 + $0x11] sm:$0xff] %vm143, %v6403
    %6457 = vst.msk [vmem:[%s6454 + $0x21] sm:$0xff] %vm143, %v6410
    %6458 = vst.msk [vmem:[%s6454 + $0x31] sm:$0xff] %vm143, %v6417
    %6459 = vst.msk [vmem:[%s6454 + $0x41] sm:$0xff] %vm143, %v6424
    %6460 = vst.msk [vmem:[%s6454 + $0x51] sm:$0xff] %vm143, %v6431
    %6461 = vst.msk [vmem:[%s6454 + $0x61] sm:$0xff] %vm143, %v6438
    %6462 = vst.msk [vmem:[%s6454 + $0x71] sm:$0xff] %vm143, %v6445
    %v6463 = vld [vmem:[#allocation4] sm:$0xff]
    %v6464 = vld [vmem:[#allocation4 + $0x8] sm:$0x3]
    %v6465 = vld [vmem:[#allocation4 + $0x10] sm:$0xff]
    %v6466 = vld [vmem:[#allocation4 + $0x18] sm:$0x3]
    %v6467 = vld [vmem:[#allocation4 + $0x20] sm:$0xff]
    %v6468 = vld [vmem:[#allocation4 + $0x28] sm:$0x3]
    %v6469 = vld [vmem:[#allocation4 + $0x30] sm:$0xff]
    %v6470 = vld [vmem:[#allocation4 + $0x38] sm:$0x3]
    %v6471 = vld [vmem:[#allocation4 + $0x40] sm:$0xff]
    %v6472 = vld [vmem:[#allocation4 + $0x48] sm:$0x3]
    %v6473 = vld [vmem:[#allocation4 + $0x50] sm:$0xff]
    %v6474 = vld [vmem:[#allocation4 + $0x58] sm:$0x3]
    %v6475 = vld [vmem:[#allocation4 + $0x60] sm:$0xff]
    %v6476 = vld [vmem:[#allocation4 + $0x68] sm:$0x3]
    %v6477 = vld [vmem:[#allocation4 + $0x70] sm:$0xff]
    %v6478 = vld [vmem:[#allocation4 + $0x78] sm:$0x3]
    %v6479 = vld [vmem:[#allocation4 + $0x80] sm:$0xff]
    %v6480 = vld [vmem:[#allocation4 + $0x88] sm:$0x3]
    %v6481 = vld [vmem:[#allocation4 + $0x90] sm:$0xff]
    %v6482 = vld [vmem:[#allocation4 + $0x98] sm:$0x3]
    %6483 = vst.msk [vmem:[#allocation5] sm:$0xff] %vm143, %v6463
    %6484 = vst.msk [vmem:[#allocation5 + $0x10] sm:$0xff] %vm143, %v6465
    %6485 = vst.msk [vmem:[#allocation5 + $0x20] sm:$0xff] %vm143, %v6467
    %6486 = vst.msk [vmem:[#allocation5 + $0x30] sm:$0xff] %vm143, %v6469
    %6487 = vst.msk [vmem:[#allocation5 + $0x40] sm:$0xff] %vm143, %v6471
    %6488 = vst.msk [vmem:[#allocation5 + $0x50] sm:$0xff] %vm143, %v6473
    %6489 = vst.msk [vmem:[#allocation5 + $0x60] sm:$0xff] %vm143, %v6475
    %6490 = vst.msk [vmem:[#allocation5 + $0x70] sm:$0xff] %vm143, %v6477
    %v6507 = vrot.slane %v6463, 1
    %v6508 = vrot.slane %v6464, 1
    %v6509 = vsel %vm450, %v6507, %v6508
    %v6510 = vrot.slane %v6465, 1
    %v6511 = vrot.slane %v6466, 1
    %v6512 = vsel %vm450, %v6510, %v6511
    %v6513 = vrot.slane %v6467, 1
    %v6514 = vrot.slane %v6468, 1
    %v6515 = vsel %vm450, %v6513, %v6514
    %v6516 = vrot.slane %v6469, 1
    %v6517 = vrot.slane %v6470, 1
    %v6518 = vsel %vm450, %v6516, %v6517
    %v6519 = vrot.slane %v6471, 1
    %v6520 = vrot.slane %v6472, 1
    %v6521 = vsel %vm450, %v6519, %v6520
    %v6522 = vrot.slane %v6473, 1
    %v6523 = vrot.slane %v6474, 1
    %v6524 = vsel %vm450, %v6522, %v6523
    %v6525 = vrot.slane %v6475, 1
    %v6526 = vrot.slane %v6476, 1
    %v6527 = vsel %vm450, %v6525, %v6526
    %v6528 = vrot.slane %v6477, 1
    %v6529 = vrot.slane %v6478, 1
    %v6530 = vsel %vm450, %v6528, %v6529
    %6531 = vrot.lane.b32.xlu0 %v6509, 16
    %v6532 = vpop.permute.xlu0 %6531
    %6533 = vrot.lane.b32.xlu0 %v6512, 16
    %v6534 = vpop.permute.xlu0 %6533
    %6535 = vrot.lane.b32.xlu0 %v6515, 16
    %v6536 = vpop.permute.xlu0 %6535
    %6537 = vrot.lane.b32.xlu0 %v6518, 16
    %v6538 = vpop.permute.xlu0 %6537
    %6539 = vrot.lane.b32.xlu0 %v6521, 16
    %v6540 = vpop.permute.xlu0 %6539
    %6541 = vrot.lane.b32.xlu0 %v6524, 16
    %v6542 = vpop.permute.xlu0 %6541
    %6543 = vrot.lane.b32.xlu0 %v6527, 16
    %v6544 = vpop.permute.xlu0 %6543
    %6545 = vrot.lane.b32.xlu0 %v6530, 16
    %v6546 = vpop.permute.xlu0 %6545
    %vm6555 = vcmask 261248
    %6556 = vst.msk [vmem:[#allocation5] sm:$0xff] %vm6555, %v6532
    %6557 = vst.msk [vmem:[#allocation5 + $0x10] sm:$0xff] %vm6555, %v6534
    %6558 = vst.msk [vmem:[#allocation5 + $0x20] sm:$0xff] %vm6555, %v6536
    %6559 = vst.msk [vmem:[#allocation5 + $0x30] sm:$0xff] %vm6555, %v6538
    %6560 = vst.msk [vmem:[#allocation5 + $0x40] sm:$0xff] %vm6555, %v6540
    %6561 = vst.msk [vmem:[#allocation5 + $0x50] sm:$0xff] %vm6555, %v6542
    %6562 = vst.msk [vmem:[#allocation5 + $0x60] sm:$0xff] %vm6555, %v6544
    %6563 = vst.msk [vmem:[#allocation5 + $0x70] sm:$0xff] %vm6555, %v6546
    %v6564 = vrot.slane %v6463, 2
    %v6565 = vrot.slane %v6464, 2
    %v6566 = vsel %vm660, %v6564, %v6565
    %v6567 = vrot.slane %v6465, 2
    %v6568 = vrot.slane %v6466, 2
    %v6569 = vsel %vm660, %v6567, %v6568
    %v6570 = vrot.slane %v6467, 2
    %v6571 = vrot.slane %v6468, 2
    %v6572 = vsel %vm660, %v6570, %v6571
    %v6573 = vrot.slane %v6469, 2
    %v6574 = vrot.slane %v6470, 2
    %v6575 = vsel %vm660, %v6573, %v6574
    %v6576 = vrot.slane %v6471, 2
    %v6577 = vrot.slane %v6472, 2
    %v6578 = vsel %vm660, %v6576, %v6577
    %v6579 = vrot.slane %v6473, 2
    %v6580 = vrot.slane %v6474, 2
    %v6581 = vsel %vm660, %v6579, %v6580
    %v6582 = vrot.slane %v6475, 2
    %v6583 = vrot.slane %v6476, 2
    %v6584 = vsel %vm660, %v6582, %v6583
    %v6585 = vrot.slane %v6477, 2
    %v6586 = vrot.slane %v6478, 2
    %v6587 = vsel %vm660, %v6585, %v6586
    %6588 = vrot.lane.b32.xlu0 %v6566, 32
    %v6589 = vpop.permute.xlu0 %6588
    %6590 = vrot.lane.b32.xlu0 %v6569, 32
    %v6591 = vpop.permute.xlu0 %6590
    %6592 = vrot.lane.b32.xlu0 %v6572, 32
    %v6593 = vpop.permute.xlu0 %6592
    %6594 = vrot.lane.b32.xlu0 %v6575, 32
    %v6595 = vpop.permute.xlu0 %6594
    %6596 = vrot.lane.b32.xlu0 %v6578, 32
    %v6597 = vpop.permute.xlu0 %6596
    %6598 = vrot.lane.b32.xlu0 %v6581, 32
    %v6599 = vpop.permute.xlu0 %6598
    %6600 = vrot.lane.b32.xlu0 %v6584, 32
    %v6601 = vpop.permute.xlu0 %6600
    %6602 = vrot.lane.b32.xlu0 %v6587, 32
    %v6603 = vpop.permute.xlu0 %6602
    %vm6612 = vcmask 392448
    %6613 = vst.msk [vmem:[#allocation5] sm:$0xff] %vm6612, %v6589
    %6614 = vst.msk [vmem:[#allocation5 + $0x10] sm:$0xff] %vm6612, %v6591
    %6615 = vst.msk [vmem:[#allocation5 + $0x20] sm:$0xff] %vm6612, %v6593
    %6616 = vst.msk [vmem:[#allocation5 + $0x30] sm:$0xff] %vm6612, %v6595
    %6617 = vst.msk [vmem:[#allocation5 + $0x40] sm:$0xff] %vm6612, %v6597
    %6618 = vst.msk [vmem:[#allocation5 + $0x50] sm:$0xff] %vm6612, %v6599
    %6619 = vst.msk [vmem:[#allocation5 + $0x60] sm:$0xff] %vm6612, %v6601
    %6620 = vst.msk [vmem:[#allocation5 + $0x70] sm:$0xff] %vm6612, %v6603
    %6622 = vrot.lane.b32.xlu0 %v6465, 48
    %v6623 = vpop.permute.xlu0 %6622
    %6624 = vrot.lane.b32.xlu0 %v6467, 48
    %v6625 = vpop.permute.xlu0 %6624
    %6626 = vrot.lane.b32.xlu0 %v6469, 48
    %v6627 = vpop.permute.xlu0 %6626
    %6628 = vrot.lane.b32.xlu0 %v6471, 48
    %v6629 = vpop.permute.xlu0 %6628
    %6630 = vrot.lane.b32.xlu0 %v6473, 48
    %v6631 = vpop.permute.xlu0 %6630
    %6632 = vrot.lane.b32.xlu0 %v6475, 48
    %v6633 = vpop.permute.xlu0 %6632
    %6634 = vrot.lane.b32.xlu0 %v6477, 48
    %v6635 = vpop.permute.xlu0 %6634
    %6636 = vrot.lane.b32.xlu0 %v6479, 48
    %v6637 = vpop.permute.xlu0 %6636
    %vm6646 = vcmask 523648
    %6647 = vst.msk [vmem:[#allocation5] sm:$0xff] %vm6646, %v6623
    %6648 = vst.msk [vmem:[#allocation5 + $0x10] sm:$0xff] %vm6646, %v6625
    %6649 = vst.msk [vmem:[#allocation5 + $0x20] sm:$0xff] %vm6646, %v6627
    %6650 = vst.msk [vmem:[#allocation5 + $0x30] sm:$0xff] %vm6646, %v6629
    %6651 = vst.msk [vmem:[#allocation5 + $0x40] sm:$0xff] %vm6646, %v6631
    %6652 = vst.msk [vmem:[#allocation5 + $0x50] sm:$0xff] %vm6646, %v6633
    %6653 = vst.msk [vmem:[#allocation5 + $0x60] sm:$0xff] %vm6646, %v6635
    %6654 = vst.msk [vmem:[#allocation5 + $0x70] sm:$0xff] %vm6646, %v6637
    %v6656 = vrot.slane %v6479, 1
    %v6657 = vrot.slane %v6480, 1
    %v6658 = vsel %vm450, %v6656, %v6657
    %6659 = vrot.lane.b32.xlu0 %v6512, 64
    %v6660 = vpop.permute.xlu0 %6659
    %6661 = vrot.lane.b32.xlu0 %v6515, 64
    %v6662 = vpop.permute.xlu0 %6661
    %6663 = vrot.lane.b32.xlu0 %v6518, 64
    %v6664 = vpop.permute.xlu0 %6663
    %6665 = vrot.lane.b32.xlu0 %v6521, 64
    %v6666 = vpop.permute.xlu0 %6665
    %6667 = vrot.lane.b32.xlu0 %v6524, 64
    %v6668 = vpop.permute.xlu0 %6667
    %6669 = vrot.lane.b32.xlu0 %v6527, 64
    %v6670 = vpop.permute.xlu0 %6669
    %6671 = vrot.lane.b32.xlu0 %v6530, 64
    %v6672 = vpop.permute.xlu0 %6671
    %6673 = vrot.lane.b32.xlu0 %v6658, 64
    %v6674 = vpop.permute.xlu0 %6673
    %vm6683 = vcmask 654848
    %6684 = vst.msk [vmem:[#allocation5] sm:$0xff] %vm6683, %v6660
    %6685 = vst.msk [vmem:[#allocation5 + $0x10] sm:$0xff] %vm6683, %v6662
    %6686 = vst.msk [vmem:[#allocation5 + $0x20] sm:$0xff] %vm6683, %v6664
    %6687 = vst.msk [vmem:[#allocation5 + $0x30] sm:$0xff] %vm6683, %v6666
    %6688 = vst.msk [vmem:[#allocation5 + $0x40] sm:$0xff] %vm6683, %v6668
    %6689 = vst.msk [vmem:[#allocation5 + $0x50] sm:$0xff] %vm6683, %v6670
    %6690 = vst.msk [vmem:[#allocation5 + $0x60] sm:$0xff] %vm6683, %v6672
    %6691 = vst.msk [vmem:[#allocation5 + $0x70] sm:$0xff] %vm6683, %v6674
    %v6692 = vrot.slane %v6479, 2
    %v6693 = vrot.slane %v6480, 2
    %v6694 = vsel %vm660, %v6692, %v6693
    %6695 = vrot.lane.b32.xlu0 %v6569, 80
    %v6696 = vpop.permute.xlu0 %6695
    %6697 = vrot.lane.b32.xlu0 %v6572, 80
    %v6698 = vpop.permute.xlu0 %6697
    %6699 = vrot.lane.b32.xlu0 %v6575, 80
    %v6700 = vpop.permute.xlu0 %6699
    %6701 = vrot.lane.b32.xlu0 %v6578, 80
    %v6702 = vpop.permute.xlu0 %6701
    %6703 = vrot.lane.b32.xlu0 %v6581, 80
    %v6704 = vpop.permute.xlu0 %6703
    %6705 = vrot.lane.b32.xlu0 %v6584, 80
    %v6706 = vpop.permute.xlu0 %6705
    %6707 = vrot.lane.b32.xlu0 %v6587, 80
    %v6708 = vpop.permute.xlu0 %6707
    %6709 = vrot.lane.b32.xlu0 %v6694, 80
    %v6710 = vpop.permute.xlu0 %6709
    %vm6719 = vcmask 786048
    %6720 = vst.msk [vmem:[#allocation5] sm:$0xff] %vm6719, %v6696
    %6721 = vst.msk [vmem:[#allocation5 + $0x10] sm:$0xff] %vm6719, %v6698
    %6722 = vst.msk [vmem:[#allocation5 + $0x20] sm:$0xff] %vm6719, %v6700
    %6723 = vst.msk [vmem:[#allocation5 + $0x30] sm:$0xff] %vm6719, %v6702
    %6724 = vst.msk [vmem:[#allocation5 + $0x40] sm:$0xff] %vm6719, %v6704
    %6725 = vst.msk [vmem:[#allocation5 + $0x50] sm:$0xff] %vm6719, %v6706
    %6726 = vst.msk [vmem:[#allocation5 + $0x60] sm:$0xff] %vm6719, %v6708
    %6727 = vst.msk [vmem:[#allocation5 + $0x70] sm:$0xff] %vm6719, %v6710
    %6729 = vrot.lane.b32.xlu0 %v6467, 96
    %v6730 = vpop.permute.xlu0 %6729
    %6731 = vrot.lane.b32.xlu0 %v6469, 96
    %v6732 = vpop.permute.xlu0 %6731
    %6733 = vrot.lane.b32.xlu0 %v6471, 96
    %v6734 = vpop.permute.xlu0 %6733
    %6735 = vrot.lane.b32.xlu0 %v6473, 96
    %v6736 = vpop.permute.xlu0 %6735
    %6737 = vrot.lane.b32.xlu0 %v6475, 96
    %v6738 = vpop.permute.xlu0 %6737
    %6739 = vrot.lane.b32.xlu0 %v6477, 96
    %v6740 = vpop.permute.xlu0 %6739
    %6741 = vrot.lane.b32.xlu0 %v6479, 96
    %v6742 = vpop.permute.xlu0 %6741
    %6743 = vrot.lane.b32.xlu0 %v6481, 96
    %v6744 = vpop.permute.xlu0 %6743
    %vm6753 = vcmask 917248
    %6754 = vst.msk [vmem:[#allocation5] sm:$0xff] %vm6753, %v6730
    %6755 = vst.msk [vmem:[#allocation5 + $0x10] sm:$0xff] %vm6753, %v6732
    %6756 = vst.msk [vmem:[#allocation5 + $0x20] sm:$0xff] %vm6753, %v6734
    %6757 = vst.msk [vmem:[#allocation5 + $0x30] sm:$0xff] %vm6753, %v6736
    %6758 = vst.msk [vmem:[#allocation5 + $0x40] sm:$0xff] %vm6753, %v6738
    %6759 = vst.msk [vmem:[#allocation5 + $0x50] sm:$0xff] %vm6753, %v6740
    %6760 = vst.msk [vmem:[#allocation5 + $0x60] sm:$0xff] %vm6753, %v6742
    %6761 = vst.msk [vmem:[#allocation5 + $0x70] sm:$0xff] %vm6753, %v6744
    %v6763 = vrot.slane %v6481, 1
    %v6764 = vrot.slane %v6482, 1
    %v6765 = vsel %vm450, %v6763, %v6764
    %6766 = vrot.lane.b32.xlu0 %v6515, 112
    %v6767 = vpop.permute.xlu0 %6766
    %6768 = vrot.lane.b32.xlu0 %v6518, 112
    %v6769 = vpop.permute.xlu0 %6768
    %6770 = vrot.lane.b32.xlu0 %v6521, 112
    %v6771 = vpop.permute.xlu0 %6770
    %6772 = vrot.lane.b32.xlu0 %v6524, 112
    %v6773 = vpop.permute.xlu0 %6772
    %6774 = vrot.lane.b32.xlu0 %v6527, 112
    %v6775 = vpop.permute.xlu0 %6774
    %6776 = vrot.lane.b32.xlu0 %v6530, 112
    %v6777 = vpop.permute.xlu0 %6776
    %6778 = vrot.lane.b32.xlu0 %v6658, 112
    %v6779 = vpop.permute.xlu0 %6778
    %6780 = vrot.lane.b32.xlu0 %v6765, 112
    %v6781 = vpop.permute.xlu0 %6780
    %vm6790 = vcmask 1048448
    %6791 = vst.msk [vmem:[#allocation5] sm:$0xff] %vm6790, %v6767
    %6792 = vst.msk [vmem:[#allocation5 + $0x10] sm:$0xff] %vm6790, %v6769
    %6793 = vst.msk [vmem:[#allocation5 + $0x20] sm:$0xff] %vm6790, %v6771
    %6794 = vst.msk [vmem:[#allocation5 + $0x30] sm:$0xff] %vm6790, %v6773
    %6795 = vst.msk [vmem:[#allocation5 + $0x40] sm:$0xff] %vm6790, %v6775
    %6796 = vst.msk [vmem:[#allocation5 + $0x50] sm:$0xff] %vm6790, %v6777
    %6797 = vst.msk [vmem:[#allocation5 + $0x60] sm:$0xff] %vm6790, %v6779
    %6798 = vst.msk [vmem:[#allocation5 + $0x70] sm:$0xff] %vm6790, %v6781
    %v6799 = vrot.slane %v6481, 2
    %v6800 = vrot.slane %v6482, 2
    %v6801 = vsel %vm660, %v6799, %v6800
    %6810 = vst.msk [vmem:[#allocation5 + $0x8] sm:$0xff] %vm143, %v6572
    %6811 = vst.msk [vmem:[#allocation5 + $0x18] sm:$0xff] %vm143, %v6575
    %6812 = vst.msk [vmem:[#allocation5 + $0x28] sm:$0xff] %vm143, %v6578
    %6813 = vst.msk [vmem:[#allocation5 + $0x38] sm:$0xff] %vm143, %v6581
    %6814 = vst.msk [vmem:[#allocation5 + $0x48] sm:$0xff] %vm143, %v6584
    %6815 = vst.msk [vmem:[#allocation5 + $0x58] sm:$0xff] %vm143, %v6587
    %6816 = vst.msk [vmem:[#allocation5 + $0x68] sm:$0xff] %vm143, %v6694
    %6817 = vst.msk [vmem:[#allocation5 + $0x78] sm:$0xff] %vm143, %v6801
    %s6818 = scalar_lea.vmem [#allocation4], 160
    %v6819 = vld [vmem:[%s6818] sm:$0xff]
    %v6820 = vld [vmem:[%s6818 + $0x8] sm:$0x3]
    %v6821 = vld [vmem:[%s6818 + $0x10] sm:$0xff]
    %v6822 = vld [vmem:[%s6818 + $0x18] sm:$0x3]
    %v6823 = vld [vmem:[%s6818 + $0x20] sm:$0xff]
    %v6824 = vld [vmem:[%s6818 + $0x28] sm:$0x3]
    %v6825 = vld [vmem:[%s6818 + $0x30] sm:$0xff]
    %v6826 = vld [vmem:[%s6818 + $0x38] sm:$0x3]
    %v6827 = vld [vmem:[%s6818 + $0x40] sm:$0xff]
    %v6828 = vld [vmem:[%s6818 + $0x48] sm:$0x3]
    %v6829 = vld [vmem:[%s6818 + $0x50] sm:$0xff]
    %v6830 = vld [vmem:[%s6818 + $0x58] sm:$0x3]
    %v6831 = vld [vmem:[%s6818 + $0x60] sm:$0xff]
    %v6832 = vld [vmem:[%s6818 + $0x68] sm:$0x3]
    %v6833 = vld [vmem:[%s6818 + $0x70] sm:$0xff]
    %v6834 = vld [vmem:[%s6818 + $0x78] sm:$0x3]
    %v6835 = vld [vmem:[%s6818 + $0x80] sm:$0xff]
    %v6836 = vld [vmem:[%s6818 + $0x88] sm:$0x3]
    %v6837 = vld [vmem:[%s6818 + $0x90] sm:$0xff]
    %v6838 = vld [vmem:[%s6818 + $0x98] sm:$0x3]
    %6839 = vst.msk [vmem:[#allocation5 + $0x80] sm:$0xff] %vm143, %v6819
    %6840 = vst.msk [vmem:[#allocation5 + $0x90] sm:$0xff] %vm143, %v6821
    %6841 = vst.msk [vmem:[#allocation5 + $0xa0] sm:$0xff] %vm143, %v6823
    %6842 = vst.msk [vmem:[#allocation5 + $0xb0] sm:$0xff] %vm143, %v6825
    %6843 = vst.msk [vmem:[#allocation5 + $0xc0] sm:$0xff] %vm143, %v6827
    %6844 = vst.msk [vmem:[#allocation5 + $0xd0] sm:$0xff] %vm143, %v6829
    %6845 = vst.msk [vmem:[#allocation5 + $0xe0] sm:$0xff] %vm143, %v6831
    %6846 = vst.msk [vmem:[#allocation5 + $0xf0] sm:$0xff] %vm143, %v6833
    %v6863 = vrot.slane %v6819, 1
    %v6864 = vrot.slane %v6820, 1
    %v6865 = vsel %vm450, %v6863, %v6864
    %v6866 = vrot.slane %v6821, 1
    %v6867 = vrot.slane %v6822, 1
    %v6868 = vsel %vm450, %v6866, %v6867
    %v6869 = vrot.slane %v6823, 1
    %v6870 = vrot.slane %v6824, 1
    %v6871 = vsel %vm450, %v6869, %v6870
    %v6872 = vrot.slane %v6825, 1
    %v6873 = vrot.slane %v6826, 1
    %v6874 = vsel %vm450, %v6872, %v6873
    %v6875 = vrot.slane %v6827, 1
    %v6876 = vrot.slane %v6828, 1
    %v6877 = vsel %vm450, %v6875, %v6876
    %v6878 = vrot.slane %v6829, 1
    %v6879 = vrot.slane %v6830, 1
    %v6880 = vsel %vm450, %v6878, %v6879
    %v6881 = vrot.slane %v6831, 1
    %v6882 = vrot.slane %v6832, 1
    %v6883 = vsel %vm450, %v6881, %v6882
    %v6884 = vrot.slane %v6833, 1
    %v6885 = vrot.slane %v6834, 1
    %v6886 = vsel %vm450, %v6884, %v6885
    %6887 = vrot.lane.b32.xlu0 %v6865, 16
    %v6888 = vpop.permute.xlu0 %6887
    %6889 = vrot.lane.b32.xlu0 %v6868, 16
    %v6890 = vpop.permute.xlu0 %6889
    %6891 = vrot.lane.b32.xlu0 %v6871, 16
    %v6892 = vpop.permute.xlu0 %6891
    %6893 = vrot.lane.b32.xlu0 %v6874, 16
    %v6894 = vpop.permute.xlu0 %6893
    %6895 = vrot.lane.b32.xlu0 %v6877, 16
    %v6896 = vpop.permute.xlu0 %6895
    %6897 = vrot.lane.b32.xlu0 %v6880, 16
    %v6898 = vpop.permute.xlu0 %6897
    %6899 = vrot.lane.b32.xlu0 %v6883, 16
    %v6900 = vpop.permute.xlu0 %6899
    %6901 = vrot.lane.b32.xlu0 %v6886, 16
    %v6902 = vpop.permute.xlu0 %6901
    %6911 = vst.msk [vmem:[#allocation5 + $0x80] sm:$0xff] %vm6555, %v6888
    %6912 = vst.msk [vmem:[#allocation5 + $0x90] sm:$0xff] %vm6555, %v6890
    %6913 = vst.msk [vmem:[#allocation5 + $0xa0] sm:$0xff] %vm6555, %v6892
    %6914 = vst.msk [vmem:[#allocation5 + $0xb0] sm:$0xff] %vm6555, %v6894
    %6915 = vst.msk [vmem:[#allocation5 + $0xc0] sm:$0xff] %vm6555, %v6896
    %6916 = vst.msk [vmem:[#allocation5 + $0xd0] sm:$0xff] %vm6555, %v6898
    %6917 = vst.msk [vmem:[#allocation5 + $0xe0] sm:$0xff] %vm6555, %v6900
    %6918 = vst.msk [vmem:[#allocation5 + $0xf0] sm:$0xff] %vm6555, %v6902
    %v6919 = vrot.slane %v6819, 2
    %v6920 = vrot.slane %v6820, 2
    %v6921 = vsel %vm660, %v6919, %v6920
    %v6922 = vrot.slane %v6821, 2
    %v6923 = vrot.slane %v6822, 2
    %v6924 = vsel %vm660, %v6922, %v6923
    %v6925 = vrot.slane %v6823, 2
    %v6926 = vrot.slane %v6824, 2
    %v6927 = vsel %vm660, %v6925, %v6926
    %v6928 = vrot.slane %v6825, 2
    %v6929 = vrot.slane %v6826, 2
    %v6930 = vsel %vm660, %v6928, %v6929
    %v6931 = vrot.slane %v6827, 2
    %v6932 = vrot.slane %v6828, 2
    %v6933 = vsel %vm660, %v6931, %v6932
    %v6934 = vrot.slane %v6829, 2
    %v6935 = vrot.slane %v6830, 2
    %v6936 = vsel %vm660, %v6934, %v6935
    %v6937 = vrot.slane %v6831, 2
    %v6938 = vrot.slane %v6832, 2
    %v6939 = vsel %vm660, %v6937, %v6938
    %v6940 = vrot.slane %v6833, 2
    %v6941 = vrot.slane %v6834, 2
    %v6942 = vsel %vm660, %v6940, %v6941
    %6943 = vrot.lane.b32.xlu0 %v6921, 32
    %v6944 = vpop.permute.xlu0 %6943
    %6945 = vrot.lane.b32.xlu0 %v6924, 32
    %v6946 = vpop.permute.xlu0 %6945
    %6947 = vrot.lane.b32.xlu0 %v6927, 32
    %v6948 = vpop.permute.xlu0 %6947
    %6949 = vrot.lane.b32.xlu0 %v6930, 32
    %v6950 = vpop.permute.xlu0 %6949
    %6951 = vrot.lane.b32.xlu0 %v6933, 32
    %v6952 = vpop.permute.xlu0 %6951
    %6953 = vrot.lane.b32.xlu0 %v6936, 32
    %v6954 = vpop.permute.xlu0 %6953
    %6955 = vrot.lane.b32.xlu0 %v6939, 32
    %v6956 = vpop.permute.xlu0 %6955
    %6957 = vrot.lane.b32.xlu0 %v6942, 32
    %v6958 = vpop.permute.xlu0 %6957
    %6967 = vst.msk [vmem:[#allocation5 + $0x80] sm:$0xff] %vm6612, %v6944
    %6968 = vst.msk [vmem:[#allocation5 + $0x90] sm:$0xff] %vm6612, %v6946
    %6969 = vst.msk [vmem:[#allocation5 + $0xa0] sm:$0xff] %vm6612, %v6948
    %6970 = vst.msk [vmem:[#allocation5 + $0xb0] sm:$0xff] %vm6612, %v6950
    %6971 = vst.msk [vmem:[#allocation5 + $0xc0] sm:$0xff] %vm6612, %v6952
    %6972 = vst.msk [vmem:[#allocation5 + $0xd0] sm:$0xff] %vm6612, %v6954
    %6973 = vst.msk [vmem:[#allocation5 + $0xe0] sm:$0xff] %vm6612, %v6956
    %6974 = vst.msk [vmem:[#allocation5 + $0xf0] sm:$0xff] %vm6612, %v6958
    %6976 = vrot.lane.b32.xlu0 %v6821, 48
    %v6977 = vpop.permute.xlu0 %6976
    %6978 = vrot.lane.b32.xlu0 %v6823, 48
    %v6979 = vpop.permute.xlu0 %6978
    %6980 = vrot.lane.b32.xlu0 %v6825, 48
    %v6981 = vpop.permute.xlu0 %6980
    %6982 = vrot.lane.b32.xlu0 %v6827, 48
    %v6983 = vpop.permute.xlu0 %6982
    %6984 = vrot.lane.b32.xlu0 %v6829, 48
    %v6985 = vpop.permute.xlu0 %6984
    %6986 = vrot.lane.b32.xlu0 %v6831, 48
    %v6987 = vpop.permute.xlu0 %6986
    %6988 = vrot.lane.b32.xlu0 %v6833, 48
    %v6989 = vpop.permute.xlu0 %6988
    %6990 = vrot.lane.b32.xlu0 %v6835, 48
    %v6991 = vpop.permute.xlu0 %6990
    %7000 = vst.msk [vmem:[#allocation5 + $0x80] sm:$0xff] %vm6646, %v6977
    %7001 = vst.msk [vmem:[#allocation5 + $0x90] sm:$0xff] %vm6646, %v6979
    %7002 = vst.msk [vmem:[#allocation5 + $0xa0] sm:$0xff] %vm6646, %v6981
    %7003 = vst.msk [vmem:[#allocation5 + $0xb0] sm:$0xff] %vm6646, %v6983
    %7004 = vst.msk [vmem:[#allocation5 + $0xc0] sm:$0xff] %vm6646, %v6985
    %7005 = vst.msk [vmem:[#allocation5 + $0xd0] sm:$0xff] %vm6646, %v6987
    %7006 = vst.msk [vmem:[#allocation5 + $0xe0] sm:$0xff] %vm6646, %v6989
    %7007 = vst.msk [vmem:[#allocation5 + $0xf0] sm:$0xff] %vm6646, %v6991
    %v7009 = vrot.slane %v6835, 1
    %v7010 = vrot.slane %v6836, 1
    %v7011 = vsel %vm450, %v7009, %v7010
    %7012 = vrot.lane.b32.xlu0 %v6868, 64
    %v7013 = vpop.permute.xlu0 %7012
    %7014 = vrot.lane.b32.xlu0 %v6871, 64
    %v7015 = vpop.permute.xlu0 %7014
    %7016 = vrot.lane.b32.xlu0 %v6874, 64
    %v7017 = vpop.permute.xlu0 %7016
    %7018 = vrot.lane.b32.xlu0 %v6877, 64
    %v7019 = vpop.permute.xlu0 %7018
    %7020 = vrot.lane.b32.xlu0 %v6880, 64
    %v7021 = vpop.permute.xlu0 %7020
    %7022 = vrot.lane.b32.xlu0 %v6883, 64
    %v7023 = vpop.permute.xlu0 %7022
    %7024 = vrot.lane.b32.xlu0 %v6886, 64
    %v7025 = vpop.permute.xlu0 %7024
    %7026 = vrot.lane.b32.xlu0 %v7011, 64
    %v7027 = vpop.permute.xlu0 %7026
    %7036 = vst.msk [vmem:[#allocation5 + $0x80] sm:$0xff] %vm6683, %v7013
    %7037 = vst.msk [vmem:[#allocation5 + $0x90] sm:$0xff] %vm6683, %v7015
    %7038 = vst.msk [vmem:[#allocation5 + $0xa0] sm:$0xff] %vm6683, %v7017
    %7039 = vst.msk [vmem:[#allocation5 + $0xb0] sm:$0xff] %vm6683, %v7019
    %7040 = vst.msk [vmem:[#allocation5 + $0xc0] sm:$0xff] %vm6683, %v7021
    %7041 = vst.msk [vmem:[#allocation5 + $0xd0] sm:$0xff] %vm6683, %v7023
    %7042 = vst.msk [vmem:[#allocation5 + $0xe0] sm:$0xff] %vm6683, %v7025
    %7043 = vst.msk [vmem:[#allocation5 + $0xf0] sm:$0xff] %vm6683, %v7027
    %v7044 = vrot.slane %v6835, 2
    %v7045 = vrot.slane %v6836, 2
    %v7046 = vsel %vm660, %v7044, %v7045
    %7047 = vrot.lane.b32.xlu0 %v6924, 80
    %v7048 = vpop.permute.xlu0 %7047
    %7049 = vrot.lane.b32.xlu0 %v6927, 80
    %v7050 = vpop.permute.xlu0 %7049
    %7051 = vrot.lane.b32.xlu0 %v6930, 80
    %v7052 = vpop.permute.xlu0 %7051
    %7053 = vrot.lane.b32.xlu0 %v6933, 80
    %v7054 = vpop.permute.xlu0 %7053
    %7055 = vrot.lane.b32.xlu0 %v6936, 80
    %v7056 = vpop.permute.xlu0 %7055
    %7057 = vrot.lane.b32.xlu0 %v6939, 80
    %v7058 = vpop.permute.xlu0 %7057
    %7059 = vrot.lane.b32.xlu0 %v6942, 80
    %v7060 = vpop.permute.xlu0 %7059
    %7061 = vrot.lane.b32.xlu0 %v7046, 80
    %v7062 = vpop.permute.xlu0 %7061
    %7071 = vst.msk [vmem:[#allocation5 + $0x80] sm:$0xff] %vm6719, %v7048
    %7072 = vst.msk [vmem:[#allocation5 + $0x90] sm:$0xff] %vm6719, %v7050
    %7073 = vst.msk [vmem:[#allocation5 + $0xa0] sm:$0xff] %vm6719, %v7052
    %7074 = vst.msk [vmem:[#allocation5 + $0xb0] sm:$0xff] %vm6719, %v7054
    %7075 = vst.msk [vmem:[#allocation5 + $0xc0] sm:$0xff] %vm6719, %v7056
    %7076 = vst.msk [vmem:[#allocation5 + $0xd0] sm:$0xff] %vm6719, %v7058
    %7077 = vst.msk [vmem:[#allocation5 + $0xe0] sm:$0xff] %vm6719, %v7060
    %7078 = vst.msk [vmem:[#allocation5 + $0xf0] sm:$0xff] %vm6719, %v7062
    %7080 = vrot.lane.b32.xlu0 %v6823, 96
    %v7081 = vpop.permute.xlu0 %7080
    %7082 = vrot.lane.b32.xlu0 %v6825, 96
    %v7083 = vpop.permute.xlu0 %7082
    %7084 = vrot.lane.b32.xlu0 %v6827, 96
    %v7085 = vpop.permute.xlu0 %7084
    %7086 = vrot.lane.b32.xlu0 %v6829, 96
    %v7087 = vpop.permute.xlu0 %7086
    %7088 = vrot.lane.b32.xlu0 %v6831, 96
    %v7089 = vpop.permute.xlu0 %7088
    %7090 = vrot.lane.b32.xlu0 %v6833, 96
    %v7091 = vpop.permute.xlu0 %7090
    %7092 = vrot.lane.b32.xlu0 %v6835, 96
    %v7093 = vpop.permute.xlu0 %7092
    %7094 = vrot.lane.b32.xlu0 %v6837, 96
    %v7095 = vpop.permute.xlu0 %7094
    %7104 = vst.msk [vmem:[#allocation5 + $0x80] sm:$0xff] %vm6753, %v7081
    %7105 = vst.msk [vmem:[#allocation5 + $0x90] sm:$0xff] %vm6753, %v7083
    %7106 = vst.msk [vmem:[#allocation5 + $0xa0] sm:$0xff] %vm6753, %v7085
    %7107 = vst.msk [vmem:[#allocation5 + $0xb0] sm:$0xff] %vm6753, %v7087
    %7108 = vst.msk [vmem:[#allocation5 + $0xc0] sm:$0xff] %vm6753, %v7089
    %7109 = vst.msk [vmem:[#allocation5 + $0xd0] sm:$0xff] %vm6753, %v7091
    %7110 = vst.msk [vmem:[#allocation5 + $0xe0] sm:$0xff] %vm6753, %v7093
    %7111 = vst.msk [vmem:[#allocation5 + $0xf0] sm:$0xff] %vm6753, %v7095
    %v7113 = vrot.slane %v6837, 1
    %v7114 = vrot.slane %v6838, 1
    %v7115 = vsel %vm450, %v7113, %v7114
    %7116 = vrot.lane.b32.xlu0 %v6871, 112
    %v7117 = vpop.permute.xlu0 %7116
    %7118 = vrot.lane.b32.xlu0 %v6874, 112
    %v7119 = vpop.permute.xlu0 %7118
    %7120 = vrot.lane.b32.xlu0 %v6877, 112
    %v7121 = vpop.permute.xlu0 %7120
    %7122 = vrot.lane.b32.xlu0 %v6880, 112
    %v7123 = vpop.permute.xlu0 %7122
    %7124 = vrot.lane.b32.xlu0 %v6883, 112
    %v7125 = vpop.permute.xlu0 %7124
    %7126 = vrot.lane.b32.xlu0 %v6886, 112
    %v7127 = vpop.permute.xlu0 %7126
    %7128 = vrot.lane.b32.xlu0 %v7011, 112
    %v7129 = vpop.permute.xlu0 %7128
    %7130 = vrot.lane.b32.xlu0 %v7115, 112
    %v7131 = vpop.permute.xlu0 %7130
    %7140 = vst.msk [vmem:[#allocation5 + $0x80] sm:$0xff] %vm6790, %v7117
    %7141 = vst.msk [vmem:[#allocation5 + $0x90] sm:$0xff] %vm6790, %v7119
    %7142 = vst.msk [vmem:[#allocation5 + $0xa0] sm:$0xff] %vm6790, %v7121
    %7143 = vst.msk [vmem:[#allocation5 + $0xb0] sm:$0xff] %vm6790, %v7123
    %7144 = vst.msk [vmem:[#allocation5 + $0xc0] sm:$0xff] %vm6790, %v7125
    %7145 = vst.msk [vmem:[#allocation5 + $0xd0] sm:$0xff] %vm6790, %v7127
    %7146 = vst.msk [vmem:[#allocation5 + $0xe0] sm:$0xff] %vm6790, %v7129
    %7147 = vst.msk [vmem:[#allocation5 + $0xf0] sm:$0xff] %vm6790, %v7131
    %v7148 = vrot.slane %v6837, 2
    %v7149 = vrot.slane %v6838, 2
    %v7150 = vsel %vm660, %v7148, %v7149
    %7159 = vst.msk [vmem:[#allocation5 + $0x88] sm:$0xff] %vm143, %v6927
    %7160 = vst.msk [vmem:[#allocation5 + $0x98] sm:$0xff] %vm143, %v6930
    %7161 = vst.msk [vmem:[#allocation5 + $0xa8] sm:$0xff] %vm143, %v6933
    %7162 = vst.msk [vmem:[#allocation5 + $0xb8] sm:$0xff] %vm143, %v6936
    %7163 = vst.msk [vmem:[#allocation5 + $0xc8] sm:$0xff] %vm143, %v6939
    %7164 = vst.msk [vmem:[#allocation5 + $0xd8] sm:$0xff] %vm143, %v6942
    %7165 = vst.msk [vmem:[#allocation5 + $0xe8] sm:$0xff] %vm143, %v7046
    %7166 = vst.msk [vmem:[#allocation5 + $0xf8] sm:$0xff] %vm143, %v7150
    %v7167 = vld [vmem:[#allocation5] sm:$0xff]
    %v7168 = vld [vmem:[#allocation5 + $0x8] sm:$0xff]
    %v7169 = vld [vmem:[#allocation5 + $0x10] sm:$0xff]
    %v7170 = vld [vmem:[#allocation5 + $0x18] sm:$0xff]
    %v7171 = vld [vmem:[#allocation5 + $0x20] sm:$0xff]
    %v7172 = vld [vmem:[#allocation5 + $0x28] sm:$0xff]
    %v7173 = vld [vmem:[#allocation5 + $0x30] sm:$0xff]
    %v7174 = vld [vmem:[#allocation5 + $0x38] sm:$0xff]
    %v7175 = vld [vmem:[#allocation5 + $0x40] sm:$0xff]
    %v7176 = vld [vmem:[#allocation5 + $0x48] sm:$0xff]
    %v7177 = vld [vmem:[#allocation5 + $0x50] sm:$0xff]
    %v7178 = vld [vmem:[#allocation5 + $0x58] sm:$0xff]
    %v7179 = vld [vmem:[#allocation5 + $0x60] sm:$0xff]
    %v7180 = vld [vmem:[#allocation5 + $0x68] sm:$0xff]
    %v7181 = vld [vmem:[#allocation5 + $0x70] sm:$0xff]
    %v7182 = vld [vmem:[#allocation5 + $0x78] sm:$0xff]
    %v7183 = vld [vmem:[#allocation5 + $0x80] sm:$0xff]
    %v7184 = vld [vmem:[#allocation5 + $0x88] sm:$0xff]
    %v7185 = vld [vmem:[#allocation5 + $0x90] sm:$0xff]
    %v7186 = vld [vmem:[#allocation5 + $0x98] sm:$0xff]
    %v7187 = vld [vmem:[#allocation5 + $0xa0] sm:$0xff]
    %v7188 = vld [vmem:[#allocation5 + $0xa8] sm:$0xff]
    %v7189 = vld [vmem:[#allocation5 + $0xb0] sm:$0xff]
    %v7190 = vld [vmem:[#allocation5 + $0xb8] sm:$0xff]
    %v7191 = vld [vmem:[#allocation5 + $0xc0] sm:$0xff]
    %v7192 = vld [vmem:[#allocation5 + $0xc8] sm:$0xff]
    %v7193 = vld [vmem:[#allocation5 + $0xd0] sm:$0xff]
    %v7194 = vld [vmem:[#allocation5 + $0xd8] sm:$0xff]
    %v7195 = vld [vmem:[#allocation5 + $0xe0] sm:$0xff]
    %v7196 = vld [vmem:[#allocation5 + $0xe8] sm:$0xff]
    %v7197 = vld [vmem:[#allocation5 + $0xf0] sm:$0xff]
    %v7198 = vld [vmem:[#allocation5 + $0xf8] sm:$0xff]
    %v7199 = vld [vmem:[%s3] sm:$0xff]
    %v7200 = vld [vmem:[%s3 + $0x8] sm:$0xff]
    %v7201 = vld [vmem:[%s3 + $0x10] sm:$0xff]
    %v7202 = vld [vmem:[%s3 + $0x18] sm:$0xff]
    %v7203 = vld [vmem:[%s3 + $0x20] sm:$0xff]
    %v7204 = vld [vmem:[%s3 + $0x28] sm:$0xff]
    %v7205 = vld [vmem:[%s3 + $0x30] sm:$0xff]
    %v7206 = vld [vmem:[%s3 + $0x38] sm:$0xff]
    %v7207 = vld [vmem:[%s3 + $0x40] sm:$0xff]
    %v7208 = vld [vmem:[%s3 + $0x48] sm:$0xff]
    %v7209 = vld [vmem:[%s3 + $0x50] sm:$0xff]
    %v7210 = vld [vmem:[%s3 + $0x58] sm:$0xff]
    %v7211 = vld [vmem:[%s3 + $0x60] sm:$0xff]
    %v7212 = vld [vmem:[%s3 + $0x68] sm:$0xff]
    %v7213 = vld [vmem:[%s3 + $0x70] sm:$0xff]
    %v7214 = vld [vmem:[%s3 + $0x78] sm:$0xff]
    %v7215 = vld [vmem:[%s3 + $0x80] sm:$0xff]
    %v7216 = vld [vmem:[%s3 + $0x88] sm:$0xff]
    %v7217 = vld [vmem:[%s4] sm:$0x1]
    %v7219 = vperm.slane %v7217, 0
    %v7222 = vsel %vm143, %v7168, 0
    %v7225 = vsel %vm143, %v7170, 0
    %v7228 = vsel %vm143, %v7172, 0
    %v7231 = vsel %vm143, %v7174, 0
    %v7234 = vsel %vm143, %v7176, 0
    %v7237 = vsel %vm143, %v7178, 0
    %v7240 = vsel %vm143, %v7180, 0
    %v7243 = vsel %vm143, %v7182, 0
    %v7246 = vsel %vm143, %v7184, 0
    %v7249 = vsel %vm143, %v7186, 0
    %v7252 = vsel %vm143, %v7188, 0
    %v7255 = vsel %vm143, %v7190, 0
    %v7258 = vsel %vm143, %v7192, 0
    %v7261 = vsel %vm143, %v7194, 0
    %v7264 = vsel %vm143, %v7196, 0
    %v7267 = vsel %vm143, %v7198, 0
    %7269 = vmatpush.msra.mxu0 %v7214
    %7270 = vmatpush.msra.mxu0 %v7213
    %7271 = vmatpush.msra.mxu0 %v7212
    %7272 = vmatpush.msra.mxu0 %v7211
    %7273 = vmatpush.msra.mxu0 %v7210
    %7274 = vmatpush.msra.mxu0 %v7209
    %7275 = vmatpush.msra.mxu0 %v7208
    %7276 = vmatpush.msra.mxu0 %v7207
    %7277 = vmatpush.msra.mxu0 %v7206
    %7278 = vmatpush.msra.mxu0 %v7205
    %7279 = vmatpush.msra.mxu0 %v7204
    %7280 = vmatpush.msra.mxu0 %v7203
    %7281 = vmatpush.msra.mxu0 %v7202
    %7282 = vmatpush.msra.mxu0 %v7201
    %7283 = vmatpush.msra.mxu0 %v7200
    %7284 = vmatpush.msra.mxu0 %v7199
    %7285 = vmatmul.f32.gmra.mxu0 %v7167
    %v7286 = vpop.f32.mrf.mxu0
    %v7287 = vadd.f32 %v7219, %v7286
    %7288 = vmatmul.f32.gmra.mxu0 %v7169
    %v7289 = vpop.f32.mrf.mxu0
    %v7290 = vadd.f32 %v7219, %v7289
    %7291 = vmatmul.f32.gmra.mxu0 %v7171
    %v7292 = vpop.f32.mrf.mxu0
    %v7293 = vadd.f32 %v7219, %v7292
    %7294 = vmatmul.f32.gmra.mxu0 %v7173
    %v7295 = vpop.f32.mrf.mxu0
    %v7296 = vadd.f32 %v7219, %v7295
    %7297 = vmatmul.f32.gmra.mxu0 %v7175
    %v7298 = vpop.f32.mrf.mxu0
    %v7299 = vadd.f32 %v7219, %v7298
    %7300 = vmatmul.f32.gmra.mxu0 %v7177
    %v7301 = vpop.f32.mrf.mxu0
    %v7302 = vadd.f32 %v7219, %v7301
    %7303 = vmatmul.f32.gmra.mxu0 %v7179
    %v7304 = vpop.f32.mrf.mxu0
    %v7305 = vadd.f32 %v7219, %v7304
    %7306 = vmatmul.f32.gmra.mxu0 %v7181
    %v7307 = vpop.f32.mrf.mxu0
    %v7308 = vadd.f32 %v7219, %v7307
    %7309 = vmatmul.f32.gmra.mxu0 %v7183
    %v7310 = vpop.f32.mrf.mxu0
    %v7311 = vadd.f32 %v7219, %v7310
    %7312 = vmatmul.f32.gmra.mxu0 %v7185
    %v7313 = vpop.f32.mrf.mxu0
    %v7314 = vadd.f32 %v7219, %v7313
    %7315 = vmatmul.f32.gmra.mxu0 %v7187
    %v7316 = vpop.f32.mrf.mxu0
    %v7317 = vadd.f32 %v7219, %v7316
    %7318 = vmatmul.f32.gmra.mxu0 %v7189
    %v7319 = vpop.f32.mrf.mxu0
    %v7320 = vadd.f32 %v7219, %v7319
    %7321 = vmatmul.f32.gmra.mxu0 %v7191
    %v7322 = vpop.f32.mrf.mxu0
    %v7323 = vadd.f32 %v7219, %v7322
    %7324 = vmatmul.f32.gmra.mxu0 %v7193
    %v7325 = vpop.f32.mrf.mxu0
    %v7326 = vadd.f32 %v7219, %v7325
    %7327 = vmatmul.f32.gmra.mxu0 %v7195
    %v7328 = vpop.f32.mrf.mxu0
    %v7329 = vadd.f32 %v7219, %v7328
    %7330 = vmatmul.f32.gmra.mxu0 %v7197
    %v7331 = vpop.f32.mrf.mxu0
    %v7332 = vadd.f32 %v7219, %v7331
    %7333 = vdwg.mxu0
    %7334 = vmatpush.msra.mxu0 0.0
    %7335 = vmatpush.msra.mxu0 0.0
    %7336 = vmatpush.msra.mxu0 0.0
    %7337 = vmatpush.msra.mxu0 0.0
    %7338 = vmatpush.msra.mxu0 0.0
    %7339 = vmatpush.msra.mxu0 0.0
    %7340 = vmatpush.msra.mxu0 0.0
    %7341 = vmatpush.msra.mxu0 0.0
    %7342 = vmatpush.msra.mxu0 0.0
    %7343 = vmatpush.msra.mxu0 0.0
    %7344 = vmatpush.msra.mxu0 0.0
    %7345 = vmatpush.msra.mxu0 0.0
    %7346 = vmatpush.msra.mxu0 0.0
    %7347 = vmatpush.msra.mxu0 0.0
    %7348 = vmatpush.msra.mxu0 %v7216
    %7349 = vmatpush.msra.mxu0 %v7215
    %7350 = vmatmul.f32.gmra.mxu0 %v7222
    %v7351 = vpop.f32.mrf.mxu0
    %v7352 = vadd.f32 %v7287, %v7351
    %7353 = vmatmul.f32.gmra.mxu0 %v7225
    %v7354 = vpop.f32.mrf.mxu0
    %v7355 = vadd.f32 %v7290, %v7354
    %7356 = vmatmul.f32.gmra.mxu0 %v7228
    %v7357 = vpop.f32.mrf.mxu0
    %v7358 = vadd.f32 %v7293, %v7357
    %7359 = vmatmul.f32.gmra.mxu0 %v7231
    %v7360 = vpop.f32.mrf.mxu0
    %v7361 = vadd.f32 %v7296, %v7360
    %7362 = vmatmul.f32.gmra.mxu0 %v7234
    %v7363 = vpop.f32.mrf.mxu0
    %v7364 = vadd.f32 %v7299, %v7363
    %7365 = vmatmul.f32.gmra.mxu0 %v7237
    %v7366 = vpop.f32.mrf.mxu0
    %v7367 = vadd.f32 %v7302, %v7366
    %7368 = vmatmul.f32.gmra.mxu0 %v7240
    %v7369 = vpop.f32.mrf.mxu0
    %v7370 = vadd.f32 %v7305, %v7369
    %7371 = vmatmul.f32.gmra.mxu0 %v7243
    %v7372 = vpop.f32.mrf.mxu0
    %v7373 = vadd.f32 %v7308, %v7372
    %7374 = vmatmul.f32.gmra.mxu0 %v7246
    %v7375 = vpop.f32.mrf.mxu0
    %v7376 = vadd.f32 %v7311, %v7375
    %7377 = vmatmul.f32.gmra.mxu0 %v7249
    %v7378 = vpop.f32.mrf.mxu0
    %v7379 = vadd.f32 %v7314, %v7378
    %7380 = vmatmul.f32.gmra.mxu0 %v7252
    %v7381 = vpop.f32.mrf.mxu0
    %v7382 = vadd.f32 %v7317, %v7381
    %7383 = vmatmul.f32.gmra.mxu0 %v7255
    %v7384 = vpop.f32.mrf.mxu0
    %v7385 = vadd.f32 %v7320, %v7384
    %7386 = vmatmul.f32.gmra.mxu0 %v7258
    %v7387 = vpop.f32.mrf.mxu0
    %v7388 = vadd.f32 %v7323, %v7387
    %7389 = vmatmul.f32.gmra.mxu0 %v7261
    %v7390 = vpop.f32.mrf.mxu0
    %v7391 = vadd.f32 %v7326, %v7390
    %7392 = vmatmul.f32.gmra.mxu0 %v7264
    %v7393 = vpop.f32.mrf.mxu0
    %v7394 = vadd.f32 %v7329, %v7393
    %7395 = vmatmul.f32.gmra.mxu0 %v7267
    %v7396 = vpop.f32.mrf.mxu0
    %v7397 = vadd.f32 %v7332, %v7396
    %7398 = vdwg.mxu0
    %v7399 = vmax.f32 %v7352, 0.0
    %v7400 = vmax.f32 %v7355, 0.0
    %v7401 = vmax.f32 %v7358, 0.0
    %v7402 = vmax.f32 %v7361, 0.0
    %v7403 = vmax.f32 %v7364, 0.0
    %v7404 = vmax.f32 %v7367, 0.0
    %v7405 = vmax.f32 %v7370, 0.0
    %v7406 = vmax.f32 %v7373, 0.0
    %v7407 = vmax.f32 %v7376, 0.0
    %v7408 = vmax.f32 %v7379, 0.0
    %v7409 = vmax.f32 %v7382, 0.0
    %v7410 = vmax.f32 %v7385, 0.0
    %v7411 = vmax.f32 %v7388, 0.0
    %v7412 = vmax.f32 %v7391, 0.0
    %v7413 = vmax.f32 %v7394, 0.0
    %v7414 = vmax.f32 %v7397, 0.0
    %v7431 = vrot.slane %v7399, 2
    %v7432 = vrot.slane %v7399, 4
    %v7433 = vrot.slane %v7399, 6
    %v7434 = vrot.slane %v7400, 2
    %v7435 = vrot.slane %v7400, 4
    %v7436 = vrot.slane %v7400, 6
    %v7437 = vrot.slane %v7401, 2
    %v7438 = vrot.slane %v7401, 4
    %v7439 = vrot.slane %v7401, 6
    %v7440 = vrot.slane %v7402, 2
    %v7441 = vrot.slane %v7402, 4
    %v7442 = vrot.slane %v7402, 6
    %v7443 = vrot.slane %v7403, 2
    %v7444 = vrot.slane %v7403, 4
    %v7445 = vrot.slane %v7403, 6
    %v7446 = vrot.slane %v7404, 2
    %v7447 = vrot.slane %v7404, 4
    %v7448 = vrot.slane %v7404, 6
    %v7449 = vrot.slane %v7405, 2
    %v7450 = vrot.slane %v7405, 4
    %v7451 = vrot.slane %v7405, 6
    %v7452 = vrot.slane %v7406, 2
    %v7453 = vrot.slane %v7406, 4
    %v7454 = vrot.slane %v7406, 6
    %v7455 = vrot.slane %v7407, 2
    %v7456 = vrot.slane %v7407, 4
    %v7457 = vrot.slane %v7407, 6
    %v7458 = vrot.slane %v7408, 2
    %v7459 = vrot.slane %v7408, 4
    %v7460 = vrot.slane %v7408, 6
    %v7461 = vrot.slane %v7409, 2
    %v7462 = vrot.slane %v7409, 4
    %v7463 = vrot.slane %v7409, 6
    %v7464 = vrot.slane %v7410, 2
    %v7465 = vrot.slane %v7410, 4
    %v7466 = vrot.slane %v7410, 6
    %v7467 = vrot.slane %v7411, 2
    %v7468 = vrot.slane %v7411, 4
    %v7469 = vrot.slane %v7411, 6
    %v7470 = vrot.slane %v7412, 2
    %v7471 = vrot.slane %v7412, 4
    %v7472 = vrot.slane %v7412, 6
    %v7473 = vrot.slane %v7413, 2
    %v7474 = vrot.slane %v7413, 4
    %v7475 = vrot.slane %v7413, 6
    %v7476 = vrot.slane %v7414, 2
    %v7477 = vrot.slane %v7414, 4
    %v7478 = vrot.slane %v7414, 6
    %vm7527 = vcmask 254976
    %v7528 = vsel %vm7527, %v7399, -inf
    %v7529 = vrot.slane %v7528, 4
    %v7530 = vmax.f32 %v7528, %v7529
    %v7531 = vrot.slane %v7530, 2
    %v7532 = vmax.f32 %v7530, %v7531
    %v7533 = vrot.slane %v7532, 1
    %v7534 = vmax.f32 %v7532, %v7533
    %v7535 = vsel %vm7527, %v7431, -inf
    %v7536 = vrot.slane %v7535, 4
    %v7537 = vmax.f32 %v7535, %v7536
    %v7538 = vrot.slane %v7537, 2
    %v7539 = vmax.f32 %v7537, %v7538
    %v7540 = vrot.slane %v7539, 1
    %v7541 = vmax.f32 %v7539, %v7540
    %v7542 = vsel %vm7527, %v7432, -inf
    %v7543 = vrot.slane %v7542, 4
    %v7544 = vmax.f32 %v7542, %v7543
    %v7545 = vrot.slane %v7544, 2
    %v7546 = vmax.f32 %v7544, %v7545
    %v7547 = vrot.slane %v7546, 1
    %v7548 = vmax.f32 %v7546, %v7547
    %v7549 = vsel %vm7527, %v7433, -inf
    %v7550 = vrot.slane %v7549, 4
    %v7551 = vmax.f32 %v7549, %v7550
    %v7552 = vrot.slane %v7551, 2
    %v7553 = vmax.f32 %v7551, %v7552
    %v7554 = vrot.slane %v7553, 1
    %v7555 = vmax.f32 %v7553, %v7554
    %v7556 = vsel %vm7527, %v7400, -inf
    %v7557 = vrot.slane %v7556, 4
    %v7558 = vmax.f32 %v7556, %v7557
    %v7559 = vrot.slane %v7558, 2
    %v7560 = vmax.f32 %v7558, %v7559
    %v7561 = vrot.slane %v7560, 1
    %v7562 = vmax.f32 %v7560, %v7561
    %v7563 = vsel %vm7527, %v7434, -inf
    %v7564 = vrot.slane %v7563, 4
    %v7565 = vmax.f32 %v7563, %v7564
    %v7566 = vrot.slane %v7565, 2
    %v7567 = vmax.f32 %v7565, %v7566
    %v7568 = vrot.slane %v7567, 1
    %v7569 = vmax.f32 %v7567, %v7568
    %v7570 = vsel %vm7527, %v7435, -inf
    %v7571 = vrot.slane %v7570, 4
    %v7572 = vmax.f32 %v7570, %v7571
    %v7573 = vrot.slane %v7572, 2
    %v7574 = vmax.f32 %v7572, %v7573
    %v7575 = vrot.slane %v7574, 1
    %v7576 = vmax.f32 %v7574, %v7575
    %v7577 = vsel %vm7527, %v7436, -inf
    %v7578 = vrot.slane %v7577, 4
    %v7579 = vmax.f32 %v7577, %v7578
    %v7580 = vrot.slane %v7579, 2
    %v7581 = vmax.f32 %v7579, %v7580
    %v7582 = vrot.slane %v7581, 1
    %v7583 = vmax.f32 %v7581, %v7582
    %v7584 = vsel %vm7527, %v7401, -inf
    %v7585 = vrot.slane %v7584, 4
    %v7586 = vmax.f32 %v7584, %v7585
    %v7587 = vrot.slane %v7586, 2
    %v7588 = vmax.f32 %v7586, %v7587
    %v7589 = vrot.slane %v7588, 1
    %v7590 = vmax.f32 %v7588, %v7589
    %v7591 = vsel %vm7527, %v7437, -inf
    %v7592 = vrot.slane %v7591, 4
    %v7593 = vmax.f32 %v7591, %v7592
    %v7594 = vrot.slane %v7593, 2
    %v7595 = vmax.f32 %v7593, %v7594
    %v7596 = vrot.slane %v7595, 1
    %v7597 = vmax.f32 %v7595, %v7596
    %v7598 = vsel %vm7527, %v7438, -inf
    %v7599 = vrot.slane %v7598, 4
    %v7600 = vmax.f32 %v7598, %v7599
    %v7601 = vrot.slane %v7600, 2
    %v7602 = vmax.f32 %v7600, %v7601
    %v7603 = vrot.slane %v7602, 1
    %v7604 = vmax.f32 %v7602, %v7603
    %v7605 = vsel %vm7527, %v7439, -inf
    %v7606 = vrot.slane %v7605, 4
    %v7607 = vmax.f32 %v7605, %v7606
    %v7608 = vrot.slane %v7607, 2
    %v7609 = vmax.f32 %v7607, %v7608
    %v7610 = vrot.slane %v7609, 1
    %v7611 = vmax.f32 %v7609, %v7610
    %v7612 = vsel %vm7527, %v7402, -inf
    %v7613 = vrot.slane %v7612, 4
    %v7614 = vmax.f32 %v7612, %v7613
    %v7615 = vrot.slane %v7614, 2
    %v7616 = vmax.f32 %v7614, %v7615
    %v7617 = vrot.slane %v7616, 1
    %v7618 = vmax.f32 %v7616, %v7617
    %v7619 = vsel %vm7527, %v7440, -inf
    %v7620 = vrot.slane %v7619, 4
    %v7621 = vmax.f32 %v7619, %v7620
    %v7622 = vrot.slane %v7621, 2
    %v7623 = vmax.f32 %v7621, %v7622
    %v7624 = vrot.slane %v7623, 1
    %v7625 = vmax.f32 %v7623, %v7624
    %v7626 = vsel %vm7527, %v7441, -inf
    %v7627 = vrot.slane %v7626, 4
    %v7628 = vmax.f32 %v7626, %v7627
    %v7629 = vrot.slane %v7628, 2
    %v7630 = vmax.f32 %v7628, %v7629
    %v7631 = vrot.slane %v7630, 1
    %v7632 = vmax.f32 %v7630, %v7631
    %v7633 = vsel %vm7527, %v7442, -inf
    %v7634 = vrot.slane %v7633, 4
    %v7635 = vmax.f32 %v7633, %v7634
    %v7636 = vrot.slane %v7635, 2
    %v7637 = vmax.f32 %v7635, %v7636
    %v7638 = vrot.slane %v7637, 1
    %v7639 = vmax.f32 %v7637, %v7638
    %v7640 = vsel %vm7527, %v7403, -inf
    %v7641 = vrot.slane %v7640, 4
    %v7642 = vmax.f32 %v7640, %v7641
    %v7643 = vrot.slane %v7642, 2
    %v7644 = vmax.f32 %v7642, %v7643
    %v7645 = vrot.slane %v7644, 1
    %v7646 = vmax.f32 %v7644, %v7645
    %v7647 = vsel %vm7527, %v7443, -inf
    %v7648 = vrot.slane %v7647, 4
    %v7649 = vmax.f32 %v7647, %v7648
    %v7650 = vrot.slane %v7649, 2
    %v7651 = vmax.f32 %v7649, %v7650
    %v7652 = vrot.slane %v7651, 1
    %v7653 = vmax.f32 %v7651, %v7652
    %v7654 = vsel %vm7527, %v7444, -inf
    %v7655 = vrot.slane %v7654, 4
    %v7656 = vmax.f32 %v7654, %v7655
    %v7657 = vrot.slane %v7656, 2
    %v7658 = vmax.f32 %v7656, %v7657
    %v7659 = vrot.slane %v7658, 1
    %v7660 = vmax.f32 %v7658, %v7659
    %v7661 = vsel %vm7527, %v7445, -inf
    %v7662 = vrot.slane %v7661, 4
    %v7663 = vmax.f32 %v7661, %v7662
    %v7664 = vrot.slane %v7663, 2
    %v7665 = vmax.f32 %v7663, %v7664
    %v7666 = vrot.slane %v7665, 1
    %v7667 = vmax.f32 %v7665, %v7666
    %v7668 = vsel %vm7527, %v7404, -inf
    %v7669 = vrot.slane %v7668, 4
    %v7670 = vmax.f32 %v7668, %v7669
    %v7671 = vrot.slane %v7670, 2
    %v7672 = vmax.f32 %v7670, %v7671
    %v7673 = vrot.slane %v7672, 1
    %v7674 = vmax.f32 %v7672, %v7673
    %v7675 = vsel %vm7527, %v7446, -inf
    %v7676 = vrot.slane %v7675, 4
    %v7677 = vmax.f32 %v7675, %v7676
    %v7678 = vrot.slane %v7677, 2
    %v7679 = vmax.f32 %v7677, %v7678
    %v7680 = vrot.slane %v7679, 1
    %v7681 = vmax.f32 %v7679, %v7680
    %v7682 = vsel %vm7527, %v7447, -inf
    %v7683 = vrot.slane %v7682, 4
    %v7684 = vmax.f32 %v7682, %v7683
    %v7685 = vrot.slane %v7684, 2
    %v7686 = vmax.f32 %v7684, %v7685
    %v7687 = vrot.slane %v7686, 1
    %v7688 = vmax.f32 %v7686, %v7687
    %v7689 = vsel %vm7527, %v7448, -inf
    %v7690 = vrot.slane %v7689, 4
    %v7691 = vmax.f32 %v7689, %v7690
    %v7692 = vrot.slane %v7691, 2
    %v7693 = vmax.f32 %v7691, %v7692
    %v7694 = vrot.slane %v7693, 1
    %v7695 = vmax.f32 %v7693, %v7694
    %v7696 = vsel %vm7527, %v7405, -inf
    %v7697 = vrot.slane %v7696, 4
    %v7698 = vmax.f32 %v7696, %v7697
    %v7699 = vrot.slane %v7698, 2
    %v7700 = vmax.f32 %v7698, %v7699
    %v7701 = vrot.slane %v7700, 1
    %v7702 = vmax.f32 %v7700, %v7701
    %v7703 = vsel %vm7527, %v7449, -inf
    %v7704 = vrot.slane %v7703, 4
    %v7705 = vmax.f32 %v7703, %v7704
    %v7706 = vrot.slane %v7705, 2
    %v7707 = vmax.f32 %v7705, %v7706
    %v7708 = vrot.slane %v7707, 1
    %v7709 = vmax.f32 %v7707, %v7708
    %v7710 = vsel %vm7527, %v7450, -inf
    %v7711 = vrot.slane %v7710, 4
    %v7712 = vmax.f32 %v7710, %v7711
    %v7713 = vrot.slane %v7712, 2
    %v7714 = vmax.f32 %v7712, %v7713
    %v7715 = vrot.slane %v7714, 1
    %v7716 = vmax.f32 %v7714, %v7715
    %v7717 = vsel %vm7527, %v7451, -inf
    %v7718 = vrot.slane %v7717, 4
    %v7719 = vmax.f32 %v7717, %v7718
    %v7720 = vrot.slane %v7719, 2
    %v7721 = vmax.f32 %v7719, %v7720
    %v7722 = vrot.slane %v7721, 1
    %v7723 = vmax.f32 %v7721, %v7722
    %v7724 = vsel %vm7527, %v7406, -inf
    %v7725 = vrot.slane %v7724, 4
    %v7726 = vmax.f32 %v7724, %v7725
    %v7727 = vrot.slane %v7726, 2
    %v7728 = vmax.f32 %v7726, %v7727
    %v7729 = vrot.slane %v7728, 1
    %v7730 = vmax.f32 %v7728, %v7729
    %v7731 = vsel %vm7527, %v7452, -inf
    %v7732 = vrot.slane %v7731, 4
    %v7733 = vmax.f32 %v7731, %v7732
    %v7734 = vrot.slane %v7733, 2
    %v7735 = vmax.f32 %v7733, %v7734
    %v7736 = vrot.slane %v7735, 1
    %v7737 = vmax.f32 %v7735, %v7736
    %v7738 = vsel %vm7527, %v7453, -inf
    %v7739 = vrot.slane %v7738, 4
    %v7740 = vmax.f32 %v7738, %v7739
    %v7741 = vrot.slane %v7740, 2
    %v7742 = vmax.f32 %v7740, %v7741
    %v7743 = vrot.slane %v7742, 1
    %v7744 = vmax.f32 %v7742, %v7743
    %v7745 = vsel %vm7527, %v7454, -inf
    %v7746 = vrot.slane %v7745, 4
    %v7747 = vmax.f32 %v7745, %v7746
    %v7748 = vrot.slane %v7747, 2
    %v7749 = vmax.f32 %v7747, %v7748
    %v7750 = vrot.slane %v7749, 1
    %v7751 = vmax.f32 %v7749, %v7750
    %v7752 = vsel %vm7527, %v7407, -inf
    %v7753 = vrot.slane %v7752, 4
    %v7754 = vmax.f32 %v7752, %v7753
    %v7755 = vrot.slane %v7754, 2
    %v7756 = vmax.f32 %v7754, %v7755
    %v7757 = vrot.slane %v7756, 1
    %v7758 = vmax.f32 %v7756, %v7757
    %v7759 = vsel %vm7527, %v7455, -inf
    %v7760 = vrot.slane %v7759, 4
    %v7761 = vmax.f32 %v7759, %v7760
    %v7762 = vrot.slane %v7761, 2
    %v7763 = vmax.f32 %v7761, %v7762
    %v7764 = vrot.slane %v7763, 1
    %v7765 = vmax.f32 %v7763, %v7764
    %v7766 = vsel %vm7527, %v7456, -inf
    %v7767 = vrot.slane %v7766, 4
    %v7768 = vmax.f32 %v7766, %v7767
    %v7769 = vrot.slane %v7768, 2
    %v7770 = vmax.f32 %v7768, %v7769
    %v7771 = vrot.slane %v7770, 1
    %v7772 = vmax.f32 %v7770, %v7771
    %v7773 = vsel %vm7527, %v7457, -inf
    %v7774 = vrot.slane %v7773, 4
    %v7775 = vmax.f32 %v7773, %v7774
    %v7776 = vrot.slane %v7775, 2
    %v7777 = vmax.f32 %v7775, %v7776
    %v7778 = vrot.slane %v7777, 1
    %v7779 = vmax.f32 %v7777, %v7778
    %v7780 = vsel %vm7527, %v7408, -inf
    %v7781 = vrot.slane %v7780, 4
    %v7782 = vmax.f32 %v7780, %v7781
    %v7783 = vrot.slane %v7782, 2
    %v7784 = vmax.f32 %v7782, %v7783
    %v7785 = vrot.slane %v7784, 1
    %v7786 = vmax.f32 %v7784, %v7785
    %v7787 = vsel %vm7527, %v7458, -inf
    %v7788 = vrot.slane %v7787, 4
    %v7789 = vmax.f32 %v7787, %v7788
    %v7790 = vrot.slane %v7789, 2
    %v7791 = vmax.f32 %v7789, %v7790
    %v7792 = vrot.slane %v7791, 1
    %v7793 = vmax.f32 %v7791, %v7792
    %v7794 = vsel %vm7527, %v7459, -inf
    %v7795 = vrot.slane %v7794, 4
    %v7796 = vmax.f32 %v7794, %v7795
    %v7797 = vrot.slane %v7796, 2
    %v7798 = vmax.f32 %v7796, %v7797
    %v7799 = vrot.slane %v7798, 1
    %v7800 = vmax.f32 %v7798, %v7799
    %v7801 = vsel %vm7527, %v7460, -inf
    %v7802 = vrot.slane %v7801, 4
    %v7803 = vmax.f32 %v7801, %v7802
    %v7804 = vrot.slane %v7803, 2
    %v7805 = vmax.f32 %v7803, %v7804
    %v7806 = vrot.slane %v7805, 1
    %v7807 = vmax.f32 %v7805, %v7806
    %v7808 = vsel %vm7527, %v7409, -inf
    %v7809 = vrot.slane %v7808, 4
    %v7810 = vmax.f32 %v7808, %v7809
    %v7811 = vrot.slane %v7810, 2
    %v7812 = vmax.f32 %v7810, %v7811
    %v7813 = vrot.slane %v7812, 1
    %v7814 = vmax.f32 %v7812, %v7813
    %v7815 = vsel %vm7527, %v7461, -inf
    %v7816 = vrot.slane %v7815, 4
    %v7817 = vmax.f32 %v7815, %v7816
    %v7818 = vrot.slane %v7817, 2
    %v7819 = vmax.f32 %v7817, %v7818
    %v7820 = vrot.slane %v7819, 1
    %v7821 = vmax.f32 %v7819, %v7820
    %v7822 = vsel %vm7527, %v7462, -inf
    %v7823 = vrot.slane %v7822, 4
    %v7824 = vmax.f32 %v7822, %v7823
    %v7825 = vrot.slane %v7824, 2
    %v7826 = vmax.f32 %v7824, %v7825
    %v7827 = vrot.slane %v7826, 1
    %v7828 = vmax.f32 %v7826, %v7827
    %v7829 = vsel %vm7527, %v7463, -inf
    %v7830 = vrot.slane %v7829, 4
    %v7831 = vmax.f32 %v7829, %v7830
    %v7832 = vrot.slane %v7831, 2
    %v7833 = vmax.f32 %v7831, %v7832
    %v7834 = vrot.slane %v7833, 1
    %v7835 = vmax.f32 %v7833, %v7834
    %v7836 = vsel %vm7527, %v7410, -inf
    %v7837 = vrot.slane %v7836, 4
    %v7838 = vmax.f32 %v7836, %v7837
    %v7839 = vrot.slane %v7838, 2
    %v7840 = vmax.f32 %v7838, %v7839
    %v7841 = vrot.slane %v7840, 1
    %v7842 = vmax.f32 %v7840, %v7841
    %v7843 = vsel %vm7527, %v7464, -inf
    %v7844 = vrot.slane %v7843, 4
    %v7845 = vmax.f32 %v7843, %v7844
    %v7846 = vrot.slane %v7845, 2
    %v7847 = vmax.f32 %v7845, %v7846
    %v7848 = vrot.slane %v7847, 1
    %v7849 = vmax.f32 %v7847, %v7848
    %v7850 = vsel %vm7527, %v7465, -inf
    %v7851 = vrot.slane %v7850, 4
    %v7852 = vmax.f32 %v7850, %v7851
    %v7853 = vrot.slane %v7852, 2
    %v7854 = vmax.f32 %v7852, %v7853
    %v7855 = vrot.slane %v7854, 1
    %v7856 = vmax.f32 %v7854, %v7855
    %v7857 = vsel %vm7527, %v7466, -inf
    %v7858 = vrot.slane %v7857, 4
    %v7859 = vmax.f32 %v7857, %v7858
    %v7860 = vrot.slane %v7859, 2
    %v7861 = vmax.f32 %v7859, %v7860
    %v7862 = vrot.slane %v7861, 1
    %v7863 = vmax.f32 %v7861, %v7862
    %v7864 = vsel %vm7527, %v7411, -inf
    %v7865 = vrot.slane %v7864, 4
    %v7866 = vmax.f32 %v7864, %v7865
    %v7867 = vrot.slane %v7866, 2
    %v7868 = vmax.f32 %v7866, %v7867
    %v7869 = vrot.slane %v7868, 1
    %v7870 = vmax.f32 %v7868, %v7869
    %v7871 = vsel %vm7527, %v7467, -inf
    %v7872 = vrot.slane %v7871, 4
    %v7873 = vmax.f32 %v7871, %v7872
    %v7874 = vrot.slane %v7873, 2
    %v7875 = vmax.f32 %v7873, %v7874
    %v7876 = vrot.slane %v7875, 1
    %v7877 = vmax.f32 %v7875, %v7876
    %v7878 = vsel %vm7527, %v7468, -inf
    %v7879 = vrot.slane %v7878, 4
    %v7880 = vmax.f32 %v7878, %v7879
    %v7881 = vrot.slane %v7880, 2
    %v7882 = vmax.f32 %v7880, %v7881
    %v7883 = vrot.slane %v7882, 1
    %v7884 = vmax.f32 %v7882, %v7883
    %v7885 = vsel %vm7527, %v7469, -inf
    %v7886 = vrot.slane %v7885, 4
    %v7887 = vmax.f32 %v7885, %v7886
    %v7888 = vrot.slane %v7887, 2
    %v7889 = vmax.f32 %v7887, %v7888
    %v7890 = vrot.slane %v7889, 1
    %v7891 = vmax.f32 %v7889, %v7890
    %v7892 = vsel %vm7527, %v7412, -inf
    %v7893 = vrot.slane %v7892, 4
    %v7894 = vmax.f32 %v7892, %v7893
    %v7895 = vrot.slane %v7894, 2
    %v7896 = vmax.f32 %v7894, %v7895
    %v7897 = vrot.slane %v7896, 1
    %v7898 = vmax.f32 %v7896, %v7897
    %v7899 = vsel %vm7527, %v7470, -inf
    %v7900 = vrot.slane %v7899, 4
    %v7901 = vmax.f32 %v7899, %v7900
    %v7902 = vrot.slane %v7901, 2
    %v7903 = vmax.f32 %v7901, %v7902
    %v7904 = vrot.slane %v7903, 1
    %v7905 = vmax.f32 %v7903, %v7904
    %v7906 = vsel %vm7527, %v7471, -inf
    %v7907 = vrot.slane %v7906, 4
    %v7908 = vmax.f32 %v7906, %v7907
    %v7909 = vrot.slane %v7908, 2
    %v7910 = vmax.f32 %v7908, %v7909
    %v7911 = vrot.slane %v7910, 1
    %v7912 = vmax.f32 %v7910, %v7911
    %v7913 = vsel %vm7527, %v7472, -inf
    %v7914 = vrot.slane %v7913, 4
    %v7915 = vmax.f32 %v7913, %v7914
    %v7916 = vrot.slane %v7915, 2
    %v7917 = vmax.f32 %v7915, %v7916
    %v7918 = vrot.slane %v7917, 1
    %v7919 = vmax.f32 %v7917, %v7918
    %v7920 = vsel %vm7527, %v7413, -inf
    %v7921 = vrot.slane %v7920, 4
    %v7922 = vmax.f32 %v7920, %v7921
    %v7923 = vrot.slane %v7922, 2
    %v7924 = vmax.f32 %v7922, %v7923
    %v7925 = vrot.slane %v7924, 1
    %v7926 = vmax.f32 %v7924, %v7925
    %v7927 = vsel %vm7527, %v7473, -inf
    %v7928 = vrot.slane %v7927, 4
    %v7929 = vmax.f32 %v7927, %v7928
    %v7930 = vrot.slane %v7929, 2
    %v7931 = vmax.f32 %v7929, %v7930
    %v7932 = vrot.slane %v7931, 1
    %v7933 = vmax.f32 %v7931, %v7932
    %v7934 = vsel %vm7527, %v7474, -inf
    %v7935 = vrot.slane %v7934, 4
    %v7936 = vmax.f32 %v7934, %v7935
    %v7937 = vrot.slane %v7936, 2
    %v7938 = vmax.f32 %v7936, %v7937
    %v7939 = vrot.slane %v7938, 1
    %v7940 = vmax.f32 %v7938, %v7939
    %v7941 = vsel %vm7527, %v7475, -inf
    %v7942 = vrot.slane %v7941, 4
    %v7943 = vmax.f32 %v7941, %v7942
    %v7944 = vrot.slane %v7943, 2
    %v7945 = vmax.f32 %v7943, %v7944
    %v7946 = vrot.slane %v7945, 1
    %v7947 = vmax.f32 %v7945, %v7946
    %v7948 = vsel %vm7527, %v7414, -inf
    %v7949 = vrot.slane %v7948, 4
    %v7950 = vmax.f32 %v7948, %v7949
    %v7951 = vrot.slane %v7950, 2
    %v7952 = vmax.f32 %v7950, %v7951
    %v7953 = vrot.slane %v7952, 1
    %v7954 = vmax.f32 %v7952, %v7953
    %v7955 = vsel %vm7527, %v7476, -inf
    %v7956 = vrot.slane %v7955, 4
    %v7957 = vmax.f32 %v7955, %v7956
    %v7958 = vrot.slane %v7957, 2
    %v7959 = vmax.f32 %v7957, %v7958
    %v7960 = vrot.slane %v7959, 1
    %v7961 = vmax.f32 %v7959, %v7960
    %v7962 = vsel %vm7527, %v7477, -inf
    %v7963 = vrot.slane %v7962, 4
    %v7964 = vmax.f32 %v7962, %v7963
    %v7965 = vrot.slane %v7964, 2
    %v7966 = vmax.f32 %v7964, %v7965
    %v7967 = vrot.slane %v7966, 1
    %v7968 = vmax.f32 %v7966, %v7967
    %v7969 = vsel %vm7527, %v7478, -inf
    %v7970 = vrot.slane %v7969, 4
    %v7971 = vmax.f32 %v7969, %v7970
    %v7972 = vrot.slane %v7971, 2
    %v7973 = vmax.f32 %v7971, %v7972
    %v7974 = vrot.slane %v7973, 1
    %v7975 = vmax.f32 %v7973, %v7974
    %vm7976 = vcmask 261120
    %v7977 = vsel %vm7976, %v7534, -inf
    %v7978 = vsel %vm7976, %v7562, -inf
    %v7979 = vmax.f32 %v7977, %v7978
    %v7980 = vsel %vm7976, %v7541, -inf
    %v7981 = vsel %vm7976, %v7569, -inf
    %v7982 = vmax.f32 %v7980, %v7981
    %v7983 = vsel %vm7976, %v7548, -inf
    %v7984 = vsel %vm7976, %v7576, -inf
    %v7985 = vmax.f32 %v7983, %v7984
    %v7986 = vsel %vm7976, %v7555, -inf
    %v7987 = vsel %vm7976, %v7583, -inf
    %v7988 = vmax.f32 %v7986, %v7987
    %v7989 = vsel %vm7976, %v7590, -inf
    %v7990 = vsel %vm7976, %v7618, -inf
    %v7991 = vmax.f32 %v7989, %v7990
    %v7992 = vsel %vm7976, %v7597, -inf
    %v7993 = vsel %vm7976, %v7625, -inf
    %v7994 = vmax.f32 %v7992, %v7993
    %v7995 = vsel %vm7976, %v7604, -inf
    %v7996 = vsel %vm7976, %v7632, -inf
    %v7997 = vmax.f32 %v7995, %v7996
    %v7998 = vsel %vm7976, %v7611, -inf
    %v7999 = vsel %vm7976, %v7639, -inf
    %v8000 = vmax.f32 %v7998, %v7999
    %v8001 = vsel %vm7976, %v7646, -inf
    %v8002 = vsel %vm7976, %v7674, -inf
    %v8003 = vmax.f32 %v8001, %v8002
    %v8004 = vsel %vm7976, %v7653, -inf
    %v8005 = vsel %vm7976, %v7681, -inf
    %v8006 = vmax.f32 %v8004, %v8005
    %v8007 = vsel %vm7976, %v7660, -inf
    %v8008 = vsel %vm7976, %v7688, -inf
    %v8009 = vmax.f32 %v8007, %v8008
    %v8010 = vsel %vm7976, %v7667, -inf
    %v8011 = vsel %vm7976, %v7695, -inf
    %v8012 = vmax.f32 %v8010, %v8011
    %v8013 = vsel %vm7976, %v7702, -inf
    %v8014 = vsel %vm7976, %v7730, -inf
    %v8015 = vmax.f32 %v8013, %v8014
    %v8016 = vsel %vm7976, %v7709, -inf
    %v8017 = vsel %vm7976, %v7737, -inf
    %v8018 = vmax.f32 %v8016, %v8017
    %v8019 = vsel %vm7976, %v7716, -inf
    %v8020 = vsel %vm7976, %v7744, -inf
    %v8021 = vmax.f32 %v8019, %v8020
    %v8022 = vsel %vm7976, %v7723, -inf
    %v8023 = vsel %vm7976, %v7751, -inf
    %v8024 = vmax.f32 %v8022, %v8023
    %v8025 = vsel %vm7976, %v7758, -inf
    %v8026 = vsel %vm7976, %v7786, -inf
    %v8027 = vmax.f32 %v8025, %v8026
    %v8028 = vsel %vm7976, %v7765, -inf
    %v8029 = vsel %vm7976, %v7793, -inf
    %v8030 = vmax.f32 %v8028, %v8029
    %v8031 = vsel %vm7976, %v7772, -inf
    %v8032 = vsel %vm7976, %v7800, -inf
    %v8033 = vmax.f32 %v8031, %v8032
    %v8034 = vsel %vm7976, %v7779, -inf
    %v8035 = vsel %vm7976, %v7807, -inf
    %v8036 = vmax.f32 %v8034, %v8035
    %v8037 = vsel %vm7976, %v7814, -inf
    %v8038 = vsel %vm7976, %v7842, -inf
    %v8039 = vmax.f32 %v8037, %v8038
    %v8040 = vsel %vm7976, %v7821, -inf
    %v8041 = vsel %vm7976, %v7849, -inf
    %v8042 = vmax.f32 %v8040, %v8041
    %v8043 = vsel %vm7976, %v7828, -inf
    %v8044 = vsel %vm7976, %v7856, -inf
    %v8045 = vmax.f32 %v8043, %v8044
    %v8046 = vsel %vm7976, %v7835, -inf
    %v8047 = vsel %vm7976, %v7863, -inf
    %v8048 = vmax.f32 %v8046, %v8047
    %v8049 = vsel %vm7976, %v7870, -inf
    %v8050 = vsel %vm7976, %v7898, -inf
    %v8051 = vmax.f32 %v8049, %v8050
    %v8052 = vsel %vm7976, %v7877, -inf
    %v8053 = vsel %vm7976, %v7905, -inf
    %v8054 = vmax.f32 %v8052, %v8053
    %v8055 = vsel %vm7976, %v7884, -inf
    %v8056 = vsel %vm7976, %v7912, -inf
    %v8057 = vmax.f32 %v8055, %v8056
    %v8058 = vsel %vm7976, %v7891, -inf
    %v8059 = vsel %vm7976, %v7919, -inf
    %v8060 = vmax.f32 %v8058, %v8059
    %v8061 = vsel %vm7976, %v7926, -inf
    %v8062 = vsel %vm7976, %v7954, -inf
    %v8063 = vmax.f32 %v8061, %v8062
    %v8064 = vsel %vm7976, %v7933, -inf
    %v8065 = vsel %vm7976, %v7961, -inf
    %v8066 = vmax.f32 %v8064, %v8065
    %v8067 = vsel %vm7976, %v7940, -inf
    %v8068 = vsel %vm7976, %v7968, -inf
    %v8069 = vmax.f32 %v8067, %v8068
    %v8070 = vsel %vm7976, %v7947, -inf
    %v8071 = vsel %vm7976, %v7975, -inf
    %v8072 = vmax.f32 %v8070, %v8071
    %vm8073 = vcmask 253952
    %8074 = vst.msk [vmem:[#allocation6] sm:$0x1] %vm8073, %v7979
    %8076 = vrot.lane.b32.xlu0 %v7982, 32
    %v8077 = vpop.permute.xlu0 %8076
    %vm8079 = vcmask 516352
    %8080 = vst.msk [vmem:[#allocation6] sm:$0x1] %vm8079, %v8077
    %8082 = vrot.lane.b32.xlu0 %v7985, 64
    %v8083 = vpop.permute.xlu0 %8082
    %vm8085 = vcmask 778752
    %8086 = vst.msk [vmem:[#allocation6] sm:$0x1] %vm8085, %v8083
    %8088 = vrot.lane.b32.xlu0 %v7988, 96
    %v8089 = vpop.permute.xlu0 %8088
    %vm8091 = vcmask 1041152
    %8092 = vst.msk [vmem:[#allocation6] sm:$0x1] %vm8091, %v8089
    %8093 = vst.msk [vmem:[#allocation6 + $0x2] sm:$0x1] %vm8073, %v7991
    %8095 = vrot.lane.b32.xlu0 %v7994, 32
    %v8096 = vpop.permute.xlu0 %8095
    %8098 = vst.msk [vmem:[#allocation6 + $0x2] sm:$0x1] %vm8079, %v8096
    %8100 = vrot.lane.b32.xlu0 %v7997, 64
    %v8101 = vpop.permute.xlu0 %8100
    %8103 = vst.msk [vmem:[#allocation6 + $0x2] sm:$0x1] %vm8085, %v8101
    %8105 = vrot.lane.b32.xlu0 %v8000, 96
    %v8106 = vpop.permute.xlu0 %8105
    %8108 = vst.msk [vmem:[#allocation6 + $0x2] sm:$0x1] %vm8091, %v8106
    %8109 = vst.msk [vmem:[#allocation6 + $0x4] sm:$0x1] %vm8073, %v8003
    %8111 = vrot.lane.b32.xlu0 %v8006, 32
    %v8112 = vpop.permute.xlu0 %8111
    %8114 = vst.msk [vmem:[#allocation6 + $0x4] sm:$0x1] %vm8079, %v8112
    %8116 = vrot.lane.b32.xlu0 %v8009, 64
    %v8117 = vpop.permute.xlu0 %8116
    %8119 = vst.msk [vmem:[#allocation6 + $0x4] sm:$0x1] %vm8085, %v8117
    %8121 = vrot.lane.b32.xlu0 %v8012, 96
    %v8122 = vpop.permute.xlu0 %8121
    %8124 = vst.msk [vmem:[#allocation6 + $0x4] sm:$0x1] %vm8091, %v8122
    %8125 = vst.msk [vmem:[#allocation6 + $0x6] sm:$0x1] %vm8073, %v8015
    %8127 = vrot.lane.b32.xlu0 %v8018, 32
    %v8128 = vpop.permute.xlu0 %8127
    %8130 = vst.msk [vmem:[#allocation6 + $0x6] sm:$0x1] %vm8079, %v8128
    %8132 = vrot.lane.b32.xlu0 %v8021, 64
    %v8133 = vpop.permute.xlu0 %8132
    %8135 = vst.msk [vmem:[#allocation6 + $0x6] sm:$0x1] %vm8085, %v8133
    %8137 = vrot.lane.b32.xlu0 %v8024, 96
    %v8138 = vpop.permute.xlu0 %8137
    %8140 = vst.msk [vmem:[#allocation6 + $0x6] sm:$0x1] %vm8091, %v8138
    %8141 = vst.msk [vmem:[#allocation6 + $0x1] sm:$0x1] %vm8073, %v8027
    %8143 = vrot.lane.b32.xlu0 %v8030, 32
    %v8144 = vpop.permute.xlu0 %8143
    %8146 = vst.msk [vmem:[#allocation6 + $0x1] sm:$0x1] %vm8079, %v8144
    %8148 = vrot.lane.b32.xlu0 %v8033, 64
    %v8149 = vpop.permute.xlu0 %8148
    %8151 = vst.msk [vmem:[#allocation6 + $0x1] sm:$0x1] %vm8085, %v8149
    %8153 = vrot.lane.b32.xlu0 %v8036, 96
    %v8154 = vpop.permute.xlu0 %8153
    %8156 = vst.msk [vmem:[#allocation6 + $0x1] sm:$0x1] %vm8091, %v8154
    %8157 = vst.msk [vmem:[#allocation6 + $0x3] sm:$0x1] %vm8073, %v8039
    %8159 = vrot.lane.b32.xlu0 %v8042, 32
    %v8160 = vpop.permute.xlu0 %8159
    %8162 = vst.msk [vmem:[#allocation6 + $0x3] sm:$0x1] %vm8079, %v8160
    %8164 = vrot.lane.b32.xlu0 %v8045, 64
    %v8165 = vpop.permute.xlu0 %8164
    %8167 = vst.msk [vmem:[#allocation6 + $0x3] sm:$0x1] %vm8085, %v8165
    %8169 = vrot.lane.b32.xlu0 %v8048, 96
    %v8170 = vpop.permute.xlu0 %8169
    %8172 = vst.msk [vmem:[#allocation6 + $0x3] sm:$0x1] %vm8091, %v8170
    %8173 = vst.msk [vmem:[#allocation6 + $0x5] sm:$0x1] %vm8073, %v8051
    %8175 = vrot.lane.b32.xlu0 %v8054, 32
    %v8176 = vpop.permute.xlu0 %8175
    %8178 = vst.msk [vmem:[#allocation6 + $0x5] sm:$0x1] %vm8079, %v8176
    %8180 = vrot.lane.b32.xlu0 %v8057, 64
    %v8181 = vpop.permute.xlu0 %8180
    %8183 = vst.msk [vmem:[#allocation6 + $0x5] sm:$0x1] %vm8085, %v8181
    %8185 = vrot.lane.b32.xlu0 %v8060, 96
    %v8186 = vpop.permute.xlu0 %8185
    %8188 = vst.msk [vmem:[#allocation6 + $0x5] sm:$0x1] %vm8091, %v8186
    %8189 = vst.msk [vmem:[#allocation6 + $0x7] sm:$0x1] %vm8073, %v8063
    %8191 = vrot.lane.b32.xlu0 %v8066, 32
    %v8192 = vpop.permute.xlu0 %8191
    %8194 = vst.msk [vmem:[#allocation6 + $0x7] sm:$0x1] %vm8079, %v8192
    %8196 = vrot.lane.b32.xlu0 %v8069, 64
    %v8197 = vpop.permute.xlu0 %8196
    %8199 = vst.msk [vmem:[#allocation6 + $0x7] sm:$0x1] %vm8085, %v8197
    %8201 = vrot.lane.b32.xlu0 %v8072, 96
    %v8202 = vpop.permute.xlu0 %8201
    %8204 = vst.msk [vmem:[#allocation6 + $0x7] sm:$0x1] %vm8091, %v8202
    %v8205 = vld [vmem:[#allocation6] sm:$0xff]
    %v8206 = vld [vmem:[%s5] sm:$0xff]
    %v8207 = vld [vmem:[%s5 + $0x8] sm:$0xff]
    %v8208 = vld [vmem:[%s5 + $0x10] sm:$0xff]
    %v8209 = vld [vmem:[%s5 + $0x18] sm:$0xff]
    %v8210 = vld [vmem:[%s5 + $0x20] sm:$0xff]
    %v8211 = vld [vmem:[%s5 + $0x28] sm:$0xff]
    %v8212 = vld [vmem:[%s5 + $0x30] sm:$0xff]
    %v8213 = vld [vmem:[%s5 + $0x38] sm:$0xff]
    %v8214 = vld [vmem:[%s5 + $0x40] sm:$0xff]
    %v8215 = vld [vmem:[%s5 + $0x48] sm:$0xff]
    %v8216 = vld [vmem:[%s5 + $0x50] sm:$0xff]
    %v8217 = vld [vmem:[%s5 + $0x58] sm:$0xff]
    %v8218 = vld [vmem:[%s5 + $0x60] sm:$0xff]
    %v8219 = vld [vmem:[%s5 + $0x68] sm:$0xff]
    %v8220 = vld [vmem:[%s5 + $0x70] sm:$0xff]
    %v8221 = vld [vmem:[%s5 + $0x78] sm:$0xff]
    %v8222 = vld [vmem:[%s5 + $0x80] sm:$0xff]
    %v8223 = vld [vmem:[%s5 + $0x88] sm:$0xff]
    %v8224 = vld [vmem:[%s5 + $0x90] sm:$0xff]
    %v8225 = vld [vmem:[%s5 + $0x98] sm:$0xff]
    %v8226 = vld [vmem:[%s5 + $0xa0] sm:$0xff]
    %v8227 = vld [vmem:[%s5 + $0xa8] sm:$0xff]
    %v8228 = vld [vmem:[%s5 + $0xb0] sm:$0xff]
    %v8229 = vld [vmem:[%s5 + $0xb8] sm:$0xff]
    %v8230 = vld [vmem:[%s5 + $0xc0] sm:$0xff]
    %v8231 = vld [vmem:[%s5 + $0xc8] sm:$0xff]
    %v8232 = vld [vmem:[%s5 + $0xd0] sm:$0xff]
    %v8233 = vld [vmem:[%s5 + $0xd8] sm:$0xff]
    %v8234 = vld [vmem:[%s5 + $0xe0] sm:$0xff]
    %v8235 = vld [vmem:[%s5 + $0xe8] sm:$0xff]
    %v8236 = vld [vmem:[%s5 + $0xf0] sm:$0xff]
    %v8237 = vld [vmem:[%s5 + $0xf8] sm:$0xff]
    %v8238 = vld [vmem:[%s5 + $0x100] sm:$0xff]
    %v8239 = vld [vmem:[%s5 + $0x108] sm:$0xff]
    %v8240 = vld [vmem:[%s5 + $0x110] sm:$0xff]
    %v8241 = vld [vmem:[%s5 + $0x118] sm:$0xff]
    %v8242 = vld [vmem:[%s5 + $0x120] sm:$0xff]
    %v8243 = vld [vmem:[%s5 + $0x128] sm:$0xff]
    %v8244 = vld [vmem:[%s5 + $0x130] sm:$0xff]
    %v8245 = vld [vmem:[%s5 + $0x138] sm:$0xff]
    %v8246 = vld [vmem:[%s5 + $0x140] sm:$0xff]
    %v8247 = vld [vmem:[%s5 + $0x148] sm:$0xff]
    %v8248 = vld [vmem:[%s5 + $0x150] sm:$0xff]
    %v8249 = vld [vmem:[%s5 + $0x158] sm:$0xff]
    %v8250 = vld [vmem:[%s5 + $0x160] sm:$0xff]
    %v8251 = vld [vmem:[%s5 + $0x168] sm:$0xff]
    %v8252 = vld [vmem:[%s5 + $0x170] sm:$0xff]
    %v8253 = vld [vmem:[%s5 + $0x178] sm:$0xff]
    %v8254 = vld [vmem:[%s5 + $0x180] sm:$0xff]
    %v8255 = vld [vmem:[%s5 + $0x188] sm:$0xff]
    %v8256 = vld [vmem:[%s5 + $0x190] sm:$0xff]
    %v8257 = vld [vmem:[%s5 + $0x198] sm:$0xff]
    %v8258 = vld [vmem:[%s5 + $0x1a0] sm:$0xff]
    %v8259 = vld [vmem:[%s5 + $0x1a8] sm:$0xff]
    %v8260 = vld [vmem:[%s5 + $0x1b0] sm:$0xff]
    %v8261 = vld [vmem:[%s5 + $0x1b8] sm:$0xff]
    %v8262 = vld [vmem:[%s5 + $0x1c0] sm:$0xff]
    %v8263 = vld [vmem:[%s5 + $0x1c8] sm:$0xff]
    %v8264 = vld [vmem:[%s5 + $0x1d0] sm:$0xff]
    %v8265 = vld [vmem:[%s5 + $0x1d8] sm:$0xff]
    %v8266 = vld [vmem:[%s5 + $0x1e0] sm:$0xff]
    %v8267 = vld [vmem:[%s5 + $0x1e8] sm:$0xff]
    %v8268 = vld [vmem:[%s5 + $0x1f0] sm:$0xff]
    %v8269 = vld [vmem:[%s5 + $0x1f8] sm:$0xff]
    %v8270 = vld [vmem:[%s6] sm:$0x1]
    %v8272 = vperm.slane %v8270, 0
    %8275 = vst [vmem:[#allocation1] ss:$4 sm:$0xff] %v8205
    %v8276 = vld.sshfl [vmem:[#allocation1] sm:$0xff pattern:$0x73625140]
    %v8277 = vld.sshfl [vmem:[#allocation1 + $0x8] sm:$0xff pattern:$0x73625140]
    %v8278 = vld.sshfl [vmem:[#allocation1 + $0x10] sm:$0xff pattern:$0x73625140]
    %v8279 = vld.sshfl [vmem:[#allocation1 + $0x18] sm:$0xff pattern:$0x73625140]
    %8284 = vmatpush.msra.mxu0 %v8221
    %8285 = vmatpush.msra.mxu0 %v8220
    %8286 = vmatpush.msra.mxu0 %v8219
    %8287 = vmatpush.msra.mxu0 %v8218
    %8288 = vmatpush.msra.mxu0 %v8217
    %8289 = vmatpush.msra.mxu0 %v8216
    %8290 = vmatpush.msra.mxu0 %v8215
    %8291 = vmatpush.msra.mxu0 %v8214
    %8292 = vmatpush.msra.mxu0 %v8213
    %8293 = vmatpush.msra.mxu0 %v8212
    %8294 = vmatpush.msra.mxu0 %v8211
    %8295 = vmatpush.msra.mxu0 %v8210
    %8296 = vmatpush.msra.mxu0 %v8209
    %8297 = vmatpush.msra.mxu0 %v8208
    %8298 = vmatpush.msra.mxu0 %v8207
    %8299 = vmatpush.msra.mxu0 %v8206
    %8300 = vmatmul.f32.gmra.mxu0 %v8276
    %v8301 = vpop.f32.mrf.mxu0
    %v8302 = vadd.f32 %v8272, %v8301
    %8303 = vdwg.mxu0
    %8304 = vmatpush.msra.mxu0 %v8237
    %8305 = vmatpush.msra.mxu0 %v8236
    %8306 = vmatpush.msra.mxu0 %v8235
    %8307 = vmatpush.msra.mxu0 %v8234
    %8308 = vmatpush.msra.mxu0 %v8233
    %8309 = vmatpush.msra.mxu0 %v8232
    %8310 = vmatpush.msra.mxu0 %v8231
    %8311 = vmatpush.msra.mxu0 %v8230
    %8312 = vmatpush.msra.mxu0 %v8229
    %8313 = vmatpush.msra.mxu0 %v8228
    %8314 = vmatpush.msra.mxu0 %v8227
    %8315 = vmatpush.msra.mxu0 %v8226
    %8316 = vmatpush.msra.mxu0 %v8225
    %8317 = vmatpush.msra.mxu0 %v8224
    %8318 = vmatpush.msra.mxu0 %v8223
    %8319 = vmatpush.msra.mxu0 %v8222
    %8320 = vmatmul.f32.gmra.mxu0 %v8277
    %v8321 = vpop.f32.mrf.mxu0
    %v8322 = vadd.f32 %v8302, %v8321
    %8323 = vdwg.mxu0
    %8324 = vmatpush.msra.mxu0 %v8253
    %8325 = vmatpush.msra.mxu0 %v8252
    %8326 = vmatpush.msra.mxu0 %v8251
    %8327 = vmatpush.msra.mxu0 %v8250
    %8328 = vmatpush.msra.mxu0 %v8249
    %8329 = vmatpush.msra.mxu0 %v8248
    %8330 = vmatpush.msra.mxu0 %v8247
    %8331 = vmatpush.msra.mxu0 %v8246
    %8332 = vmatpush.msra.mxu0 %v8245
    %8333 = vmatpush.msra.mxu0 %v8244
    %8334 = vmatpush.msra.mxu0 %v8243
    %8335 = vmatpush.msra.mxu0 %v8242
    %8336 = vmatpush.msra.mxu0 %v8241
    %8337 = vmatpush.msra.mxu0 %v8240
    %8338 = vmatpush.msra.mxu0 %v8239
    %8339 = vmatpush.msra.mxu0 %v8238
    %8340 = vmatmul.f32.gmra.mxu0 %v8278
    %v8341 = vpop.f32.mrf.mxu0
    %v8342 = vadd.f32 %v8322, %v8341
    %8343 = vdwg.mxu0
    %8344 = vmatpush.msra.mxu0 %v8269
    %8345 = vmatpush.msra.mxu0 %v8268
    %8346 = vmatpush.msra.mxu0 %v8267
    %8347 = vmatpush.msra.mxu0 %v8266
    %8348 = vmatpush.msra.mxu0 %v8265
    %8349 = vmatpush.msra.mxu0 %v8264
    %8350 = vmatpush.msra.mxu0 %v8263
    %8351 = vmatpush.msra.mxu0 %v8262
    %8352 = vmatpush.msra.mxu0 %v8261
    %8353 = vmatpush.msra.mxu0 %v8260
    %8354 = vmatpush.msra.mxu0 %v8259
    %8355 = vmatpush.msra.mxu0 %v8258
    %8356 = vmatpush.msra.mxu0 %v8257
    %8357 = vmatpush.msra.mxu0 %v8256
    %8358 = vmatpush.msra.mxu0 %v8255
    %8359 = vmatpush.msra.mxu0 %v8254
    %8360 = vmatmul.f32.gmra.mxu0 %v8279
    %v8361 = vpop.f32.mrf.mxu0
    %v8362 = vadd.f32 %v8342, %v8361
    %8363 = vdwg.mxu0
    %v8364 = vmax.f32 %v8362, 0.0
    %v8365 = vld [vmem:[%s7] sm:$0xff]
    %v8366 = vld [vmem:[%s7 + $0x8] sm:$0xff]
    %v8367 = vld [vmem:[%s7 + $0x10] sm:$0xff]
    %v8368 = vld [vmem:[%s7 + $0x18] sm:$0xff]
    %v8369 = vld [vmem:[%s7 + $0x20] sm:$0xff]
    %v8370 = vld [vmem:[%s7 + $0x28] sm:$0xff]
    %v8371 = vld [vmem:[%s7 + $0x30] sm:$0xff]
    %v8372 = vld [vmem:[%s7 + $0x38] sm:$0xff]
    %v8373 = vld [vmem:[%s7 + $0x40] sm:$0xff]
    %v8374 = vld [vmem:[%s7 + $0x48] sm:$0xff]
    %v8375 = vld [vmem:[%s7 + $0x50] sm:$0xff]
    %v8376 = vld [vmem:[%s7 + $0x58] sm:$0xff]
    %v8377 = vld [vmem:[%s7 + $0x60] sm:$0xff]
    %v8378 = vld [vmem:[%s7 + $0x68] sm:$0xff]
    %v8379 = vld [vmem:[%s7 + $0x70] sm:$0xff]
    %v8380 = vld [vmem:[%s7 + $0x78] sm:$0xff]
    %v8381 = vld [vmem:[%s8] sm:$0x1]
    %v8383 = vperm.slane %v8381, 0
    %8385 = vmatpush.msra.mxu0 %v8380
    %8386 = vmatpush.msra.mxu0 %v8379
    %8387 = vmatpush.msra.mxu0 %v8378
    %8388 = vmatpush.msra.mxu0 %v8377
    %8389 = vmatpush.msra.mxu0 %v8376
    %8390 = vmatpush.msra.mxu0 %v8375
    %8391 = vmatpush.msra.mxu0 %v8374
    %8392 = vmatpush.msra.mxu0 %v8373
    %8393 = vmatpush.msra.mxu0 %v8372
    %8394 = vmatpush.msra.mxu0 %v8371
    %8395 = vmatpush.msra.mxu0 %v8370
    %8396 = vmatpush.msra.mxu0 %v8369
    %8397 = vmatpush.msra.mxu0 %v8368
    %8398 = vmatpush.msra.mxu0 %v8367
    %8399 = vmatpush.msra.mxu0 %v8366
    %8400 = vmatpush.msra.mxu0 %v8365
    %8401 = vmatmul.f32.gmra.mxu0 %v8364
    %v8402 = vpop.f32.mrf.mxu0
    %v8403 = vadd.f32 %v8383, %v8402
    %8404 = vdwg.mxu0
    %vm8405 = vcmask 74752
    %8406 = vst.msk [vmem:[#allocation7] sm:$0x3] %vm8405, %v8403
    // Predicated region
    $region38: #{forward.1} parent=1 // pred_check
      _
    $region39: #{forward.1} parent=1 // pred_check_branch
      %8408 = sbr.rel (0) target = $region41
    $region40: #{forward.1} parent=1 // pred_region
      %8410 = vsyncadd [#allocation8], 0
      %s8412 = sshll.u32 [#allocation7], 4
      %s8413 = int_to_ptr.vmem [resolvable:$true] %s8412
      %s8414 = sshll.u32 %s9, 4
      %s8415 = int_to_ptr.hbm [resolvable:$true] %s8414
      %8417 = dma.vmem_to_hbm [thread:$0]  %s8413, 32, %s8415, [#allocation8]
    $region41: #{forward.1} parent=1 // pred_fallthru
      _
    // Predicated region
    $region42: #{forward.1} parent=1 // pred_check
      _
    $region43: #{forward.1} parent=1 // pred_check_branch
      %8419 = sbr.rel (0) target = $region45
    $region44: #{forward.1} parent=1 // pred_region
      %8421 = dma.done [#allocation8], 32
    $region45: #{forward.1} parent=1 // pred_fallthru
      _
    %8422 = vsyncpa [#allocation8], 1

</llo_original>
